<compile_context>
chip_gen: v7x
topology: tpu7x:2x2x1
jax: 0.10.0
libtpu: 0.0.40
codegen_flags: <defaults>
</compile_context>

<pallas_src>
import numpy as np
import jax
import jax.numpy as jnp
from jax import lax
from jax.experimental import pallas as pl
from jax.experimental.pallas import tpu as pltpu

# ----------------------------- configuration --------------------------------
DIM = 12                                  # `dim` of the block
EXPANSION_RATIO = 8.0 / 3.0
KSIZE = 7
PAD = KSIZE // 2
CONV_RATIO = 1.0
HIDDEN = int(EXPANSION_RATIO * DIM)       # 32
CONV_CH = int(CONV_RATIO * DIM)           # 12
I_CH = HIDDEN - CONV_CH                   # 20
EPS = 1e-6
_INV_SQRT2 = 0.7071067811865476

B, H, W = 2, 16, 16
HW = H * W                                # rows per image
N = B * HW                                # total rows (one grid step)

# conv slab geometry: flat-row layout (row = h*W + w, lanes = 32 value channels),
# both images live in one slab separated by zeroed border/gap rows.
_MIN_SHIFT = PAD * W + PAD                # 51 = max |row offset| of any tap
OFFSET = 56                               # img0 base (8-aligned, >= _MIN_SHIFT)
GAP = 64                                  # zero gap between images (8-aligned, >= _MIN_SHIFT)
IMG_BASE = (OFFSET, OFFSET + HW + GAP)    # (56, 376)
PADROWS = IMG_BASE[1] + HW + OFFSET       # 688 (bottom border >= _MIN_SHIFT)


# ------------------------------- fused kernel --------------------------------
def gated_cnn_kernel(x_ref, w1g_ref, w1h_ref, wc_ref, w2_ref, bias_ref, mask_ref,
                     o_ref, slab_ref):
    """LN + fc1 + depthwise 7x7 + GELU gate + fc2 + residual for both images."""
    x = x_ref[...].astype(jnp.float32)                       # (N, DIM)

    # ---- LayerNorm (eps=1e-6, biased variance); affine folded into fc1 on host ----
    mean = jnp.mean(x, axis=-1, keepdims=True)
    var = jnp.mean(jnp.square(x - mean), axis=-1, keepdims=True)
    xn = (x - mean) * lax.rsqrt(var + EPS)

    # ---- fc1, fused into two (DIM, HIDDEN) dots: gate half / value half ----
    g = jnp.dot(xn, w1g_ref[...], preferred_element_type=jnp.float32) + bias_ref[0:1, :]
    h = jnp.dot(xn, w1h_ref[...], preferred_element_type=jnp.float32) + bias_ref[1:2, :]

    # ---- depthwise 7x7 conv over the full 32-lane value tensor ----
    # lanes [0:20)  -> identity kernel (center tap = 1, bias 0): i passes through
    # lanes [20:32) -> real depthwise weights + bias:            c is convolved
    # vertical padding: zeroed border/gap rows of the VMEM slab (only rows read)
    slab_ref[0:OFFSET, :] = jnp.zeros((OFFSET, HIDDEN), jnp.float32)
    slab_ref[OFFSET + HW:IMG_BASE[1], :] = jnp.zeros((GAP, HIDDEN), jnp.float32)
    slab_ref[IMG_BASE[1] + HW:PADROWS, :] = jnp.zeros(
        (PADROWS - IMG_BASE[1] - HW, HIDDEN), jnp.float32)
    slab_ref[IMG_BASE[0]:IMG_BASE[0] + HW, :] = h[0:HW]
    slab_ref[IMG_BASE[1]:IMG_BASE[1] + HW, :] = h[HW:N]

    wcv = wc_ref[...]                                          # (49, HIDDEN)
    wrow = [wcv[k:k + 1, :] for k in range(KSIZE * KSIZE)]     # hoisted weight rows
    # host-precomputed horizontal-padding masks, one (HW, 1) column per kw
    masks = [mask_ref[kw * HW:(kw + 1) * HW, :] for kw in range(KSIZE)]

    convs = []
    for b in range(B):                                         # static unroll (B=2)
        base = IMG_BASE[b]
        acc = None
        for kw in range(KSIZE):
            dw = kw - PAD
            partial = None
            for kh in range(KSIZE):
                start = base + (kh - PAD) * W + dw
                tap = slab_ref[start:start + HW, :]            # (HW, HIDDEN)
                contrib = tap * wrow[kh * KSIZE + kw]
                partial = contrib if partial is None else partial + contrib
            if dw != 0:
                partial = partial * masks[kw]                  # mask once per kw
            acc = partial if acc is None else acc + partial
        convs.append(acc)
    h_conv = jnp.concatenate(convs, axis=0) + bias_ref[2:3, :]  # (N, HIDDEN)

    # ---- exact (erf) GELU gating, single fc2 dot, residual ----
    gate = 0.5 * g * (1.0 + lax.erf(g * _INV_SQRT2))
    y = gate * h_conv
    out = (jnp.dot(y, w2_ref[...], preferred_element_type=jnp.float32)
           + bias_ref[3:4, 0:DIM] + x)
    o_ref[...] = out.astype(o_ref.dtype)


# -------------------------------- wrapper -------------------------------------
def gated_cnn_block(x, params):
    """x: [B, H, W, DIM] -> [B, H, W, DIM]."""
    gamma, beta, w1, b1, wc, bc, w2, b2 = params

    # ---- one-time host-side parameter packing ----
    gamma_c = gamma.reshape(DIM, 1).astype(jnp.float32)
    beta_r = beta.reshape(1, DIM).astype(jnp.float32)
    b1_r = b1.reshape(1, 2 * HIDDEN).astype(jnp.float32)

    # LayerNorm affine folded into fc1:  (xn*gamma+beta)@W + b = xn@(gamma*W) + (beta@W + b)
    w1g = gamma_c * w1[:, :HIDDEN]
    w1h = gamma_c * w1[:, HIDDEN:]
    b1g = beta_r @ w1[:, :HIDDEN] + b1_r[:, :HIDDEN]
    b1h = beta_r @ w1[:, HIDDEN:] + b1_r[:, HIDDEN:]

    # depthwise weights widened to HIDDEN lanes: identity center tap for the
    # 20 pass-through lanes, real 7x7 weights for the 12 conv lanes.
    wc49 = wc.reshape(KSIZE * KSIZE, CONV_CH).astype(jnp.float32)
    center = PAD * KSIZE + PAD
    wc_wide = jnp.zeros((KSIZE * KSIZE, HIDDEN), jnp.float32)
    wc_wide = wc_wide.at[:, I_CH:].set(wc49)
    wc_wide = wc_wide.at[center, :I_CH].set(1.0)
    bc_wide = jnp.zeros((1, HIDDEN), jnp.float32).at[:, I_CH:].set(
        bc.reshape(1, CONV_CH).astype(jnp.float32))
    b2_wide = jnp.zeros((1, HIDDEN), jnp.float32).at[:, :DIM].set(
        b2.reshape(1, DIM).astype(jnp.float32))
    biases = jnp.concatenate([b1g, b1h, bc_wide, b2_wide], axis=0)   # (4, HIDDEN)

    # horizontal-padding masks (depend only on w and kw), precomputed on host
    w_idx = jnp.arange(HW, dtype=jnp.int32) % W
    mask_cols = [(((w_idx + (kw - PAD)) >= 0) & ((w_idx + (kw - PAD)) < W)).astype(jnp.float32)
                 for kw in range(KSIZE)]
    masks = jnp.concatenate(mask_cols, axis=0).reshape(KSIZE * HW, 1)

    x2d = x.reshape(N, DIM)
    const2 = lambda i: (0, 0)

    out2d = pl.pallas_call(
        gated_cnn_kernel,
        out_shape=jax.ShapeDtypeStruct((N, DIM), x.dtype),
        grid=(1,),
        in_specs=[
            pl.BlockSpec((N, DIM), const2),                   # x (both images)
            pl.BlockSpec((DIM, HIDDEN), const2),              # w1 gate half (LN folded)
            pl.BlockSpec((DIM, HIDDEN), const2),              # w1 value half (LN folded)
            pl.BlockSpec((KSIZE * KSIZE, HIDDEN), const2),    # widened depthwise weights
            pl.BlockSpec((HIDDEN, DIM), const2),              # w2
            pl.BlockSpec((4, HIDDEN), const2),                # packed biases
            pl.BlockSpec((KSIZE * HW, 1), const2),            # horizontal-pad masks
        ],
        out_specs=pl.BlockSpec((N, DIM), const2),
        scratch_shapes=[pltpu.VMEM((PADROWS, HIDDEN), jnp.float32)],
    )(x2d, w1g, w1h, wc_wide, w2.astype(jnp.float32), biases, masks)

    return out2d.reshape(B, H, W, DIM)


# ------------------------------ reference ------------------------------------
def reference(x, params):
    gamma, beta, w1, b1, wc, bc, w2, b2 = params
    shortcut = x
    mean = jnp.mean(x, axis=-1, keepdims=True)
    var = jnp.mean(jnp.square(x - mean), axis=-1, keepdims=True)
    xn = (x - mean) / jnp.sqrt(var + EPS) * gamma.reshape(-1) + beta.reshape(-1)
    y = jnp.einsum("bhwc,cd->bhwd", xn, w1) + b1.reshape(-1)
    g = y[..., :HIDDEN]
    i = y[..., HIDDEN:HIDDEN + I_CH]
    c = y[..., HIDDEN + I_CH:]
    c = lax.conv_general_dilated(
        c, wc.reshape(KSIZE, KSIZE, 1, CONV_CH),
        window_strides=(1, 1), padding="SAME",
        dimension_numbers=("NHWC", "HWIO", "NHWC"),
        feature_group_count=CONV_CH,
    ) + bc.reshape(-1)
    h = jnp.concatenate([i, c], axis=-1)
    gated = jax.nn.gelu(g, approximate=False) * h
    out = jnp.einsum("bhwk,kd->bhwd", gated, w2) + b2.reshape(-1)
    return out + shortcut


# --------------------------------- main ---------------------------------------
if __name__ == "__main__":
    key = jax.random.PRNGKey(0)
    ks = jax.random.split(key, 9)

    x = jax.random.normal(ks[0], (B, H, W, DIM), jnp.float32)

    # Deterministic synthetic parameters (shapes match nn.Module __init__).
    gamma = (1.0 + 0.1 * jax.random.normal(ks[1], (1, DIM))).astype(jnp.float32)
    beta = (0.1 * jax.random.normal(ks[2], (1, DIM))).astype(jnp.float32)
    w1 = (0.2 * jax.random.normal(ks[3], (DIM, 2 * HIDDEN))).astype(jnp.float32)
    b1 = (0.1 * jax.random.normal(ks[4], (1, 2 * HIDDEN))).astype(jnp.float32)
    wc = (0.2 * jax.random.normal(ks[5], (KSIZE, KSIZE, CONV_CH))).astype(jnp.float32)
    bc = (0.1 * jax.random.normal(ks[6], (1, 1, 1, CONV_CH))).astype(jnp.float32)
    w2 = (0.2 * jax.random.normal(ks[7], (HIDDEN, DIM))).astype(jnp.float32)
    b2 = (0.1 * jax.random.normal(ks[8], (1, DIM))).astype(jnp.float32)

    params = (gamma, beta, w1, b1, wc, bc, w2, b2)

    out = jax.jit(gated_cnn_block)(x, params)
    out = jax.block_until_ready(out)

    ref = jax.block_until_ready(reference(x, params))
    np.testing.assert_allclose(np.asarray(out), np.asarray(ref), rtol=1e-4, atol=1e-4)

    print("KERNEL_OK")
</pallas_src>

<mosaic_0001>
module attributes {stable_mosaic.version = 11 : i64} {
  func.func @gated_cnn_kernel(%arg0: i32, %arg1: memref<512x12xf32, #tpu.memory_space<vmem>>, %arg2: memref<12x32xf32, #tpu.memory_space<vmem>>, %arg3: memref<12x32xf32, #tpu.memory_space<vmem>>, %arg4: memref<49x32xf32, #tpu.memory_space<vmem>>, %arg5: memref<32x12xf32, #tpu.memory_space<vmem>>, %arg6: memref<4x32xf32, #tpu.memory_space<vmem>>, %arg7: memref<1792x1xf32, #tpu.memory_space<vmem>>, %arg8: memref<512x12xf32, #tpu.memory_space<vmem>>, %arg9: memref<688x32xf32, #tpu.memory_space<vmem>>) attributes {dimension_semantics = [#tpu.dimension_semantics<arbitrary>], iteration_bounds = array<i64: 1>, scalar_prefetch = 0 : i64, scratch_operands = 1 : i64, tpu.core_type = #tpu.core_type<tc>, window_params = [{pipeline_mode = #tpu.pipeline_mode<synchronous>, transform_indices = @transform_0, window_bounds = array<i64: 512, 12>}, {pipeline_mode = #tpu.pipeline_mode<synchronous>, transform_indices = @transform_1, window_bounds = array<i64: 12, 32>}, {pipeline_mode = #tpu.pipeline_mode<synchronous>, transform_indices = @transform_2, window_bounds = array<i64: 12, 32>}, {pipeline_mode = #tpu.pipeline_mode<synchronous>, transform_indices = @transform_3, window_bounds = array<i64: 49, 32>}, {pipeline_mode = #tpu.pipeline_mode<synchronous>, transform_indices = @transform_4, window_bounds = array<i64: 32, 12>}, {pipeline_mode = #tpu.pipeline_mode<synchronous>, transform_indices = @transform_5, window_bounds = array<i64: 4, 32>}, {pipeline_mode = #tpu.pipeline_mode<synchronous>, transform_indices = @transform_6, window_bounds = array<i64: 1792, 1>}, {pipeline_mode = #tpu.pipeline_mode<synchronous>, transform_indices = @transform_7, window_bounds = array<i64: 512, 12>}]} {
    %c0 = arith.constant 0 : index
    %c0_0 = arith.constant 0 : index
    %0 = vector.load %arg1[%c0, %c0_0] : memref<512x12xf32, #tpu.memory_space<vmem>>, vector<512x12xf32>
    %cst = arith.constant dense<0.000000e+00> : vector<512xf32>
    %1 = vector.multi_reduction <add>, %0, %cst [1] : vector<512x12xf32> to vector<512xf32>
    %2 = vector.shape_cast %1 : vector<512xf32> to vector<512x1xf32>
    %cst_1 = arith.constant 1.200000e+01 : f32
    %3 = vector.broadcast %cst_1 : f32 to vector<512x1xf32>
    %4 = arith.divf %2, %3 : vector<512x1xf32>
    %5 = vector.broadcast %4 : vector<512x1xf32> to vector<512x12xf32>
    %6 = arith.subf %0, %5 : vector<512x12xf32>
    %7 = arith.mulf %6, %6 : vector<512x12xf32>
    %cst_2 = arith.constant dense<0.000000e+00> : vector<512xf32>
    %8 = vector.multi_reduction <add>, %7, %cst_2 [1] : vector<512x12xf32> to vector<512xf32>
    %9 = vector.shape_cast %8 : vector<512xf32> to vector<512x1xf32>
    %cst_3 = arith.constant 1.200000e+01 : f32
    %10 = vector.broadcast %cst_3 : f32 to vector<512x1xf32>
    %11 = arith.divf %9, %10 : vector<512x1xf32>
    %12 = vector.broadcast %4 : vector<512x1xf32> to vector<512x12xf32>
    %13 = arith.subf %0, %12 : vector<512x12xf32>
    %cst_4 = arith.constant 9.99999997E-7 : f32
    %14 = vector.broadcast %cst_4 : f32 to vector<512x1xf32>
    %15 = arith.addf %11, %14 : vector<512x1xf32>
    %16 = math.rsqrt %15 : vector<512x1xf32>
    %17 = vector.broadcast %16 : vector<512x1xf32> to vector<512x12xf32>
    %18 = arith.mulf %13, %17 : vector<512x12xf32>
    %c0_5 = arith.constant 0 : index
    %c0_6 = arith.constant 0 : index
    %19 = vector.load %arg2[%c0_5, %c0_6] : memref<12x32xf32, #tpu.memory_space<vmem>>, vector<12x32xf32>
    %cst_7 = arith.constant dense<0.000000e+00> : vector<512x32xf32>
    %20 = tpu.matmul %18, %19, %cst_7 {dimension_numbers = #tpu.dot_dimension_numbers<[1], [0], [0], [1], [0, 0, 1, 1], [], []>} : vector<512x12xf32>, vector<12x32xf32>, vector<512x32xf32> -> vector<512x32xf32>
    %c0_8 = arith.constant 0 : index
    %c0_9 = arith.constant 0 : index
    %21 = vector.load %arg6[%c0_8, %c0_9] : memref<4x32xf32, #tpu.memory_space<vmem>>, vector<1x32xf32>
    %22 = vector.broadcast %21 : vector<1x32xf32> to vector<512x32xf32>
    %23 = arith.addf %20, %22 : vector<512x32xf32>
    %c0_10 = arith.constant 0 : index
    %c0_11 = arith.constant 0 : index
    %24 = vector.load %arg3[%c0_10, %c0_11] : memref<12x32xf32, #tpu.memory_space<vmem>>, vector<12x32xf32>
    %cst_12 = arith.constant dense<0.000000e+00> : vector<512x32xf32>
    %25 = tpu.matmul %18, %24, %cst_12 {dimension_numbers = #tpu.dot_dimension_numbers<[1], [0], [0], [1], [0, 0, 1, 1], [], []>} : vector<512x12xf32>, vector<12x32xf32>, vector<512x32xf32> -> vector<512x32xf32>
    %c1 = arith.constant 1 : index
    %c0_13 = arith.constant 0 : index
    %26 = vector.load %arg6[%c1, %c0_13] : memref<4x32xf32, #tpu.memory_space<vmem>>, vector<1x32xf32>
    %27 = vector.broadcast %26 : vector<1x32xf32> to vector<512x32xf32>
    %28 = arith.addf %25, %27 : vector<512x32xf32>
    %cst_14 = arith.constant 0.000000e+00 : f32
    %29 = vector.broadcast %cst_14 : f32 to vector<56x32xf32>
    %c0_15 = arith.constant 0 : index
    %c0_16 = arith.constant 0 : index
    %30 = vector.load %arg9[%c0_15, %c0_16] : memref<688x32xf32, #tpu.memory_space<vmem>>, vector<56x32xf32>
    tpu.vector_store %arg9[%c0_15, %c0_16], %29 {strides = array<i32>} : memref<688x32xf32, #tpu.memory_space<vmem>>, vector<56x32xf32>,
    %cst_17 = arith.constant 0.000000e+00 : f32
    %31 = vector.broadcast %cst_17 : f32 to vector<64x32xf32>
    %c312 = arith.constant 312 : index
    %c0_18 = arith.constant 0 : index
    %32 = vector.load %arg9[%c312, %c0_18] : memref<688x32xf32, #tpu.memory_space<vmem>>, vector<64x32xf32>
    tpu.vector_store %arg9[%c312, %c0_18], %31 {strides = array<i32>} : memref<688x32xf32, #tpu.memory_space<vmem>>, vector<64x32xf32>,
    %cst_19 = arith.constant 0.000000e+00 : f32
    %33 = vector.broadcast %cst_19 : f32 to vector<56x32xf32>
    %c632 = arith.constant 632 : index
    %c0_20 = arith.constant 0 : index
    %34 = vector.load %arg9[%c632, %c0_20] : memref<688x32xf32, #tpu.memory_space<vmem>>, vector<56x32xf32>
    tpu.vector_store %arg9[%c632, %c0_20], %33 {strides = array<i32>} : memref<688x32xf32, #tpu.memory_space<vmem>>, vector<56x32xf32>,
    %35 = vector.extract_strided_slice %28 {offsets = [0, 0], sizes = [256, 32], strides = [1, 1]} : vector<512x32xf32> to vector<256x32xf32>
    %c56 = arith.constant 56 : index
    %c0_21 = arith.constant 0 : index
    %36 = vector.load %arg9[%c56, %c0_21] : memref<688x32xf32, #tpu.memory_space<vmem>>, vector<256x32xf32>
    tpu.vector_store %arg9[%c56, %c0_21], %35 {strides = array<i32>} : memref<688x32xf32, #tpu.memory_space<vmem>>, vector<256x32xf32>,
    %37 = vector.extract_strided_slice %28 {offsets = [256, 0], sizes = [256, 32], strides = [1, 1]} : vector<512x32xf32> to vector<256x32xf32>
    %c376 = arith.constant 376 : index
    %c0_22 = arith.constant 0 : index
    %38 = vector.load %arg9[%c376, %c0_22] : memref<688x32xf32, #tpu.memory_space<vmem>>, vector<256x32xf32>
    tpu.vector_store %arg9[%c376, %c0_22], %37 {strides = array<i32>} : memref<688x32xf32, #tpu.memory_space<vmem>>, vector<256x32xf32>,
    %c0_23 = arith.constant 0 : index
    %c0_24 = arith.constant 0 : index
    %39 = vector.load %arg4[%c0_23, %c0_24] : memref<49x32xf32, #tpu.memory_space<vmem>>, vector<49x32xf32>
    %40 = vector.extract_strided_slice %39 {offsets = [0, 0], sizes = [1, 32], strides = [1, 1]} : vector<49x32xf32> to vector<1x32xf32>
    %41 = vector.extract_strided_slice %39 {offsets = [1, 0], sizes = [1, 32], strides = [1, 1]} : vector<49x32xf32> to vector<1x32xf32>
    %42 = vector.extract_strided_slice %39 {offsets = [2, 0], sizes = [1, 32], strides = [1, 1]} : vector<49x32xf32> to vector<1x32xf32>
    %43 = vector.extract_strided_slice %39 {offsets = [3, 0], sizes = [1, 32], strides = [1, 1]} : vector<49x32xf32> to vector<1x32xf32>
    %44 = vector.extract_strided_slice %39 {offsets = [4, 0], sizes = [1, 32], strides = [1, 1]} : vector<49x32xf32> to vector<1x32xf32>
    %45 = vector.extract_strided_slice %39 {offsets = [5, 0], sizes = [1, 32], strides = [1, 1]} : vector<49x32xf32> to vector<1x32xf32>
    %46 = vector.extract_strided_slice %39 {offsets = [6, 0], sizes = [1, 32], strides = [1, 1]} : vector<49x32xf32> to vector<1x32xf32>
    %47 = vector.extract_strided_slice %39 {offsets = [7, 0], sizes = [1, 32], strides = [1, 1]} : vector<49x32xf32> to vector<1x32xf32>
    %48 = vector.extract_strided_slice %39 {offsets = [8, 0], sizes = [1, 32], strides = [1, 1]} : vector<49x32xf32> to vector<1x32xf32>
    %49 = vector.extract_strided_slice %39 {offsets = [9, 0], sizes = [1, 32], strides = [1, 1]} : vector<49x32xf32> to vector<1x32xf32>
    %50 = vector.extract_strided_slice %39 {offsets = [10, 0], sizes = [1, 32], strides = [1, 1]} : vector<49x32xf32> to vector<1x32xf32>
    %51 = vector.extract_strided_slice %39 {offsets = [11, 0], sizes = [1, 32], strides = [1, 1]} : vector<49x32xf32> to vector<1x32xf32>
    %52 = vector.extract_strided_slice %39 {offsets = [12, 0], sizes = [1, 32], strides = [1, 1]} : vector<49x32xf32> to vector<1x32xf32>
    %53 = vector.extract_strided_slice %39 {offsets = [13, 0], sizes = [1, 32], strides = [1, 1]} : vector<49x32xf32> to vector<1x32xf32>
    %54 = vector.extract_strided_slice %39 {offsets = [14, 0], sizes = [1, 32], strides = [1, 1]} : vector<49x32xf32> to vector<1x32xf32>
    %55 = vector.extract_strided_slice %39 {offsets = [15, 0], sizes = [1, 32], strides = [1, 1]} : vector<49x32xf32> to vector<1x32xf32>
    %56 = vector.extract_strided_slice %39 {offsets = [16, 0], sizes = [1, 32], strides = [1, 1]} : vector<49x32xf32> to vector<1x32xf32>
    %57 = vector.extract_strided_slice %39 {offsets = [17, 0], sizes = [1, 32], strides = [1, 1]} : vector<49x32xf32> to vector<1x32xf32>
    %58 = vector.extract_strided_slice %39 {offsets = [18, 0], sizes = [1, 32], strides = [1, 1]} : vector<49x32xf32> to vector<1x32xf32>
    %59 = vector.extract_strided_slice %39 {offsets = [19, 0], sizes = [1, 32], strides = [1, 1]} : vector<49x32xf32> to vector<1x32xf32>
    %60 = vector.extract_strided_slice %39 {offsets = [20, 0], sizes = [1, 32], strides = [1, 1]} : vector<49x32xf32> to vector<1x32xf32>
    %61 = vector.extract_strided_slice %39 {offsets = [21, 0], sizes = [1, 32], strides = [1, 1]} : vector<49x32xf32> to vector<1x32xf32>
    %62 = vector.extract_strided_slice %39 {offsets = [22, 0], sizes = [1, 32], strides = [1, 1]} : vector<49x32xf32> to vector<1x32xf32>
    %63 = vector.extract_strided_slice %39 {offsets = [23, 0], sizes = [1, 32], strides = [1, 1]} : vector<49x32xf32> to vector<1x32xf32>
    %64 = vector.extract_strided_slice %39 {offsets = [24, 0], sizes = [1, 32], strides = [1, 1]} : vector<49x32xf32> to vector<1x32xf32>
    %65 = vector.extract_strided_slice %39 {offsets = [25, 0], sizes = [1, 32], strides = [1, 1]} : vector<49x32xf32> to vector<1x32xf32>
    %66 = vector.extract_strided_slice %39 {offsets = [26, 0], sizes = [1, 32], strides = [1, 1]} : vector<49x32xf32> to vector<1x32xf32>
    %67 = vector.extract_strided_slice %39 {offsets = [27, 0], sizes = [1, 32], strides = [1, 1]} : vector<49x32xf32> to vector<1x32xf32>
    %68 = vector.extract_strided_slice %39 {offsets = [28, 0], sizes = [1, 32], strides = [1, 1]} : vector<49x32xf32> to vector<1x32xf32>
    %69 = vector.extract_strided_slice %39 {offsets = [29, 0], sizes = [1, 32], strides = [1, 1]} : vector<49x32xf32> to vector<1x32xf32>
    %70 = vector.extract_strided_slice %39 {offsets = [30, 0], sizes = [1, 32], strides = [1, 1]} : vector<49x32xf32> to vector<1x32xf32>
    %71 = vector.extract_strided_slice %39 {offsets = [31, 0], sizes = [1, 32], strides = [1, 1]} : vector<49x32xf32> to vector<1x32xf32>
    %72 = vector.extract_strided_slice %39 {offsets = [32, 0], sizes = [1, 32], strides = [1, 1]} : vector<49x32xf32> to vector<1x32xf32>
    %73 = vector.extract_strided_slice %39 {offsets = [33, 0], sizes = [1, 32], strides = [1, 1]} : vector<49x32xf32> to vector<1x32xf32>
    %74 = vector.extract_strided_slice %39 {offsets = [34, 0], sizes = [1, 32], strides = [1, 1]} : vector<49x32xf32> to vector<1x32xf32>
    %75 = vector.extract_strided_slice %39 {offsets = [35, 0], sizes = [1, 32], strides = [1, 1]} : vector<49x32xf32> to vector<1x32xf32>
    %76 = vector.extract_strided_slice %39 {offsets = [36, 0], sizes = [1, 32], strides = [1, 1]} : vector<49x32xf32> to vector<1x32xf32>
    %77 = vector.extract_strided_slice %39 {offsets = [37, 0], sizes = [1, 32], strides = [1, 1]} : vector<49x32xf32> to vector<1x32xf32>
    %78 = vector.extract_strided_slice %39 {offsets = [38, 0], sizes = [1, 32], strides = [1, 1]} : vector<49x32xf32> to vector<1x32xf32>
    %79 = vector.extract_strided_slice %39 {offsets = [39, 0], sizes = [1, 32], strides = [1, 1]} : vector<49x32xf32> to vector<1x32xf32>
    %80 = vector.extract_strided_slice %39 {offsets = [40, 0], sizes = [1, 32], strides = [1, 1]} : vector<49x32xf32> to vector<1x32xf32>
    %81 = vector.extract_strided_slice %39 {offsets = [41, 0], sizes = [1, 32], strides = [1, 1]} : vector<49x32xf32> to vector<1x32xf32>
    %82 = vector.extract_strided_slice %39 {offsets = [42, 0], sizes = [1, 32], strides = [1, 1]} : vector<49x32xf32> to vector<1x32xf32>
    %83 = vector.extract_strided_slice %39 {offsets = [43, 0], sizes = [1, 32], strides = [1, 1]} : vector<49x32xf32> to vector<1x32xf32>
    %84 = vector.extract_strided_slice %39 {offsets = [44, 0], sizes = [1, 32], strides = [1, 1]} : vector<49x32xf32> to vector<1x32xf32>
    %85 = vector.extract_strided_slice %39 {offsets = [45, 0], sizes = [1, 32], strides = [1, 1]} : vector<49x32xf32> to vector<1x32xf32>
    %86 = vector.extract_strided_slice %39 {offsets = [46, 0], sizes = [1, 32], strides = [1, 1]} : vector<49x32xf32> to vector<1x32xf32>
    %87 = vector.extract_strided_slice %39 {offsets = [47, 0], sizes = [1, 32], strides = [1, 1]} : vector<49x32xf32> to vector<1x32xf32>
    %88 = vector.extract_strided_slice %39 {offsets = [48, 0], sizes = [1, 32], strides = [1, 1]} : vector<49x32xf32> to vector<1x32xf32>
    %c0_25 = arith.constant 0 : index
    %c0_26 = arith.constant 0 : index
    %89 = vector.load %arg7[%c0_25, %c0_26] : memref<1792x1xf32, #tpu.memory_space<vmem>>, vector<256x1xf32>
    %c256 = arith.constant 256 : index
    %c0_27 = arith.constant 0 : index
    %90 = vector.load %arg7[%c256, %c0_27] : memref<1792x1xf32, #tpu.memory_space<vmem>>, vector<256x1xf32>
    %c512 = arith.constant 512 : index
    %c0_28 = arith.constant 0 : index
    %91 = vector.load %arg7[%c512, %c0_28] : memref<1792x1xf32, #tpu.memory_space<vmem>>, vector<256x1xf32>
    %c1024 = arith.constant 1024 : index
    %c0_29 = arith.constant 0 : index
    %92 = vector.load %arg7[%c1024, %c0_29] : memref<1792x1xf32, #tpu.memory_space<vmem>>, vector<256x1xf32>
    %c1280 = arith.constant 1280 : index
    %c0_30 = arith.constant 0 : index
    %93 = vector.load %arg7[%c1280, %c0_30] : memref<1792x1xf32, #tpu.memory_space<vmem>>, vector<256x1xf32>
    %c1536 = arith.constant 1536 : index
    %c0_31 = arith.constant 0 : index
    %94 = vector.load %arg7[%c1536, %c0_31] : memref<1792x1xf32, #tpu.memory_space<vmem>>, vector<256x1xf32>
    %c5 = arith.constant 5 : index
    %c0_32 = arith.constant 0 : index
    %95 = vector.load %arg9[%c5, %c0_32] : memref<688x32xf32, #tpu.memory_space<vmem>>, vector<256x32xf32>
    %96 = vector.broadcast %40 : vector<1x32xf32> to vector<256x32xf32>
    %97 = arith.mulf %95, %96 : vector<256x32xf32>
    %c21 = arith.constant 21 : index
    %c0_33 = arith.constant 0 : index
    %98 = vector.load %arg9[%c21, %c0_33] : memref<688x32xf32, #tpu.memory_space<vmem>>, vector<256x32xf32>
    %99 = vector.broadcast %47 : vector<1x32xf32> to vector<256x32xf32>
    %100 = arith.mulf %98, %99 : vector<256x32xf32>
    %101 = arith.addf %97, %100 : vector<256x32xf32>
    %c37 = arith.constant 37 : index
    %c0_34 = arith.constant 0 : index
    %102 = vector.load %arg9[%c37, %c0_34] : memref<688x32xf32, #tpu.memory_space<vmem>>, vector<256x32xf32>
    %103 = vector.broadcast %54 : vector<1x32xf32> to vector<256x32xf32>
    %104 = arith.mulf %102, %103 : vector<256x32xf32>
    %105 = arith.addf %101, %104 : vector<256x32xf32>
    %c53 = arith.constant 53 : index
    %c0_35 = arith.constant 0 : index
    %106 = vector.load %arg9[%c53, %c0_35] : memref<688x32xf32, #tpu.memory_space<vmem>>, vector<256x32xf32>
    %107 = vector.broadcast %61 : vector<1x32xf32> to vector<256x32xf32>
    %108 = arith.mulf %106, %107 : vector<256x32xf32>
    %109 = arith.addf %105, %108 : vector<256x32xf32>
    %c69 = arith.constant 69 : index
    %c0_36 = arith.constant 0 : index
    %110 = vector.load %arg9[%c69, %c0_36] : memref<688x32xf32, #tpu.memory_space<vmem>>, vector<256x32xf32>
    %111 = vector.broadcast %68 : vector<1x32xf32> to vector<256x32xf32>
    %112 = arith.mulf %110, %111 : vector<256x32xf32>
    %113 = arith.addf %109, %112 : vector<256x32xf32>
    %c85 = arith.constant 85 : index
    %c0_37 = arith.constant 0 : index
    %114 = vector.load %arg9[%c85, %c0_37] : memref<688x32xf32, #tpu.memory_space<vmem>>, vector<256x32xf32>
    %115 = vector.broadcast %75 : vector<1x32xf32> to vector<256x32xf32>
    %116 = arith.mulf %114, %115 : vector<256x32xf32>
    %117 = arith.addf %113, %116 : vector<256x32xf32>
    %c101 = arith.constant 101 : index
    %c0_38 = arith.constant 0 : index
    %118 = vector.load %arg9[%c101, %c0_38] : memref<688x32xf32, #tpu.memory_space<vmem>>, vector<256x32xf32>
    %119 = vector.broadcast %82 : vector<1x32xf32> to vector<256x32xf32>
    %120 = arith.mulf %118, %119 : vector<256x32xf32>
    %121 = arith.addf %117, %120 : vector<256x32xf32>
    %122 = vector.broadcast %89 : vector<256x1xf32> to vector<256x32xf32>
    %123 = arith.mulf %121, %122 : vector<256x32xf32>
    %c6 = arith.constant 6 : index
    %c0_39 = arith.constant 0 : index
    %124 = vector.load %arg9[%c6, %c0_39] : memref<688x32xf32, #tpu.memory_space<vmem>>, vector<256x32xf32>
    %125 = vector.broadcast %41 : vector<1x32xf32> to vector<256x32xf32>
    %126 = arith.mulf %124, %125 : vector<256x32xf32>
    %c22 = arith.constant 22 : index
    %c0_40 = arith.constant 0 : index
    %127 = vector.load %arg9[%c22, %c0_40] : memref<688x32xf32, #tpu.memory_space<vmem>>, vector<256x32xf32>
    %128 = vector.broadcast %48 : vector<1x32xf32> to vector<256x32xf32>
    %129 = arith.mulf %127, %128 : vector<256x32xf32>
    %130 = arith.addf %126, %129 : vector<256x32xf32>
    %c38 = arith.constant 38 : index
    %c0_41 = arith.constant 0 : index
    %131 = vector.load %arg9[%c38, %c0_41] : memref<688x32xf32, #tpu.memory_space<vmem>>, vector<256x32xf32>
    %132 = vector.broadcast %55 : vector<1x32xf32> to vector<256x32xf32>
    %133 = arith.mulf %131, %132 : vector<256x32xf32>
    %134 = arith.addf %130, %133 : vector<256x32xf32>
    %c54 = arith.constant 54 : index
    %c0_42 = arith.constant 0 : index
    %135 = vector.load %arg9[%c54, %c0_42] : memref<688x32xf32, #tpu.memory_space<vmem>>, vector<256x32xf32>
    %136 = vector.broadcast %62 : vector<1x32xf32> to vector<256x32xf32>
    %137 = arith.mulf %135, %136 : vector<256x32xf32>
    %138 = arith.addf %134, %137 : vector<256x32xf32>
    %c70 = arith.constant 70 : index
    %c0_43 = arith.constant 0 : index
    %139 = vector.load %arg9[%c70, %c0_43] : memref<688x32xf32, #tpu.memory_space<vmem>>, vector<256x32xf32>
    %140 = vector.broadcast %69 : vector<1x32xf32> to vector<256x32xf32>
    %141 = arith.mulf %139, %140 : vector<256x32xf32>
    %142 = arith.addf %138, %141 : vector<256x32xf32>
    %c86 = arith.constant 86 : index
    %c0_44 = arith.constant 0 : index
    %143 = vector.load %arg9[%c86, %c0_44] : memref<688x32xf32, #tpu.memory_space<vmem>>, vector<256x32xf32>
    %144 = vector.broadcast %76 : vector<1x32xf32> to vector<256x32xf32>
    %145 = arith.mulf %143, %144 : vector<256x32xf32>
    %146 = arith.addf %142, %145 : vector<256x32xf32>
    %c102 = arith.constant 102 : index
    %c0_45 = arith.constant 0 : index
    %147 = vector.load %arg9[%c102, %c0_45] : memref<688x32xf32, #tpu.memory_space<vmem>>, vector<256x32xf32>
    %148 = vector.broadcast %83 : vector<1x32xf32> to vector<256x32xf32>
    %149 = arith.mulf %147, %148 : vector<256x32xf32>
    %150 = arith.addf %146, %149 : vector<256x32xf32>
    %151 = vector.broadcast %90 : vector<256x1xf32> to vector<256x32xf32>
    %152 = arith.mulf %150, %151 : vector<256x32xf32>
    %153 = arith.addf %123, %152 : vector<256x32xf32>
    %c7 = arith.constant 7 : index
    %c0_46 = arith.constant 0 : index
    %154 = vector.load %arg9[%c7, %c0_46] : memref<688x32xf32, #tpu.memory_space<vmem>>, vector<256x32xf32>
    %155 = vector.broadcast %42 : vector<1x32xf32> to vector<256x32xf32>
    %156 = arith.mulf %154, %155 : vector<256x32xf32>
    %c23 = arith.constant 23 : index
    %c0_47 = arith.constant 0 : index
    %157 = vector.load %arg9[%c23, %c0_47] : memref<688x32xf32, #tpu.memory_space<vmem>>, vector<256x32xf32>
    %158 = vector.broadcast %49 : vector<1x32xf32> to vector<256x32xf32>
    %159 = arith.mulf %157, %158 : vector<256x32xf32>
    %160 = arith.addf %156, %159 : vector<256x32xf32>
    %c39 = arith.constant 39 : index
    %c0_48 = arith.constant 0 : index
    %161 = vector.load %arg9[%c39, %c0_48] : memref<688x32xf32, #tpu.memory_space<vmem>>, vector<256x32xf32>
    %162 = vector.broadcast %56 : vector<1x32xf32> to vector<256x32xf32>
    %163 = arith.mulf %161, %162 : vector<256x32xf32>
    %164 = arith.addf %160, %163 : vector<256x32xf32>
    %c55 = arith.constant 55 : index
    %c0_49 = arith.constant 0 : index
    %165 = vector.load %arg9[%c55, %c0_49] : memref<688x32xf32, #tpu.memory_space<vmem>>, vector<256x32xf32>
    %166 = vector.broadcast %63 : vector<1x32xf32> to vector<256x32xf32>
    %167 = arith.mulf %165, %166 : vector<256x32xf32>
    %168 = arith.addf %164, %167 : vector<256x32xf32>
    %c71 = arith.constant 71 : index
    %c0_50 = arith.constant 0 : index
    %169 = vector.load %arg9[%c71, %c0_50] : memref<688x32xf32, #tpu.memory_space<vmem>>, vector<256x32xf32>
    %170 = vector.broadcast %70 : vector<1x32xf32> to vector<256x32xf32>
    %171 = arith.mulf %169, %170 : vector<256x32xf32>
    %172 = arith.addf %168, %171 : vector<256x32xf32>
    %c87 = arith.constant 87 : index
    %c0_51 = arith.constant 0 : index
    %173 = vector.load %arg9[%c87, %c0_51] : memref<688x32xf32, #tpu.memory_space<vmem>>, vector<256x32xf32>
    %174 = vector.broadcast %77 : vector<1x32xf32> to vector<256x32xf32>
    %175 = arith.mulf %173, %174 : vector<256x32xf32>
    %176 = arith.addf %172, %175 : vector<256x32xf32>
    %c103 = arith.constant 103 : index
    %c0_52 = arith.constant 0 : index
    %177 = vector.load %arg9[%c103, %c0_52] : memref<688x32xf32, #tpu.memory_space<vmem>>, vector<256x32xf32>
    %178 = vector.broadcast %84 : vector<1x32xf32> to vector<256x32xf32>
    %179 = arith.mulf %177, %178 : vector<256x32xf32>
    %180 = arith.addf %176, %179 : vector<256x32xf32>
    %181 = vector.broadcast %91 : vector<256x1xf32> to vector<256x32xf32>
    %182 = arith.mulf %180, %181 : vector<256x32xf32>
    %183 = arith.addf %153, %182 : vector<256x32xf32>
    %c8 = arith.constant 8 : index
    %c0_53 = arith.constant 0 : index
    %184 = vector.load %arg9[%c8, %c0_53] : memref<688x32xf32, #tpu.memory_space<vmem>>, vector<256x32xf32>
    %185 = vector.broadcast %43 : vector<1x32xf32> to vector<256x32xf32>
    %186 = arith.mulf %184, %185 : vector<256x32xf32>
    %c24 = arith.constant 24 : index
    %c0_54 = arith.constant 0 : index
    %187 = vector.load %arg9[%c24, %c0_54] : memref<688x32xf32, #tpu.memory_space<vmem>>, vector<256x32xf32>
    %188 = vector.broadcast %50 : vector<1x32xf32> to vector<256x32xf32>
    %189 = arith.mulf %187, %188 : vector<256x32xf32>
    %190 = arith.addf %186, %189 : vector<256x32xf32>
    %c40 = arith.constant 40 : index
    %c0_55 = arith.constant 0 : index
    %191 = vector.load %arg9[%c40, %c0_55] : memref<688x32xf32, #tpu.memory_space<vmem>>, vector<256x32xf32>
    %192 = vector.broadcast %57 : vector<1x32xf32> to vector<256x32xf32>
    %193 = arith.mulf %191, %192 : vector<256x32xf32>
    %194 = arith.addf %190, %193 : vector<256x32xf32>
    %c56_56 = arith.constant 56 : index
    %c0_57 = arith.constant 0 : index
    %195 = vector.load %arg9[%c56_56, %c0_57] : memref<688x32xf32, #tpu.memory_space<vmem>>, vector<256x32xf32>
    %196 = vector.broadcast %64 : vector<1x32xf32> to vector<256x32xf32>
    %197 = arith.mulf %195, %196 : vector<256x32xf32>
    %198 = arith.addf %194, %197 : vector<256x32xf32>
    %c72 = arith.constant 72 : index
    %c0_58 = arith.constant 0 : index
    %199 = vector.load %arg9[%c72, %c0_58] : memref<688x32xf32, #tpu.memory_space<vmem>>, vector<256x32xf32>
    %200 = vector.broadcast %71 : vector<1x32xf32> to vector<256x32xf32>
    %201 = arith.mulf %199, %200 : vector<256x32xf32>
    %202 = arith.addf %198, %201 : vector<256x32xf32>
    %c88 = arith.constant 88 : index
    %c0_59 = arith.constant 0 : index
    %203 = vector.load %arg9[%c88, %c0_59] : memref<688x32xf32, #tpu.memory_space<vmem>>, vector<256x32xf32>
    %204 = vector.broadcast %78 : vector<1x32xf32> to vector<256x32xf32>
    %205 = arith.mulf %203, %204 : vector<256x32xf32>
    %206 = arith.addf %202, %205 : vector<256x32xf32>
    %c104 = arith.constant 104 : index
    %c0_60 = arith.constant 0 : index
    %207 = vector.load %arg9[%c104, %c0_60] : memref<688x32xf32, #tpu.memory_space<vmem>>, vector<256x32xf32>
    %208 = vector.broadcast %85 : vector<1x32xf32> to vector<256x32xf32>
    %209 = arith.mulf %207, %208 : vector<256x32xf32>
    %210 = arith.addf %206, %209 : vector<256x32xf32>
    %211 = arith.addf %183, %210 : vector<256x32xf32>
    %c9 = arith.constant 9 : index
    %c0_61 = arith.constant 0 : index
    %212 = vector.load %arg9[%c9, %c0_61] : memref<688x32xf32, #tpu.memory_space<vmem>>, vector<256x32xf32>
    %213 = vector.broadcast %44 : vector<1x32xf32> to vector<256x32xf32>
    %214 = arith.mulf %212, %213 : vector<256x32xf32>
    %c25 = arith.constant 25 : index
    %c0_62 = arith.constant 0 : index
    %215 = vector.load %arg9[%c25, %c0_62] : memref<688x32xf32, #tpu.memory_space<vmem>>, vector<256x32xf32>
    %216 = vector.broadcast %51 : vector<1x32xf32> to vector<256x32xf32>
    %217 = arith.mulf %215, %216 : vector<256x32xf32>
    %218 = arith.addf %214, %217 : vector<256x32xf32>
    %c41 = arith.constant 41 : index
    %c0_63 = arith.constant 0 : index
    %219 = vector.load %arg9[%c41, %c0_63] : memref<688x32xf32, #tpu.memory_space<vmem>>, vector<256x32xf32>
    %220 = vector.broadcast %58 : vector<1x32xf32> to vector<256x32xf32>
    %221 = arith.mulf %219, %220 : vector<256x32xf32>
    %222 = arith.addf %218, %221 : vector<256x32xf32>
    %c57 = arith.constant 57 : index
    %c0_64 = arith.constant 0 : index
    %223 = vector.load %arg9[%c57, %c0_64] : memref<688x32xf32, #tpu.memory_space<vmem>>, vector<256x32xf32>
    %224 = vector.broadcast %65 : vector<1x32xf32> to vector<256x32xf32>
    %225 = arith.mulf %223, %224 : vector<256x32xf32>
    %226 = arith.addf %222, %225 : vector<256x32xf32>
    %c73 = arith.constant 73 : index
    %c0_65 = arith.constant 0 : index
    %227 = vector.load %arg9[%c73, %c0_65] : memref<688x32xf32, #tpu.memory_space<vmem>>, vector<256x32xf32>
    %228 = vector.broadcast %72 : vector<1x32xf32> to vector<256x32xf32>
    %229 = arith.mulf %227, %228 : vector<256x32xf32>
    %230 = arith.addf %226, %229 : vector<256x32xf32>
    %c89 = arith.constant 89 : index
    %c0_66 = arith.constant 0 : index
    %231 = vector.load %arg9[%c89, %c0_66] : memref<688x32xf32, #tpu.memory_space<vmem>>, vector<256x32xf32>
    %232 = vector.broadcast %79 : vector<1x32xf32> to vector<256x32xf32>
    %233 = arith.mulf %231, %232 : vector<256x32xf32>
    %234 = arith.addf %230, %233 : vector<256x32xf32>
    %c105 = arith.constant 105 : index
    %c0_67 = arith.constant 0 : index
    %235 = vector.load %arg9[%c105, %c0_67] : memref<688x32xf32, #tpu.memory_space<vmem>>, vector<256x32xf32>
    %236 = vector.broadcast %86 : vector<1x32xf32> to vector<256x32xf32>
    %237 = arith.mulf %235, %236 : vector<256x32xf32>
    %238 = arith.addf %234, %237 : vector<256x32xf32>
    %239 = vector.broadcast %92 : vector<256x1xf32> to vector<256x32xf32>
    %240 = arith.mulf %238, %239 : vector<256x32xf32>
    %241 = arith.addf %211, %240 : vector<256x32xf32>
    %c10 = arith.constant 10 : index
    %c0_68 = arith.constant 0 : index
    %242 = vector.load %arg9[%c10, %c0_68] : memref<688x32xf32, #tpu.memory_space<vmem>>, vector<256x32xf32>
    %243 = vector.broadcast %45 : vector<1x32xf32> to vector<256x32xf32>
    %244 = arith.mulf %242, %243 : vector<256x32xf32>
    %c26 = arith.constant 26 : index
    %c0_69 = arith.constant 0 : index
    %245 = vector.load %arg9[%c26, %c0_69] : memref<688x32xf32, #tpu.memory_space<vmem>>, vector<256x32xf32>
    %246 = vector.broadcast %52 : vector<1x32xf32> to vector<256x32xf32>
    %247 = arith.mulf %245, %246 : vector<256x32xf32>
    %248 = arith.addf %244, %247 : vector<256x32xf32>
    %c42 = arith.constant 42 : index
    %c0_70 = arith.constant 0 : index
    %249 = vector.load %arg9[%c42, %c0_70] : memref<688x32xf32, #tpu.memory_space<vmem>>, vector<256x32xf32>
    %250 = vector.broadcast %59 : vector<1x32xf32> to vector<256x32xf32>
    %251 = arith.mulf %249, %250 : vector<256x32xf32>
    %252 = arith.addf %248, %251 : vector<256x32xf32>
    %c58 = arith.constant 58 : index
    %c0_71 = arith.constant 0 : index
    %253 = vector.load %arg9[%c58, %c0_71] : memref<688x32xf32, #tpu.memory_space<vmem>>, vector<256x32xf32>
    %254 = vector.broadcast %66 : vector<1x32xf32> to vector<256x32xf32>
    %255 = arith.mulf %253, %254 : vector<256x32xf32>
    %256 = arith.addf %252, %255 : vector<256x32xf32>
    %c74 = arith.constant 74 : index
    %c0_72 = arith.constant 0 : index
    %257 = vector.load %arg9[%c74, %c0_72] : memref<688x32xf32, #tpu.memory_space<vmem>>, vector<256x32xf32>
    %258 = vector.broadcast %73 : vector<1x32xf32> to vector<256x32xf32>
    %259 = arith.mulf %257, %258 : vector<256x32xf32>
    %260 = arith.addf %256, %259 : vector<256x32xf32>
    %c90 = arith.constant 90 : index
    %c0_73 = arith.constant 0 : index
    %261 = vector.load %arg9[%c90, %c0_73] : memref<688x32xf32, #tpu.memory_space<vmem>>, vector<256x32xf32>
    %262 = vector.broadcast %80 : vector<1x32xf32> to vector<256x32xf32>
    %263 = arith.mulf %261, %262 : vector<256x32xf32>
    %264 = arith.addf %260, %263 : vector<256x32xf32>
    %c106 = arith.constant 106 : index
    %c0_74 = arith.constant 0 : index
    %265 = vector.load %arg9[%c106, %c0_74] : memref<688x32xf32, #tpu.memory_space<vmem>>, vector<256x32xf32>
    %266 = vector.broadcast %87 : vector<1x32xf32> to vector<256x32xf32>
    %267 = arith.mulf %265, %266 : vector<256x32xf32>
    %268 = arith.addf %264, %267 : vector<256x32xf32>
    %269 = vector.broadcast %93 : vector<256x1xf32> to vector<256x32xf32>
    %270 = arith.mulf %268, %269 : vector<256x32xf32>
    %271 = arith.addf %241, %270 : vector<256x32xf32>
    %c11 = arith.constant 11 : index
    %c0_75 = arith.constant 0 : index
    %272 = vector.load %arg9[%c11, %c0_75] : memref<688x32xf32, #tpu.memory_space<vmem>>, vector<256x32xf32>
    %273 = vector.broadcast %46 : vector<1x32xf32> to vector<256x32xf32>
    %274 = arith.mulf %272, %273 : vector<256x32xf32>
    %c27 = arith.constant 27 : index
    %c0_76 = arith.constant 0 : index
    %275 = vector.load %arg9[%c27, %c0_76] : memref<688x32xf32, #tpu.memory_space<vmem>>, vector<256x32xf32>
    %276 = vector.broadcast %53 : vector<1x32xf32> to vector<256x32xf32>
    %277 = arith.mulf %275, %276 : vector<256x32xf32>
    %278 = arith.addf %274, %277 : vector<256x32xf32>
    %c43 = arith.constant 43 : index
    %c0_77 = arith.constant 0 : index
    %279 = vector.load %arg9[%c43, %c0_77] : memref<688x32xf32, #tpu.memory_space<vmem>>, vector<256x32xf32>
    %280 = vector.broadcast %60 : vector<1x32xf32> to vector<256x32xf32>
    %281 = arith.mulf %279, %280 : vector<256x32xf32>
    %282 = arith.addf %278, %281 : vector<256x32xf32>
    %c59 = arith.constant 59 : index
    %c0_78 = arith.constant 0 : index
    %283 = vector.load %arg9[%c59, %c0_78] : memref<688x32xf32, #tpu.memory_space<vmem>>, vector<256x32xf32>
    %284 = vector.broadcast %67 : vector<1x32xf32> to vector<256x32xf32>
    %285 = arith.mulf %283, %284 : vector<256x32xf32>
    %286 = arith.addf %282, %285 : vector<256x32xf32>
    %c75 = arith.constant 75 : index
    %c0_79 = arith.constant 0 : index
    %287 = vector.load %arg9[%c75, %c0_79] : memref<688x32xf32, #tpu.memory_space<vmem>>, vector<256x32xf32>
    %288 = vector.broadcast %74 : vector<1x32xf32> to vector<256x32xf32>
    %289 = arith.mulf %287, %288 : vector<256x32xf32>
    %290 = arith.addf %286, %289 : vector<256x32xf32>
    %c91 = arith.constant 91 : index
    %c0_80 = arith.constant 0 : index
    %291 = vector.load %arg9[%c91, %c0_80] : memref<688x32xf32, #tpu.memory_space<vmem>>, vector<256x32xf32>
    %292 = vector.broadcast %81 : vector<1x32xf32> to vector<256x32xf32>
    %293 = arith.mulf %291, %292 : vector<256x32xf32>
    %294 = arith.addf %290, %293 : vector<256x32xf32>
    %c107 = arith.constant 107 : index
    %c0_81 = arith.constant 0 : index
    %295 = vector.load %arg9[%c107, %c0_81] : memref<688x32xf32, #tpu.memory_space<vmem>>, vector<256x32xf32>
    %296 = vector.broadcast %88 : vector<1x32xf32> to vector<256x32xf32>
    %297 = arith.mulf %295, %296 : vector<256x32xf32>
    %298 = arith.addf %294, %297 : vector<256x32xf32>
    %299 = vector.broadcast %94 : vector<256x1xf32> to vector<256x32xf32>
    %300 = arith.mulf %298, %299 : vector<256x32xf32>
    %301 = arith.addf %271, %300 : vector<256x32xf32>
    %c325 = arith.constant 325 : index
    %c0_82 = arith.constant 0 : index
    %302 = vector.load %arg9[%c325, %c0_82] : memref<688x32xf32, #tpu.memory_space<vmem>>, vector<256x32xf32>
    %303 = vector.broadcast %40 : vector<1x32xf32> to vector<256x32xf32>
    %304 = arith.mulf %302, %303 : vector<256x32xf32>
    %c341 = arith.constant 341 : index
    %c0_83 = arith.constant 0 : index
    %305 = vector.load %arg9[%c341, %c0_83] : memref<688x32xf32, #tpu.memory_space<vmem>>, vector<256x32xf32>
    %306 = vector.broadcast %47 : vector<1x32xf32> to vector<256x32xf32>
    %307 = arith.mulf %305, %306 : vector<256x32xf32>
    %308 = arith.addf %304, %307 : vector<256x32xf32>
    %c357 = arith.constant 357 : index
    %c0_84 = arith.constant 0 : index
    %309 = vector.load %arg9[%c357, %c0_84] : memref<688x32xf32, #tpu.memory_space<vmem>>, vector<256x32xf32>
    %310 = vector.broadcast %54 : vector<1x32xf32> to vector<256x32xf32>
    %311 = arith.mulf %309, %310 : vector<256x32xf32>
    %312 = arith.addf %308, %311 : vector<256x32xf32>
    %c373 = arith.constant 373 : index
    %c0_85 = arith.constant 0 : index
    %313 = vector.load %arg9[%c373, %c0_85] : memref<688x32xf32, #tpu.memory_space<vmem>>, vector<256x32xf32>
    %314 = vector.broadcast %61 : vector<1x32xf32> to vector<256x32xf32>
    %315 = arith.mulf %313, %314 : vector<256x32xf32>
    %316 = arith.addf %312, %315 : vector<256x32xf32>
    %c389 = arith.constant 389 : index
    %c0_86 = arith.constant 0 : index
    %317 = vector.load %arg9[%c389, %c0_86] : memref<688x32xf32, #tpu.memory_space<vmem>>, vector<256x32xf32>
    %318 = vector.broadcast %68 : vector<1x32xf32> to vector<256x32xf32>
    %319 = arith.mulf %317, %318 : vector<256x32xf32>
    %320 = arith.addf %316, %319 : vector<256x32xf32>
    %c405 = arith.constant 405 : index
    %c0_87 = arith.constant 0 : index
    %321 = vector.load %arg9[%c405, %c0_87] : memref<688x32xf32, #tpu.memory_space<vmem>>, vector<256x32xf32>
    %322 = vector.broadcast %75 : vector<1x32xf32> to vector<256x32xf32>
    %323 = arith.mulf %321, %322 : vector<256x32xf32>
    %324 = arith.addf %320, %323 : vector<256x32xf32>
    %c421 = arith.constant 421 : index
    %c0_88 = arith.constant 0 : index
    %325 = vector.load %arg9[%c421, %c0_88] : memref<688x32xf32, #tpu.memory_space<vmem>>, vector<256x32xf32>
    %326 = vector.broadcast %82 : vector<1x32xf32> to vector<256x32xf32>
    %327 = arith.mulf %325, %326 : vector<256x32xf32>
    %328 = arith.addf %324, %327 : vector<256x32xf32>
    %329 = vector.broadcast %89 : vector<256x1xf32> to vector<256x32xf32>
    %330 = arith.mulf %328, %329 : vector<256x32xf32>
    %c326 = arith.constant 326 : index
    %c0_89 = arith.constant 0 : index
    %331 = vector.load %arg9[%c326, %c0_89] : memref<688x32xf32, #tpu.memory_space<vmem>>, vector<256x32xf32>
    %332 = vector.broadcast %41 : vector<1x32xf32> to vector<256x32xf32>
    %333 = arith.mulf %331, %332 : vector<256x32xf32>
    %c342 = arith.constant 342 : index
    %c0_90 = arith.constant 0 : index
    %334 = vector.load %arg9[%c342, %c0_90] : memref<688x32xf32, #tpu.memory_space<vmem>>, vector<256x32xf32>
    %335 = vector.broadcast %48 : vector<1x32xf32> to vector<256x32xf32>
    %336 = arith.mulf %334, %335 : vector<256x32xf32>
    %337 = arith.addf %333, %336 : vector<256x32xf32>
    %c358 = arith.constant 358 : index
    %c0_91 = arith.constant 0 : index
    %338 = vector.load %arg9[%c358, %c0_91] : memref<688x32xf32, #tpu.memory_space<vmem>>, vector<256x32xf32>
    %339 = vector.broadcast %55 : vector<1x32xf32> to vector<256x32xf32>
    %340 = arith.mulf %338, %339 : vector<256x32xf32>
    %341 = arith.addf %337, %340 : vector<256x32xf32>
    %c374 = arith.constant 374 : index
    %c0_92 = arith.constant 0 : index
    %342 = vector.load %arg9[%c374, %c0_92] : memref<688x32xf32, #tpu.memory_space<vmem>>, vector<256x32xf32>
    %343 = vector.broadcast %62 : vector<1x32xf32> to vector<256x32xf32>
    %344 = arith.mulf %342, %343 : vector<256x32xf32>
    %345 = arith.addf %341, %344 : vector<256x32xf32>
    %c390 = arith.constant 390 : index
    %c0_93 = arith.constant 0 : index
    %346 = vector.load %arg9[%c390, %c0_93] : memref<688x32xf32, #tpu.memory_space<vmem>>, vector<256x32xf32>
    %347 = vector.broadcast %69 : vector<1x32xf32> to vector<256x32xf32>
    %348 = arith.mulf %346, %347 : vector<256x32xf32>
    %349 = arith.addf %345, %348 : vector<256x32xf32>
    %c406 = arith.constant 406 : index
    %c0_94 = arith.constant 0 : index
    %350 = vector.load %arg9[%c406, %c0_94] : memref<688x32xf32, #tpu.memory_space<vmem>>, vector<256x32xf32>
    %351 = vector.broadcast %76 : vector<1x32xf32> to vector<256x32xf32>
    %352 = arith.mulf %350, %351 : vector<256x32xf32>
    %353 = arith.addf %349, %352 : vector<256x32xf32>
    %c422 = arith.constant 422 : index
    %c0_95 = arith.constant 0 : index
    %354 = vector.load %arg9[%c422, %c0_95] : memref<688x32xf32, #tpu.memory_space<vmem>>, vector<256x32xf32>
    %355 = vector.broadcast %83 : vector<1x32xf32> to vector<256x32xf32>
    %356 = arith.mulf %354, %355 : vector<256x32xf32>
    %357 = arith.addf %353, %356 : vector<256x32xf32>
    %358 = vector.broadcast %90 : vector<256x1xf32> to vector<256x32xf32>
    %359 = arith.mulf %357, %358 : vector<256x32xf32>
    %360 = arith.addf %330, %359 : vector<256x32xf32>
    %c327 = arith.constant 327 : index
    %c0_96 = arith.constant 0 : index
    %361 = vector.load %arg9[%c327, %c0_96] : memref<688x32xf32, #tpu.memory_space<vmem>>, vector<256x32xf32>
    %362 = vector.broadcast %42 : vector<1x32xf32> to vector<256x32xf32>
    %363 = arith.mulf %361, %362 : vector<256x32xf32>
    %c343 = arith.constant 343 : index
    %c0_97 = arith.constant 0 : index
    %364 = vector.load %arg9[%c343, %c0_97] : memref<688x32xf32, #tpu.memory_space<vmem>>, vector<256x32xf32>
    %365 = vector.broadcast %49 : vector<1x32xf32> to vector<256x32xf32>
    %366 = arith.mulf %364, %365 : vector<256x32xf32>
    %367 = arith.addf %363, %366 : vector<256x32xf32>
    %c359 = arith.constant 359 : index
    %c0_98 = arith.constant 0 : index
    %368 = vector.load %arg9[%c359, %c0_98] : memref<688x32xf32, #tpu.memory_space<vmem>>, vector<256x32xf32>
    %369 = vector.broadcast %56 : vector<1x32xf32> to vector<256x32xf32>
    %370 = arith.mulf %368, %369 : vector<256x32xf32>
    %371 = arith.addf %367, %370 : vector<256x32xf32>
    %c375 = arith.constant 375 : index
    %c0_99 = arith.constant 0 : index
    %372 = vector.load %arg9[%c375, %c0_99] : memref<688x32xf32, #tpu.memory_space<vmem>>, vector<256x32xf32>
    %373 = vector.broadcast %63 : vector<1x32xf32> to vector<256x32xf32>
    %374 = arith.mulf %372, %373 : vector<256x32xf32>
    %375 = arith.addf %371, %374 : vector<256x32xf32>
    %c391 = arith.constant 391 : index
    %c0_100 = arith.constant 0 : index
    %376 = vector.load %arg9[%c391, %c0_100] : memref<688x32xf32, #tpu.memory_space<vmem>>, vector<256x32xf32>
    %377 = vector.broadcast %70 : vector<1x32xf32> to vector<256x32xf32>
    %378 = arith.mulf %376, %377 : vector<256x32xf32>
    %379 = arith.addf %375, %378 : vector<256x32xf32>
    %c407 = arith.constant 407 : index
    %c0_101 = arith.constant 0 : index
    %380 = vector.load %arg9[%c407, %c0_101] : memref<688x32xf32, #tpu.memory_space<vmem>>, vector<256x32xf32>
    %381 = vector.broadcast %77 : vector<1x32xf32> to vector<256x32xf32>
    %382 = arith.mulf %380, %381 : vector<256x32xf32>
    %383 = arith.addf %379, %382 : vector<256x32xf32>
    %c423 = arith.constant 423 : index
    %c0_102 = arith.constant 0 : index
    %384 = vector.load %arg9[%c423, %c0_102] : memref<688x32xf32, #tpu.memory_space<vmem>>, vector<256x32xf32>
    %385 = vector.broadcast %84 : vector<1x32xf32> to vector<256x32xf32>
    %386 = arith.mulf %384, %385 : vector<256x32xf32>
    %387 = arith.addf %383, %386 : vector<256x32xf32>
    %388 = vector.broadcast %91 : vector<256x1xf32> to vector<256x32xf32>
    %389 = arith.mulf %387, %388 : vector<256x32xf32>
    %390 = arith.addf %360, %389 : vector<256x32xf32>
    %c328 = arith.constant 328 : index
    %c0_103 = arith.constant 0 : index
    %391 = vector.load %arg9[%c328, %c0_103] : memref<688x32xf32, #tpu.memory_space<vmem>>, vector<256x32xf32>
    %392 = vector.broadcast %43 : vector<1x32xf32> to vector<256x32xf32>
    %393 = arith.mulf %391, %392 : vector<256x32xf32>
    %c344 = arith.constant 344 : index
    %c0_104 = arith.constant 0 : index
    %394 = vector.load %arg9[%c344, %c0_104] : memref<688x32xf32, #tpu.memory_space<vmem>>, vector<256x32xf32>
    %395 = vector.broadcast %50 : vector<1x32xf32> to vector<256x32xf32>
    %396 = arith.mulf %394, %395 : vector<256x32xf32>
    %397 = arith.addf %393, %396 : vector<256x32xf32>
    %c360 = arith.constant 360 : index
    %c0_105 = arith.constant 0 : index
    %398 = vector.load %arg9[%c360, %c0_105] : memref<688x32xf32, #tpu.memory_space<vmem>>, vector<256x32xf32>
    %399 = vector.broadcast %57 : vector<1x32xf32> to vector<256x32xf32>
    %400 = arith.mulf %398, %399 : vector<256x32xf32>
    %401 = arith.addf %397, %400 : vector<256x32xf32>
    %c376_106 = arith.constant 376 : index
    %c0_107 = arith.constant 0 : index
    %402 = vector.load %arg9[%c376_106, %c0_107] : memref<688x32xf32, #tpu.memory_space<vmem>>, vector<256x32xf32>
    %403 = vector.broadcast %64 : vector<1x32xf32> to vector<256x32xf32>
    %404 = arith.mulf %402, %403 : vector<256x32xf32>
    %405 = arith.addf %401, %404 : vector<256x32xf32>
    %c392 = arith.constant 392 : index
    %c0_108 = arith.constant 0 : index
    %406 = vector.load %arg9[%c392, %c0_108] : memref<688x32xf32, #tpu.memory_space<vmem>>, vector<256x32xf32>
    %407 = vector.broadcast %71 : vector<1x32xf32> to vector<256x32xf32>
    %408 = arith.mulf %406, %407 : vector<256x32xf32>
    %409 = arith.addf %405, %408 : vector<256x32xf32>
    %c408 = arith.constant 408 : index
    %c0_109 = arith.constant 0 : index
    %410 = vector.load %arg9[%c408, %c0_109] : memref<688x32xf32, #tpu.memory_space<vmem>>, vector<256x32xf32>
    %411 = vector.broadcast %78 : vector<1x32xf32> to vector<256x32xf32>
    %412 = arith.mulf %410, %411 : vector<256x32xf32>
    %413 = arith.addf %409, %412 : vector<256x32xf32>
    %c424 = arith.constant 424 : index
    %c0_110 = arith.constant 0 : index
    %414 = vector.load %arg9[%c424, %c0_110] : memref<688x32xf32, #tpu.memory_space<vmem>>, vector<256x32xf32>
    %415 = vector.broadcast %85 : vector<1x32xf32> to vector<256x32xf32>
    %416 = arith.mulf %414, %415 : vector<256x32xf32>
    %417 = arith.addf %413, %416 : vector<256x32xf32>
    %418 = arith.addf %390, %417 : vector<256x32xf32>
    %c329 = arith.constant 329 : index
    %c0_111 = arith.constant 0 : index
    %419 = vector.load %arg9[%c329, %c0_111] : memref<688x32xf32, #tpu.memory_space<vmem>>, vector<256x32xf32>
    %420 = vector.broadcast %44 : vector<1x32xf32> to vector<256x32xf32>
    %421 = arith.mulf %419, %420 : vector<256x32xf32>
    %c345 = arith.constant 345 : index
    %c0_112 = arith.constant 0 : index
    %422 = vector.load %arg9[%c345, %c0_112] : memref<688x32xf32, #tpu.memory_space<vmem>>, vector<256x32xf32>
    %423 = vector.broadcast %51 : vector<1x32xf32> to vector<256x32xf32>
    %424 = arith.mulf %422, %423 : vector<256x32xf32>
    %425 = arith.addf %421, %424 : vector<256x32xf32>
    %c361 = arith.constant 361 : index
    %c0_113 = arith.constant 0 : index
    %426 = vector.load %arg9[%c361, %c0_113] : memref<688x32xf32, #tpu.memory_space<vmem>>, vector<256x32xf32>
    %427 = vector.broadcast %58 : vector<1x32xf32> to vector<256x32xf32>
    %428 = arith.mulf %426, %427 : vector<256x32xf32>
    %429 = arith.addf %425, %428 : vector<256x32xf32>
    %c377 = arith.constant 377 : index
    %c0_114 = arith.constant 0 : index
    %430 = vector.load %arg9[%c377, %c0_114] : memref<688x32xf32, #tpu.memory_space<vmem>>, vector<256x32xf32>
    %431 = vector.broadcast %65 : vector<1x32xf32> to vector<256x32xf32>
    %432 = arith.mulf %430, %431 : vector<256x32xf32>
    %433 = arith.addf %429, %432 : vector<256x32xf32>
    %c393 = arith.constant 393 : index
    %c0_115 = arith.constant 0 : index
    %434 = vector.load %arg9[%c393, %c0_115] : memref<688x32xf32, #tpu.memory_space<vmem>>, vector<256x32xf32>
    %435 = vector.broadcast %72 : vector<1x32xf32> to vector<256x32xf32>
    %436 = arith.mulf %434, %435 : vector<256x32xf32>
    %437 = arith.addf %433, %436 : vector<256x32xf32>
    %c409 = arith.constant 409 : index
    %c0_116 = arith.constant 0 : index
    %438 = vector.load %arg9[%c409, %c0_116] : memref<688x32xf32, #tpu.memory_space<vmem>>, vector<256x32xf32>
    %439 = vector.broadcast %79 : vector<1x32xf32> to vector<256x32xf32>
    %440 = arith.mulf %438, %439 : vector<256x32xf32>
    %441 = arith.addf %437, %440 : vector<256x32xf32>
    %c425 = arith.constant 425 : index
    %c0_117 = arith.constant 0 : index
    %442 = vector.load %arg9[%c425, %c0_117] : memref<688x32xf32, #tpu.memory_space<vmem>>, vector<256x32xf32>
    %443 = vector.broadcast %86 : vector<1x32xf32> to vector<256x32xf32>
    %444 = arith.mulf %442, %443 : vector<256x32xf32>
    %445 = arith.addf %441, %444 : vector<256x32xf32>
    %446 = vector.broadcast %92 : vector<256x1xf32> to vector<256x32xf32>
    %447 = arith.mulf %445, %446 : vector<256x32xf32>
    %448 = arith.addf %418, %447 : vector<256x32xf32>
    %c330 = arith.constant 330 : index
    %c0_118 = arith.constant 0 : index
    %449 = vector.load %arg9[%c330, %c0_118] : memref<688x32xf32, #tpu.memory_space<vmem>>, vector<256x32xf32>
    %450 = vector.broadcast %45 : vector<1x32xf32> to vector<256x32xf32>
    %451 = arith.mulf %449, %450 : vector<256x32xf32>
    %c346 = arith.constant 346 : index
    %c0_119 = arith.constant 0 : index
    %452 = vector.load %arg9[%c346, %c0_119] : memref<688x32xf32, #tpu.memory_space<vmem>>, vector<256x32xf32>
    %453 = vector.broadcast %52 : vector<1x32xf32> to vector<256x32xf32>
    %454 = arith.mulf %452, %453 : vector<256x32xf32>
    %455 = arith.addf %451, %454 : vector<256x32xf32>
    %c362 = arith.constant 362 : index
    %c0_120 = arith.constant 0 : index
    %456 = vector.load %arg9[%c362, %c0_120] : memref<688x32xf32, #tpu.memory_space<vmem>>, vector<256x32xf32>
    %457 = vector.broadcast %59 : vector<1x32xf32> to vector<256x32xf32>
    %458 = arith.mulf %456, %457 : vector<256x32xf32>
    %459 = arith.addf %455, %458 : vector<256x32xf32>
    %c378 = arith.constant 378 : index
    %c0_121 = arith.constant 0 : index
    %460 = vector.load %arg9[%c378, %c0_121] : memref<688x32xf32, #tpu.memory_space<vmem>>, vector<256x32xf32>
    %461 = vector.broadcast %66 : vector<1x32xf32> to vector<256x32xf32>
    %462 = arith.mulf %460, %461 : vector<256x32xf32>
    %463 = arith.addf %459, %462 : vector<256x32xf32>
    %c394 = arith.constant 394 : index
    %c0_122 = arith.constant 0 : index
    %464 = vector.load %arg9[%c394, %c0_122] : memref<688x32xf32, #tpu.memory_space<vmem>>, vector<256x32xf32>
    %465 = vector.broadcast %73 : vector<1x32xf32> to vector<256x32xf32>
    %466 = arith.mulf %464, %465 : vector<256x32xf32>
    %467 = arith.addf %463, %466 : vector<256x32xf32>
    %c410 = arith.constant 410 : index
    %c0_123 = arith.constant 0 : index
    %468 = vector.load %arg9[%c410, %c0_123] : memref<688x32xf32, #tpu.memory_space<vmem>>, vector<256x32xf32>
    %469 = vector.broadcast %80 : vector<1x32xf32> to vector<256x32xf32>
    %470 = arith.mulf %468, %469 : vector<256x32xf32>
    %471 = arith.addf %467, %470 : vector<256x32xf32>
    %c426 = arith.constant 426 : index
    %c0_124 = arith.constant 0 : index
    %472 = vector.load %arg9[%c426, %c0_124] : memref<688x32xf32, #tpu.memory_space<vmem>>, vector<256x32xf32>
    %473 = vector.broadcast %87 : vector<1x32xf32> to vector<256x32xf32>
    %474 = arith.mulf %472, %473 : vector<256x32xf32>
    %475 = arith.addf %471, %474 : vector<256x32xf32>
    %476 = vector.broadcast %93 : vector<256x1xf32> to vector<256x32xf32>
    %477 = arith.mulf %475, %476 : vector<256x32xf32>
    %478 = arith.addf %448, %477 : vector<256x32xf32>
    %c331 = arith.constant 331 : index
    %c0_125 = arith.constant 0 : index
    %479 = vector.load %arg9[%c331, %c0_125] : memref<688x32xf32, #tpu.memory_space<vmem>>, vector<256x32xf32>
    %480 = vector.broadcast %46 : vector<1x32xf32> to vector<256x32xf32>
    %481 = arith.mulf %479, %480 : vector<256x32xf32>
    %c347 = arith.constant 347 : index
    %c0_126 = arith.constant 0 : index
    %482 = vector.load %arg9[%c347, %c0_126] : memref<688x32xf32, #tpu.memory_space<vmem>>, vector<256x32xf32>
    %483 = vector.broadcast %53 : vector<1x32xf32> to vector<256x32xf32>
    %484 = arith.mulf %482, %483 : vector<256x32xf32>
    %485 = arith.addf %481, %484 : vector<256x32xf32>
    %c363 = arith.constant 363 : index
    %c0_127 = arith.constant 0 : index
    %486 = vector.load %arg9[%c363, %c0_127] : memref<688x32xf32, #tpu.memory_space<vmem>>, vector<256x32xf32>
    %487 = vector.broadcast %60 : vector<1x32xf32> to vector<256x32xf32>
    %488 = arith.mulf %486, %487 : vector<256x32xf32>
    %489 = arith.addf %485, %488 : vector<256x32xf32>
    %c379 = arith.constant 379 : index
    %c0_128 = arith.constant 0 : index
    %490 = vector.load %arg9[%c379, %c0_128] : memref<688x32xf32, #tpu.memory_space<vmem>>, vector<256x32xf32>
    %491 = vector.broadcast %67 : vector<1x32xf32> to vector<256x32xf32>
    %492 = arith.mulf %490, %491 : vector<256x32xf32>
    %493 = arith.addf %489, %492 : vector<256x32xf32>
    %c395 = arith.constant 395 : index
    %c0_129 = arith.constant 0 : index
    %494 = vector.load %arg9[%c395, %c0_129] : memref<688x32xf32, #tpu.memory_space<vmem>>, vector<256x32xf32>
    %495 = vector.broadcast %74 : vector<1x32xf32> to vector<256x32xf32>
    %496 = arith.mulf %494, %495 : vector<256x32xf32>
    %497 = arith.addf %493, %496 : vector<256x32xf32>
    %c411 = arith.constant 411 : index
    %c0_130 = arith.constant 0 : index
    %498 = vector.load %arg9[%c411, %c0_130] : memref<688x32xf32, #tpu.memory_space<vmem>>, vector<256x32xf32>
    %499 = vector.broadcast %81 : vector<1x32xf32> to vector<256x32xf32>
    %500 = arith.mulf %498, %499 : vector<256x32xf32>
    %501 = arith.addf %497, %500 : vector<256x32xf32>
    %c427 = arith.constant 427 : index
    %c0_131 = arith.constant 0 : index
    %502 = vector.load %arg9[%c427, %c0_131] : memref<688x32xf32, #tpu.memory_space<vmem>>, vector<256x32xf32>
    %503 = vector.broadcast %88 : vector<1x32xf32> to vector<256x32xf32>
    %504 = arith.mulf %502, %503 : vector<256x32xf32>
    %505 = arith.addf %501, %504 : vector<256x32xf32>
    %506 = vector.broadcast %94 : vector<256x1xf32> to vector<256x32xf32>
    %507 = arith.mulf %505, %506 : vector<256x32xf32>
    %508 = arith.addf %478, %507 : vector<256x32xf32>
    %509 = tpu.concatenate %301, %508 in 0 : vector<256x32xf32>, vector<256x32xf32> -> vector<512x32xf32>
    %c2 = arith.constant 2 : index
    %c0_132 = arith.constant 0 : index
    %510 = vector.load %arg6[%c2, %c0_132] : memref<4x32xf32, #tpu.memory_space<vmem>>, vector<1x32xf32>
    %511 = vector.broadcast %510 : vector<1x32xf32> to vector<512x32xf32>
    %512 = arith.addf %509, %511 : vector<512x32xf32>
    %cst_133 = arith.constant 5.000000e-01 : f32
    %513 = vector.broadcast %cst_133 : f32 to vector<512x32xf32>
    %514 = arith.mulf %513, %23 : vector<512x32xf32>
    %cst_134 = arith.constant 0.707106769 : f32
    %515 = vector.broadcast %cst_134 : f32 to vector<512x32xf32>
    %516 = arith.mulf %23, %515 : vector<512x32xf32>
    %517 = math.erf %516 : vector<512x32xf32>
    %cst_135 = arith.constant 1.000000e+00 : f32
    %518 = vector.broadcast %cst_135 : f32 to vector<512x32xf32>
    %519 = arith.addf %518, %517 : vector<512x32xf32>
    %520 = arith.mulf %514, %519 : vector<512x32xf32>
    %521 = arith.mulf %520, %512 : vector<512x32xf32>
    %c0_136 = arith.constant 0 : index
    %c0_137 = arith.constant 0 : index
    %522 = vector.load %arg5[%c0_136, %c0_137] : memref<32x12xf32, #tpu.memory_space<vmem>>, vector<32x12xf32>
    %cst_138 = arith.constant dense<0.000000e+00> : vector<512x12xf32>
    %523 = tpu.matmul %521, %522, %cst_138 {dimension_numbers = #tpu.dot_dimension_numbers<[1], [0], [0], [1], [0, 0, 1, 1], [], []>} : vector<512x32xf32>, vector<32x12xf32>, vector<512x12xf32> -> vector<512x12xf32>
    %c3 = arith.constant 3 : index
    %c0_139 = arith.constant 0 : index
    %524 = vector.load %arg6[%c3, %c0_139] : memref<4x32xf32, #tpu.memory_space<vmem>>, vector<1x12xf32>
    %525 = vector.broadcast %524 : vector<1x12xf32> to vector<512x12xf32>
    %526 = arith.addf %523, %525 : vector<512x12xf32>
    %527 = arith.addf %526, %0 : vector<512x12xf32>
    %c0_140 = arith.constant 0 : index
    %c0_141 = arith.constant 0 : index
    %528 = vector.load %arg8[%c0_140, %c0_141] : memref<512x12xf32, #tpu.memory_space<vmem>>, vector<512x12xf32>
    tpu.vector_store %arg8[%c0_140, %c0_141], %527 {strides = array<i32>} : memref<512x12xf32, #tpu.memory_space<vmem>>, vector<512x12xf32>,
    return
  }
  func.func @transform_0(%arg0: i32) -> (i32, i32) {
    %c0_i32 = arith.constant 0 : i32
    %c0_i32_0 = arith.constant 0 : i32
    %c0_i32_1 = arith.constant 0 : i32
    return %c0_i32, %c0_i32_0 : i32, i32
  }
  func.func @transform_1(%arg0: i32) -> (i32, i32) {
    %c0_i32 = arith.constant 0 : i32
    %c0_i32_0 = arith.constant 0 : i32
    %c0_i32_1 = arith.constant 0 : i32
    return %c0_i32, %c0_i32_0 : i32, i32
  }
  func.func @transform_2(%arg0: i32) -> (i32, i32) {
    %c0_i32 = arith.constant 0 : i32
    %c0_i32_0 = arith.constant 0 : i32
    %c0_i32_1 = arith.constant 0 : i32
    return %c0_i32, %c0_i32_0 : i32, i32
  }
  func.func @transform_3(%arg0: i32) -> (i32, i32) {
    %c0_i32 = arith.constant 0 : i32
    %c0_i32_0 = arith.constant 0 : i32
    %c0_i32_1 = arith.constant 0 : i32
    return %c0_i32, %c0_i32_0 : i32, i32
  }
  func.func @transform_4(%arg0: i32) -> (i32, i32) {
    %c0_i32 = arith.constant 0 : i32
    %c0_i32_0 = arith.constant 0 : i32
    %c0_i32_1 = arith.constant 0 : i32
    return %c0_i32, %c0_i32_0 : i32, i32
  }
  func.func @transform_5(%arg0: i32) -> (i32, i32) {
    %c0_i32 = arith.constant 0 : i32
    %c0_i32_0 = arith.constant 0 : i32
    %c0_i32_1 = arith.constant 0 : i32
    return %c0_i32, %c0_i32_0 : i32, i32
  }
  func.func @transform_6(%arg0: i32) -> (i32, i32) {
    %c0_i32 = arith.constant 0 : i32
    %c0_i32_0 = arith.constant 0 : i32
    %c0_i32_1 = arith.constant 0 : i32
    return %c0_i32, %c0_i32_0 : i32, i32
  }
  func.func @transform_7(%arg0: i32) -> (i32, i32) {
    %c0_i32 = arith.constant 0 : i32
    %c0_i32_0 = arith.constant 0 : i32
    %c0_i32_1 = arith.constant 0 : i32
    return %c0_i32, %c0_i32_0 : i32, i32
  }
}

</mosaic_0001>

<llo_original>
// kernel: custom-call
$region0: #{custom-call}
  %s0 = inlined_call_operand.vmem [shape: pred[1792], index: 0, kind: output, shape index: {}]

// kernel: gated_cnn_block.1
$region0: #{gated_cnn_block.1}
  #allocation0 [shape = 'u32[]', space=smem, size = 0x4, offset = 0x4, fixed_abs, tag = 'smem constant byte address 0x4 - core index']
  #allocation1 [shape = 'u32[144,128]{1,0:T(1,128)}', space=vmem, size = 0x12000, scoped, tag = 'internal scratch']
  #allocation2 [shape = 'f32[688,32]{1,0:T(8,128)}', space=vmem, size = 0x56000, scoped, tag = 'scratch operand']
  %s0 = inlined_call_operand.vmem [shape: f32[512,12], index: 0, kind: input, shape index: {}]
  %s1 = inlined_call_operand.vmem [shape: f32[12,32], index: 1, kind: input, shape index: {}]
  %s2 = inlined_call_operand.vmem [shape: f32[12,32], index: 2, kind: input, shape index: {}]
  %s3 = inlined_call_operand.vmem [shape: f32[49,32], index: 3, kind: input, shape index: {}]
  %s4 = inlined_call_operand.vmem [shape: f32[32,12], index: 4, kind: input, shape index: {}]
  %s5 = inlined_call_operand.vmem [shape: f32[4,32], index: 5, kind: input, shape index: {}]
  %s6 = inlined_call_operand.vmem [shape: f32[1792,1], index: 6, kind: input, shape index: {}]
  %s7 = inlined_call_operand.vmem [shape: f32[512,12], index: 7, kind: output, shape index: {}]
  %s8 = sld [smem:[#allocation0]]
  $region38: #{gated_cnn_block.1} parent=0
    _
  %s10 = ssub.s32 1, %s8
  %s11 = scalar_select 0, %s10, %s8
  // Predicated region
  $region2: #{gated_cnn_block.1} parent=0 // pred_check
    _
  $region3: #{gated_cnn_block.1} parent=0 // pred_check_branch
    %13 = sbr.rel (0) target = $region5
  $region4: #{gated_cnn_block.1} parent=0 // pred_region
    _
  $region5: #{gated_cnn_block.1} parent=0 // pred_fallthru
    _
  // Predicated region
  $region6: #{gated_cnn_block.1} parent=0 // pred_check
    _
  $region7: #{gated_cnn_block.1} parent=0 // pred_check_branch
    %15 = sbr.rel (0) target = $region9
  $region8: #{gated_cnn_block.1} parent=0 // pred_region
    _
  $region9: #{gated_cnn_block.1} parent=0 // pred_fallthru
    _
  // Predicated region
  $region10: #{gated_cnn_block.1} parent=0 // pred_check
    _
  $region11: #{gated_cnn_block.1} parent=0 // pred_check_branch
    %17 = sbr.rel (0) target = $region13
  $region12: #{gated_cnn_block.1} parent=0 // pred_region
    _
  $region13: #{gated_cnn_block.1} parent=0 // pred_fallthru
    _
  // Predicated region
  $region14: #{gated_cnn_block.1} parent=0 // pred_check
    _
  $region15: #{gated_cnn_block.1} parent=0 // pred_check_branch
    %19 = sbr.rel (0) target = $region17
  $region16: #{gated_cnn_block.1} parent=0 // pred_region
    _
  $region17: #{gated_cnn_block.1} parent=0 // pred_fallthru
    _
  // Predicated region
  $region18: #{gated_cnn_block.1} parent=0 // pred_check
    _
  $region19: #{gated_cnn_block.1} parent=0 // pred_check_branch
    %21 = sbr.rel (0) target = $region21
  $region20: #{gated_cnn_block.1} parent=0 // pred_region
    _
  $region21: #{gated_cnn_block.1} parent=0 // pred_fallthru
    _
  // Predicated region
  $region22: #{gated_cnn_block.1} parent=0 // pred_check
    _
  $region23: #{gated_cnn_block.1} parent=0 // pred_check_branch
    %23 = sbr.rel (0) target = $region25
  $region24: #{gated_cnn_block.1} parent=0 // pred_region
    _
  $region25: #{gated_cnn_block.1} parent=0 // pred_fallthru
    _
  // Predicated region
  $region26: #{gated_cnn_block.1} parent=0 // pred_check
    _
  $region27: #{gated_cnn_block.1} parent=0 // pred_check_branch
    %25 = sbr.rel (0) target = $region29
  $region28: #{gated_cnn_block.1} parent=0 // pred_region
    _
  $region29: #{gated_cnn_block.1} parent=0 // pred_fallthru
    _
  %v26 = vld [vmem:[%s0] sm:$0xff]
  %v27 = vld [vmem:[%s0 + $0x8] sm:$0xff]
  %v28 = vld [vmem:[%s0 + $0x10] sm:$0xff]
  %v29 = vld [vmem:[%s0 + $0x18] sm:$0xff]
  %v30 = vld [vmem:[%s0 + $0x20] sm:$0xff]
  %v31 = vld [vmem:[%s0 + $0x28] sm:$0xff]
  %v32 = vld [vmem:[%s0 + $0x30] sm:$0xff]
  %v33 = vld [vmem:[%s0 + $0x38] sm:$0xff]
  %v34 = vld [vmem:[%s0 + $0x40] sm:$0xff]
  %v35 = vld [vmem:[%s0 + $0x48] sm:$0xff]
  %v36 = vld [vmem:[%s0 + $0x50] sm:$0xff]
  %v37 = vld [vmem:[%s0 + $0x58] sm:$0xff]
  %v38 = vld [vmem:[%s0 + $0x60] sm:$0xff]
  %v39 = vld [vmem:[%s0 + $0x68] sm:$0xff]
  %v40 = vld [vmem:[%s0 + $0x70] sm:$0xff]
  %v41 = vld [vmem:[%s0 + $0x78] sm:$0xff]
  %v42 = vld [vmem:[%s0 + $0x80] sm:$0xff]
  %v43 = vld [vmem:[%s0 + $0x88] sm:$0xff]
  %v44 = vld [vmem:[%s0 + $0x90] sm:$0xff]
  %v45 = vld [vmem:[%s0 + $0x98] sm:$0xff]
  %v46 = vld [vmem:[%s0 + $0xa0] sm:$0xff]
  %v47 = vld [vmem:[%s0 + $0xa8] sm:$0xff]
  %v48 = vld [vmem:[%s0 + $0xb0] sm:$0xff]
  %v49 = vld [vmem:[%s0 + $0xb8] sm:$0xff]
  %v50 = vld [vmem:[%s0 + $0xc0] sm:$0xff]
  %v51 = vld [vmem:[%s0 + $0xc8] sm:$0xff]
  %v52 = vld [vmem:[%s0 + $0xd0] sm:$0xff]
  %v53 = vld [vmem:[%s0 + $0xd8] sm:$0xff]
  %v54 = vld [vmem:[%s0 + $0xe0] sm:$0xff]
  %v55 = vld [vmem:[%s0 + $0xe8] sm:$0xff]
  %v56 = vld [vmem:[%s0 + $0xf0] sm:$0xff]
  %v57 = vld [vmem:[%s0 + $0xf8] sm:$0xff]
  %v58 = vld [vmem:[%s0 + $0x100] sm:$0xff]
  %v59 = vld [vmem:[%s0 + $0x108] sm:$0xff]
  %v60 = vld [vmem:[%s0 + $0x110] sm:$0xff]
  %v61 = vld [vmem:[%s0 + $0x118] sm:$0xff]
  %v62 = vld [vmem:[%s0 + $0x120] sm:$0xff]
  %v63 = vld [vmem:[%s0 + $0x128] sm:$0xff]
  %v64 = vld [vmem:[%s0 + $0x130] sm:$0xff]
  %v65 = vld [vmem:[%s0 + $0x138] sm:$0xff]
  %v66 = vld [vmem:[%s0 + $0x140] sm:$0xff]
  %v67 = vld [vmem:[%s0 + $0x148] sm:$0xff]
  %v68 = vld [vmem:[%s0 + $0x150] sm:$0xff]
  %v69 = vld [vmem:[%s0 + $0x158] sm:$0xff]
  %v70 = vld [vmem:[%s0 + $0x160] sm:$0xff]
  %v71 = vld [vmem:[%s0 + $0x168] sm:$0xff]
  %v72 = vld [vmem:[%s0 + $0x170] sm:$0xff]
  %v73 = vld [vmem:[%s0 + $0x178] sm:$0xff]
  %v74 = vld [vmem:[%s0 + $0x180] sm:$0xff]
  %v75 = vld [vmem:[%s0 + $0x188] sm:$0xff]
  %v76 = vld [vmem:[%s0 + $0x190] sm:$0xff]
  %v77 = vld [vmem:[%s0 + $0x198] sm:$0xff]
  %v78 = vld [vmem:[%s0 + $0x1a0] sm:$0xff]
  %v79 = vld [vmem:[%s0 + $0x1a8] sm:$0xff]
  %v80 = vld [vmem:[%s0 + $0x1b0] sm:$0xff]
  %v81 = vld [vmem:[%s0 + $0x1b8] sm:$0xff]
  %v82 = vld [vmem:[%s0 + $0x1c0] sm:$0xff]
  %v83 = vld [vmem:[%s0 + $0x1c8] sm:$0xff]
  %v84 = vld [vmem:[%s0 + $0x1d0] sm:$0xff]
  %v85 = vld [vmem:[%s0 + $0x1d8] sm:$0xff]
  %v86 = vld [vmem:[%s0 + $0x1e0] sm:$0xff]
  %v87 = vld [vmem:[%s0 + $0x1e8] sm:$0xff]
  %v88 = vld [vmem:[%s0 + $0x1f0] sm:$0xff]
  %v89 = vld [vmem:[%s0 + $0x1f8] sm:$0xff]
  %vm90 = vcmask 97280
  %v91 = vsel %vm90, %v26, 0.0
  %92 = vadd.xlane.f32.xlu0 %v91
  %v93 = vpop.xlane.xlu0 %92
  %v94 = vsel %vm90, %v27, 0.0
  %95 = vadd.xlane.f32.xlu0 %v94
  %v96 = vpop.xlane.xlu0 %95
  %v97 = vsel %vm90, %v28, 0.0
  %98 = vadd.xlane.f32.xlu0 %v97
  %v99 = vpop.xlane.xlu0 %98
  %v100 = vsel %vm90, %v29, 0.0
  %101 = vadd.xlane.f32.xlu0 %v100
  %v102 = vpop.xlane.xlu0 %101
  %v103 = vsel %vm90, %v30, 0.0
  %104 = vadd.xlane.f32.xlu0 %v103
  %v105 = vpop.xlane.xlu0 %104
  %v106 = vsel %vm90, %v31, 0.0
  %107 = vadd.xlane.f32.xlu0 %v106
  %v108 = vpop.xlane.xlu0 %107
  %v109 = vsel %vm90, %v32, 0.0
  %110 = vadd.xlane.f32.xlu0 %v109
  %v111 = vpop.xlane.xlu0 %110
  %v112 = vsel %vm90, %v33, 0.0
  %113 = vadd.xlane.f32.xlu0 %v112
  %v114 = vpop.xlane.xlu0 %113
  %v115 = vsel %vm90, %v34, 0.0
  %116 = vadd.xlane.f32.xlu0 %v115
  %v117 = vpop.xlane.xlu0 %116
  %v118 = vsel %vm90, %v35, 0.0
  %119 = vadd.xlane.f32.xlu0 %v118
  %v120 = vpop.xlane.xlu0 %119
  %v121 = vsel %vm90, %v36, 0.0
  %122 = vadd.xlane.f32.xlu0 %v121
  %v123 = vpop.xlane.xlu0 %122
  %v124 = vsel %vm90, %v37, 0.0
  %125 = vadd.xlane.f32.xlu0 %v124
  %v126 = vpop.xlane.xlu0 %125
  %v127 = vsel %vm90, %v38, 0.0
  %128 = vadd.xlane.f32.xlu0 %v127
  %v129 = vpop.xlane.xlu0 %128
  %v130 = vsel %vm90, %v39, 0.0
  %131 = vadd.xlane.f32.xlu0 %v130
  %v132 = vpop.xlane.xlu0 %131
  %v133 = vsel %vm90, %v40, 0.0
  %134 = vadd.xlane.f32.xlu0 %v133
  %v135 = vpop.xlane.xlu0 %134
  %v136 = vsel %vm90, %v41, 0.0
  %137 = vadd.xlane.f32.xlu0 %v136
  %v138 = vpop.xlane.xlu0 %137
  %v139 = vsel %vm90, %v42, 0.0
  %140 = vadd.xlane.f32.xlu0 %v139
  %v141 = vpop.xlane.xlu0 %140
  %v142 = vsel %vm90, %v43, 0.0
  %143 = vadd.xlane.f32.xlu0 %v142
  %v144 = vpop.xlane.xlu0 %143
  %v145 = vsel %vm90, %v44, 0.0
  %146 = vadd.xlane.f32.xlu0 %v145
  %v147 = vpop.xlane.xlu0 %146
  %v148 = vsel %vm90, %v45, 0.0
  %149 = vadd.xlane.f32.xlu0 %v148
  %v150 = vpop.xlane.xlu0 %149
  %v151 = vsel %vm90, %v46, 0.0
  %152 = vadd.xlane.f32.xlu0 %v151
  %v153 = vpop.xlane.xlu0 %152
  %v154 = vsel %vm90, %v47, 0.0
  %155 = vadd.xlane.f32.xlu0 %v154
  %v156 = vpop.xlane.xlu0 %155
  %v157 = vsel %vm90, %v48, 0.0
  %158 = vadd.xlane.f32.xlu0 %v157
  %v159 = vpop.xlane.xlu0 %158
  %v160 = vsel %vm90, %v49, 0.0
  %161 = vadd.xlane.f32.xlu0 %v160
  %v162 = vpop.xlane.xlu0 %161
  %v163 = vsel %vm90, %v50, 0.0
  %164 = vadd.xlane.f32.xlu0 %v163
  %v165 = vpop.xlane.xlu0 %164
  %v166 = vsel %vm90, %v51, 0.0
  %167 = vadd.xlane.f32.xlu0 %v166
  %v168 = vpop.xlane.xlu0 %167
  %v169 = vsel %vm90, %v52, 0.0
  %170 = vadd.xlane.f32.xlu0 %v169
  %v171 = vpop.xlane.xlu0 %170
  %v172 = vsel %vm90, %v53, 0.0
  %173 = vadd.xlane.f32.xlu0 %v172
  %v174 = vpop.xlane.xlu0 %173
  %v175 = vsel %vm90, %v54, 0.0
  %176 = vadd.xlane.f32.xlu0 %v175
  %v177 = vpop.xlane.xlu0 %176
  %v178 = vsel %vm90, %v55, 0.0
  %179 = vadd.xlane.f32.xlu0 %v178
  %v180 = vpop.xlane.xlu0 %179
  %v181 = vsel %vm90, %v56, 0.0
  %182 = vadd.xlane.f32.xlu0 %v181
  %v183 = vpop.xlane.xlu0 %182
  %v184 = vsel %vm90, %v57, 0.0
  %185 = vadd.xlane.f32.xlu0 %v184
  %v186 = vpop.xlane.xlu0 %185
  %v187 = vsel %vm90, %v58, 0.0
  %188 = vadd.xlane.f32.xlu0 %v187
  %v189 = vpop.xlane.xlu0 %188
  %v190 = vsel %vm90, %v59, 0.0
  %191 = vadd.xlane.f32.xlu0 %v190
  %v192 = vpop.xlane.xlu0 %191
  %v193 = vsel %vm90, %v60, 0.0
  %194 = vadd.xlane.f32.xlu0 %v193
  %v195 = vpop.xlane.xlu0 %194
  %v196 = vsel %vm90, %v61, 0.0
  %197 = vadd.xlane.f32.xlu0 %v196
  %v198 = vpop.xlane.xlu0 %197
  %v199 = vsel %vm90, %v62, 0.0
  %200 = vadd.xlane.f32.xlu0 %v199
  %v201 = vpop.xlane.xlu0 %200
  %v202 = vsel %vm90, %v63, 0.0
  %203 = vadd.xlane.f32.xlu0 %v202
  %v204 = vpop.xlane.xlu0 %203
  %v205 = vsel %vm90, %v64, 0.0
  %206 = vadd.xlane.f32.xlu0 %v205
  %v207 = vpop.xlane.xlu0 %206
  %v208 = vsel %vm90, %v65, 0.0
  %209 = vadd.xlane.f32.xlu0 %v208
  %v210 = vpop.xlane.xlu0 %209
  %v211 = vsel %vm90, %v66, 0.0
  %212 = vadd.xlane.f32.xlu0 %v211
  %v213 = vpop.xlane.xlu0 %212
  %v214 = vsel %vm90, %v67, 0.0
  %215 = vadd.xlane.f32.xlu0 %v214
  %v216 = vpop.xlane.xlu0 %215
  %v217 = vsel %vm90, %v68, 0.0
  %218 = vadd.xlane.f32.xlu0 %v217
  %v219 = vpop.xlane.xlu0 %218
  %v220 = vsel %vm90, %v69, 0.0
  %221 = vadd.xlane.f32.xlu0 %v220
  %v222 = vpop.xlane.xlu0 %221
  %v223 = vsel %vm90, %v70, 0.0
  %224 = vadd.xlane.f32.xlu0 %v223
  %v225 = vpop.xlane.xlu0 %224
  %v226 = vsel %vm90, %v71, 0.0
  %227 = vadd.xlane.f32.xlu0 %v226
  %v228 = vpop.xlane.xlu0 %227
  %v229 = vsel %vm90, %v72, 0.0
  %230 = vadd.xlane.f32.xlu0 %v229
  %v231 = vpop.xlane.xlu0 %230
  %v232 = vsel %vm90, %v73, 0.0
  %233 = vadd.xlane.f32.xlu0 %v232
  %v234 = vpop.xlane.xlu0 %233
  %v235 = vsel %vm90, %v74, 0.0
  %236 = vadd.xlane.f32.xlu0 %v235
  %v237 = vpop.xlane.xlu0 %236
  %v238 = vsel %vm90, %v75, 0.0
  %239 = vadd.xlane.f32.xlu0 %v238
  %v240 = vpop.xlane.xlu0 %239
  %v241 = vsel %vm90, %v76, 0.0
  %242 = vadd.xlane.f32.xlu0 %v241
  %v243 = vpop.xlane.xlu0 %242
  %v244 = vsel %vm90, %v77, 0.0
  %245 = vadd.xlane.f32.xlu0 %v244
  %v246 = vpop.xlane.xlu0 %245
  %v247 = vsel %vm90, %v78, 0.0
  %248 = vadd.xlane.f32.xlu0 %v247
  %v249 = vpop.xlane.xlu0 %248
  %v250 = vsel %vm90, %v79, 0.0
  %251 = vadd.xlane.f32.xlu0 %v250
  %v252 = vpop.xlane.xlu0 %251
  %v253 = vsel %vm90, %v80, 0.0
  %254 = vadd.xlane.f32.xlu0 %v253
  %v255 = vpop.xlane.xlu0 %254
  %v256 = vsel %vm90, %v81, 0.0
  %257 = vadd.xlane.f32.xlu0 %v256
  %v258 = vpop.xlane.xlu0 %257
  %v259 = vsel %vm90, %v82, 0.0
  %260 = vadd.xlane.f32.xlu0 %v259
  %v261 = vpop.xlane.xlu0 %260
  %v262 = vsel %vm90, %v83, 0.0
  %263 = vadd.xlane.f32.xlu0 %v262
  %v264 = vpop.xlane.xlu0 %263
  %v265 = vsel %vm90, %v84, 0.0
  %266 = vadd.xlane.f32.xlu0 %v265
  %v267 = vpop.xlane.xlu0 %266
  %v268 = vsel %vm90, %v85, 0.0
  %269 = vadd.xlane.f32.xlu0 %v268
  %v270 = vpop.xlane.xlu0 %269
  %v271 = vsel %vm90, %v86, 0.0
  %272 = vadd.xlane.f32.xlu0 %v271
  %v273 = vpop.xlane.xlu0 %272
  %v274 = vsel %vm90, %v87, 0.0
  %275 = vadd.xlane.f32.xlu0 %v274
  %v276 = vpop.xlane.xlu0 %275
  %v277 = vsel %vm90, %v88, 0.0
  %278 = vadd.xlane.f32.xlu0 %v277
  %v279 = vpop.xlane.xlu0 %278
  %v280 = vsel %vm90, %v89, 0.0
  %281 = vadd.xlane.f32.xlu0 %v280
  %v282 = vpop.xlane.xlu0 %281
  %v283 = vrcp.pop 12.0
  %v284 = vmul.f32 %v93, %v283
  %v285 = vmul.f32 %v96, %v283
  %v286 = vmul.f32 %v99, %v283
  %v287 = vmul.f32 %v102, %v283
  %v288 = vmul.f32 %v105, %v283
  %v289 = vmul.f32 %v108, %v283
  %v290 = vmul.f32 %v111, %v283
  %v291 = vmul.f32 %v114, %v283
  %v292 = vmul.f32 %v117, %v283
  %v293 = vmul.f32 %v120, %v283
  %v294 = vmul.f32 %v123, %v283
  %v295 = vmul.f32 %v126, %v283
  %v296 = vmul.f32 %v129, %v283
  %v297 = vmul.f32 %v132, %v283
  %v298 = vmul.f32 %v135, %v283
  %v299 = vmul.f32 %v138, %v283
  %v300 = vmul.f32 %v141, %v283
  %v301 = vmul.f32 %v144, %v283
  %v302 = vmul.f32 %v147, %v283
  %v303 = vmul.f32 %v150, %v283
  %v304 = vmul.f32 %v153, %v283
  %v305 = vmul.f32 %v156, %v283
  %v306 = vmul.f32 %v159, %v283
  %v307 = vmul.f32 %v162, %v283
  %v308 = vmul.f32 %v165, %v283
  %v309 = vmul.f32 %v168, %v283
  %v310 = vmul.f32 %v171, %v283
  %v311 = vmul.f32 %v174, %v283
  %v312 = vmul.f32 %v177, %v283
  %v313 = vmul.f32 %v180, %v283
  %v314 = vmul.f32 %v183, %v283
  %v315 = vmul.f32 %v186, %v283
  %v316 = vmul.f32 %v189, %v283
  %v317 = vmul.f32 %v192, %v283
  %v318 = vmul.f32 %v195, %v283
  %v319 = vmul.f32 %v198, %v283
  %v320 = vmul.f32 %v201, %v283
  %v321 = vmul.f32 %v204, %v283
  %v322 = vmul.f32 %v207, %v283
  %v323 = vmul.f32 %v210, %v283
  %v324 = vmul.f32 %v213, %v283
  %v325 = vmul.f32 %v216, %v283
  %v326 = vmul.f32 %v219, %v283
  %v327 = vmul.f32 %v222, %v283
  %v328 = vmul.f32 %v225, %v283
  %v329 = vmul.f32 %v228, %v283
  %v330 = vmul.f32 %v231, %v283
  %v331 = vmul.f32 %v234, %v283
  %v332 = vmul.f32 %v237, %v283
  %v333 = vmul.f32 %v240, %v283
  %v334 = vmul.f32 %v243, %v283
  %v335 = vmul.f32 %v246, %v283
  %v336 = vmul.f32 %v249, %v283
  %v337 = vmul.f32 %v252, %v283
  %v338 = vmul.f32 %v255, %v283
  %v339 = vmul.f32 %v258, %v283
  %v340 = vmul.f32 %v261, %v283
  %v341 = vmul.f32 %v264, %v283
  %v342 = vmul.f32 %v267, %v283
  %v343 = vmul.f32 %v270, %v283
  %v344 = vmul.f32 %v273, %v283
  %v345 = vmul.f32 %v276, %v283
  %v346 = vmul.f32 %v279, %v283
  %v347 = vmul.f32 %v282, %v283
  %v348 = vsub.f32 %v26, %v284
  %v349 = vsub.f32 %v27, %v285
  %v350 = vsub.f32 %v28, %v286
  %v351 = vsub.f32 %v29, %v287
  %v352 = vsub.f32 %v30, %v288
  %v353 = vsub.f32 %v31, %v289
  %v354 = vsub.f32 %v32, %v290
  %v355 = vsub.f32 %v33, %v291
  %v356 = vsub.f32 %v34, %v292
  %v357 = vsub.f32 %v35, %v293
  %v358 = vsub.f32 %v36, %v294
  %v359 = vsub.f32 %v37, %v295
  %v360 = vsub.f32 %v38, %v296
  %v361 = vsub.f32 %v39, %v297
  %v362 = vsub.f32 %v40, %v298
  %v363 = vsub.f32 %v41, %v299
  %v364 = vsub.f32 %v42, %v300
  %v365 = vsub.f32 %v43, %v301
  %v366 = vsub.f32 %v44, %v302
  %v367 = vsub.f32 %v45, %v303
  %v368 = vsub.f32 %v46, %v304
  %v369 = vsub.f32 %v47, %v305
  %v370 = vsub.f32 %v48, %v306
  %v371 = vsub.f32 %v49, %v307
  %v372 = vsub.f32 %v50, %v308
  %v373 = vsub.f32 %v51, %v309
  %v374 = vsub.f32 %v52, %v310
  %v375 = vsub.f32 %v53, %v311
  %v376 = vsub.f32 %v54, %v312
  %v377 = vsub.f32 %v55, %v313
  %v378 = vsub.f32 %v56, %v314
  %v379 = vsub.f32 %v57, %v315
  %v380 = vsub.f32 %v58, %v316
  %v381 = vsub.f32 %v59, %v317
  %v382 = vsub.f32 %v60, %v318
  %v383 = vsub.f32 %v61, %v319
  %v384 = vsub.f32 %v62, %v320
  %v385 = vsub.f32 %v63, %v321
  %v386 = vsub.f32 %v64, %v322
  %v387 = vsub.f32 %v65, %v323
  %v388 = vsub.f32 %v66, %v324
  %v389 = vsub.f32 %v67, %v325
  %v390 = vsub.f32 %v68, %v326
  %v391 = vsub.f32 %v69, %v327
  %v392 = vsub.f32 %v70, %v328
  %v393 = vsub.f32 %v71, %v329
  %v394 = vsub.f32 %v72, %v330
  %v395 = vsub.f32 %v73, %v331
  %v396 = vsub.f32 %v74, %v332
  %v397 = vsub.f32 %v75, %v333
  %v398 = vsub.f32 %v76, %v334
  %v399 = vsub.f32 %v77, %v335
  %v400 = vsub.f32 %v78, %v336
  %v401 = vsub.f32 %v79, %v337
  %v402 = vsub.f32 %v80, %v338
  %v403 = vsub.f32 %v81, %v339
  %v404 = vsub.f32 %v82, %v340
  %v405 = vsub.f32 %v83, %v341
  %v406 = vsub.f32 %v84, %v342
  %v407 = vsub.f32 %v85, %v343
  %v408 = vsub.f32 %v86, %v344
  %v409 = vsub.f32 %v87, %v345
  %v410 = vsub.f32 %v88, %v346
  %v411 = vsub.f32 %v89, %v347
  %v412 = vmul.f32 %v348, %v348
  %v413 = vmul.f32 %v349, %v349
  %v414 = vmul.f32 %v350, %v350
  %v415 = vmul.f32 %v351, %v351
  %v416 = vmul.f32 %v352, %v352
  %v417 = vmul.f32 %v353, %v353
  %v418 = vmul.f32 %v354, %v354
  %v419 = vmul.f32 %v355, %v355
  %v420 = vmul.f32 %v356, %v356
  %v421 = vmul.f32 %v357, %v357
  %v422 = vmul.f32 %v358, %v358
  %v423 = vmul.f32 %v359, %v359
  %v424 = vmul.f32 %v360, %v360
  %v425 = vmul.f32 %v361, %v361
  %v426 = vmul.f32 %v362, %v362
  %v427 = vmul.f32 %v363, %v363
  %v428 = vmul.f32 %v364, %v364
  %v429 = vmul.f32 %v365, %v365
  %v430 = vmul.f32 %v366, %v366
  %v431 = vmul.f32 %v367, %v367
  %v432 = vmul.f32 %v368, %v368
  %v433 = vmul.f32 %v369, %v369
  %v434 = vmul.f32 %v370, %v370
  %v435 = vmul.f32 %v371, %v371
  %v436 = vmul.f32 %v372, %v372
  %v437 = vmul.f32 %v373, %v373
  %v438 = vmul.f32 %v374, %v374
  %v439 = vmul.f32 %v375, %v375
  %v440 = vmul.f32 %v376, %v376
  %v441 = vmul.f32 %v377, %v377
  %v442 = vmul.f32 %v378, %v378
  %v443 = vmul.f32 %v379, %v379
  %v444 = vmul.f32 %v380, %v380
  %v445 = vmul.f32 %v381, %v381
  %v446 = vmul.f32 %v382, %v382
  %v447 = vmul.f32 %v383, %v383
  %v448 = vmul.f32 %v384, %v384
  %v449 = vmul.f32 %v385, %v385
  %v450 = vmul.f32 %v386, %v386
  %v451 = vmul.f32 %v387, %v387
  %v452 = vmul.f32 %v388, %v388
  %v453 = vmul.f32 %v389, %v389
  %v454 = vmul.f32 %v390, %v390
  %v455 = vmul.f32 %v391, %v391
  %v456 = vmul.f32 %v392, %v392
  %v457 = vmul.f32 %v393, %v393
  %v458 = vmul.f32 %v394, %v394
  %v459 = vmul.f32 %v395, %v395
  %v460 = vmul.f32 %v396, %v396
  %v461 = vmul.f32 %v397, %v397
  %v462 = vmul.f32 %v398, %v398
  %v463 = vmul.f32 %v399, %v399
  %v464 = vmul.f32 %v400, %v400
  %v465 = vmul.f32 %v401, %v401
  %v466 = vmul.f32 %v402, %v402
  %v467 = vmul.f32 %v403, %v403
  %v468 = vmul.f32 %v404, %v404
  %v469 = vmul.f32 %v405, %v405
  %v470 = vmul.f32 %v406, %v406
  %v471 = vmul.f32 %v407, %v407
  %v472 = vmul.f32 %v408, %v408
  %v473 = vmul.f32 %v409, %v409
  %v474 = vmul.f32 %v410, %v410
  %v475 = vmul.f32 %v411, %v411
  %v476 = vsel %vm90, %v412, 0.0
  %477 = vadd.xlane.f32.xlu0 %v476
  %v478 = vpop.xlane.xlu0 %477
  %v479 = vsel %vm90, %v413, 0.0
  %480 = vadd.xlane.f32.xlu0 %v479
  %v481 = vpop.xlane.xlu0 %480
  %v482 = vsel %vm90, %v414, 0.0
  %483 = vadd.xlane.f32.xlu0 %v482
  %v484 = vpop.xlane.xlu0 %483
  %v485 = vsel %vm90, %v415, 0.0
  %486 = vadd.xlane.f32.xlu0 %v485
  %v487 = vpop.xlane.xlu0 %486
  %v488 = vsel %vm90, %v416, 0.0
  %489 = vadd.xlane.f32.xlu0 %v488
  %v490 = vpop.xlane.xlu0 %489
  %v491 = vsel %vm90, %v417, 0.0
  %492 = vadd.xlane.f32.xlu0 %v491
  %v493 = vpop.xlane.xlu0 %492
  %v494 = vsel %vm90, %v418, 0.0
  %495 = vadd.xlane.f32.xlu0 %v494
  %v496 = vpop.xlane.xlu0 %495
  %v497 = vsel %vm90, %v419, 0.0
  %498 = vadd.xlane.f32.xlu0 %v497
  %v499 = vpop.xlane.xlu0 %498
  %v500 = vsel %vm90, %v420, 0.0
  %501 = vadd.xlane.f32.xlu0 %v500
  %v502 = vpop.xlane.xlu0 %501
  %v503 = vsel %vm90, %v421, 0.0
  %504 = vadd.xlane.f32.xlu0 %v503
  %v505 = vpop.xlane.xlu0 %504
  %v506 = vsel %vm90, %v422, 0.0
  %507 = vadd.xlane.f32.xlu0 %v506
  %v508 = vpop.xlane.xlu0 %507
  %v509 = vsel %vm90, %v423, 0.0
  %510 = vadd.xlane.f32.xlu0 %v509
  %v511 = vpop.xlane.xlu0 %510
  %v512 = vsel %vm90, %v424, 0.0
  %513 = vadd.xlane.f32.xlu0 %v512
  %v514 = vpop.xlane.xlu0 %513
  %v515 = vsel %vm90, %v425, 0.0
  %516 = vadd.xlane.f32.xlu0 %v515
  %v517 = vpop.xlane.xlu0 %516
  %v518 = vsel %vm90, %v426, 0.0
  %519 = vadd.xlane.f32.xlu0 %v518
  %v520 = vpop.xlane.xlu0 %519
  %v521 = vsel %vm90, %v427, 0.0
  %522 = vadd.xlane.f32.xlu0 %v521
  %v523 = vpop.xlane.xlu0 %522
  %v524 = vsel %vm90, %v428, 0.0
  %525 = vadd.xlane.f32.xlu0 %v524
  %v526 = vpop.xlane.xlu0 %525
  %v527 = vsel %vm90, %v429, 0.0
  %528 = vadd.xlane.f32.xlu0 %v527
  %v529 = vpop.xlane.xlu0 %528
  %v530 = vsel %vm90, %v430, 0.0
  %531 = vadd.xlane.f32.xlu0 %v530
  %v532 = vpop.xlane.xlu0 %531
  %v533 = vsel %vm90, %v431, 0.0
  %534 = vadd.xlane.f32.xlu0 %v533
  %v535 = vpop.xlane.xlu0 %534
  %v536 = vsel %vm90, %v432, 0.0
  %537 = vadd.xlane.f32.xlu0 %v536
  %v538 = vpop.xlane.xlu0 %537
  %v539 = vsel %vm90, %v433, 0.0
  %540 = vadd.xlane.f32.xlu0 %v539
  %v541 = vpop.xlane.xlu0 %540
  %v542 = vsel %vm90, %v434, 0.0
  %543 = vadd.xlane.f32.xlu0 %v542
  %v544 = vpop.xlane.xlu0 %543
  %v545 = vsel %vm90, %v435, 0.0
  %546 = vadd.xlane.f32.xlu0 %v545
  %v547 = vpop.xlane.xlu0 %546
  %v548 = vsel %vm90, %v436, 0.0
  %549 = vadd.xlane.f32.xlu0 %v548
  %v550 = vpop.xlane.xlu0 %549
  %v551 = vsel %vm90, %v437, 0.0
  %552 = vadd.xlane.f32.xlu0 %v551
  %v553 = vpop.xlane.xlu0 %552
  %v554 = vsel %vm90, %v438, 0.0
  %555 = vadd.xlane.f32.xlu0 %v554
  %v556 = vpop.xlane.xlu0 %555
  %v557 = vsel %vm90, %v439, 0.0
  %558 = vadd.xlane.f32.xlu0 %v557
  %v559 = vpop.xlane.xlu0 %558
  %v560 = vsel %vm90, %v440, 0.0
  %561 = vadd.xlane.f32.xlu0 %v560
  %v562 = vpop.xlane.xlu0 %561
  %v563 = vsel %vm90, %v441, 0.0
  %564 = vadd.xlane.f32.xlu0 %v563
  %v565 = vpop.xlane.xlu0 %564
  %v566 = vsel %vm90, %v442, 0.0
  %567 = vadd.xlane.f32.xlu0 %v566
  %v568 = vpop.xlane.xlu0 %567
  %v569 = vsel %vm90, %v443, 0.0
  %570 = vadd.xlane.f32.xlu0 %v569
  %v571 = vpop.xlane.xlu0 %570
  %v572 = vsel %vm90, %v444, 0.0
  %573 = vadd.xlane.f32.xlu0 %v572
  %v574 = vpop.xlane.xlu0 %573
  %v575 = vsel %vm90, %v445, 0.0
  %576 = vadd.xlane.f32.xlu0 %v575
  %v577 = vpop.xlane.xlu0 %576
  %v578 = vsel %vm90, %v446, 0.0
  %579 = vadd.xlane.f32.xlu0 %v578
  %v580 = vpop.xlane.xlu0 %579
  %v581 = vsel %vm90, %v447, 0.0
  %582 = vadd.xlane.f32.xlu0 %v581
  %v583 = vpop.xlane.xlu0 %582
  %v584 = vsel %vm90, %v448, 0.0
  %585 = vadd.xlane.f32.xlu0 %v584
  %v586 = vpop.xlane.xlu0 %585
  %v587 = vsel %vm90, %v449, 0.0
  %588 = vadd.xlane.f32.xlu0 %v587
  %v589 = vpop.xlane.xlu0 %588
  %v590 = vsel %vm90, %v450, 0.0
  %591 = vadd.xlane.f32.xlu0 %v590
  %v592 = vpop.xlane.xlu0 %591
  %v593 = vsel %vm90, %v451, 0.0
  %594 = vadd.xlane.f32.xlu0 %v593
  %v595 = vpop.xlane.xlu0 %594
  %v596 = vsel %vm90, %v452, 0.0
  %597 = vadd.xlane.f32.xlu0 %v596
  %v598 = vpop.xlane.xlu0 %597
  %v599 = vsel %vm90, %v453, 0.0
  %600 = vadd.xlane.f32.xlu0 %v599
  %v601 = vpop.xlane.xlu0 %600
  %v602 = vsel %vm90, %v454, 0.0
  %603 = vadd.xlane.f32.xlu0 %v602
  %v604 = vpop.xlane.xlu0 %603
  %v605 = vsel %vm90, %v455, 0.0
  %606 = vadd.xlane.f32.xlu0 %v605
  %v607 = vpop.xlane.xlu0 %606
  %v608 = vsel %vm90, %v456, 0.0
  %609 = vadd.xlane.f32.xlu0 %v608
  %v610 = vpop.xlane.xlu0 %609
  %v611 = vsel %vm90, %v457, 0.0
  %612 = vadd.xlane.f32.xlu0 %v611
  %v613 = vpop.xlane.xlu0 %612
  %v614 = vsel %vm90, %v458, 0.0
  %615 = vadd.xlane.f32.xlu0 %v614
  %v616 = vpop.xlane.xlu0 %615
  %v617 = vsel %vm90, %v459, 0.0
  %618 = vadd.xlane.f32.xlu0 %v617
  %v619 = vpop.xlane.xlu0 %618
  %v620 = vsel %vm90, %v460, 0.0
  %621 = vadd.xlane.f32.xlu0 %v620
  %v622 = vpop.xlane.xlu0 %621
  %v623 = vsel %vm90, %v461, 0.0
  %624 = vadd.xlane.f32.xlu0 %v623
  %v625 = vpop.xlane.xlu0 %624
  %v626 = vsel %vm90, %v462, 0.0
  %627 = vadd.xlane.f32.xlu0 %v626
  %v628 = vpop.xlane.xlu0 %627
  %v629 = vsel %vm90, %v463, 0.0
  %630 = vadd.xlane.f32.xlu0 %v629
  %v631 = vpop.xlane.xlu0 %630
  %v632 = vsel %vm90, %v464, 0.0
  %633 = vadd.xlane.f32.xlu0 %v632
  %v634 = vpop.xlane.xlu0 %633
  %v635 = vsel %vm90, %v465, 0.0
  %636 = vadd.xlane.f32.xlu0 %v635
  %v637 = vpop.xlane.xlu0 %636
  %v638 = vsel %vm90, %v466, 0.0
  %639 = vadd.xlane.f32.xlu0 %v638
  %v640 = vpop.xlane.xlu0 %639
  %v641 = vsel %vm90, %v467, 0.0
  %642 = vadd.xlane.f32.xlu0 %v641
  %v643 = vpop.xlane.xlu0 %642
  %v644 = vsel %vm90, %v468, 0.0
  %645 = vadd.xlane.f32.xlu0 %v644
  %v646 = vpop.xlane.xlu0 %645
  %v647 = vsel %vm90, %v469, 0.0
  %648 = vadd.xlane.f32.xlu0 %v647
  %v649 = vpop.xlane.xlu0 %648
  %v650 = vsel %vm90, %v470, 0.0
  %651 = vadd.xlane.f32.xlu0 %v650
  %v652 = vpop.xlane.xlu0 %651
  %v653 = vsel %vm90, %v471, 0.0
  %654 = vadd.xlane.f32.xlu0 %v653
  %v655 = vpop.xlane.xlu0 %654
  %v656 = vsel %vm90, %v472, 0.0
  %657 = vadd.xlane.f32.xlu0 %v656
  %v658 = vpop.xlane.xlu0 %657
  %v659 = vsel %vm90, %v473, 0.0
  %660 = vadd.xlane.f32.xlu0 %v659
  %v661 = vpop.xlane.xlu0 %660
  %v662 = vsel %vm90, %v474, 0.0
  %663 = vadd.xlane.f32.xlu0 %v662
  %v664 = vpop.xlane.xlu0 %663
  %v665 = vsel %vm90, %v475, 0.0
  %666 = vadd.xlane.f32.xlu0 %v665
  %v667 = vpop.xlane.xlu0 %666
  %v668 = vmul.f32 %v478, %v283
  %v669 = vmul.f32 %v481, %v283
  %v670 = vmul.f32 %v484, %v283
  %v671 = vmul.f32 %v487, %v283
  %v672 = vmul.f32 %v490, %v283
  %v673 = vmul.f32 %v493, %v283
  %v674 = vmul.f32 %v496, %v283
  %v675 = vmul.f32 %v499, %v283
  %v676 = vmul.f32 %v502, %v283
  %v677 = vmul.f32 %v505, %v283
  %v678 = vmul.f32 %v508, %v283
  %v679 = vmul.f32 %v511, %v283
  %v680 = vmul.f32 %v514, %v283
  %v681 = vmul.f32 %v517, %v283
  %v682 = vmul.f32 %v520, %v283
  %v683 = vmul.f32 %v523, %v283
  %v684 = vmul.f32 %v526, %v283
  %v685 = vmul.f32 %v529, %v283
  %v686 = vmul.f32 %v532, %v283
  %v687 = vmul.f32 %v535, %v283
  %v688 = vmul.f32 %v538, %v283
  %v689 = vmul.f32 %v541, %v283
  %v690 = vmul.f32 %v544, %v283
  %v691 = vmul.f32 %v547, %v283
  %v692 = vmul.f32 %v550, %v283
  %v693 = vmul.f32 %v553, %v283
  %v694 = vmul.f32 %v556, %v283
  %v695 = vmul.f32 %v559, %v283
  %v696 = vmul.f32 %v562, %v283
  %v697 = vmul.f32 %v565, %v283
  %v698 = vmul.f32 %v568, %v283
  %v699 = vmul.f32 %v571, %v283
  %v700 = vmul.f32 %v574, %v283
  %v701 = vmul.f32 %v577, %v283
  %v702 = vmul.f32 %v580, %v283
  %v703 = vmul.f32 %v583, %v283
  %v704 = vmul.f32 %v586, %v283
  %v705 = vmul.f32 %v589, %v283
  %v706 = vmul.f32 %v592, %v283
  %v707 = vmul.f32 %v595, %v283
  %v708 = vmul.f32 %v598, %v283
  %v709 = vmul.f32 %v601, %v283
  %v710 = vmul.f32 %v604, %v283
  %v711 = vmul.f32 %v607, %v283
  %v712 = vmul.f32 %v610, %v283
  %v713 = vmul.f32 %v613, %v283
  %v714 = vmul.f32 %v616, %v283
  %v715 = vmul.f32 %v619, %v283
  %v716 = vmul.f32 %v622, %v283
  %v717 = vmul.f32 %v625, %v283
  %v718 = vmul.f32 %v628, %v283
  %v719 = vmul.f32 %v631, %v283
  %v720 = vmul.f32 %v634, %v283
  %v721 = vmul.f32 %v637, %v283
  %v722 = vmul.f32 %v640, %v283
  %v723 = vmul.f32 %v643, %v283
  %v724 = vmul.f32 %v646, %v283
  %v725 = vmul.f32 %v649, %v283
  %v726 = vmul.f32 %v652, %v283
  %v727 = vmul.f32 %v655, %v283
  %v728 = vmul.f32 %v658, %v283
  %v729 = vmul.f32 %v661, %v283
  %v730 = vmul.f32 %v664, %v283
  %v731 = vmul.f32 %v667, %v283
  %v732 = vadd.f32 %v668, 1e-06
  %v733 = vadd.f32 %v669, 1e-06
  %v734 = vadd.f32 %v670, 1e-06
  %v735 = vadd.f32 %v671, 1e-06
  %v736 = vadd.f32 %v672, 1e-06
  %v737 = vadd.f32 %v673, 1e-06
  %v738 = vadd.f32 %v674, 1e-06
  %v739 = vadd.f32 %v675, 1e-06
  %v740 = vadd.f32 %v676, 1e-06
  %v741 = vadd.f32 %v677, 1e-06
  %v742 = vadd.f32 %v678, 1e-06
  %v743 = vadd.f32 %v679, 1e-06
  %v744 = vadd.f32 %v680, 1e-06
  %v745 = vadd.f32 %v681, 1e-06
  %v746 = vadd.f32 %v682, 1e-06
  %v747 = vadd.f32 %v683, 1e-06
  %v748 = vadd.f32 %v684, 1e-06
  %v749 = vadd.f32 %v685, 1e-06
  %v750 = vadd.f32 %v686, 1e-06
  %v751 = vadd.f32 %v687, 1e-06
  %v752 = vadd.f32 %v688, 1e-06
  %v753 = vadd.f32 %v689, 1e-06
  %v754 = vadd.f32 %v690, 1e-06
  %v755 = vadd.f32 %v691, 1e-06
  %v756 = vadd.f32 %v692, 1e-06
  %v757 = vadd.f32 %v693, 1e-06
  %v758 = vadd.f32 %v694, 1e-06
  %v759 = vadd.f32 %v695, 1e-06
  %v760 = vadd.f32 %v696, 1e-06
  %v761 = vadd.f32 %v697, 1e-06
  %v762 = vadd.f32 %v698, 1e-06
  %v763 = vadd.f32 %v699, 1e-06
  %v764 = vadd.f32 %v700, 1e-06
  %v765 = vadd.f32 %v701, 1e-06
  %v766 = vadd.f32 %v702, 1e-06
  %v767 = vadd.f32 %v703, 1e-06
  %v768 = vadd.f32 %v704, 1e-06
  %v769 = vadd.f32 %v705, 1e-06
  %v770 = vadd.f32 %v706, 1e-06
  %v771 = vadd.f32 %v707, 1e-06
  %v772 = vadd.f32 %v708, 1e-06
  %v773 = vadd.f32 %v709, 1e-06
  %v774 = vadd.f32 %v710, 1e-06
  %v775 = vadd.f32 %v711, 1e-06
  %v776 = vadd.f32 %v712, 1e-06
  %v777 = vadd.f32 %v713, 1e-06
  %v778 = vadd.f32 %v714, 1e-06
  %v779 = vadd.f32 %v715, 1e-06
  %v780 = vadd.f32 %v716, 1e-06
  %v781 = vadd.f32 %v717, 1e-06
  %v782 = vadd.f32 %v718, 1e-06
  %v783 = vadd.f32 %v719, 1e-06
  %v784 = vadd.f32 %v720, 1e-06
  %v785 = vadd.f32 %v721, 1e-06
  %v786 = vadd.f32 %v722, 1e-06
  %v787 = vadd.f32 %v723, 1e-06
  %v788 = vadd.f32 %v724, 1e-06
  %v789 = vadd.f32 %v725, 1e-06
  %v790 = vadd.f32 %v726, 1e-06
  %v791 = vadd.f32 %v727, 1e-06
  %v792 = vadd.f32 %v728, 1e-06
  %v793 = vadd.f32 %v729, 1e-06
  %v794 = vadd.f32 %v730, 1e-06
  %v795 = vadd.f32 %v731, 1e-06
  %v796 = vrsqrt.pop %v732
  %v797 = vrsqrt.pop %v733
  %v798 = vrsqrt.pop %v734
  %v799 = vrsqrt.pop %v735
  %v800 = vrsqrt.pop %v736
  %v801 = vrsqrt.pop %v737
  %v802 = vrsqrt.pop %v738
  %v803 = vrsqrt.pop %v739
  %v804 = vrsqrt.pop %v740
  %v805 = vrsqrt.pop %v741
  %v806 = vrsqrt.pop %v742
  %v807 = vrsqrt.pop %v743
  %v808 = vrsqrt.pop %v744
  %v809 = vrsqrt.pop %v745
  %v810 = vrsqrt.pop %v746
  %v811 = vrsqrt.pop %v747
  %v812 = vrsqrt.pop %v748
  %v813 = vrsqrt.pop %v749
  %v814 = vrsqrt.pop %v750
  %v815 = vrsqrt.pop %v751
  %v816 = vrsqrt.pop %v752
  %v817 = vrsqrt.pop %v753
  %v818 = vrsqrt.pop %v754
  %v819 = vrsqrt.pop %v755
  %v820 = vrsqrt.pop %v756
  %v821 = vrsqrt.pop %v757
  %v822 = vrsqrt.pop %v758
  %v823 = vrsqrt.pop %v759
  %v824 = vrsqrt.pop %v760
  %v825 = vrsqrt.pop %v761
  %v826 = vrsqrt.pop %v762
  %v827 = vrsqrt.pop %v763
  %v828 = vrsqrt.pop %v764
  %v829 = vrsqrt.pop %v765
  %v830 = vrsqrt.pop %v766
  %v831 = vrsqrt.pop %v767
  %v832 = vrsqrt.pop %v768
  %v833 = vrsqrt.pop %v769
  %v834 = vrsqrt.pop %v770
  %v835 = vrsqrt.pop %v771
  %v836 = vrsqrt.pop %v772
  %v837 = vrsqrt.pop %v773
  %v838 = vrsqrt.pop %v774
  %v839 = vrsqrt.pop %v775
  %v840 = vrsqrt.pop %v776
  %v841 = vrsqrt.pop %v777
  %v842 = vrsqrt.pop %v778
  %v843 = vrsqrt.pop %v779
  %v844 = vrsqrt.pop %v780
  %v845 = vrsqrt.pop %v781
  %v846 = vrsqrt.pop %v782
  %v847 = vrsqrt.pop %v783
  %v848 = vrsqrt.pop %v784
  %v849 = vrsqrt.pop %v785
  %v850 = vrsqrt.pop %v786
  %v851 = vrsqrt.pop %v787
  %v852 = vrsqrt.pop %v788
  %v853 = vrsqrt.pop %v789
  %v854 = vrsqrt.pop %v790
  %v855 = vrsqrt.pop %v791
  %v856 = vrsqrt.pop %v792
  %v857 = vrsqrt.pop %v793
  %v858 = vrsqrt.pop %v794
  %v859 = vrsqrt.pop %v795
  %v860 = vmul.f32 %v348, %v796
  %v861 = vmul.f32 %v349, %v797
  %v862 = vmul.f32 %v350, %v798
  %v863 = vmul.f32 %v351, %v799
  %v864 = vmul.f32 %v352, %v800
  %v865 = vmul.f32 %v353, %v801
  %v866 = vmul.f32 %v354, %v802
  %v867 = vmul.f32 %v355, %v803
  %v868 = vmul.f32 %v356, %v804
  %v869 = vmul.f32 %v357, %v805
  %v870 = vmul.f32 %v358, %v806
  %v871 = vmul.f32 %v359, %v807
  %v872 = vmul.f32 %v360, %v808
  %v873 = vmul.f32 %v361, %v809
  %v874 = vmul.f32 %v362, %v810
  %v875 = vmul.f32 %v363, %v811
  %v876 = vmul.f32 %v364, %v812
  %v877 = vmul.f32 %v365, %v813
  %v878 = vmul.f32 %v366, %v814
  %v879 = vmul.f32 %v367, %v815
  %v880 = vmul.f32 %v368, %v816
  %v881 = vmul.f32 %v369, %v817
  %v882 = vmul.f32 %v370, %v818
  %v883 = vmul.f32 %v371, %v819
  %v884 = vmul.f32 %v372, %v820
  %v885 = vmul.f32 %v373, %v821
  %v886 = vmul.f32 %v374, %v822
  %v887 = vmul.f32 %v375, %v823
  %v888 = vmul.f32 %v376, %v824
  %v889 = vmul.f32 %v377, %v825
  %v890 = vmul.f32 %v378, %v826
  %v891 = vmul.f32 %v379, %v827
  %v892 = vmul.f32 %v380, %v828
  %v893 = vmul.f32 %v381, %v829
  %v894 = vmul.f32 %v382, %v830
  %v895 = vmul.f32 %v383, %v831
  %v896 = vmul.f32 %v384, %v832
  %v897 = vmul.f32 %v385, %v833
  %v898 = vmul.f32 %v386, %v834
  %v899 = vmul.f32 %v387, %v835
  %v900 = vmul.f32 %v388, %v836
  %v901 = vmul.f32 %v389, %v837
  %v902 = vmul.f32 %v390, %v838
  %v903 = vmul.f32 %v391, %v839
  %v904 = vmul.f32 %v392, %v840
  %v905 = vmul.f32 %v393, %v841
  %v906 = vmul.f32 %v394, %v842
  %v907 = vmul.f32 %v395, %v843
  %v908 = vmul.f32 %v396, %v844
  %v909 = vmul.f32 %v397, %v845
  %v910 = vmul.f32 %v398, %v846
  %v911 = vmul.f32 %v399, %v847
  %v912 = vmul.f32 %v400, %v848
  %v913 = vmul.f32 %v401, %v849
  %v914 = vmul.f32 %v402, %v850
  %v915 = vmul.f32 %v403, %v851
  %v916 = vmul.f32 %v404, %v852
  %v917 = vmul.f32 %v405, %v853
  %v918 = vmul.f32 %v406, %v854
  %v919 = vmul.f32 %v407, %v855
  %v920 = vmul.f32 %v408, %v856
  %v921 = vmul.f32 %v409, %v857
  %v922 = vmul.f32 %v410, %v858
  %v923 = vmul.f32 %v411, %v859
  %v924 = vld [vmem:[%s1] sm:$0xff]
  %v925 = vld [vmem:[%s1 + $0x8] sm:$0xf]
  %v926 = vld [vmem:[%s5] sm:$0x1]
  %v927 = vlaneseq
  %v928 = vshrl.u32 %v927, 7
  %v929 = vsub.s32 0, %v928
  %v930 = vrot.slane %v926, %v929
  %v932 = vsel %vm90, %v860, 0
  %v935 = vsel %vm90, %v861, 0
  %v938 = vsel %vm90, %v862, 0
  %v941 = vsel %vm90, %v863, 0
  %v944 = vsel %vm90, %v864, 0
  %v947 = vsel %vm90, %v865, 0
  %v950 = vsel %vm90, %v866, 0
  %v953 = vsel %vm90, %v867, 0
  %v956 = vsel %vm90, %v868, 0
  %v959 = vsel %vm90, %v869, 0
  %v962 = vsel %vm90, %v870, 0
  %v965 = vsel %vm90, %v871, 0
  %v968 = vsel %vm90, %v872, 0
  %v971 = vsel %vm90, %v873, 0
  %v974 = vsel %vm90, %v874, 0
  %v977 = vsel %vm90, %v875, 0
  %v980 = vsel %vm90, %v876, 0
  %v983 = vsel %vm90, %v877, 0
  %v986 = vsel %vm90, %v878, 0
  %v989 = vsel %vm90, %v879, 0
  %v992 = vsel %vm90, %v880, 0
  %v995 = vsel %vm90, %v881, 0
  %v998 = vsel %vm90, %v882, 0
  %v1001 = vsel %vm90, %v883, 0
  %v1004 = vsel %vm90, %v884, 0
  %v1007 = vsel %vm90, %v885, 0
  %v1010 = vsel %vm90, %v886, 0
  %v1013 = vsel %vm90, %v887, 0
  %v1016 = vsel %vm90, %v888, 0
  %v1019 = vsel %vm90, %v889, 0
  %v1022 = vsel %vm90, %v890, 0
  %v1025 = vsel %vm90, %v891, 0
  %v1028 = vsel %vm90, %v892, 0
  %v1031 = vsel %vm90, %v893, 0
  %v1034 = vsel %vm90, %v894, 0
  %v1037 = vsel %vm90, %v895, 0
  %v1040 = vsel %vm90, %v896, 0
  %v1043 = vsel %vm90, %v897, 0
  %v1046 = vsel %vm90, %v898, 0
  %v1049 = vsel %vm90, %v899, 0
  %v1052 = vsel %vm90, %v900, 0
  %v1055 = vsel %vm90, %v901, 0
  %v1058 = vsel %vm90, %v902, 0
  %v1061 = vsel %vm90, %v903, 0
  %v1064 = vsel %vm90, %v904, 0
  %v1067 = vsel %vm90, %v905, 0
  %v1070 = vsel %vm90, %v906, 0
  %v1073 = vsel %vm90, %v907, 0
  %v1076 = vsel %vm90, %v908, 0
  %v1079 = vsel %vm90, %v909, 0
  %v1082 = vsel %vm90, %v910, 0
  %v1085 = vsel %vm90, %v911, 0
  %v1088 = vsel %vm90, %v912, 0
  %v1091 = vsel %vm90, %v913, 0
  %v1094 = vsel %vm90, %v914, 0
  %v1097 = vsel %vm90, %v915, 0
  %v1100 = vsel %vm90, %v916, 0
  %v1103 = vsel %vm90, %v917, 0
  %v1106 = vsel %vm90, %v918, 0
  %v1109 = vsel %vm90, %v919, 0
  %v1112 = vsel %vm90, %v920, 0
  %v1115 = vsel %vm90, %v921, 0
  %v1118 = vsel %vm90, %v922, 0
  %v1121 = vsel %vm90, %v923, 0
  %vm1123 = vcmask 1043456
  %v1125 = vsel %vm1123, %v925, 0
  %1127 = vmatprep.subr.mxu0 0.0
  %1128 = vmatpush1.msra.mxu0 %v924
  %1129 = vmatprep.subr.mxu0 0.0
  %1130 = vmatpush1.msra.mxu0 %v1125
  %1131 = vmatprep.subr.mxu0 0.0
  %1132 = vmatpush1.msra.mxu0 0.0
  %1133 = vmatprep.subr.mxu0 0.0
  %1134 = vmatpush1.msra.mxu0 0.0
  %1135 = vmatprep.subr.mxu0 0.0
  %1136 = vmatpush1.msra.mxu0 0.0
  %1137 = vmatprep.subr.mxu0 0.0
  %1138 = vmatpush1.msra.mxu0 0.0
  %1139 = vmatprep.subr.mxu0 0.0
  %1140 = vmatpush1.msra.mxu0 0.0
  %1141 = vmatprep.subr.mxu0 0.0
  %1142 = vmatpush1.msra.mxu0 0.0
  %1143 = vmatprep.subr.mxu0 0.0
  %1144 = vmatpush1.msra.mxu0 0.0
  %1145 = vmatprep.subr.mxu0 0.0
  %1146 = vmatpush1.msra.mxu0 0.0
  %1147 = vmatprep.subr.mxu0 0.0
  %1148 = vmatpush1.msra.mxu0 0.0
  %1149 = vmatprep.subr.mxu0 0.0
  %1150 = vmatpush1.msra.mxu0 0.0
  %1151 = vmatprep.subr.mxu0 0.0
  %1152 = vmatpush1.msra.mxu0 0.0
  %1153 = vmatprep.subr.mxu0 0.0
  %1154 = vmatpush1.msra.mxu0 0.0
  %1155 = vmatprep.subr.mxu0 0.0
  %1156 = vmatpush1.msra.mxu0 0.0
  %1157 = vmatprep.subr.mxu0 0.0
  %1158 = vmatpush1.msra.mxu0 0.0
  %1159 = vmatprep.subr.mxu0 0.0
  %1160 = vmatpush1.msra.mxu0 0.0
  %1161 = vmatprep.subr.mxu0 0.0
  %1162 = vmatpush1.msra.mxu0 0.0
  %1163 = vmatprep.subr.mxu0 0.0
  %1164 = vmatpush1.msra.mxu0 0.0
  %1165 = vmatprep.subr.mxu0 0.0
  %1166 = vmatpush1.msra.mxu0 0.0
  %1167 = vmatprep.subr.mxu0 0.0
  %1168 = vmatpush1.msra.mxu0 0.0
  %1169 = vmatprep.subr.mxu0 0.0
  %1170 = vmatpush1.msra.mxu0 0.0
  %1171 = vmatprep.subr.mxu0 0.0
  %1172 = vmatpush1.msra.mxu0 0.0
  %1173 = vmatprep.subr.mxu0 0.0
  %1174 = vmatpush1.msra.mxu0 0.0
  %1175 = vmatprep.subr.mxu0 0.0
  %1176 = vmatpush1.msra.mxu0 0.0
  %1177 = vmatprep.subr.mxu0 0.0
  %1178 = vmatpush1.msra.mxu0 0.0
  %1179 = vmatprep.subr.mxu0 0.0
  %1180 = vmatpush1.msra.mxu0 0.0
  %1181 = vmatprep.subr.mxu0 0.0
  %1182 = vmatpush1.msra.mxu0 0.0
  %1183 = vmatprep.subr.mxu0 0.0
  %1184 = vmatpush1.msra.mxu0 0.0
  %1185 = vmatprep.subr.mxu0 0.0
  %1186 = vmatpush1.msra.mxu0 0.0
  %1187 = vmatprep.subr.mxu0 0.0
  %1188 = vmatpush1.msra.mxu0 0.0
  %1189 = vmatprep.subr.mxu0 0.0
  %1190 = vmatpush1.msra.mxu0 0.0
  %1191 = vmatprep.mubr.f32.mxu0 0.0
  %1192 = vmatmul.mubr.f32.gmra.mrb[0].mxu0 %v932
  %v1193 = vpop.f32.mrb[0].mxu0
  %v1194 = vadd.f32 %v930, %v1193
  %v1195 = vpop.f32.mrb[0].mxu0
  %1196 = vmatprep.mubr.f32.mxu0 0.0
  %1197 = vmatmul.mubr.f32.gmra.mrb[0].mxu0 %v935
  %v1198 = vpop.f32.mrb[0].mxu0
  %v1199 = vadd.f32 %v930, %v1198
  %v1200 = vpop.f32.mrb[0].mxu0
  %1201 = vmatprep.mubr.f32.mxu0 0.0
  %1202 = vmatmul.mubr.f32.gmra.mrb[0].mxu0 %v938
  %v1203 = vpop.f32.mrb[0].mxu0
  %v1204 = vadd.f32 %v930, %v1203
  %v1205 = vpop.f32.mrb[0].mxu0
  %1206 = vmatprep.mubr.f32.mxu0 0.0
  %1207 = vmatmul.mubr.f32.gmra.mrb[0].mxu0 %v941
  %v1208 = vpop.f32.mrb[0].mxu0
  %v1209 = vadd.f32 %v930, %v1208
  %v1210 = vpop.f32.mrb[0].mxu0
  %1211 = vmatprep.mubr.f32.mxu0 0.0
  %1212 = vmatmul.mubr.f32.gmra.mrb[0].mxu0 %v944
  %v1213 = vpop.f32.mrb[0].mxu0
  %v1214 = vadd.f32 %v930, %v1213
  %v1215 = vpop.f32.mrb[0].mxu0
  %1216 = vmatprep.mubr.f32.mxu0 0.0
  %1217 = vmatmul.mubr.f32.gmra.mrb[0].mxu0 %v947
  %v1218 = vpop.f32.mrb[0].mxu0
  %v1219 = vadd.f32 %v930, %v1218
  %v1220 = vpop.f32.mrb[0].mxu0
  %1221 = vmatprep.mubr.f32.mxu0 0.0
  %1222 = vmatmul.mubr.f32.gmra.mrb[0].mxu0 %v950
  %v1223 = vpop.f32.mrb[0].mxu0
  %v1224 = vadd.f32 %v930, %v1223
  %v1225 = vpop.f32.mrb[0].mxu0
  %1226 = vmatprep.mubr.f32.mxu0 0.0
  %1227 = vmatmul.mubr.f32.gmra.mrb[0].mxu0 %v953
  %v1228 = vpop.f32.mrb[0].mxu0
  %v1229 = vadd.f32 %v930, %v1228
  %v1230 = vpop.f32.mrb[0].mxu0
  %1231 = vmatprep.mubr.f32.mxu0 0.0
  %1232 = vmatmul.mubr.f32.gmra.mrb[0].mxu0 %v956
  %v1233 = vpop.f32.mrb[0].mxu0
  %v1234 = vadd.f32 %v930, %v1233
  %v1235 = vpop.f32.mrb[0].mxu0
  %1236 = vmatprep.mubr.f32.mxu0 0.0
  %1237 = vmatmul.mubr.f32.gmra.mrb[0].mxu0 %v959
  %v1238 = vpop.f32.mrb[0].mxu0
  %v1239 = vadd.f32 %v930, %v1238
  %v1240 = vpop.f32.mrb[0].mxu0
  %1241 = vmatprep.mubr.f32.mxu0 0.0
  %1242 = vmatmul.mubr.f32.gmra.mrb[0].mxu0 %v962
  %v1243 = vpop.f32.mrb[0].mxu0
  %v1244 = vadd.f32 %v930, %v1243
  %v1245 = vpop.f32.mrb[0].mxu0
  %1246 = vmatprep.mubr.f32.mxu0 0.0
  %1247 = vmatmul.mubr.f32.gmra.mrb[0].mxu0 %v965
  %v1248 = vpop.f32.mrb[0].mxu0
  %v1249 = vadd.f32 %v930, %v1248
  %v1250 = vpop.f32.mrb[0].mxu0
  %1251 = vmatprep.mubr.f32.mxu0 0.0
  %1252 = vmatmul.mubr.f32.gmra.mrb[0].mxu0 %v968
  %v1253 = vpop.f32.mrb[0].mxu0
  %v1254 = vadd.f32 %v930, %v1253
  %v1255 = vpop.f32.mrb[0].mxu0
  %1256 = vmatprep.mubr.f32.mxu0 0.0
  %1257 = vmatmul.mubr.f32.gmra.mrb[0].mxu0 %v971
  %v1258 = vpop.f32.mrb[0].mxu0
  %v1259 = vadd.f32 %v930, %v1258
  %v1260 = vpop.f32.mrb[0].mxu0
  %1261 = vmatprep.mubr.f32.mxu0 0.0
  %1262 = vmatmul.mubr.f32.gmra.mrb[0].mxu0 %v974
  %v1263 = vpop.f32.mrb[0].mxu0
  %v1264 = vadd.f32 %v930, %v1263
  %v1265 = vpop.f32.mrb[0].mxu0
  %1266 = vmatprep.mubr.f32.mxu0 0.0
  %1267 = vmatmul.mubr.f32.gmra.mrb[0].mxu0 %v977
  %v1268 = vpop.f32.mrb[0].mxu0
  %v1269 = vadd.f32 %v930, %v1268
  %v1270 = vpop.f32.mrb[0].mxu0
  %1271 = vmatprep.mubr.f32.mxu0 0.0
  %1272 = vmatmul.mubr.f32.gmra.mrb[0].mxu0 %v980
  %v1273 = vpop.f32.mrb[0].mxu0
  %v1274 = vadd.f32 %v930, %v1273
  %v1275 = vpop.f32.mrb[0].mxu0
  %1276 = vmatprep.mubr.f32.mxu0 0.0
  %1277 = vmatmul.mubr.f32.gmra.mrb[0].mxu0 %v983
  %v1278 = vpop.f32.mrb[0].mxu0
  %v1279 = vadd.f32 %v930, %v1278
  %v1280 = vpop.f32.mrb[0].mxu0
  %1281 = vmatprep.mubr.f32.mxu0 0.0
  %1282 = vmatmul.mubr.f32.gmra.mrb[0].mxu0 %v986
  %v1283 = vpop.f32.mrb[0].mxu0
  %v1284 = vadd.f32 %v930, %v1283
  %v1285 = vpop.f32.mrb[0].mxu0
  %1286 = vmatprep.mubr.f32.mxu0 0.0
  %1287 = vmatmul.mubr.f32.gmra.mrb[0].mxu0 %v989
  %v1288 = vpop.f32.mrb[0].mxu0
  %v1289 = vadd.f32 %v930, %v1288
  %v1290 = vpop.f32.mrb[0].mxu0
  %1291 = vmatprep.mubr.f32.mxu0 0.0
  %1292 = vmatmul.mubr.f32.gmra.mrb[0].mxu0 %v992
  %v1293 = vpop.f32.mrb[0].mxu0
  %v1294 = vadd.f32 %v930, %v1293
  %v1295 = vpop.f32.mrb[0].mxu0
  %1296 = vmatprep.mubr.f32.mxu0 0.0
  %1297 = vmatmul.mubr.f32.gmra.mrb[0].mxu0 %v995
  %v1298 = vpop.f32.mrb[0].mxu0
  %v1299 = vadd.f32 %v930, %v1298
  %v1300 = vpop.f32.mrb[0].mxu0
  %1301 = vmatprep.mubr.f32.mxu0 0.0
  %1302 = vmatmul.mubr.f32.gmra.mrb[0].mxu0 %v998
  %v1303 = vpop.f32.mrb[0].mxu0
  %v1304 = vadd.f32 %v930, %v1303
  %v1305 = vpop.f32.mrb[0].mxu0
  %1306 = vmatprep.mubr.f32.mxu0 0.0
  %1307 = vmatmul.mubr.f32.gmra.mrb[0].mxu0 %v1001
  %v1308 = vpop.f32.mrb[0].mxu0
  %v1309 = vadd.f32 %v930, %v1308
  %v1310 = vpop.f32.mrb[0].mxu0
  %1311 = vmatprep.mubr.f32.mxu0 0.0
  %1312 = vmatmul.mubr.f32.gmra.mrb[0].mxu0 %v1004
  %v1313 = vpop.f32.mrb[0].mxu0
  %v1314 = vadd.f32 %v930, %v1313
  %v1315 = vpop.f32.mrb[0].mxu0
  %1316 = vmatprep.mubr.f32.mxu0 0.0
  %1317 = vmatmul.mubr.f32.gmra.mrb[0].mxu0 %v1007
  %v1318 = vpop.f32.mrb[0].mxu0
  %v1319 = vadd.f32 %v930, %v1318
  %v1320 = vpop.f32.mrb[0].mxu0
  %1321 = vmatprep.mubr.f32.mxu0 0.0
  %1322 = vmatmul.mubr.f32.gmra.mrb[0].mxu0 %v1010
  %v1323 = vpop.f32.mrb[0].mxu0
  %v1324 = vadd.f32 %v930, %v1323
  %v1325 = vpop.f32.mrb[0].mxu0
  %1326 = vmatprep.mubr.f32.mxu0 0.0
  %1327 = vmatmul.mubr.f32.gmra.mrb[0].mxu0 %v1013
  %v1328 = vpop.f32.mrb[0].mxu0
  %v1329 = vadd.f32 %v930, %v1328
  %v1330 = vpop.f32.mrb[0].mxu0
  %1331 = vmatprep.mubr.f32.mxu0 0.0
  %1332 = vmatmul.mubr.f32.gmra.mrb[0].mxu0 %v1016
  %v1333 = vpop.f32.mrb[0].mxu0
  %v1334 = vadd.f32 %v930, %v1333
  %v1335 = vpop.f32.mrb[0].mxu0
  %1336 = vmatprep.mubr.f32.mxu0 0.0
  %1337 = vmatmul.mubr.f32.gmra.mrb[0].mxu0 %v1019
  %v1338 = vpop.f32.mrb[0].mxu0
  %v1339 = vadd.f32 %v930, %v1338
  %v1340 = vpop.f32.mrb[0].mxu0
  %1341 = vmatprep.mubr.f32.mxu0 0.0
  %1342 = vmatmul.mubr.f32.gmra.mrb[0].mxu0 %v1022
  %v1343 = vpop.f32.mrb[0].mxu0
  %v1344 = vadd.f32 %v930, %v1343
  %v1345 = vpop.f32.mrb[0].mxu0
  %1346 = vmatprep.mubr.f32.mxu0 0.0
  %1347 = vmatmul.mubr.f32.gmra.mrb[0].mxu0 %v1025
  %v1348 = vpop.f32.mrb[0].mxu0
  %v1349 = vadd.f32 %v930, %v1348
  %v1350 = vpop.f32.mrb[0].mxu0
  %1351 = vmatprep.mubr.f32.mxu0 0.0
  %1352 = vmatmul.mubr.f32.gmra.mrb[0].mxu0 %v1028
  %v1353 = vpop.f32.mrb[0].mxu0
  %v1354 = vadd.f32 %v930, %v1353
  %v1355 = vpop.f32.mrb[0].mxu0
  %1356 = vmatprep.mubr.f32.mxu0 0.0
  %1357 = vmatmul.mubr.f32.gmra.mrb[0].mxu0 %v1031
  %v1358 = vpop.f32.mrb[0].mxu0
  %v1359 = vadd.f32 %v930, %v1358
  %v1360 = vpop.f32.mrb[0].mxu0
  %1361 = vmatprep.mubr.f32.mxu0 0.0
  %1362 = vmatmul.mubr.f32.gmra.mrb[0].mxu0 %v1034
  %v1363 = vpop.f32.mrb[0].mxu0
  %v1364 = vadd.f32 %v930, %v1363
  %v1365 = vpop.f32.mrb[0].mxu0
  %1366 = vmatprep.mubr.f32.mxu0 0.0
  %1367 = vmatmul.mubr.f32.gmra.mrb[0].mxu0 %v1037
  %v1368 = vpop.f32.mrb[0].mxu0
  %v1369 = vadd.f32 %v930, %v1368
  %v1370 = vpop.f32.mrb[0].mxu0
  %1371 = vmatprep.mubr.f32.mxu0 0.0
  %1372 = vmatmul.mubr.f32.gmra.mrb[0].mxu0 %v1040
  %v1373 = vpop.f32.mrb[0].mxu0
  %v1374 = vadd.f32 %v930, %v1373
  %v1375 = vpop.f32.mrb[0].mxu0
  %1376 = vmatprep.mubr.f32.mxu0 0.0
  %1377 = vmatmul.mubr.f32.gmra.mrb[0].mxu0 %v1043
  %v1378 = vpop.f32.mrb[0].mxu0
  %v1379 = vadd.f32 %v930, %v1378
  %v1380 = vpop.f32.mrb[0].mxu0
  %1381 = vmatprep.mubr.f32.mxu0 0.0
  %1382 = vmatmul.mubr.f32.gmra.mrb[0].mxu0 %v1046
  %v1383 = vpop.f32.mrb[0].mxu0
  %v1384 = vadd.f32 %v930, %v1383
  %v1385 = vpop.f32.mrb[0].mxu0
  %1386 = vmatprep.mubr.f32.mxu0 0.0
  %1387 = vmatmul.mubr.f32.gmra.mrb[0].mxu0 %v1049
  %v1388 = vpop.f32.mrb[0].mxu0
  %v1389 = vadd.f32 %v930, %v1388
  %v1390 = vpop.f32.mrb[0].mxu0
  %1391 = vmatprep.mubr.f32.mxu0 0.0
  %1392 = vmatmul.mubr.f32.gmra.mrb[0].mxu0 %v1052
  %v1393 = vpop.f32.mrb[0].mxu0
  %v1394 = vadd.f32 %v930, %v1393
  %v1395 = vpop.f32.mrb[0].mxu0
  %1396 = vmatprep.mubr.f32.mxu0 0.0
  %1397 = vmatmul.mubr.f32.gmra.mrb[0].mxu0 %v1055
  %v1398 = vpop.f32.mrb[0].mxu0
  %v1399 = vadd.f32 %v930, %v1398
  %v1400 = vpop.f32.mrb[0].mxu0
  %1401 = vmatprep.mubr.f32.mxu0 0.0
  %1402 = vmatmul.mubr.f32.gmra.mrb[0].mxu0 %v1058
  %v1403 = vpop.f32.mrb[0].mxu0
  %v1404 = vadd.f32 %v930, %v1403
  %v1405 = vpop.f32.mrb[0].mxu0
  %1406 = vmatprep.mubr.f32.mxu0 0.0
  %1407 = vmatmul.mubr.f32.gmra.mrb[0].mxu0 %v1061
  %v1408 = vpop.f32.mrb[0].mxu0
  %v1409 = vadd.f32 %v930, %v1408
  %v1410 = vpop.f32.mrb[0].mxu0
  %1411 = vmatprep.mubr.f32.mxu0 0.0
  %1412 = vmatmul.mubr.f32.gmra.mrb[0].mxu0 %v1064
  %v1413 = vpop.f32.mrb[0].mxu0
  %v1414 = vadd.f32 %v930, %v1413
  %v1415 = vpop.f32.mrb[0].mxu0
  %1416 = vmatprep.mubr.f32.mxu0 0.0
  %1417 = vmatmul.mubr.f32.gmra.mrb[0].mxu0 %v1067
  %v1418 = vpop.f32.mrb[0].mxu0
  %v1419 = vadd.f32 %v930, %v1418
  %v1420 = vpop.f32.mrb[0].mxu0
  %1421 = vmatprep.mubr.f32.mxu0 0.0
  %1422 = vmatmul.mubr.f32.gmra.mrb[0].mxu0 %v1070
  %v1423 = vpop.f32.mrb[0].mxu0
  %v1424 = vadd.f32 %v930, %v1423
  %v1425 = vpop.f32.mrb[0].mxu0
  %1426 = vmatprep.mubr.f32.mxu0 0.0
  %1427 = vmatmul.mubr.f32.gmra.mrb[0].mxu0 %v1073
  %v1428 = vpop.f32.mrb[0].mxu0
  %v1429 = vadd.f32 %v930, %v1428
  %v1430 = vpop.f32.mrb[0].mxu0
  %1431 = vmatprep.mubr.f32.mxu0 0.0
  %1432 = vmatmul.mubr.f32.gmra.mrb[0].mxu0 %v1076
  %v1433 = vpop.f32.mrb[0].mxu0
  %v1434 = vadd.f32 %v930, %v1433
  %v1435 = vpop.f32.mrb[0].mxu0
  %1436 = vmatprep.mubr.f32.mxu0 0.0
  %1437 = vmatmul.mubr.f32.gmra.mrb[0].mxu0 %v1079
  %v1438 = vpop.f32.mrb[0].mxu0
  %v1439 = vadd.f32 %v930, %v1438
  %v1440 = vpop.f32.mrb[0].mxu0
  %1441 = vmatprep.mubr.f32.mxu0 0.0
  %1442 = vmatmul.mubr.f32.gmra.mrb[0].mxu0 %v1082
  %v1443 = vpop.f32.mrb[0].mxu0
  %v1444 = vadd.f32 %v930, %v1443
  %v1445 = vpop.f32.mrb[0].mxu0
  %1446 = vmatprep.mubr.f32.mxu0 0.0
  %1447 = vmatmul.mubr.f32.gmra.mrb[0].mxu0 %v1085
  %v1448 = vpop.f32.mrb[0].mxu0
  %v1449 = vadd.f32 %v930, %v1448
  %v1450 = vpop.f32.mrb[0].mxu0
  %1451 = vmatprep.mubr.f32.mxu0 0.0
  %1452 = vmatmul.mubr.f32.gmra.mrb[0].mxu0 %v1088
  %v1453 = vpop.f32.mrb[0].mxu0
  %v1454 = vadd.f32 %v930, %v1453
  %v1455 = vpop.f32.mrb[0].mxu0
  %1456 = vmatprep.mubr.f32.mxu0 0.0
  %1457 = vmatmul.mubr.f32.gmra.mrb[0].mxu0 %v1091
  %v1458 = vpop.f32.mrb[0].mxu0
  %v1459 = vadd.f32 %v930, %v1458
  %v1460 = vpop.f32.mrb[0].mxu0
  %1461 = vmatprep.mubr.f32.mxu0 0.0
  %1462 = vmatmul.mubr.f32.gmra.mrb[0].mxu0 %v1094
  %v1463 = vpop.f32.mrb[0].mxu0
  %v1464 = vadd.f32 %v930, %v1463
  %v1465 = vpop.f32.mrb[0].mxu0
  %1466 = vmatprep.mubr.f32.mxu0 0.0
  %1467 = vmatmul.mubr.f32.gmra.mrb[0].mxu0 %v1097
  %v1468 = vpop.f32.mrb[0].mxu0
  %v1469 = vadd.f32 %v930, %v1468
  %v1470 = vpop.f32.mrb[0].mxu0
  %1471 = vmatprep.mubr.f32.mxu0 0.0
  %1472 = vmatmul.mubr.f32.gmra.mrb[0].mxu0 %v1100
  %v1473 = vpop.f32.mrb[0].mxu0
  %v1474 = vadd.f32 %v930, %v1473
  %v1475 = vpop.f32.mrb[0].mxu0
  %1476 = vmatprep.mubr.f32.mxu0 0.0
  %1477 = vmatmul.mubr.f32.gmra.mrb[0].mxu0 %v1103
  %v1478 = vpop.f32.mrb[0].mxu0
  %v1479 = vadd.f32 %v930, %v1478
  %v1480 = vpop.f32.mrb[0].mxu0
  %1481 = vmatprep.mubr.f32.mxu0 0.0
  %1482 = vmatmul.mubr.f32.gmra.mrb[0].mxu0 %v1106
  %v1483 = vpop.f32.mrb[0].mxu0
  %v1484 = vadd.f32 %v930, %v1483
  %v1485 = vpop.f32.mrb[0].mxu0
  %1486 = vmatprep.mubr.f32.mxu0 0.0
  %1487 = vmatmul.mubr.f32.gmra.mrb[0].mxu0 %v1109
  %v1488 = vpop.f32.mrb[0].mxu0
  %v1489 = vadd.f32 %v930, %v1488
  %v1490 = vpop.f32.mrb[0].mxu0
  %1491 = vmatprep.mubr.f32.mxu0 0.0
  %1492 = vmatmul.mubr.f32.gmra.mrb[0].mxu0 %v1112
  %v1493 = vpop.f32.mrb[0].mxu0
  %v1494 = vadd.f32 %v930, %v1493
  %v1495 = vpop.f32.mrb[0].mxu0
  %1496 = vmatprep.mubr.f32.mxu0 0.0
  %1497 = vmatmul.mubr.f32.gmra.mrb[0].mxu0 %v1115
  %v1498 = vpop.f32.mrb[0].mxu0
  %v1499 = vadd.f32 %v930, %v1498
  %v1500 = vpop.f32.mrb[0].mxu0
  %1501 = vmatprep.mubr.f32.mxu0 0.0
  %1502 = vmatmul.mubr.f32.gmra.mrb[0].mxu0 %v1118
  %v1503 = vpop.f32.mrb[0].mxu0
  %v1504 = vadd.f32 %v930, %v1503
  %v1505 = vpop.f32.mrb[0].mxu0
  %1506 = vmatprep.mubr.f32.mxu0 0.0
  %1507 = vmatmul.mubr.f32.gmra.mrb[0].mxu0 %v1121
  %v1508 = vpop.f32.mrb[0].mxu0
  %v1509 = vadd.f32 %v930, %v1508
  %v1510 = vpop.f32.mrb[0].mxu0
  %1511 = vdwg.mxu0
  %v1512 = vld [vmem:[%s2] sm:$0xff]
  %v1513 = vld [vmem:[%s2 + $0x8] sm:$0xf]
  %v1514 = vld [vmem:[%s5 + $0x1] sm:$0x1]
  %v1515 = vlaneseq
  %v1516 = vshrl.u32 %v1515, 7
  %v1517 = vsub.s32 0, %v1516
  %v1518 = vrot.slane %v1514, %v1517
  %v1520 = vsel %vm1123, %v1513, 0
  %1522 = vmatprep.subr.mxu0 0.0
  %1523 = vmatpush1.msra.mxu0 %v1512
  %1524 = vmatprep.subr.mxu0 0.0
  %1525 = vmatpush1.msra.mxu0 %v1520
  %1526 = vmatprep.subr.mxu0 0.0
  %1527 = vmatpush1.msra.mxu0 0.0
  %1528 = vmatprep.subr.mxu0 0.0
  %1529 = vmatpush1.msra.mxu0 0.0
  %1530 = vmatprep.subr.mxu0 0.0
  %1531 = vmatpush1.msra.mxu0 0.0
  %1532 = vmatprep.subr.mxu0 0.0
  %1533 = vmatpush1.msra.mxu0 0.0
  %1534 = vmatprep.subr.mxu0 0.0
  %1535 = vmatpush1.msra.mxu0 0.0
  %1536 = vmatprep.subr.mxu0 0.0
  %1537 = vmatpush1.msra.mxu0 0.0
  %1538 = vmatprep.subr.mxu0 0.0
  %1539 = vmatpush1.msra.mxu0 0.0
  %1540 = vmatprep.subr.mxu0 0.0
  %1541 = vmatpush1.msra.mxu0 0.0
  %1542 = vmatprep.subr.mxu0 0.0
  %1543 = vmatpush1.msra.mxu0 0.0
  %1544 = vmatprep.subr.mxu0 0.0
  %1545 = vmatpush1.msra.mxu0 0.0
  %1546 = vmatprep.subr.mxu0 0.0
  %1547 = vmatpush1.msra.mxu0 0.0
  %1548 = vmatprep.subr.mxu0 0.0
  %1549 = vmatpush1.msra.mxu0 0.0
  %1550 = vmatprep.subr.mxu0 0.0
  %1551 = vmatpush1.msra.mxu0 0.0
  %1552 = vmatprep.subr.mxu0 0.0
  %1553 = vmatpush1.msra.mxu0 0.0
  %1554 = vmatprep.subr.mxu0 0.0
  %1555 = vmatpush1.msra.mxu0 0.0
  %1556 = vmatprep.subr.mxu0 0.0
  %1557 = vmatpush1.msra.mxu0 0.0
  %1558 = vmatprep.subr.mxu0 0.0
  %1559 = vmatpush1.msra.mxu0 0.0
  %1560 = vmatprep.subr.mxu0 0.0
  %1561 = vmatpush1.msra.mxu0 0.0
  %1562 = vmatprep.subr.mxu0 0.0
  %1563 = vmatpush1.msra.mxu0 0.0
  %1564 = vmatprep.subr.mxu0 0.0
  %1565 = vmatpush1.msra.mxu0 0.0
  %1566 = vmatprep.subr.mxu0 0.0
  %1567 = vmatpush1.msra.mxu0 0.0
  %1568 = vmatprep.subr.mxu0 0.0
  %1569 = vmatpush1.msra.mxu0 0.0
  %1570 = vmatprep.subr.mxu0 0.0
  %1571 = vmatpush1.msra.mxu0 0.0
  %1572 = vmatprep.subr.mxu0 0.0
  %1573 = vmatpush1.msra.mxu0 0.0
  %1574 = vmatprep.subr.mxu0 0.0
  %1575 = vmatpush1.msra.mxu0 0.0
  %1576 = vmatprep.subr.mxu0 0.0
  %1577 = vmatpush1.msra.mxu0 0.0
  %1578 = vmatprep.subr.mxu0 0.0
  %1579 = vmatpush1.msra.mxu0 0.0
  %1580 = vmatprep.subr.mxu0 0.0
  %1581 = vmatpush1.msra.mxu0 0.0
  %1582 = vmatprep.subr.mxu0 0.0
  %1583 = vmatpush1.msra.mxu0 0.0
  %1584 = vmatprep.subr.mxu0 0.0
  %1585 = vmatpush1.msra.mxu0 0.0
  %1586 = vmatprep.mubr.f32.mxu0 0.0
  %1587 = vmatmul.mubr.f32.gmra.mrb[0].mxu0 %v932
  %v1588 = vpop.f32.mrb[0].mxu0
  %v1589 = vadd.f32 %v1518, %v1588
  %v1590 = vpop.f32.mrb[0].mxu0
  %1591 = vmatprep.mubr.f32.mxu0 0.0
  %1592 = vmatmul.mubr.f32.gmra.mrb[0].mxu0 %v935
  %v1593 = vpop.f32.mrb[0].mxu0
  %v1594 = vadd.f32 %v1518, %v1593
  %v1595 = vpop.f32.mrb[0].mxu0
  %1596 = vmatprep.mubr.f32.mxu0 0.0
  %1597 = vmatmul.mubr.f32.gmra.mrb[0].mxu0 %v938
  %v1598 = vpop.f32.mrb[0].mxu0
  %v1599 = vadd.f32 %v1518, %v1598
  %v1600 = vpop.f32.mrb[0].mxu0
  %1601 = vmatprep.mubr.f32.mxu0 0.0
  %1602 = vmatmul.mubr.f32.gmra.mrb[0].mxu0 %v941
  %v1603 = vpop.f32.mrb[0].mxu0
  %v1604 = vadd.f32 %v1518, %v1603
  %v1605 = vpop.f32.mrb[0].mxu0
  %1606 = vmatprep.mubr.f32.mxu0 0.0
  %1607 = vmatmul.mubr.f32.gmra.mrb[0].mxu0 %v944
  %v1608 = vpop.f32.mrb[0].mxu0
  %v1609 = vadd.f32 %v1518, %v1608
  %v1610 = vpop.f32.mrb[0].mxu0
  %1611 = vmatprep.mubr.f32.mxu0 0.0
  %1612 = vmatmul.mubr.f32.gmra.mrb[0].mxu0 %v947
  %v1613 = vpop.f32.mrb[0].mxu0
  %v1614 = vadd.f32 %v1518, %v1613
  %v1615 = vpop.f32.mrb[0].mxu0
  %1616 = vmatprep.mubr.f32.mxu0 0.0
  %1617 = vmatmul.mubr.f32.gmra.mrb[0].mxu0 %v950
  %v1618 = vpop.f32.mrb[0].mxu0
  %v1619 = vadd.f32 %v1518, %v1618
  %v1620 = vpop.f32.mrb[0].mxu0
  %1621 = vmatprep.mubr.f32.mxu0 0.0
  %1622 = vmatmul.mubr.f32.gmra.mrb[0].mxu0 %v953
  %v1623 = vpop.f32.mrb[0].mxu0
  %v1624 = vadd.f32 %v1518, %v1623
  %v1625 = vpop.f32.mrb[0].mxu0
  %1626 = vmatprep.mubr.f32.mxu0 0.0
  %1627 = vmatmul.mubr.f32.gmra.mrb[0].mxu0 %v956
  %v1628 = vpop.f32.mrb[0].mxu0
  %v1629 = vadd.f32 %v1518, %v1628
  %v1630 = vpop.f32.mrb[0].mxu0
  %1631 = vmatprep.mubr.f32.mxu0 0.0
  %1632 = vmatmul.mubr.f32.gmra.mrb[0].mxu0 %v959
  %v1633 = vpop.f32.mrb[0].mxu0
  %v1634 = vadd.f32 %v1518, %v1633
  %v1635 = vpop.f32.mrb[0].mxu0
  %1636 = vmatprep.mubr.f32.mxu0 0.0
  %1637 = vmatmul.mubr.f32.gmra.mrb[0].mxu0 %v962
  %v1638 = vpop.f32.mrb[0].mxu0
  %v1639 = vadd.f32 %v1518, %v1638
  %v1640 = vpop.f32.mrb[0].mxu0
  %1641 = vmatprep.mubr.f32.mxu0 0.0
  %1642 = vmatmul.mubr.f32.gmra.mrb[0].mxu0 %v965
  %v1643 = vpop.f32.mrb[0].mxu0
  %v1644 = vadd.f32 %v1518, %v1643
  %v1645 = vpop.f32.mrb[0].mxu0
  %1646 = vmatprep.mubr.f32.mxu0 0.0
  %1647 = vmatmul.mubr.f32.gmra.mrb[0].mxu0 %v968
  %v1648 = vpop.f32.mrb[0].mxu0
  %v1649 = vadd.f32 %v1518, %v1648
  %v1650 = vpop.f32.mrb[0].mxu0
  %1651 = vmatprep.mubr.f32.mxu0 0.0
  %1652 = vmatmul.mubr.f32.gmra.mrb[0].mxu0 %v971
  %v1653 = vpop.f32.mrb[0].mxu0
  %v1654 = vadd.f32 %v1518, %v1653
  %v1655 = vpop.f32.mrb[0].mxu0
  %1656 = vmatprep.mubr.f32.mxu0 0.0
  %1657 = vmatmul.mubr.f32.gmra.mrb[0].mxu0 %v974
  %v1658 = vpop.f32.mrb[0].mxu0
  %v1659 = vadd.f32 %v1518, %v1658
  %v1660 = vpop.f32.mrb[0].mxu0
  %1661 = vmatprep.mubr.f32.mxu0 0.0
  %1662 = vmatmul.mubr.f32.gmra.mrb[0].mxu0 %v977
  %v1663 = vpop.f32.mrb[0].mxu0
  %v1664 = vadd.f32 %v1518, %v1663
  %v1665 = vpop.f32.mrb[0].mxu0
  %1666 = vmatprep.mubr.f32.mxu0 0.0
  %1667 = vmatmul.mubr.f32.gmra.mrb[0].mxu0 %v980
  %v1668 = vpop.f32.mrb[0].mxu0
  %v1669 = vadd.f32 %v1518, %v1668
  %v1670 = vpop.f32.mrb[0].mxu0
  %1671 = vmatprep.mubr.f32.mxu0 0.0
  %1672 = vmatmul.mubr.f32.gmra.mrb[0].mxu0 %v983
  %v1673 = vpop.f32.mrb[0].mxu0
  %v1674 = vadd.f32 %v1518, %v1673
  %v1675 = vpop.f32.mrb[0].mxu0
  %1676 = vmatprep.mubr.f32.mxu0 0.0
  %1677 = vmatmul.mubr.f32.gmra.mrb[0].mxu0 %v986
  %v1678 = vpop.f32.mrb[0].mxu0
  %v1679 = vadd.f32 %v1518, %v1678
  %v1680 = vpop.f32.mrb[0].mxu0
  %1681 = vmatprep.mubr.f32.mxu0 0.0
  %1682 = vmatmul.mubr.f32.gmra.mrb[0].mxu0 %v989
  %v1683 = vpop.f32.mrb[0].mxu0
  %v1684 = vadd.f32 %v1518, %v1683
  %v1685 = vpop.f32.mrb[0].mxu0
  %1686 = vmatprep.mubr.f32.mxu0 0.0
  %1687 = vmatmul.mubr.f32.gmra.mrb[0].mxu0 %v992
  %v1688 = vpop.f32.mrb[0].mxu0
  %v1689 = vadd.f32 %v1518, %v1688
  %v1690 = vpop.f32.mrb[0].mxu0
  %1691 = vmatprep.mubr.f32.mxu0 0.0
  %1692 = vmatmul.mubr.f32.gmra.mrb[0].mxu0 %v995
  %v1693 = vpop.f32.mrb[0].mxu0
  %v1694 = vadd.f32 %v1518, %v1693
  %v1695 = vpop.f32.mrb[0].mxu0
  %1696 = vmatprep.mubr.f32.mxu0 0.0
  %1697 = vmatmul.mubr.f32.gmra.mrb[0].mxu0 %v998
  %v1698 = vpop.f32.mrb[0].mxu0
  %v1699 = vadd.f32 %v1518, %v1698
  %v1700 = vpop.f32.mrb[0].mxu0
  %1701 = vmatprep.mubr.f32.mxu0 0.0
  %1702 = vmatmul.mubr.f32.gmra.mrb[0].mxu0 %v1001
  %v1703 = vpop.f32.mrb[0].mxu0
  %v1704 = vadd.f32 %v1518, %v1703
  %v1705 = vpop.f32.mrb[0].mxu0
  %1706 = vmatprep.mubr.f32.mxu0 0.0
  %1707 = vmatmul.mubr.f32.gmra.mrb[0].mxu0 %v1004
  %v1708 = vpop.f32.mrb[0].mxu0
  %v1709 = vadd.f32 %v1518, %v1708
  %v1710 = vpop.f32.mrb[0].mxu0
  %1711 = vmatprep.mubr.f32.mxu0 0.0
  %1712 = vmatmul.mubr.f32.gmra.mrb[0].mxu0 %v1007
  %v1713 = vpop.f32.mrb[0].mxu0
  %v1714 = vadd.f32 %v1518, %v1713
  %v1715 = vpop.f32.mrb[0].mxu0
  %1716 = vmatprep.mubr.f32.mxu0 0.0
  %1717 = vmatmul.mubr.f32.gmra.mrb[0].mxu0 %v1010
  %v1718 = vpop.f32.mrb[0].mxu0
  %v1719 = vadd.f32 %v1518, %v1718
  %v1720 = vpop.f32.mrb[0].mxu0
  %1721 = vmatprep.mubr.f32.mxu0 0.0
  %1722 = vmatmul.mubr.f32.gmra.mrb[0].mxu0 %v1013
  %v1723 = vpop.f32.mrb[0].mxu0
  %v1724 = vadd.f32 %v1518, %v1723
  %v1725 = vpop.f32.mrb[0].mxu0
  %1726 = vmatprep.mubr.f32.mxu0 0.0
  %1727 = vmatmul.mubr.f32.gmra.mrb[0].mxu0 %v1016
  %v1728 = vpop.f32.mrb[0].mxu0
  %v1729 = vadd.f32 %v1518, %v1728
  %v1730 = vpop.f32.mrb[0].mxu0
  %1731 = vmatprep.mubr.f32.mxu0 0.0
  %1732 = vmatmul.mubr.f32.gmra.mrb[0].mxu0 %v1019
  %v1733 = vpop.f32.mrb[0].mxu0
  %v1734 = vadd.f32 %v1518, %v1733
  %v1735 = vpop.f32.mrb[0].mxu0
  %1736 = vmatprep.mubr.f32.mxu0 0.0
  %1737 = vmatmul.mubr.f32.gmra.mrb[0].mxu0 %v1022
  %v1738 = vpop.f32.mrb[0].mxu0
  %v1739 = vadd.f32 %v1518, %v1738
  %v1740 = vpop.f32.mrb[0].mxu0
  %1741 = vmatprep.mubr.f32.mxu0 0.0
  %1742 = vmatmul.mubr.f32.gmra.mrb[0].mxu0 %v1025
  %v1743 = vpop.f32.mrb[0].mxu0
  %v1744 = vadd.f32 %v1518, %v1743
  %v1745 = vpop.f32.mrb[0].mxu0
  %1746 = vmatprep.mubr.f32.mxu0 0.0
  %1747 = vmatmul.mubr.f32.gmra.mrb[0].mxu0 %v1028
  %v1748 = vpop.f32.mrb[0].mxu0
  %v1749 = vadd.f32 %v1518, %v1748
  %v1750 = vpop.f32.mrb[0].mxu0
  %1751 = vmatprep.mubr.f32.mxu0 0.0
  %1752 = vmatmul.mubr.f32.gmra.mrb[0].mxu0 %v1031
  %v1753 = vpop.f32.mrb[0].mxu0
  %v1754 = vadd.f32 %v1518, %v1753
  %v1755 = vpop.f32.mrb[0].mxu0
  %1756 = vmatprep.mubr.f32.mxu0 0.0
  %1757 = vmatmul.mubr.f32.gmra.mrb[0].mxu0 %v1034
  %v1758 = vpop.f32.mrb[0].mxu0
  %v1759 = vadd.f32 %v1518, %v1758
  %v1760 = vpop.f32.mrb[0].mxu0
  %1761 = vmatprep.mubr.f32.mxu0 0.0
  %1762 = vmatmul.mubr.f32.gmra.mrb[0].mxu0 %v1037
  %v1763 = vpop.f32.mrb[0].mxu0
  %v1764 = vadd.f32 %v1518, %v1763
  %v1765 = vpop.f32.mrb[0].mxu0
  %1766 = vmatprep.mubr.f32.mxu0 0.0
  %1767 = vmatmul.mubr.f32.gmra.mrb[0].mxu0 %v1040
  %v1768 = vpop.f32.mrb[0].mxu0
  %v1769 = vadd.f32 %v1518, %v1768
  %v1770 = vpop.f32.mrb[0].mxu0
  %1771 = vmatprep.mubr.f32.mxu0 0.0
  %1772 = vmatmul.mubr.f32.gmra.mrb[0].mxu0 %v1043
  %v1773 = vpop.f32.mrb[0].mxu0
  %v1774 = vadd.f32 %v1518, %v1773
  %v1775 = vpop.f32.mrb[0].mxu0
  %1776 = vmatprep.mubr.f32.mxu0 0.0
  %1777 = vmatmul.mubr.f32.gmra.mrb[0].mxu0 %v1046
  %v1778 = vpop.f32.mrb[0].mxu0
  %v1779 = vadd.f32 %v1518, %v1778
  %v1780 = vpop.f32.mrb[0].mxu0
  %1781 = vmatprep.mubr.f32.mxu0 0.0
  %1782 = vmatmul.mubr.f32.gmra.mrb[0].mxu0 %v1049
  %v1783 = vpop.f32.mrb[0].mxu0
  %v1784 = vadd.f32 %v1518, %v1783
  %v1785 = vpop.f32.mrb[0].mxu0
  %1786 = vmatprep.mubr.f32.mxu0 0.0
  %1787 = vmatmul.mubr.f32.gmra.mrb[0].mxu0 %v1052
  %v1788 = vpop.f32.mrb[0].mxu0
  %v1789 = vadd.f32 %v1518, %v1788
  %v1790 = vpop.f32.mrb[0].mxu0
  %1791 = vmatprep.mubr.f32.mxu0 0.0
  %1792 = vmatmul.mubr.f32.gmra.mrb[0].mxu0 %v1055
  %v1793 = vpop.f32.mrb[0].mxu0
  %v1794 = vadd.f32 %v1518, %v1793
  %v1795 = vpop.f32.mrb[0].mxu0
  %1796 = vmatprep.mubr.f32.mxu0 0.0
  %1797 = vmatmul.mubr.f32.gmra.mrb[0].mxu0 %v1058
  %v1798 = vpop.f32.mrb[0].mxu0
  %v1799 = vadd.f32 %v1518, %v1798
  %v1800 = vpop.f32.mrb[0].mxu0
  %1801 = vmatprep.mubr.f32.mxu0 0.0
  %1802 = vmatmul.mubr.f32.gmra.mrb[0].mxu0 %v1061
  %v1803 = vpop.f32.mrb[0].mxu0
  %v1804 = vadd.f32 %v1518, %v1803
  %v1805 = vpop.f32.mrb[0].mxu0
  %1806 = vmatprep.mubr.f32.mxu0 0.0
  %1807 = vmatmul.mubr.f32.gmra.mrb[0].mxu0 %v1064
  %v1808 = vpop.f32.mrb[0].mxu0
  %v1809 = vadd.f32 %v1518, %v1808
  %v1810 = vpop.f32.mrb[0].mxu0
  %1811 = vmatprep.mubr.f32.mxu0 0.0
  %1812 = vmatmul.mubr.f32.gmra.mrb[0].mxu0 %v1067
  %v1813 = vpop.f32.mrb[0].mxu0
  %v1814 = vadd.f32 %v1518, %v1813
  %v1815 = vpop.f32.mrb[0].mxu0
  %1816 = vmatprep.mubr.f32.mxu0 0.0
  %1817 = vmatmul.mubr.f32.gmra.mrb[0].mxu0 %v1070
  %v1818 = vpop.f32.mrb[0].mxu0
  %v1819 = vadd.f32 %v1518, %v1818
  %v1820 = vpop.f32.mrb[0].mxu0
  %1821 = vmatprep.mubr.f32.mxu0 0.0
  %1822 = vmatmul.mubr.f32.gmra.mrb[0].mxu0 %v1073
  %v1823 = vpop.f32.mrb[0].mxu0
  %v1824 = vadd.f32 %v1518, %v1823
  %v1825 = vpop.f32.mrb[0].mxu0
  %1826 = vmatprep.mubr.f32.mxu0 0.0
  %1827 = vmatmul.mubr.f32.gmra.mrb[0].mxu0 %v1076
  %v1828 = vpop.f32.mrb[0].mxu0
  %v1829 = vadd.f32 %v1518, %v1828
  %v1830 = vpop.f32.mrb[0].mxu0
  %1831 = vmatprep.mubr.f32.mxu0 0.0
  %1832 = vmatmul.mubr.f32.gmra.mrb[0].mxu0 %v1079
  %v1833 = vpop.f32.mrb[0].mxu0
  %v1834 = vadd.f32 %v1518, %v1833
  %v1835 = vpop.f32.mrb[0].mxu0
  %1836 = vmatprep.mubr.f32.mxu0 0.0
  %1837 = vmatmul.mubr.f32.gmra.mrb[0].mxu0 %v1082
  %v1838 = vpop.f32.mrb[0].mxu0
  %v1839 = vadd.f32 %v1518, %v1838
  %v1840 = vpop.f32.mrb[0].mxu0
  %1841 = vmatprep.mubr.f32.mxu0 0.0
  %1842 = vmatmul.mubr.f32.gmra.mrb[0].mxu0 %v1085
  %v1843 = vpop.f32.mrb[0].mxu0
  %v1844 = vadd.f32 %v1518, %v1843
  %v1845 = vpop.f32.mrb[0].mxu0
  %1846 = vmatprep.mubr.f32.mxu0 0.0
  %1847 = vmatmul.mubr.f32.gmra.mrb[0].mxu0 %v1088
  %v1848 = vpop.f32.mrb[0].mxu0
  %v1849 = vadd.f32 %v1518, %v1848
  %v1850 = vpop.f32.mrb[0].mxu0
  %1851 = vmatprep.mubr.f32.mxu0 0.0
  %1852 = vmatmul.mubr.f32.gmra.mrb[0].mxu0 %v1091
  %v1853 = vpop.f32.mrb[0].mxu0
  %v1854 = vadd.f32 %v1518, %v1853
  %v1855 = vpop.f32.mrb[0].mxu0
  %1856 = vmatprep.mubr.f32.mxu0 0.0
  %1857 = vmatmul.mubr.f32.gmra.mrb[0].mxu0 %v1094
  %v1858 = vpop.f32.mrb[0].mxu0
  %v1859 = vadd.f32 %v1518, %v1858
  %v1860 = vpop.f32.mrb[0].mxu0
  %1861 = vmatprep.mubr.f32.mxu0 0.0
  %1862 = vmatmul.mubr.f32.gmra.mrb[0].mxu0 %v1097
  %v1863 = vpop.f32.mrb[0].mxu0
  %v1864 = vadd.f32 %v1518, %v1863
  %v1865 = vpop.f32.mrb[0].mxu0
  %1866 = vmatprep.mubr.f32.mxu0 0.0
  %1867 = vmatmul.mubr.f32.gmra.mrb[0].mxu0 %v1100
  %v1868 = vpop.f32.mrb[0].mxu0
  %v1869 = vadd.f32 %v1518, %v1868
  %v1870 = vpop.f32.mrb[0].mxu0
  %1871 = vmatprep.mubr.f32.mxu0 0.0
  %1872 = vmatmul.mubr.f32.gmra.mrb[0].mxu0 %v1103
  %v1873 = vpop.f32.mrb[0].mxu0
  %v1874 = vadd.f32 %v1518, %v1873
  %v1875 = vpop.f32.mrb[0].mxu0
  %1876 = vmatprep.mubr.f32.mxu0 0.0
  %1877 = vmatmul.mubr.f32.gmra.mrb[0].mxu0 %v1106
  %v1878 = vpop.f32.mrb[0].mxu0
  %v1879 = vadd.f32 %v1518, %v1878
  %v1880 = vpop.f32.mrb[0].mxu0
  %1881 = vmatprep.mubr.f32.mxu0 0.0
  %1882 = vmatmul.mubr.f32.gmra.mrb[0].mxu0 %v1109
  %v1883 = vpop.f32.mrb[0].mxu0
  %v1884 = vadd.f32 %v1518, %v1883
  %v1885 = vpop.f32.mrb[0].mxu0
  %1886 = vmatprep.mubr.f32.mxu0 0.0
  %1887 = vmatmul.mubr.f32.gmra.mrb[0].mxu0 %v1112
  %v1888 = vpop.f32.mrb[0].mxu0
  %v1889 = vadd.f32 %v1518, %v1888
  %v1890 = vpop.f32.mrb[0].mxu0
  %1891 = vmatprep.mubr.f32.mxu0 0.0
  %1892 = vmatmul.mubr.f32.gmra.mrb[0].mxu0 %v1115
  %v1893 = vpop.f32.mrb[0].mxu0
  %v1894 = vadd.f32 %v1518, %v1893
  %v1895 = vpop.f32.mrb[0].mxu0
  %1896 = vmatprep.mubr.f32.mxu0 0.0
  %1897 = vmatmul.mubr.f32.gmra.mrb[0].mxu0 %v1118
  %v1898 = vpop.f32.mrb[0].mxu0
  %v1899 = vadd.f32 %v1518, %v1898
  %v1900 = vpop.f32.mrb[0].mxu0
  %1901 = vmatprep.mubr.f32.mxu0 0.0
  %1902 = vmatmul.mubr.f32.gmra.mrb[0].mxu0 %v1121
  %v1903 = vpop.f32.mrb[0].mxu0
  %v1904 = vadd.f32 %v1518, %v1903
  %v1905 = vpop.f32.mrb[0].mxu0
  %1906 = vdwg.mxu0
  %vm1907 = vcmask 261120
  %1908 = vst.msk [vmem:[#allocation2] sm:$0xff] %vm1907, 0.0
  %1909 = vst.msk [vmem:[#allocation2 + $0x8] sm:$0xff] %vm1907, 0.0
  %1910 = vst.msk [vmem:[#allocation2 + $0x10] sm:$0xff] %vm1907, 0.0
  %1911 = vst.msk [vmem:[#allocation2 + $0x18] sm:$0xff] %vm1907, 0.0
  %1912 = vst.msk [vmem:[#allocation2 + $0x20] sm:$0xff] %vm1907, 0.0
  %1913 = vst.msk [vmem:[#allocation2 + $0x28] sm:$0xff] %vm1907, 0.0
  %1914 = vst.msk [vmem:[#allocation2 + $0x30] sm:$0xff] %vm1907, 0.0
  %1915 = vst.msk [vmem:[#allocation2 + $0x138] sm:$0xff] %vm1907, 0.0
  %1916 = vst.msk [vmem:[#allocation2 + $0x140] sm:$0xff] %vm1907, 0.0
  %1917 = vst.msk [vmem:[#allocation2 + $0x148] sm:$0xff] %vm1907, 0.0
  %1918 = vst.msk [vmem:[#allocation2 + $0x150] sm:$0xff] %vm1907, 0.0
  %1919 = vst.msk [vmem:[#allocation2 + $0x158] sm:$0xff] %vm1907, 0.0
  %1920 = vst.msk [vmem:[#allocation2 + $0x160] sm:$0xff] %vm1907, 0.0
  %1921 = vst.msk [vmem:[#allocation2 + $0x168] sm:$0xff] %vm1907, 0.0
  %1922 = vst.msk [vmem:[#allocation2 + $0x170] sm:$0xff] %vm1907, 0.0
  %1923 = vst.msk [vmem:[#allocation2 + $0x278] sm:$0xff] %vm1907, 0.0
  %1924 = vst.msk [vmem:[#allocation2 + $0x280] sm:$0xff] %vm1907, 0.0
  %1925 = vst.msk [vmem:[#allocation2 + $0x288] sm:$0xff] %vm1907, 0.0
  %1926 = vst.msk [vmem:[#allocation2 + $0x290] sm:$0xff] %vm1907, 0.0
  %1927 = vst.msk [vmem:[#allocation2 + $0x298] sm:$0xff] %vm1907, 0.0
  %1928 = vst.msk [vmem:[#allocation2 + $0x2a0] sm:$0xff] %vm1907, 0.0
  %1929 = vst.msk [vmem:[#allocation2 + $0x2a8] sm:$0xff] %vm1907, 0.0
  %1930 = vst.msk [vmem:[#allocation2 + $0x38] sm:$0xff] %vm1907, %v1589
  %1931 = vst.msk [vmem:[#allocation2 + $0x40] sm:$0xff] %vm1907, %v1594
  %1932 = vst.msk [vmem:[#allocation2 + $0x48] sm:$0xff] %vm1907, %v1599
  %1933 = vst.msk [vmem:[#allocation2 + $0x50] sm:$0xff] %vm1907, %v1604
  %1934 = vst.msk [vmem:[#allocation2 + $0x58] sm:$0xff] %vm1907, %v1609
  %1935 = vst.msk [vmem:[#allocation2 + $0x60] sm:$0xff] %vm1907, %v1614
  %1936 = vst.msk [vmem:[#allocation2 + $0x68] sm:$0xff] %vm1907, %v1619
  %1937 = vst.msk [vmem:[#allocation2 + $0x70] sm:$0xff] %vm1907, %v1624
  %1938 = vst.msk [vmem:[#allocation2 + $0x78] sm:$0xff] %vm1907, %v1629
  %1939 = vst.msk [vmem:[#allocation2 + $0x80] sm:$0xff] %vm1907, %v1634
  %1940 = vst.msk [vmem:[#allocation2 + $0x88] sm:$0xff] %vm1907, %v1639
  %1941 = vst.msk [vmem:[#allocation2 + $0x90] sm:$0xff] %vm1907, %v1644
  %1942 = vst.msk [vmem:[#allocation2 + $0x98] sm:$0xff] %vm1907, %v1649
  %1943 = vst.msk [vmem:[#allocation2 + $0xa0] sm:$0xff] %vm1907, %v1654
  %1944 = vst.msk [vmem:[#allocation2 + $0xa8] sm:$0xff] %vm1907, %v1659
  %1945 = vst.msk [vmem:[#allocation2 + $0xb0] sm:$0xff] %vm1907, %v1664
  %1946 = vst.msk [vmem:[#allocation2 + $0xb8] sm:$0xff] %vm1907, %v1669
  %1947 = vst.msk [vmem:[#allocation2 + $0xc0] sm:$0xff] %vm1907, %v1674
  %1948 = vst.msk [vmem:[#allocation2 + $0xc8] sm:$0xff] %vm1907, %v1679
  %1949 = vst.msk [vmem:[#allocation2 + $0xd0] sm:$0xff] %vm1907, %v1684
  %1950 = vst.msk [vmem:[#allocation2 + $0xd8] sm:$0xff] %vm1907, %v1689
  %1951 = vst.msk [vmem:[#allocation2 + $0xe0] sm:$0xff] %vm1907, %v1694
  %1952 = vst.msk [vmem:[#allocation2 + $0xe8] sm:$0xff] %vm1907, %v1699
  %1953 = vst.msk [vmem:[#allocation2 + $0xf0] sm:$0xff] %vm1907, %v1704
  %1954 = vst.msk [vmem:[#allocation2 + $0xf8] sm:$0xff] %vm1907, %v1709
  %1955 = vst.msk [vmem:[#allocation2 + $0x100] sm:$0xff] %vm1907, %v1714
  %1956 = vst.msk [vmem:[#allocation2 + $0x108] sm:$0xff] %vm1907, %v1719
  %1957 = vst.msk [vmem:[#allocation2 + $0x110] sm:$0xff] %vm1907, %v1724
  %1958 = vst.msk [vmem:[#allocation2 + $0x118] sm:$0xff] %vm1907, %v1729
  %1959 = vst.msk [vmem:[#allocation2 + $0x120] sm:$0xff] %vm1907, %v1734
  %1960 = vst.msk [vmem:[#allocation2 + $0x128] sm:$0xff] %vm1907, %v1739
  %1961 = vst.msk [vmem:[#allocation2 + $0x130] sm:$0xff] %vm1907, %v1744
  %1962 = vst.msk [vmem:[#allocation2 + $0x178] sm:$0xff] %vm1907, %v1749
  %1963 = vst.msk [vmem:[#allocation2 + $0x180] sm:$0xff] %vm1907, %v1754
  %1964 = vst.msk [vmem:[#allocation2 + $0x188] sm:$0xff] %vm1907, %v1759
  %1965 = vst.msk [vmem:[#allocation2 + $0x190] sm:$0xff] %vm1907, %v1764
  %1966 = vst.msk [vmem:[#allocation2 + $0x198] sm:$0xff] %vm1907, %v1769
  %1967 = vst.msk [vmem:[#allocation2 + $0x1a0] sm:$0xff] %vm1907, %v1774
  %1968 = vst.msk [vmem:[#allocation2 + $0x1a8] sm:$0xff] %vm1907, %v1779
  %1969 = vst.msk [vmem:[#allocation2 + $0x1b0] sm:$0xff] %vm1907, %v1784
  %1970 = vst.msk [vmem:[#allocation2 + $0x1b8] sm:$0xff] %vm1907, %v1789
  %1971 = vst.msk [vmem:[#allocation2 + $0x1c0] sm:$0xff] %vm1907, %v1794
  %1972 = vst.msk [vmem:[#allocation2 + $0x1c8] sm:$0xff] %vm1907, %v1799
  %1973 = vst.msk [vmem:[#allocation2 + $0x1d0] sm:$0xff] %vm1907, %v1804
  %1974 = vst.msk [vmem:[#allocation2 + $0x1d8] sm:$0xff] %vm1907, %v1809
  %1975 = vst.msk [vmem:[#allocation2 + $0x1e0] sm:$0xff] %vm1907, %v1814
  %1976 = vst.msk [vmem:[#allocation2 + $0x1e8] sm:$0xff] %vm1907, %v1819
  %1977 = vst.msk [vmem:[#allocation2 + $0x1f0] sm:$0xff] %vm1907, %v1824
  %1978 = vst.msk [vmem:[#allocation2 + $0x1f8] sm:$0xff] %vm1907, %v1829
  %1979 = vst.msk [vmem:[#allocation2 + $0x200] sm:$0xff] %vm1907, %v1834
  %1980 = vst.msk [vmem:[#allocation2 + $0x208] sm:$0xff] %vm1907, %v1839
  %1981 = vst.msk [vmem:[#allocation2 + $0x210] sm:$0xff] %vm1907, %v1844
  %1982 = vst.msk [vmem:[#allocation2 + $0x218] sm:$0xff] %vm1907, %v1849
  %1983 = vst.msk [vmem:[#allocation2 + $0x220] sm:$0xff] %vm1907, %v1854
  %1984 = vst.msk [vmem:[#allocation2 + $0x228] sm:$0xff] %vm1907, %v1859
  %1985 = vst.msk [vmem:[#allocation2 + $0x230] sm:$0xff] %vm1907, %v1864
  %1986 = vst.msk [vmem:[#allocation2 + $0x238] sm:$0xff] %vm1907, %v1869
  %1987 = vst.msk [vmem:[#allocation2 + $0x240] sm:$0xff] %vm1907, %v1874
  %1988 = vst.msk [vmem:[#allocation2 + $0x248] sm:$0xff] %vm1907, %v1879
  %1989 = vst.msk [vmem:[#allocation2 + $0x250] sm:$0xff] %vm1907, %v1884
  %1990 = vst.msk [vmem:[#allocation2 + $0x258] sm:$0xff] %vm1907, %v1889
  %1991 = vst.msk [vmem:[#allocation2 + $0x260] sm:$0xff] %vm1907, %v1894
  %1992 = vst.msk [vmem:[#allocation2 + $0x268] sm:$0xff] %vm1907, %v1899
  %1993 = vst.msk [vmem:[#allocation2 + $0x270] sm:$0xff] %vm1907, %v1904
  %v1994 = vld [vmem:[%s3] sm:$0xff]
  %v1995 = vld [vmem:[%s3 + $0x8] sm:$0xff]
  %v1996 = vld [vmem:[%s3 + $0x10] sm:$0xff]
  %v1997 = vld [vmem:[%s3 + $0x18] sm:$0xff]
  %v1998 = vld [vmem:[%s3 + $0x20] sm:$0xff]
  %v1999 = vld [vmem:[%s3 + $0x28] sm:$0xff]
  %v2000 = vld [vmem:[%s3 + $0x30] sm:$0x1]
  %v2001 = vld [vmem:[%s6] sm:$0xff]
  %v2002 = vld [vmem:[%s6 + $0x8] sm:$0xff]
  %v2003 = vld [vmem:[%s6 + $0x10] sm:$0xff]
  %v2004 = vld [vmem:[%s6 + $0x18] sm:$0xff]
  %v2005 = vld [vmem:[%s6 + $0x20] sm:$0xff]
  %v2006 = vld [vmem:[%s6 + $0x28] sm:$0xff]
  %v2007 = vld [vmem:[%s6 + $0x30] sm:$0xff]
  %v2008 = vld [vmem:[%s6 + $0x38] sm:$0xff]
  %v2009 = vld [vmem:[%s6 + $0x40] sm:$0xff]
  %v2010 = vld [vmem:[%s6 + $0x48] sm:$0xff]
  %v2011 = vld [vmem:[%s6 + $0x50] sm:$0xff]
  %v2012 = vld [vmem:[%s6 + $0x58] sm:$0xff]
  %v2013 = vld [vmem:[%s6 + $0x60] sm:$0xff]
  %v2014 = vld [vmem:[%s6 + $0x68] sm:$0xff]
  %v2015 = vld [vmem:[%s6 + $0x70] sm:$0xff]
  %v2016 = vld [vmem:[%s6 + $0x78] sm:$0xff]
  %v2017 = vld [vmem:[%s6 + $0x80] sm:$0xff]
  %v2018 = vld [vmem:[%s6 + $0x88] sm:$0xff]
  %v2019 = vld [vmem:[%s6 + $0x90] sm:$0xff]
  %v2020 = vld [vmem:[%s6 + $0x98] sm:$0xff]
  %v2021 = vld [vmem:[%s6 + $0xa0] sm:$0xff]
  %v2022 = vld [vmem:[%s6 + $0xa8] sm:$0xff]
  %v2023 = vld [vmem:[%s6 + $0xb0] sm:$0xff]
  %v2024 = vld [vmem:[%s6 + $0xb8] sm:$0xff]
  %v2025 = vld [vmem:[%s6 + $0xc0] sm:$0xff]
  %v2026 = vld [vmem:[%s6 + $0xc8] sm:$0xff]
  %v2027 = vld [vmem:[%s6 + $0xd0] sm:$0xff]
  %v2028 = vld [vmem:[%s6 + $0xd8] sm:$0xff]
  %v2029 = vld [vmem:[%s6 + $0xe0] sm:$0xff]
  %v2030 = vld [vmem:[%s6 + $0xe8] sm:$0xff]
  %v2031 = vld [vmem:[%s6 + $0xf0] sm:$0xff]
  %v2032 = vld [vmem:[%s6 + $0xf8] sm:$0xff]
  %v2033 = vld [vmem:[%s6 + $0x100] sm:$0xff]
  %v2034 = vld [vmem:[%s6 + $0x108] sm:$0xff]
  %v2035 = vld [vmem:[%s6 + $0x110] sm:$0xff]
  %v2036 = vld [vmem:[%s6 + $0x118] sm:$0xff]
  %v2037 = vld [vmem:[%s6 + $0x120] sm:$0xff]
  %v2038 = vld [vmem:[%s6 + $0x128] sm:$0xff]
  %v2039 = vld [vmem:[%s6 + $0x130] sm:$0xff]
  %v2040 = vld [vmem:[%s6 + $0x138] sm:$0xff]
  %v2041 = vld [vmem:[%s6 + $0x140] sm:$0xff]
  %v2042 = vld [vmem:[%s6 + $0x148] sm:$0xff]
  %v2043 = vld [vmem:[%s6 + $0x150] sm:$0xff]
  %v2044 = vld [vmem:[%s6 + $0x158] sm:$0xff]
  %v2045 = vld [vmem:[%s6 + $0x160] sm:$0xff]
  %v2046 = vld [vmem:[%s6 + $0x168] sm:$0xff]
  %v2047 = vld [vmem:[%s6 + $0x170] sm:$0xff]
  %v2048 = vld [vmem:[%s6 + $0x178] sm:$0xff]
  %v2049 = vld [vmem:[%s6 + $0x180] sm:$0xff]
  %v2050 = vld [vmem:[%s6 + $0x188] sm:$0xff]
  %v2051 = vld [vmem:[%s6 + $0x190] sm:$0xff]
  %v2052 = vld [vmem:[%s6 + $0x198] sm:$0xff]
  %v2053 = vld [vmem:[%s6 + $0x1a0] sm:$0xff]
  %v2054 = vld [vmem:[%s6 + $0x1a8] sm:$0xff]
  %v2055 = vld [vmem:[%s6 + $0x1b0] sm:$0xff]
  %v2056 = vld [vmem:[%s6 + $0x1b8] sm:$0xff]
  %v2057 = vld [vmem:[%s6 + $0x1c0] sm:$0xff]
  %v2058 = vld [vmem:[%s6 + $0x1c8] sm:$0xff]
  %v2059 = vld [vmem:[%s6 + $0x1d0] sm:$0xff]
  %v2060 = vld [vmem:[%s6 + $0x1d8] sm:$0xff]
  %v2061 = vld [vmem:[%s6 + $0x1e0] sm:$0xff]
  %v2062 = vld [vmem:[%s6 + $0x1e8] sm:$0xff]
  %v2063 = vld [vmem:[%s6 + $0x1f0] sm:$0xff]
  %v2064 = vld [vmem:[%s6 + $0x1f8] sm:$0xff]
  %v2065 = vld [vmem:[%s6 + $0x200] sm:$0xff]
  %v2066 = vld [vmem:[%s6 + $0x208] sm:$0xff]
  %v2067 = vld [vmem:[%s6 + $0x210] sm:$0xff]
  %v2068 = vld [vmem:[%s6 + $0x218] sm:$0xff]
  %v2069 = vld [vmem:[%s6 + $0x220] sm:$0xff]
  %v2070 = vld [vmem:[%s6 + $0x228] sm:$0xff]
  %v2071 = vld [vmem:[%s6 + $0x230] sm:$0xff]
  %v2072 = vld [vmem:[%s6 + $0x238] sm:$0xff]
  %v2073 = vld [vmem:[%s6 + $0x240] sm:$0xff]
  %v2074 = vld [vmem:[%s6 + $0x248] sm:$0xff]
  %v2075 = vld [vmem:[%s6 + $0x250] sm:$0xff]
  %v2076 = vld [vmem:[%s6 + $0x258] sm:$0xff]
  %v2077 = vld [vmem:[%s6 + $0x260] sm:$0xff]
  %v2078 = vld [vmem:[%s6 + $0x268] sm:$0xff]
  %v2079 = vld [vmem:[%s6 + $0x270] sm:$0xff]
  %v2080 = vld [vmem:[%s6 + $0x278] sm:$0xff]
  %v2081 = vld [vmem:[%s6 + $0x280] sm:$0xff]
  %v2082 = vld [vmem:[%s6 + $0x288] sm:$0xff]
  %v2083 = vld [vmem:[%s6 + $0x290] sm:$0xff]
  %v2084 = vld [vmem:[%s6 + $0x298] sm:$0xff]
  %v2085 = vld [vmem:[%s6 + $0x2a0] sm:$0xff]
  %v2086 = vld [vmem:[%s6 + $0x2a8] sm:$0xff]
  %v2087 = vld [vmem:[%s6 + $0x2b0] sm:$0xff]
  %v2088 = vld [vmem:[%s6 + $0x2b8] sm:$0xff]
  %v2089 = vld [vmem:[%s6 + $0x2c0] sm:$0xff]
  %v2090 = vld [vmem:[%s6 + $0x2c8] sm:$0xff]
  %v2091 = vld [vmem:[%s6 + $0x2d0] sm:$0xff]
  %v2092 = vld [vmem:[%s6 + $0x2d8] sm:$0xff]
  %v2093 = vld [vmem:[%s6 + $0x2e0] sm:$0xff]
  %v2094 = vld [vmem:[%s6 + $0x2e8] sm:$0xff]
  %v2095 = vld [vmem:[%s6 + $0x2f0] sm:$0xff]
  %v2096 = vld [vmem:[%s6 + $0x2f8] sm:$0xff]
  %v2097 = vld [vmem:[%s6 + $0x400] sm:$0xff]
  %v2098 = vld [vmem:[%s6 + $0x408] sm:$0xff]
  %v2099 = vld [vmem:[%s6 + $0x410] sm:$0xff]
  %v2100 = vld [vmem:[%s6 + $0x418] sm:$0xff]
  %v2101 = vld [vmem:[%s6 + $0x420] sm:$0xff]
  %v2102 = vld [vmem:[%s6 + $0x428] sm:$0xff]
  %v2103 = vld [vmem:[%s6 + $0x430] sm:$0xff]
  %v2104 = vld [vmem:[%s6 + $0x438] sm:$0xff]
  %v2105 = vld [vmem:[%s6 + $0x440] sm:$0xff]
  %v2106 = vld [vmem:[%s6 + $0x448] sm:$0xff]
  %v2107 = vld [vmem:[%s6 + $0x450] sm:$0xff]
  %v2108 = vld [vmem:[%s6 + $0x458] sm:$0xff]
  %v2109 = vld [vmem:[%s6 + $0x460] sm:$0xff]
  %v2110 = vld [vmem:[%s6 + $0x468] sm:$0xff]
  %v2111 = vld [vmem:[%s6 + $0x470] sm:$0xff]
  %v2112 = vld [vmem:[%s6 + $0x478] sm:$0xff]
  %v2113 = vld [vmem:[%s6 + $0x480] sm:$0xff]
  %v2114 = vld [vmem:[%s6 + $0x488] sm:$0xff]
  %v2115 = vld [vmem:[%s6 + $0x490] sm:$0xff]
  %v2116 = vld [vmem:[%s6 + $0x498] sm:$0xff]
  %v2117 = vld [vmem:[%s6 + $0x4a0] sm:$0xff]
  %v2118 = vld [vmem:[%s6 + $0x4a8] sm:$0xff]
  %v2119 = vld [vmem:[%s6 + $0x4b0] sm:$0xff]
  %v2120 = vld [vmem:[%s6 + $0x4b8] sm:$0xff]
  %v2121 = vld [vmem:[%s6 + $0x4c0] sm:$0xff]
  %v2122 = vld [vmem:[%s6 + $0x4c8] sm:$0xff]
  %v2123 = vld [vmem:[%s6 + $0x4d0] sm:$0xff]
  %v2124 = vld [vmem:[%s6 + $0x4d8] sm:$0xff]
  %v2125 = vld [vmem:[%s6 + $0x4e0] sm:$0xff]
  %v2126 = vld [vmem:[%s6 + $0x4e8] sm:$0xff]
  %v2127 = vld [vmem:[%s6 + $0x4f0] sm:$0xff]
  %v2128 = vld [vmem:[%s6 + $0x4f8] sm:$0xff]
  %v2129 = vld [vmem:[%s6 + $0x500] sm:$0xff]
  %v2130 = vld [vmem:[%s6 + $0x508] sm:$0xff]
  %v2131 = vld [vmem:[%s6 + $0x510] sm:$0xff]
  %v2132 = vld [vmem:[%s6 + $0x518] sm:$0xff]
  %v2133 = vld [vmem:[%s6 + $0x520] sm:$0xff]
  %v2134 = vld [vmem:[%s6 + $0x528] sm:$0xff]
  %v2135 = vld [vmem:[%s6 + $0x530] sm:$0xff]
  %v2136 = vld [vmem:[%s6 + $0x538] sm:$0xff]
  %v2137 = vld [vmem:[%s6 + $0x540] sm:$0xff]
  %v2138 = vld [vmem:[%s6 + $0x548] sm:$0xff]
  %v2139 = vld [vmem:[%s6 + $0x550] sm:$0xff]
  %v2140 = vld [vmem:[%s6 + $0x558] sm:$0xff]
  %v2141 = vld [vmem:[%s6 + $0x560] sm:$0xff]
  %v2142 = vld [vmem:[%s6 + $0x568] sm:$0xff]
  %v2143 = vld [vmem:[%s6 + $0x570] sm:$0xff]
  %v2144 = vld [vmem:[%s6 + $0x578] sm:$0xff]
  %v2145 = vld [vmem:[%s6 + $0x580] sm:$0xff]
  %v2146 = vld [vmem:[%s6 + $0x588] sm:$0xff]
  %v2147 = vld [vmem:[%s6 + $0x590] sm:$0xff]
  %v2148 = vld [vmem:[%s6 + $0x598] sm:$0xff]
  %v2149 = vld [vmem:[%s6 + $0x5a0] sm:$0xff]
  %v2150 = vld [vmem:[%s6 + $0x5a8] sm:$0xff]
  %v2151 = vld [vmem:[%s6 + $0x5b0] sm:$0xff]
  %v2152 = vld [vmem:[%s6 + $0x5b8] sm:$0xff]
  %v2153 = vld [vmem:[%s6 + $0x5c0] sm:$0xff]
  %v2154 = vld [vmem:[%s6 + $0x5c8] sm:$0xff]
  %v2155 = vld [vmem:[%s6 + $0x5d0] sm:$0xff]
  %v2156 = vld [vmem:[%s6 + $0x5d8] sm:$0xff]
  %v2157 = vld [vmem:[%s6 + $0x5e0] sm:$0xff]
  %v2158 = vld [vmem:[%s6 + $0x5e8] sm:$0xff]
  %v2159 = vld [vmem:[%s6 + $0x5f0] sm:$0xff]
  %v2160 = vld [vmem:[%s6 + $0x5f8] sm:$0xff]
  %v2161 = vld [vmem:[%s6 + $0x600] sm:$0xff]
  %v2162 = vld [vmem:[%s6 + $0x608] sm:$0xff]
  %v2163 = vld [vmem:[%s6 + $0x610] sm:$0xff]
  %v2164 = vld [vmem:[%s6 + $0x618] sm:$0xff]
  %v2165 = vld [vmem:[%s6 + $0x620] sm:$0xff]
  %v2166 = vld [vmem:[%s6 + $0x628] sm:$0xff]
  %v2167 = vld [vmem:[%s6 + $0x630] sm:$0xff]
  %v2168 = vld [vmem:[%s6 + $0x638] sm:$0xff]
  %v2169 = vld [vmem:[%s6 + $0x640] sm:$0xff]
  %v2170 = vld [vmem:[%s6 + $0x648] sm:$0xff]
  %v2171 = vld [vmem:[%s6 + $0x650] sm:$0xff]
  %v2172 = vld [vmem:[%s6 + $0x658] sm:$0xff]
  %v2173 = vld [vmem:[%s6 + $0x660] sm:$0xff]
  %v2174 = vld [vmem:[%s6 + $0x668] sm:$0xff]
  %v2175 = vld [vmem:[%s6 + $0x670] sm:$0xff]
  %v2176 = vld [vmem:[%s6 + $0x678] sm:$0xff]
  %v2177 = vld [vmem:[%s6 + $0x680] sm:$0xff]
  %v2178 = vld [vmem:[%s6 + $0x688] sm:$0xff]
  %v2179 = vld [vmem:[%s6 + $0x690] sm:$0xff]
  %v2180 = vld [vmem:[%s6 + $0x698] sm:$0xff]
  %v2181 = vld [vmem:[%s6 + $0x6a0] sm:$0xff]
  %v2182 = vld [vmem:[%s6 + $0x6a8] sm:$0xff]
  %v2183 = vld [vmem:[%s6 + $0x6b0] sm:$0xff]
  %v2184 = vld [vmem:[%s6 + $0x6b8] sm:$0xff]
  %v2185 = vld [vmem:[%s6 + $0x6c0] sm:$0xff]
  %v2186 = vld [vmem:[%s6 + $0x6c8] sm:$0xff]
  %v2187 = vld [vmem:[%s6 + $0x6d0] sm:$0xff]
  %v2188 = vld [vmem:[%s6 + $0x6d8] sm:$0xff]
  %v2189 = vld [vmem:[%s6 + $0x6e0] sm:$0xff]
  %v2190 = vld [vmem:[%s6 + $0x6e8] sm:$0xff]
  %v2191 = vld [vmem:[%s6 + $0x6f0] sm:$0xff]
  %v2192 = vld [vmem:[%s6 + $0x6f8] sm:$0xff]
  %v2193 = vld [vmem:[#allocation2 + $0x5] sm:$0xff]
  %v2194 = vld [vmem:[#allocation2 + $0xd] sm:$0xff]
  %v2195 = vld [vmem:[#allocation2 + $0x15] sm:$0xff]
  %v2196 = vld [vmem:[#allocation2 + $0x1d] sm:$0xff]
  %v2197 = vld [vmem:[#allocation2 + $0x25] sm:$0xff]
  %v2198 = vld [vmem:[#allocation2 + $0x2d] sm:$0xff]
  %v2199 = vld [vmem:[#allocation2 + $0x35] sm:$0xff]
  %v2200 = vld [vmem:[#allocation2 + $0x3d] sm:$0xff]
  %v2201 = vld [vmem:[#allocation2 + $0x45] sm:$0xff]
  %v2202 = vld [vmem:[#allocation2 + $0x4d] sm:$0xff]
  %v2203 = vld [vmem:[#allocation2 + $0x55] sm:$0xff]
  %v2204 = vld [vmem:[#allocation2 + $0x5d] sm:$0xff]
  %v2205 = vld [vmem:[#allocation2 + $0x65] sm:$0xff]
  %v2206 = vld [vmem:[#allocation2 + $0x6d] sm:$0xff]
  %v2207 = vld [vmem:[#allocation2 + $0x75] sm:$0xff]
  %v2208 = vld [vmem:[#allocation2 + $0x7d] sm:$0xff]
  %v2209 = vld [vmem:[#allocation2 + $0x85] sm:$0xff]
  %v2210 = vld [vmem:[#allocation2 + $0x8d] sm:$0xff]
  %v2211 = vld [vmem:[#allocation2 + $0x95] sm:$0xff]
  %v2212 = vld [vmem:[#allocation2 + $0x9d] sm:$0xff]
  %v2213 = vld [vmem:[#allocation2 + $0xa5] sm:$0xff]
  %v2214 = vld [vmem:[#allocation2 + $0xad] sm:$0xff]
  %v2215 = vld [vmem:[#allocation2 + $0xb5] sm:$0xff]
  %v2216 = vld [vmem:[#allocation2 + $0xbd] sm:$0xff]
  %v2217 = vld [vmem:[#allocation2 + $0xc5] sm:$0xff]
  %v2218 = vld [vmem:[#allocation2 + $0xcd] sm:$0xff]
  %v2219 = vld [vmem:[#allocation2 + $0xd5] sm:$0xff]
  %v2220 = vld [vmem:[#allocation2 + $0xdd] sm:$0xff]
  %v2221 = vld [vmem:[#allocation2 + $0xe5] sm:$0xff]
  %v2222 = vld [vmem:[#allocation2 + $0xed] sm:$0xff]
  %v2223 = vld [vmem:[#allocation2 + $0xf5] sm:$0xff]
  %v2224 = vld [vmem:[#allocation2 + $0xfd] sm:$0xff]
  %v2225 = vlaneseq
  %v2226 = vshrl.u32 %v2225, 7
  %v2227 = vsub.s32 0, %v2226
  %v2228 = vrot.slane %v1994, %v2227
  %v2229 = vmul.f32 %v2193, %v2228
  %v2230 = vmul.f32 %v2194, %v2228
  %v2231 = vmul.f32 %v2195, %v2228
  %v2232 = vmul.f32 %v2196, %v2228
  %v2233 = vmul.f32 %v2197, %v2228
  %v2234 = vmul.f32 %v2198, %v2228
  %v2235 = vmul.f32 %v2199, %v2228
  %v2236 = vmul.f32 %v2200, %v2228
  %v2237 = vmul.f32 %v2201, %v2228
  %v2238 = vmul.f32 %v2202, %v2228
  %v2239 = vmul.f32 %v2203, %v2228
  %v2240 = vmul.f32 %v2204, %v2228
  %v2241 = vmul.f32 %v2205, %v2228
  %v2242 = vmul.f32 %v2206, %v2228
  %v2243 = vmul.f32 %v2207, %v2228
  %v2244 = vmul.f32 %v2208, %v2228
  %v2245 = vmul.f32 %v2209, %v2228
  %v2246 = vmul.f32 %v2210, %v2228
  %v2247 = vmul.f32 %v2211, %v2228
  %v2248 = vmul.f32 %v2212, %v2228
  %v2249 = vmul.f32 %v2213, %v2228
  %v2250 = vmul.f32 %v2214, %v2228
  %v2251 = vmul.f32 %v2215, %v2228
  %v2252 = vmul.f32 %v2216, %v2228
  %v2253 = vmul.f32 %v2217, %v2228
  %v2254 = vmul.f32 %v2218, %v2228
  %v2255 = vmul.f32 %v2219, %v2228
  %v2256 = vmul.f32 %v2220, %v2228
  %v2257 = vmul.f32 %v2221, %v2228
  %v2258 = vmul.f32 %v2222, %v2228
  %v2259 = vmul.f32 %v2223, %v2228
  %v2260 = vmul.f32 %v2224, %v2228
  %v2261 = vld [vmem:[#allocation2 + $0x105] sm:$0xff]
  %v2262 = vld [vmem:[#allocation2 + $0x10d] sm:$0xff]
  %v2263 = vlaneseq
  %v2264 = vshrl.u32 %v2263, 7
  %v2265 = vsub.s32 7, %v2264
  %v2266 = vrot.slane %v1994, %v2265
  %v2267 = vmul.f32 %v2195, %v2266
  %v2268 = vmul.f32 %v2196, %v2266
  %v2269 = vmul.f32 %v2197, %v2266
  %v2270 = vmul.f32 %v2198, %v2266
  %v2271 = vmul.f32 %v2199, %v2266
  %v2272 = vmul.f32 %v2200, %v2266
  %v2273 = vmul.f32 %v2201, %v2266
  %v2274 = vmul.f32 %v2202, %v2266
  %v2275 = vmul.f32 %v2203, %v2266
  %v2276 = vmul.f32 %v2204, %v2266
  %v2277 = vmul.f32 %v2205, %v2266
  %v2278 = vmul.f32 %v2206, %v2266
  %v2279 = vmul.f32 %v2207, %v2266
  %v2280 = vmul.f32 %v2208, %v2266
  %v2281 = vmul.f32 %v2209, %v2266
  %v2282 = vmul.f32 %v2210, %v2266
  %v2283 = vmul.f32 %v2211, %v2266
  %v2284 = vmul.f32 %v2212, %v2266
  %v2285 = vmul.f32 %v2213, %v2266
  %v2286 = vmul.f32 %v2214, %v2266
  %v2287 = vmul.f32 %v2215, %v2266
  %v2288 = vmul.f32 %v2216, %v2266
  %v2289 = vmul.f32 %v2217, %v2266
  %v2290 = vmul.f32 %v2218, %v2266
  %v2291 = vmul.f32 %v2219, %v2266
  %v2292 = vmul.f32 %v2220, %v2266
  %v2293 = vmul.f32 %v2221, %v2266
  %v2294 = vmul.f32 %v2222, %v2266
  %v2295 = vmul.f32 %v2223, %v2266
  %v2296 = vmul.f32 %v2224, %v2266
  %v2297 = vmul.f32 %v2261, %v2266
  %v2298 = vmul.f32 %v2262, %v2266
  %v2299 = vadd.f32 %v2229, %v2267
  %v2300 = vadd.f32 %v2230, %v2268
  %v2301 = vadd.f32 %v2231, %v2269
  %v2302 = vadd.f32 %v2232, %v2270
  %v2303 = vadd.f32 %v2233, %v2271
  %v2304 = vadd.f32 %v2234, %v2272
  %v2305 = vadd.f32 %v2235, %v2273
  %v2306 = vadd.f32 %v2236, %v2274
  %v2307 = vadd.f32 %v2237, %v2275
  %v2308 = vadd.f32 %v2238, %v2276
  %v2309 = vadd.f32 %v2239, %v2277
  %v2310 = vadd.f32 %v2240, %v2278
  %v2311 = vadd.f32 %v2241, %v2279
  %v2312 = vadd.f32 %v2242, %v2280
  %v2313 = vadd.f32 %v2243, %v2281
  %v2314 = vadd.f32 %v2244, %v2282
  %v2315 = vadd.f32 %v2245, %v2283
  %v2316 = vadd.f32 %v2246, %v2284
  %v2317 = vadd.f32 %v2247, %v2285
  %v2318 = vadd.f32 %v2248, %v2286
  %v2319 = vadd.f32 %v2249, %v2287
  %v2320 = vadd.f32 %v2250, %v2288
  %v2321 = vadd.f32 %v2251, %v2289
  %v2322 = vadd.f32 %v2252, %v2290
  %v2323 = vadd.f32 %v2253, %v2291
  %v2324 = vadd.f32 %v2254, %v2292
  %v2325 = vadd.f32 %v2255, %v2293
  %v2326 = vadd.f32 %v2256, %v2294
  %v2327 = vadd.f32 %v2257, %v2295
  %v2328 = vadd.f32 %v2258, %v2296
  %v2329 = vadd.f32 %v2259, %v2297
  %v2330 = vadd.f32 %v2260, %v2298
  %v2331 = vld [vmem:[#allocation2 + $0x115] sm:$0xff]
  %v2332 = vld [vmem:[#allocation2 + $0x11d] sm:$0xff]
  %v2333 = vlaneseq
  %v2334 = vshrl.u32 %v2333, 7
  %v2335 = vsub.s32 6, %v2334
  %v2336 = vrot.slane %v1995, %v2335
  %v2337 = vmul.f32 %v2197, %v2336
  %v2338 = vmul.f32 %v2198, %v2336
  %v2339 = vmul.f32 %v2199, %v2336
  %v2340 = vmul.f32 %v2200, %v2336
  %v2341 = vmul.f32 %v2201, %v2336
  %v2342 = vmul.f32 %v2202, %v2336
  %v2343 = vmul.f32 %v2203, %v2336
  %v2344 = vmul.f32 %v2204, %v2336
  %v2345 = vmul.f32 %v2205, %v2336
  %v2346 = vmul.f32 %v2206, %v2336
  %v2347 = vmul.f32 %v2207, %v2336
  %v2348 = vmul.f32 %v2208, %v2336
  %v2349 = vmul.f32 %v2209, %v2336
  %v2350 = vmul.f32 %v2210, %v2336
  %v2351 = vmul.f32 %v2211, %v2336
  %v2352 = vmul.f32 %v2212, %v2336
  %v2353 = vmul.f32 %v2213, %v2336
  %v2354 = vmul.f32 %v2214, %v2336
  %v2355 = vmul.f32 %v2215, %v2336
  %v2356 = vmul.f32 %v2216, %v2336
  %v2357 = vmul.f32 %v2217, %v2336
  %v2358 = vmul.f32 %v2218, %v2336
  %v2359 = vmul.f32 %v2219, %v2336
  %v2360 = vmul.f32 %v2220, %v2336
  %v2361 = vmul.f32 %v2221, %v2336
  %v2362 = vmul.f32 %v2222, %v2336
  %v2363 = vmul.f32 %v2223, %v2336
  %v2364 = vmul.f32 %v2224, %v2336
  %v2365 = vmul.f32 %v2261, %v2336
  %v2366 = vmul.f32 %v2262, %v2336
  %v2367 = vmul.f32 %v2331, %v2336
  %v2368 = vmul.f32 %v2332, %v2336
  %v2369 = vadd.f32 %v2299, %v2337
  %v2370 = vadd.f32 %v2300, %v2338
  %v2371 = vadd.f32 %v2301, %v2339
  %v2372 = vadd.f32 %v2302, %v2340
  %v2373 = vadd.f32 %v2303, %v2341
  %v2374 = vadd.f32 %v2304, %v2342
  %v2375 = vadd.f32 %v2305, %v2343
  %v2376 = vadd.f32 %v2306, %v2344
  %v2377 = vadd.f32 %v2307, %v2345
  %v2378 = vadd.f32 %v2308, %v2346
  %v2379 = vadd.f32 %v2309, %v2347
  %v2380 = vadd.f32 %v2310, %v2348
  %v2381 = vadd.f32 %v2311, %v2349
  %v2382 = vadd.f32 %v2312, %v2350
  %v2383 = vadd.f32 %v2313, %v2351
  %v2384 = vadd.f32 %v2314, %v2352
  %v2385 = vadd.f32 %v2315, %v2353
  %v2386 = vadd.f32 %v2316, %v2354
  %v2387 = vadd.f32 %v2317, %v2355
  %v2388 = vadd.f32 %v2318, %v2356
  %v2389 = vadd.f32 %v2319, %v2357
  %v2390 = vadd.f32 %v2320, %v2358
  %v2391 = vadd.f32 %v2321, %v2359
  %v2392 = vadd.f32 %v2322, %v2360
  %v2393 = vadd.f32 %v2323, %v2361
  %v2394 = vadd.f32 %v2324, %v2362
  %v2395 = vadd.f32 %v2325, %v2363
  %v2396 = vadd.f32 %v2326, %v2364
  %v2397 = vadd.f32 %v2327, %v2365
  %v2398 = vadd.f32 %v2328, %v2366
  %v2399 = vadd.f32 %v2329, %v2367
  %v2400 = vadd.f32 %v2330, %v2368
  %v2401 = vld [vmem:[#allocation2 + $0x125] sm:$0xff]
  %v2402 = vld [vmem:[#allocation2 + $0x12d] sm:$0xff]
  %v2403 = vlaneseq
  %v2404 = vshrl.u32 %v2403, 7
  %v2405 = vsub.s32 5, %v2404
  %v2406 = vrot.slane %v1996, %v2405
  %v2407 = vmul.f32 %v2199, %v2406
  %v2408 = vmul.f32 %v2200, %v2406
  %v2409 = vmul.f32 %v2201, %v2406
  %v2410 = vmul.f32 %v2202, %v2406
  %v2411 = vmul.f32 %v2203, %v2406
  %v2412 = vmul.f32 %v2204, %v2406
  %v2413 = vmul.f32 %v2205, %v2406
  %v2414 = vmul.f32 %v2206, %v2406
  %v2415 = vmul.f32 %v2207, %v2406
  %v2416 = vmul.f32 %v2208, %v2406
  %v2417 = vmul.f32 %v2209, %v2406
  %v2418 = vmul.f32 %v2210, %v2406
  %v2419 = vmul.f32 %v2211, %v2406
  %v2420 = vmul.f32 %v2212, %v2406
  %v2421 = vmul.f32 %v2213, %v2406
  %v2422 = vmul.f32 %v2214, %v2406
  %v2423 = vmul.f32 %v2215, %v2406
  %v2424 = vmul.f32 %v2216, %v2406
  %v2425 = vmul.f32 %v2217, %v2406
  %v2426 = vmul.f32 %v2218, %v2406
  %v2427 = vmul.f32 %v2219, %v2406
  %v2428 = vmul.f32 %v2220, %v2406
  %v2429 = vmul.f32 %v2221, %v2406
  %v2430 = vmul.f32 %v2222, %v2406
  %v2431 = vmul.f32 %v2223, %v2406
  %v2432 = vmul.f32 %v2224, %v2406
  %v2433 = vmul.f32 %v2261, %v2406
  %v2434 = vmul.f32 %v2262, %v2406
  %v2435 = vmul.f32 %v2331, %v2406
  %v2436 = vmul.f32 %v2332, %v2406
  %v2437 = vmul.f32 %v2401, %v2406
  %v2438 = vmul.f32 %v2402, %v2406
  %v2439 = vadd.f32 %v2369, %v2407
  %v2440 = vadd.f32 %v2370, %v2408
  %v2441 = vadd.f32 %v2371, %v2409
  %v2442 = vadd.f32 %v2372, %v2410
  %v2443 = vadd.f32 %v2373, %v2411
  %v2444 = vadd.f32 %v2374, %v2412
  %v2445 = vadd.f32 %v2375, %v2413
  %v2446 = vadd.f32 %v2376, %v2414
  %v2447 = vadd.f32 %v2377, %v2415
  %v2448 = vadd.f32 %v2378, %v2416
  %v2449 = vadd.f32 %v2379, %v2417
  %v2450 = vadd.f32 %v2380, %v2418
  %v2451 = vadd.f32 %v2381, %v2419
  %v2452 = vadd.f32 %v2382, %v2420
  %v2453 = vadd.f32 %v2383, %v2421
  %v2454 = vadd.f32 %v2384, %v2422
  %v2455 = vadd.f32 %v2385, %v2423
  %v2456 = vadd.f32 %v2386, %v2424
  %v2457 = vadd.f32 %v2387, %v2425
  %v2458 = vadd.f32 %v2388, %v2426
  %v2459 = vadd.f32 %v2389, %v2427
  %v2460 = vadd.f32 %v2390, %v2428
  %v2461 = vadd.f32 %v2391, %v2429
  %v2462 = vadd.f32 %v2392, %v2430
  %v2463 = vadd.f32 %v2393, %v2431
  %v2464 = vadd.f32 %v2394, %v2432
  %v2465 = vadd.f32 %v2395, %v2433
  %v2466 = vadd.f32 %v2396, %v2434
  %v2467 = vadd.f32 %v2397, %v2435
  %v2468 = vadd.f32 %v2398, %v2436
  %v2469 = vadd.f32 %v2399, %v2437
  %v2470 = vadd.f32 %v2400, %v2438
  %v2471 = vld [vmem:[#allocation2 + $0x135] sm:$0xff]
  %v2472 = vld [vmem:[#allocation2 + $0x13d] sm:$0xff]
  %v2473 = vlaneseq
  %v2474 = vshrl.u32 %v2473, 7
  %v2475 = vsub.s32 4, %v2474
  %v2476 = vrot.slane %v1997, %v2475
  %v2477 = vmul.f32 %v2201, %v2476
  %v2478 = vmul.f32 %v2202, %v2476
  %v2479 = vmul.f32 %v2203, %v2476
  %v2480 = vmul.f32 %v2204, %v2476
  %v2481 = vmul.f32 %v2205, %v2476
  %v2482 = vmul.f32 %v2206, %v2476
  %v2483 = vmul.f32 %v2207, %v2476
  %v2484 = vmul.f32 %v2208, %v2476
  %v2485 = vmul.f32 %v2209, %v2476
  %v2486 = vmul.f32 %v2210, %v2476
  %v2487 = vmul.f32 %v2211, %v2476
  %v2488 = vmul.f32 %v2212, %v2476
  %v2489 = vmul.f32 %v2213, %v2476
  %v2490 = vmul.f32 %v2214, %v2476
  %v2491 = vmul.f32 %v2215, %v2476
  %v2492 = vmul.f32 %v2216, %v2476
  %v2493 = vmul.f32 %v2217, %v2476
  %v2494 = vmul.f32 %v2218, %v2476
  %v2495 = vmul.f32 %v2219, %v2476
  %v2496 = vmul.f32 %v2220, %v2476
  %v2497 = vmul.f32 %v2221, %v2476
  %v2498 = vmul.f32 %v2222, %v2476
  %v2499 = vmul.f32 %v2223, %v2476
  %v2500 = vmul.f32 %v2224, %v2476
  %v2501 = vmul.f32 %v2261, %v2476
  %v2502 = vmul.f32 %v2262, %v2476
  %v2503 = vmul.f32 %v2331, %v2476
  %v2504 = vmul.f32 %v2332, %v2476
  %v2505 = vmul.f32 %v2401, %v2476
  %v2506 = vmul.f32 %v2402, %v2476
  %v2507 = vmul.f32 %v2471, %v2476
  %v2508 = vmul.f32 %v2472, %v2476
  %v2509 = vadd.f32 %v2439, %v2477
  %v2510 = vadd.f32 %v2440, %v2478
  %v2511 = vadd.f32 %v2441, %v2479
  %v2512 = vadd.f32 %v2442, %v2480
  %v2513 = vadd.f32 %v2443, %v2481
  %v2514 = vadd.f32 %v2444, %v2482
  %v2515 = vadd.f32 %v2445, %v2483
  %v2516 = vadd.f32 %v2446, %v2484
  %v2517 = vadd.f32 %v2447, %v2485
  %v2518 = vadd.f32 %v2448, %v2486
  %v2519 = vadd.f32 %v2449, %v2487
  %v2520 = vadd.f32 %v2450, %v2488
  %v2521 = vadd.f32 %v2451, %v2489
  %v2522 = vadd.f32 %v2452, %v2490
  %v2523 = vadd.f32 %v2453, %v2491
  %v2524 = vadd.f32 %v2454, %v2492
  %v2525 = vadd.f32 %v2455, %v2493
  %v2526 = vadd.f32 %v2456, %v2494
  %v2527 = vadd.f32 %v2457, %v2495
  %v2528 = vadd.f32 %v2458, %v2496
  %v2529 = vadd.f32 %v2459, %v2497
  %v2530 = vadd.f32 %v2460, %v2498
  %v2531 = vadd.f32 %v2461, %v2499
  %v2532 = vadd.f32 %v2462, %v2500
  %v2533 = vadd.f32 %v2463, %v2501
  %v2534 = vadd.f32 %v2464, %v2502
  %v2535 = vadd.f32 %v2465, %v2503
  %v2536 = vadd.f32 %v2466, %v2504
  %v2537 = vadd.f32 %v2467, %v2505
  %v2538 = vadd.f32 %v2468, %v2506
  %v2539 = vadd.f32 %v2469, %v2507
  %v2540 = vadd.f32 %v2470, %v2508
  %v2541 = vld [vmem:[#allocation2 + $0x145] sm:$0xff]
  %v2542 = vld [vmem:[#allocation2 + $0x14d] sm:$0xff]
  %v2543 = vlaneseq
  %v2544 = vshrl.u32 %v2543, 7
  %v2545 = vsub.s32 3, %v2544
  %v2546 = vrot.slane %v1998, %v2545
  %v2547 = vmul.f32 %v2203, %v2546
  %v2548 = vmul.f32 %v2204, %v2546
  %v2549 = vmul.f32 %v2205, %v2546
  %v2550 = vmul.f32 %v2206, %v2546
  %v2551 = vmul.f32 %v2207, %v2546
  %v2552 = vmul.f32 %v2208, %v2546
  %v2553 = vmul.f32 %v2209, %v2546
  %v2554 = vmul.f32 %v2210, %v2546
  %v2555 = vmul.f32 %v2211, %v2546
  %v2556 = vmul.f32 %v2212, %v2546
  %v2557 = vmul.f32 %v2213, %v2546
  %v2558 = vmul.f32 %v2214, %v2546
  %v2559 = vmul.f32 %v2215, %v2546
  %v2560 = vmul.f32 %v2216, %v2546
  %v2561 = vmul.f32 %v2217, %v2546
  %v2562 = vmul.f32 %v2218, %v2546
  %v2563 = vmul.f32 %v2219, %v2546
  %v2564 = vmul.f32 %v2220, %v2546
  %v2565 = vmul.f32 %v2221, %v2546
  %v2566 = vmul.f32 %v2222, %v2546
  %v2567 = vmul.f32 %v2223, %v2546
  %v2568 = vmul.f32 %v2224, %v2546
  %v2569 = vmul.f32 %v2261, %v2546
  %v2570 = vmul.f32 %v2262, %v2546
  %v2571 = vmul.f32 %v2331, %v2546
  %v2572 = vmul.f32 %v2332, %v2546
  %v2573 = vmul.f32 %v2401, %v2546
  %v2574 = vmul.f32 %v2402, %v2546
  %v2575 = vmul.f32 %v2471, %v2546
  %v2576 = vmul.f32 %v2472, %v2546
  %v2577 = vmul.f32 %v2541, %v2546
  %v2578 = vmul.f32 %v2542, %v2546
  %v2579 = vadd.f32 %v2509, %v2547
  %v2580 = vadd.f32 %v2510, %v2548
  %v2581 = vadd.f32 %v2511, %v2549
  %v2582 = vadd.f32 %v2512, %v2550
  %v2583 = vadd.f32 %v2513, %v2551
  %v2584 = vadd.f32 %v2514, %v2552
  %v2585 = vadd.f32 %v2515, %v2553
  %v2586 = vadd.f32 %v2516, %v2554
  %v2587 = vadd.f32 %v2517, %v2555
  %v2588 = vadd.f32 %v2518, %v2556
  %v2589 = vadd.f32 %v2519, %v2557
  %v2590 = vadd.f32 %v2520, %v2558
  %v2591 = vadd.f32 %v2521, %v2559
  %v2592 = vadd.f32 %v2522, %v2560
  %v2593 = vadd.f32 %v2523, %v2561
  %v2594 = vadd.f32 %v2524, %v2562
  %v2595 = vadd.f32 %v2525, %v2563
  %v2596 = vadd.f32 %v2526, %v2564
  %v2597 = vadd.f32 %v2527, %v2565
  %v2598 = vadd.f32 %v2528, %v2566
  %v2599 = vadd.f32 %v2529, %v2567
  %v2600 = vadd.f32 %v2530, %v2568
  %v2601 = vadd.f32 %v2531, %v2569
  %v2602 = vadd.f32 %v2532, %v2570
  %v2603 = vadd.f32 %v2533, %v2571
  %v2604 = vadd.f32 %v2534, %v2572
  %v2605 = vadd.f32 %v2535, %v2573
  %v2606 = vadd.f32 %v2536, %v2574
  %v2607 = vadd.f32 %v2537, %v2575
  %v2608 = vadd.f32 %v2538, %v2576
  %v2609 = vadd.f32 %v2539, %v2577
  %v2610 = vadd.f32 %v2540, %v2578
  %v2611 = vld [vmem:[#allocation2 + $0x155] sm:$0xff]
  %v2612 = vld [vmem:[#allocation2 + $0x15d] sm:$0xff]
  %v2613 = vlaneseq
  %v2614 = vshrl.u32 %v2613, 7
  %v2615 = vsub.s32 2, %v2614
  %v2616 = vrot.slane %v1999, %v2615
  %v2617 = vmul.f32 %v2205, %v2616
  %v2618 = vmul.f32 %v2206, %v2616
  %v2619 = vmul.f32 %v2207, %v2616
  %v2620 = vmul.f32 %v2208, %v2616
  %v2621 = vmul.f32 %v2209, %v2616
  %v2622 = vmul.f32 %v2210, %v2616
  %v2623 = vmul.f32 %v2211, %v2616
  %v2624 = vmul.f32 %v2212, %v2616
  %v2625 = vmul.f32 %v2213, %v2616
  %v2626 = vmul.f32 %v2214, %v2616
  %v2627 = vmul.f32 %v2215, %v2616
  %v2628 = vmul.f32 %v2216, %v2616
  %v2629 = vmul.f32 %v2217, %v2616
  %v2630 = vmul.f32 %v2218, %v2616
  %v2631 = vmul.f32 %v2219, %v2616
  %v2632 = vmul.f32 %v2220, %v2616
  %v2633 = vmul.f32 %v2221, %v2616
  %v2634 = vmul.f32 %v2222, %v2616
  %v2635 = vmul.f32 %v2223, %v2616
  %v2636 = vmul.f32 %v2224, %v2616
  %v2637 = vmul.f32 %v2261, %v2616
  %v2638 = vmul.f32 %v2262, %v2616
  %v2639 = vmul.f32 %v2331, %v2616
  %v2640 = vmul.f32 %v2332, %v2616
  %v2641 = vmul.f32 %v2401, %v2616
  %v2642 = vmul.f32 %v2402, %v2616
  %v2643 = vmul.f32 %v2471, %v2616
  %v2644 = vmul.f32 %v2472, %v2616
  %v2645 = vmul.f32 %v2541, %v2616
  %v2646 = vmul.f32 %v2542, %v2616
  %v2647 = vmul.f32 %v2611, %v2616
  %v2648 = vmul.f32 %v2612, %v2616
  %v2649 = vadd.f32 %v2579, %v2617
  %v2650 = vadd.f32 %v2580, %v2618
  %v2651 = vadd.f32 %v2581, %v2619
  %v2652 = vadd.f32 %v2582, %v2620
  %v2653 = vadd.f32 %v2583, %v2621
  %v2654 = vadd.f32 %v2584, %v2622
  %v2655 = vadd.f32 %v2585, %v2623
  %v2656 = vadd.f32 %v2586, %v2624
  %v2657 = vadd.f32 %v2587, %v2625
  %v2658 = vadd.f32 %v2588, %v2626
  %v2659 = vadd.f32 %v2589, %v2627
  %v2660 = vadd.f32 %v2590, %v2628
  %v2661 = vadd.f32 %v2591, %v2629
  %v2662 = vadd.f32 %v2592, %v2630
  %v2663 = vadd.f32 %v2593, %v2631
  %v2664 = vadd.f32 %v2594, %v2632
  %v2665 = vadd.f32 %v2595, %v2633
  %v2666 = vadd.f32 %v2596, %v2634
  %v2667 = vadd.f32 %v2597, %v2635
  %v2668 = vadd.f32 %v2598, %v2636
  %v2669 = vadd.f32 %v2599, %v2637
  %v2670 = vadd.f32 %v2600, %v2638
  %v2671 = vadd.f32 %v2601, %v2639
  %v2672 = vadd.f32 %v2602, %v2640
  %v2673 = vadd.f32 %v2603, %v2641
  %v2674 = vadd.f32 %v2604, %v2642
  %v2675 = vadd.f32 %v2605, %v2643
  %v2676 = vadd.f32 %v2606, %v2644
  %v2677 = vadd.f32 %v2607, %v2645
  %v2678 = vadd.f32 %v2608, %v2646
  %v2679 = vadd.f32 %v2609, %v2647
  %v2680 = vadd.f32 %v2610, %v2648
  %2682 = vset.pattern.permute.xlu0 0
  %2683 = vperm.xlu0 %2682, %v2001
  %v2684 = vpop.permute.xlu0 %2683
  %2687 = vset.pattern.permute.xlu0 0
  %2688 = vperm.xlu0 %2687, %v2002
  %v2689 = vpop.permute.xlu0 %2688
  %2692 = vset.pattern.permute.xlu0 0
  %2693 = vperm.xlu0 %2692, %v2003
  %v2694 = vpop.permute.xlu0 %2693
  %2697 = vset.pattern.permute.xlu0 0
  %2698 = vperm.xlu0 %2697, %v2004
  %v2699 = vpop.permute.xlu0 %2698
  %2702 = vset.pattern.permute.xlu0 0
  %2703 = vperm.xlu0 %2702, %v2005
  %v2704 = vpop.permute.xlu0 %2703
  %2707 = vset.pattern.permute.xlu0 0
  %2708 = vperm.xlu0 %2707, %v2006
  %v2709 = vpop.permute.xlu0 %2708
  %2712 = vset.pattern.permute.xlu0 0
  %2713 = vperm.xlu0 %2712, %v2007
  %v2714 = vpop.permute.xlu0 %2713
  %2717 = vset.pattern.permute.xlu0 0
  %2718 = vperm.xlu0 %2717, %v2008
  %v2719 = vpop.permute.xlu0 %2718
  %2722 = vset.pattern.permute.xlu0 0
  %2723 = vperm.xlu0 %2722, %v2009
  %v2724 = vpop.permute.xlu0 %2723
  %2727 = vset.pattern.permute.xlu0 0
  %2728 = vperm.xlu0 %2727, %v2010
  %v2729 = vpop.permute.xlu0 %2728
  %2732 = vset.pattern.permute.xlu0 0
  %2733 = vperm.xlu0 %2732, %v2011
  %v2734 = vpop.permute.xlu0 %2733
  %2737 = vset.pattern.permute.xlu0 0
  %2738 = vperm.xlu0 %2737, %v2012
  %v2739 = vpop.permute.xlu0 %2738
  %2742 = vset.pattern.permute.xlu0 0
  %2743 = vperm.xlu0 %2742, %v2013
  %v2744 = vpop.permute.xlu0 %2743
  %2747 = vset.pattern.permute.xlu0 0
  %2748 = vperm.xlu0 %2747, %v2014
  %v2749 = vpop.permute.xlu0 %2748
  %2752 = vset.pattern.permute.xlu0 0
  %2753 = vperm.xlu0 %2752, %v2015
  %v2754 = vpop.permute.xlu0 %2753
  %2757 = vset.pattern.permute.xlu0 0
  %2758 = vperm.xlu0 %2757, %v2016
  %v2759 = vpop.permute.xlu0 %2758
  %2762 = vset.pattern.permute.xlu0 0
  %2763 = vperm.xlu0 %2762, %v2017
  %v2764 = vpop.permute.xlu0 %2763
  %2767 = vset.pattern.permute.xlu0 0
  %2768 = vperm.xlu0 %2767, %v2018
  %v2769 = vpop.permute.xlu0 %2768
  %2772 = vset.pattern.permute.xlu0 0
  %2773 = vperm.xlu0 %2772, %v2019
  %v2774 = vpop.permute.xlu0 %2773
  %2777 = vset.pattern.permute.xlu0 0
  %2778 = vperm.xlu0 %2777, %v2020
  %v2779 = vpop.permute.xlu0 %2778
  %2782 = vset.pattern.permute.xlu0 0
  %2783 = vperm.xlu0 %2782, %v2021
  %v2784 = vpop.permute.xlu0 %2783
  %2787 = vset.pattern.permute.xlu0 0
  %2788 = vperm.xlu0 %2787, %v2022
  %v2789 = vpop.permute.xlu0 %2788
  %2792 = vset.pattern.permute.xlu0 0
  %2793 = vperm.xlu0 %2792, %v2023
  %v2794 = vpop.permute.xlu0 %2793
  %2797 = vset.pattern.permute.xlu0 0
  %2798 = vperm.xlu0 %2797, %v2024
  %v2799 = vpop.permute.xlu0 %2798
  %2802 = vset.pattern.permute.xlu0 0
  %2803 = vperm.xlu0 %2802, %v2025
  %v2804 = vpop.permute.xlu0 %2803
  %2807 = vset.pattern.permute.xlu0 0
  %2808 = vperm.xlu0 %2807, %v2026
  %v2809 = vpop.permute.xlu0 %2808
  %2812 = vset.pattern.permute.xlu0 0
  %2813 = vperm.xlu0 %2812, %v2027
  %v2814 = vpop.permute.xlu0 %2813
  %2817 = vset.pattern.permute.xlu0 0
  %2818 = vperm.xlu0 %2817, %v2028
  %v2819 = vpop.permute.xlu0 %2818
  %2822 = vset.pattern.permute.xlu0 0
  %2823 = vperm.xlu0 %2822, %v2029
  %v2824 = vpop.permute.xlu0 %2823
  %2827 = vset.pattern.permute.xlu0 0
  %2828 = vperm.xlu0 %2827, %v2030
  %v2829 = vpop.permute.xlu0 %2828
  %2832 = vset.pattern.permute.xlu0 0
  %2833 = vperm.xlu0 %2832, %v2031
  %v2834 = vpop.permute.xlu0 %2833
  %2837 = vset.pattern.permute.xlu0 0
  %2838 = vperm.xlu0 %2837, %v2032
  %v2839 = vpop.permute.xlu0 %2838
  %v2841 = vmul.f32 %v2649, %v2684
  %v2842 = vmul.f32 %v2650, %v2689
  %v2843 = vmul.f32 %v2651, %v2694
  %v2844 = vmul.f32 %v2652, %v2699
  %v2845 = vmul.f32 %v2653, %v2704
  %v2846 = vmul.f32 %v2654, %v2709
  %v2847 = vmul.f32 %v2655, %v2714
  %v2848 = vmul.f32 %v2656, %v2719
  %v2849 = vmul.f32 %v2657, %v2724
  %v2850 = vmul.f32 %v2658, %v2729
  %v2851 = vmul.f32 %v2659, %v2734
  %v2852 = vmul.f32 %v2660, %v2739
  %v2853 = vmul.f32 %v2661, %v2744
  %v2854 = vmul.f32 %v2662, %v2749
  %v2855 = vmul.f32 %v2663, %v2754
  %v2856 = vmul.f32 %v2664, %v2759
  %v2857 = vmul.f32 %v2665, %v2764
  %v2858 = vmul.f32 %v2666, %v2769
  %v2859 = vmul.f32 %v2667, %v2774
  %v2860 = vmul.f32 %v2668, %v2779
  %v2861 = vmul.f32 %v2669, %v2784
  %v2862 = vmul.f32 %v2670, %v2789
  %v2863 = vmul.f32 %v2671, %v2794
  %v2864 = vmul.f32 %v2672, %v2799
  %v2865 = vmul.f32 %v2673, %v2804
  %v2866 = vmul.f32 %v2674, %v2809
  %v2867 = vmul.f32 %v2675, %v2814
  %v2868 = vmul.f32 %v2676, %v2819
  %v2869 = vmul.f32 %v2677, %v2824
  %v2870 = vmul.f32 %v2678, %v2829
  %v2871 = vmul.f32 %v2679, %v2834
  %v2872 = vmul.f32 %v2680, %v2839
  %v2873 = vld [vmem:[#allocation2 + $0x6] sm:$0xff]
  %v2874 = vld [vmem:[#allocation2 + $0xe] sm:$0xff]
  %v2875 = vld [vmem:[#allocation2 + $0x16] sm:$0xff]
  %v2876 = vld [vmem:[#allocation2 + $0x1e] sm:$0xff]
  %v2877 = vld [vmem:[#allocation2 + $0x26] sm:$0xff]
  %v2878 = vld [vmem:[#allocation2 + $0x2e] sm:$0xff]
  %v2879 = vld [vmem:[#allocation2 + $0x36] sm:$0xff]
  %v2880 = vld [vmem:[#allocation2 + $0x3e] sm:$0xff]
  %v2881 = vld [vmem:[#allocation2 + $0x46] sm:$0xff]
  %v2882 = vld [vmem:[#allocation2 + $0x4e] sm:$0xff]
  %v2883 = vld [vmem:[#allocation2 + $0x56] sm:$0xff]
  %v2884 = vld [vmem:[#allocation2 + $0x5e] sm:$0xff]
  %v2885 = vld [vmem:[#allocation2 + $0x66] sm:$0xff]
  %v2886 = vld [vmem:[#allocation2 + $0x6e] sm:$0xff]
  %v2887 = vld [vmem:[#allocation2 + $0x76] sm:$0xff]
  %v2888 = vld [vmem:[#allocation2 + $0x7e] sm:$0xff]
  %v2889 = vld [vmem:[#allocation2 + $0x86] sm:$0xff]
  %v2890 = vld [vmem:[#allocation2 + $0x8e] sm:$0xff]
  %v2891 = vld [vmem:[#allocation2 + $0x96] sm:$0xff]
  %v2892 = vld [vmem:[#allocation2 + $0x9e] sm:$0xff]
  %v2893 = vld [vmem:[#allocation2 + $0xa6] sm:$0xff]
  %v2894 = vld [vmem:[#allocation2 + $0xae] sm:$0xff]
  %v2895 = vld [vmem:[#allocation2 + $0xb6] sm:$0xff]
  %v2896 = vld [vmem:[#allocation2 + $0xbe] sm:$0xff]
  %v2897 = vld [vmem:[#allocation2 + $0xc6] sm:$0xff]
  %v2898 = vld [vmem:[#allocation2 + $0xce] sm:$0xff]
  %v2899 = vld [vmem:[#allocation2 + $0xd6] sm:$0xff]
  %v2900 = vld [vmem:[#allocation2 + $0xde] sm:$0xff]
  %v2901 = vld [vmem:[#allocation2 + $0xe6] sm:$0xff]
  %v2902 = vld [vmem:[#allocation2 + $0xee] sm:$0xff]
  %v2903 = vld [vmem:[#allocation2 + $0xf6] sm:$0xff]
  %v2904 = vld [vmem:[#allocation2 + $0xfe] sm:$0xff]
  %v2905 = vlaneseq
  %v2906 = vshrl.u32 %v2905, 7
  %v2907 = vsub.s32 1, %v2906
  %v2908 = vrot.slane %v1994, %v2907
  %v2909 = vmul.f32 %v2873, %v2908
  %v2910 = vmul.f32 %v2874, %v2908
  %v2911 = vmul.f32 %v2875, %v2908
  %v2912 = vmul.f32 %v2876, %v2908
  %v2913 = vmul.f32 %v2877, %v2908
  %v2914 = vmul.f32 %v2878, %v2908
  %v2915 = vmul.f32 %v2879, %v2908
  %v2916 = vmul.f32 %v2880, %v2908
  %v2917 = vmul.f32 %v2881, %v2908
  %v2918 = vmul.f32 %v2882, %v2908
  %v2919 = vmul.f32 %v2883, %v2908
  %v2920 = vmul.f32 %v2884, %v2908
  %v2921 = vmul.f32 %v2885, %v2908
  %v2922 = vmul.f32 %v2886, %v2908
  %v2923 = vmul.f32 %v2887, %v2908
  %v2924 = vmul.f32 %v2888, %v2908
  %v2925 = vmul.f32 %v2889, %v2908
  %v2926 = vmul.f32 %v2890, %v2908
  %v2927 = vmul.f32 %v2891, %v2908
  %v2928 = vmul.f32 %v2892, %v2908
  %v2929 = vmul.f32 %v2893, %v2908
  %v2930 = vmul.f32 %v2894, %v2908
  %v2931 = vmul.f32 %v2895, %v2908
  %v2932 = vmul.f32 %v2896, %v2908
  %v2933 = vmul.f32 %v2897, %v2908
  %v2934 = vmul.f32 %v2898, %v2908
  %v2935 = vmul.f32 %v2899, %v2908
  %v2936 = vmul.f32 %v2900, %v2908
  %v2937 = vmul.f32 %v2901, %v2908
  %v2938 = vmul.f32 %v2902, %v2908
  %v2939 = vmul.f32 %v2903, %v2908
  %v2940 = vmul.f32 %v2904, %v2908
  %v2941 = vld [vmem:[#allocation2 + $0x106] sm:$0xff]
  %v2942 = vld [vmem:[#allocation2 + $0x10e] sm:$0xff]
  %v2943 = vlaneseq
  %v2944 = vshrl.u32 %v2943, 7
  %v2945 = vsub.s32 0, %v2944
  %v2946 = vrot.slane %v1995, %v2945
  %v2947 = vmul.f32 %v2875, %v2946
  %v2948 = vmul.f32 %v2876, %v2946
  %v2949 = vmul.f32 %v2877, %v2946
  %v2950 = vmul.f32 %v2878, %v2946
  %v2951 = vmul.f32 %v2879, %v2946
  %v2952 = vmul.f32 %v2880, %v2946
  %v2953 = vmul.f32 %v2881, %v2946
  %v2954 = vmul.f32 %v2882, %v2946
  %v2955 = vmul.f32 %v2883, %v2946
  %v2956 = vmul.f32 %v2884, %v2946
  %v2957 = vmul.f32 %v2885, %v2946
  %v2958 = vmul.f32 %v2886, %v2946
  %v2959 = vmul.f32 %v2887, %v2946
  %v2960 = vmul.f32 %v2888, %v2946
  %v2961 = vmul.f32 %v2889, %v2946
  %v2962 = vmul.f32 %v2890, %v2946
  %v2963 = vmul.f32 %v2891, %v2946
  %v2964 = vmul.f32 %v2892, %v2946
  %v2965 = vmul.f32 %v2893, %v2946
  %v2966 = vmul.f32 %v2894, %v2946
  %v2967 = vmul.f32 %v2895, %v2946
  %v2968 = vmul.f32 %v2896, %v2946
  %v2969 = vmul.f32 %v2897, %v2946
  %v2970 = vmul.f32 %v2898, %v2946
  %v2971 = vmul.f32 %v2899, %v2946
  %v2972 = vmul.f32 %v2900, %v2946
  %v2973 = vmul.f32 %v2901, %v2946
  %v2974 = vmul.f32 %v2902, %v2946
  %v2975 = vmul.f32 %v2903, %v2946
  %v2976 = vmul.f32 %v2904, %v2946
  %v2977 = vmul.f32 %v2941, %v2946
  %v2978 = vmul.f32 %v2942, %v2946
  %v2979 = vadd.f32 %v2909, %v2947
  %v2980 = vadd.f32 %v2910, %v2948
  %v2981 = vadd.f32 %v2911, %v2949
  %v2982 = vadd.f32 %v2912, %v2950
  %v2983 = vadd.f32 %v2913, %v2951
  %v2984 = vadd.f32 %v2914, %v2952
  %v2985 = vadd.f32 %v2915, %v2953
  %v2986 = vadd.f32 %v2916, %v2954
  %v2987 = vadd.f32 %v2917, %v2955
  %v2988 = vadd.f32 %v2918, %v2956
  %v2989 = vadd.f32 %v2919, %v2957
  %v2990 = vadd.f32 %v2920, %v2958
  %v2991 = vadd.f32 %v2921, %v2959
  %v2992 = vadd.f32 %v2922, %v2960
  %v2993 = vadd.f32 %v2923, %v2961
  %v2994 = vadd.f32 %v2924, %v2962
  %v2995 = vadd.f32 %v2925, %v2963
  %v2996 = vadd.f32 %v2926, %v2964
  %v2997 = vadd.f32 %v2927, %v2965
  %v2998 = vadd.f32 %v2928, %v2966
  %v2999 = vadd.f32 %v2929, %v2967
  %v3000 = vadd.f32 %v2930, %v2968
  %v3001 = vadd.f32 %v2931, %v2969
  %v3002 = vadd.f32 %v2932, %v2970
  %v3003 = vadd.f32 %v2933, %v2971
  %v3004 = vadd.f32 %v2934, %v2972
  %v3005 = vadd.f32 %v2935, %v2973
  %v3006 = vadd.f32 %v2936, %v2974
  %v3007 = vadd.f32 %v2937, %v2975
  %v3008 = vadd.f32 %v2938, %v2976
  %v3009 = vadd.f32 %v2939, %v2977
  %v3010 = vadd.f32 %v2940, %v2978
  %v3011 = vld [vmem:[#allocation2 + $0x116] sm:$0xff]
  %v3012 = vld [vmem:[#allocation2 + $0x11e] sm:$0xff]
  %v3013 = vlaneseq
  %v3014 = vshrl.u32 %v3013, 7
  %v3015 = vsub.s32 7, %v3014
  %v3016 = vrot.slane %v1995, %v3015
  %v3017 = vmul.f32 %v2877, %v3016
  %v3018 = vmul.f32 %v2878, %v3016
  %v3019 = vmul.f32 %v2879, %v3016
  %v3020 = vmul.f32 %v2880, %v3016
  %v3021 = vmul.f32 %v2881, %v3016
  %v3022 = vmul.f32 %v2882, %v3016
  %v3023 = vmul.f32 %v2883, %v3016
  %v3024 = vmul.f32 %v2884, %v3016
  %v3025 = vmul.f32 %v2885, %v3016
  %v3026 = vmul.f32 %v2886, %v3016
  %v3027 = vmul.f32 %v2887, %v3016
  %v3028 = vmul.f32 %v2888, %v3016
  %v3029 = vmul.f32 %v2889, %v3016
  %v3030 = vmul.f32 %v2890, %v3016
  %v3031 = vmul.f32 %v2891, %v3016
  %v3032 = vmul.f32 %v2892, %v3016
  %v3033 = vmul.f32 %v2893, %v3016
  %v3034 = vmul.f32 %v2894, %v3016
  %v3035 = vmul.f32 %v2895, %v3016
  %v3036 = vmul.f32 %v2896, %v3016
  %v3037 = vmul.f32 %v2897, %v3016
  %v3038 = vmul.f32 %v2898, %v3016
  %v3039 = vmul.f32 %v2899, %v3016
  %v3040 = vmul.f32 %v2900, %v3016
  %v3041 = vmul.f32 %v2901, %v3016
  %v3042 = vmul.f32 %v2902, %v3016
  %v3043 = vmul.f32 %v2903, %v3016
  %v3044 = vmul.f32 %v2904, %v3016
  %v3045 = vmul.f32 %v2941, %v3016
  %v3046 = vmul.f32 %v2942, %v3016
  %v3047 = vmul.f32 %v3011, %v3016
  %v3048 = vmul.f32 %v3012, %v3016
  %v3049 = vadd.f32 %v2979, %v3017
  %v3050 = vadd.f32 %v2980, %v3018
  %v3051 = vadd.f32 %v2981, %v3019
  %v3052 = vadd.f32 %v2982, %v3020
  %v3053 = vadd.f32 %v2983, %v3021
  %v3054 = vadd.f32 %v2984, %v3022
  %v3055 = vadd.f32 %v2985, %v3023
  %v3056 = vadd.f32 %v2986, %v3024
  %v3057 = vadd.f32 %v2987, %v3025
  %v3058 = vadd.f32 %v2988, %v3026
  %v3059 = vadd.f32 %v2989, %v3027
  %v3060 = vadd.f32 %v2990, %v3028
  %v3061 = vadd.f32 %v2991, %v3029
  %v3062 = vadd.f32 %v2992, %v3030
  %v3063 = vadd.f32 %v2993, %v3031
  %v3064 = vadd.f32 %v2994, %v3032
  %v3065 = vadd.f32 %v2995, %v3033
  %v3066 = vadd.f32 %v2996, %v3034
  %v3067 = vadd.f32 %v2997, %v3035
  %v3068 = vadd.f32 %v2998, %v3036
  %v3069 = vadd.f32 %v2999, %v3037
  %v3070 = vadd.f32 %v3000, %v3038
  %v3071 = vadd.f32 %v3001, %v3039
  %v3072 = vadd.f32 %v3002, %v3040
  %v3073 = vadd.f32 %v3003, %v3041
  %v3074 = vadd.f32 %v3004, %v3042
  %v3075 = vadd.f32 %v3005, %v3043
  %v3076 = vadd.f32 %v3006, %v3044
  %v3077 = vadd.f32 %v3007, %v3045
  %v3078 = vadd.f32 %v3008, %v3046
  %v3079 = vadd.f32 %v3009, %v3047
  %v3080 = vadd.f32 %v3010, %v3048
  %v3081 = vld [vmem:[#allocation2 + $0x126] sm:$0xff]
  %v3082 = vld [vmem:[#allocation2 + $0x12e] sm:$0xff]
  %v3083 = vlaneseq
  %v3084 = vshrl.u32 %v3083, 7
  %v3085 = vsub.s32 6, %v3084
  %v3086 = vrot.slane %v1996, %v3085
  %v3087 = vmul.f32 %v2879, %v3086
  %v3088 = vmul.f32 %v2880, %v3086
  %v3089 = vmul.f32 %v2881, %v3086
  %v3090 = vmul.f32 %v2882, %v3086
  %v3091 = vmul.f32 %v2883, %v3086
  %v3092 = vmul.f32 %v2884, %v3086
  %v3093 = vmul.f32 %v2885, %v3086
  %v3094 = vmul.f32 %v2886, %v3086
  %v3095 = vmul.f32 %v2887, %v3086
  %v3096 = vmul.f32 %v2888, %v3086
  %v3097 = vmul.f32 %v2889, %v3086
  %v3098 = vmul.f32 %v2890, %v3086
  %v3099 = vmul.f32 %v2891, %v3086
  %v3100 = vmul.f32 %v2892, %v3086
  %v3101 = vmul.f32 %v2893, %v3086
  %v3102 = vmul.f32 %v2894, %v3086
  %v3103 = vmul.f32 %v2895, %v3086
  %v3104 = vmul.f32 %v2896, %v3086
  %v3105 = vmul.f32 %v2897, %v3086
  %v3106 = vmul.f32 %v2898, %v3086
  %v3107 = vmul.f32 %v2899, %v3086
  %v3108 = vmul.f32 %v2900, %v3086
  %v3109 = vmul.f32 %v2901, %v3086
  %v3110 = vmul.f32 %v2902, %v3086
  %v3111 = vmul.f32 %v2903, %v3086
  %v3112 = vmul.f32 %v2904, %v3086
  %v3113 = vmul.f32 %v2941, %v3086
  %v3114 = vmul.f32 %v2942, %v3086
  %v3115 = vmul.f32 %v3011, %v3086
  %v3116 = vmul.f32 %v3012, %v3086
  %v3117 = vmul.f32 %v3081, %v3086
  %v3118 = vmul.f32 %v3082, %v3086
  %v3119 = vadd.f32 %v3049, %v3087
  %v3120 = vadd.f32 %v3050, %v3088
  %v3121 = vadd.f32 %v3051, %v3089
  %v3122 = vadd.f32 %v3052, %v3090
  %v3123 = vadd.f32 %v3053, %v3091
  %v3124 = vadd.f32 %v3054, %v3092
  %v3125 = vadd.f32 %v3055, %v3093
  %v3126 = vadd.f32 %v3056, %v3094
  %v3127 = vadd.f32 %v3057, %v3095
  %v3128 = vadd.f32 %v3058, %v3096
  %v3129 = vadd.f32 %v3059, %v3097
  %v3130 = vadd.f32 %v3060, %v3098
  %v3131 = vadd.f32 %v3061, %v3099
  %v3132 = vadd.f32 %v3062, %v3100
  %v3133 = vadd.f32 %v3063, %v3101
  %v3134 = vadd.f32 %v3064, %v3102
  %v3135 = vadd.f32 %v3065, %v3103
  %v3136 = vadd.f32 %v3066, %v3104
  %v3137 = vadd.f32 %v3067, %v3105
  %v3138 = vadd.f32 %v3068, %v3106
  %v3139 = vadd.f32 %v3069, %v3107
  %v3140 = vadd.f32 %v3070, %v3108
  %v3141 = vadd.f32 %v3071, %v3109
  %v3142 = vadd.f32 %v3072, %v3110
  %v3143 = vadd.f32 %v3073, %v3111
  %v3144 = vadd.f32 %v3074, %v3112
  %v3145 = vadd.f32 %v3075, %v3113
  %v3146 = vadd.f32 %v3076, %v3114
  %v3147 = vadd.f32 %v3077, %v3115
  %v3148 = vadd.f32 %v3078, %v3116
  %v3149 = vadd.f32 %v3079, %v3117
  %v3150 = vadd.f32 %v3080, %v3118
  %v3151 = vld [vmem:[#allocation2 + $0x136] sm:$0xff]
  %v3152 = vld [vmem:[#allocation2 + $0x13e] sm:$0xff]
  %v3153 = vlaneseq
  %v3154 = vshrl.u32 %v3153, 7
  %v3155 = vsub.s32 5, %v3154
  %v3156 = vrot.slane %v1997, %v3155
  %v3157 = vmul.f32 %v2881, %v3156
  %v3158 = vmul.f32 %v2882, %v3156
  %v3159 = vmul.f32 %v2883, %v3156
  %v3160 = vmul.f32 %v2884, %v3156
  %v3161 = vmul.f32 %v2885, %v3156
  %v3162 = vmul.f32 %v2886, %v3156
  %v3163 = vmul.f32 %v2887, %v3156
  %v3164 = vmul.f32 %v2888, %v3156
  %v3165 = vmul.f32 %v2889, %v3156
  %v3166 = vmul.f32 %v2890, %v3156
  %v3167 = vmul.f32 %v2891, %v3156
  %v3168 = vmul.f32 %v2892, %v3156
  %v3169 = vmul.f32 %v2893, %v3156
  %v3170 = vmul.f32 %v2894, %v3156
  %v3171 = vmul.f32 %v2895, %v3156
  %v3172 = vmul.f32 %v2896, %v3156
  %v3173 = vmul.f32 %v2897, %v3156
  %v3174 = vmul.f32 %v2898, %v3156
  %v3175 = vmul.f32 %v2899, %v3156
  %v3176 = vmul.f32 %v2900, %v3156
  %v3177 = vmul.f32 %v2901, %v3156
  %v3178 = vmul.f32 %v2902, %v3156
  %v3179 = vmul.f32 %v2903, %v3156
  %v3180 = vmul.f32 %v2904, %v3156
  %v3181 = vmul.f32 %v2941, %v3156
  %v3182 = vmul.f32 %v2942, %v3156
  %v3183 = vmul.f32 %v3011, %v3156
  %v3184 = vmul.f32 %v3012, %v3156
  %v3185 = vmul.f32 %v3081, %v3156
  %v3186 = vmul.f32 %v3082, %v3156
  %v3187 = vmul.f32 %v3151, %v3156
  %v3188 = vmul.f32 %v3152, %v3156
  %v3189 = vadd.f32 %v3119, %v3157
  %v3190 = vadd.f32 %v3120, %v3158
  %v3191 = vadd.f32 %v3121, %v3159
  %v3192 = vadd.f32 %v3122, %v3160
  %v3193 = vadd.f32 %v3123, %v3161
  %v3194 = vadd.f32 %v3124, %v3162
  %v3195 = vadd.f32 %v3125, %v3163
  %v3196 = vadd.f32 %v3126, %v3164
  %v3197 = vadd.f32 %v3127, %v3165
  %v3198 = vadd.f32 %v3128, %v3166
  %v3199 = vadd.f32 %v3129, %v3167
  %v3200 = vadd.f32 %v3130, %v3168
  %v3201 = vadd.f32 %v3131, %v3169
  %v3202 = vadd.f32 %v3132, %v3170
  %v3203 = vadd.f32 %v3133, %v3171
  %v3204 = vadd.f32 %v3134, %v3172
  %v3205 = vadd.f32 %v3135, %v3173
  %v3206 = vadd.f32 %v3136, %v3174
  %v3207 = vadd.f32 %v3137, %v3175
  %v3208 = vadd.f32 %v3138, %v3176
  %v3209 = vadd.f32 %v3139, %v3177
  %v3210 = vadd.f32 %v3140, %v3178
  %v3211 = vadd.f32 %v3141, %v3179
  %v3212 = vadd.f32 %v3142, %v3180
  %v3213 = vadd.f32 %v3143, %v3181
  %v3214 = vadd.f32 %v3144, %v3182
  %v3215 = vadd.f32 %v3145, %v3183
  %v3216 = vadd.f32 %v3146, %v3184
  %v3217 = vadd.f32 %v3147, %v3185
  %v3218 = vadd.f32 %v3148, %v3186
  %v3219 = vadd.f32 %v3149, %v3187
  %v3220 = vadd.f32 %v3150, %v3188
  %v3221 = vld [vmem:[#allocation2 + $0x146] sm:$0xff]
  %v3222 = vld [vmem:[#allocation2 + $0x14e] sm:$0xff]
  %v3223 = vlaneseq
  %v3224 = vshrl.u32 %v3223, 7
  %v3225 = vsub.s32 4, %v3224
  %v3226 = vrot.slane %v1998, %v3225
  %v3227 = vmul.f32 %v2883, %v3226
  %v3228 = vmul.f32 %v2884, %v3226
  %v3229 = vmul.f32 %v2885, %v3226
  %v3230 = vmul.f32 %v2886, %v3226
  %v3231 = vmul.f32 %v2887, %v3226
  %v3232 = vmul.f32 %v2888, %v3226
  %v3233 = vmul.f32 %v2889, %v3226
  %v3234 = vmul.f32 %v2890, %v3226
  %v3235 = vmul.f32 %v2891, %v3226
  %v3236 = vmul.f32 %v2892, %v3226
  %v3237 = vmul.f32 %v2893, %v3226
  %v3238 = vmul.f32 %v2894, %v3226
  %v3239 = vmul.f32 %v2895, %v3226
  %v3240 = vmul.f32 %v2896, %v3226
  %v3241 = vmul.f32 %v2897, %v3226
  %v3242 = vmul.f32 %v2898, %v3226
  %v3243 = vmul.f32 %v2899, %v3226
  %v3244 = vmul.f32 %v2900, %v3226
  %v3245 = vmul.f32 %v2901, %v3226
  %v3246 = vmul.f32 %v2902, %v3226
  %v3247 = vmul.f32 %v2903, %v3226
  %v3248 = vmul.f32 %v2904, %v3226
  %v3249 = vmul.f32 %v2941, %v3226
  %v3250 = vmul.f32 %v2942, %v3226
  %v3251 = vmul.f32 %v3011, %v3226
  %v3252 = vmul.f32 %v3012, %v3226
  %v3253 = vmul.f32 %v3081, %v3226
  %v3254 = vmul.f32 %v3082, %v3226
  %v3255 = vmul.f32 %v3151, %v3226
  %v3256 = vmul.f32 %v3152, %v3226
  %v3257 = vmul.f32 %v3221, %v3226
  %v3258 = vmul.f32 %v3222, %v3226
  %v3259 = vadd.f32 %v3189, %v3227
  %v3260 = vadd.f32 %v3190, %v3228
  %v3261 = vadd.f32 %v3191, %v3229
  %v3262 = vadd.f32 %v3192, %v3230
  %v3263 = vadd.f32 %v3193, %v3231
  %v3264 = vadd.f32 %v3194, %v3232
  %v3265 = vadd.f32 %v3195, %v3233
  %v3266 = vadd.f32 %v3196, %v3234
  %v3267 = vadd.f32 %v3197, %v3235
  %v3268 = vadd.f32 %v3198, %v3236
  %v3269 = vadd.f32 %v3199, %v3237
  %v3270 = vadd.f32 %v3200, %v3238
  %v3271 = vadd.f32 %v3201, %v3239
  %v3272 = vadd.f32 %v3202, %v3240
  %v3273 = vadd.f32 %v3203, %v3241
  %v3274 = vadd.f32 %v3204, %v3242
  %v3275 = vadd.f32 %v3205, %v3243
  %v3276 = vadd.f32 %v3206, %v3244
  %v3277 = vadd.f32 %v3207, %v3245
  %v3278 = vadd.f32 %v3208, %v3246
  %v3279 = vadd.f32 %v3209, %v3247
  %v3280 = vadd.f32 %v3210, %v3248
  %v3281 = vadd.f32 %v3211, %v3249
  %v3282 = vadd.f32 %v3212, %v3250
  %v3283 = vadd.f32 %v3213, %v3251
  %v3284 = vadd.f32 %v3214, %v3252
  %v3285 = vadd.f32 %v3215, %v3253
  %v3286 = vadd.f32 %v3216, %v3254
  %v3287 = vadd.f32 %v3217, %v3255
  %v3288 = vadd.f32 %v3218, %v3256
  %v3289 = vadd.f32 %v3219, %v3257
  %v3290 = vadd.f32 %v3220, %v3258
  %v3291 = vld [vmem:[#allocation2 + $0x156] sm:$0xff]
  %v3292 = vld [vmem:[#allocation2 + $0x15e] sm:$0xff]
  %v3293 = vlaneseq
  %v3294 = vshrl.u32 %v3293, 7
  %v3295 = vsub.s32 3, %v3294
  %v3296 = vrot.slane %v1999, %v3295
  %v3297 = vmul.f32 %v2885, %v3296
  %v3298 = vmul.f32 %v2886, %v3296
  %v3299 = vmul.f32 %v2887, %v3296
  %v3300 = vmul.f32 %v2888, %v3296
  %v3301 = vmul.f32 %v2889, %v3296
  %v3302 = vmul.f32 %v2890, %v3296
  %v3303 = vmul.f32 %v2891, %v3296
  %v3304 = vmul.f32 %v2892, %v3296
  %v3305 = vmul.f32 %v2893, %v3296
  %v3306 = vmul.f32 %v2894, %v3296
  %v3307 = vmul.f32 %v2895, %v3296
  %v3308 = vmul.f32 %v2896, %v3296
  %v3309 = vmul.f32 %v2897, %v3296
  %v3310 = vmul.f32 %v2898, %v3296
  %v3311 = vmul.f32 %v2899, %v3296
  %v3312 = vmul.f32 %v2900, %v3296
  %v3313 = vmul.f32 %v2901, %v3296
  %v3314 = vmul.f32 %v2902, %v3296
  %v3315 = vmul.f32 %v2903, %v3296
  %v3316 = vmul.f32 %v2904, %v3296
  %v3317 = vmul.f32 %v2941, %v3296
  %v3318 = vmul.f32 %v2942, %v3296
  %v3319 = vmul.f32 %v3011, %v3296
  %v3320 = vmul.f32 %v3012, %v3296
  %v3321 = vmul.f32 %v3081, %v3296
  %v3322 = vmul.f32 %v3082, %v3296
  %v3323 = vmul.f32 %v3151, %v3296
  %v3324 = vmul.f32 %v3152, %v3296
  %v3325 = vmul.f32 %v3221, %v3296
  %v3326 = vmul.f32 %v3222, %v3296
  %v3327 = vmul.f32 %v3291, %v3296
  %v3328 = vmul.f32 %v3292, %v3296
  %v3329 = vadd.f32 %v3259, %v3297
  %v3330 = vadd.f32 %v3260, %v3298
  %v3331 = vadd.f32 %v3261, %v3299
  %v3332 = vadd.f32 %v3262, %v3300
  %v3333 = vadd.f32 %v3263, %v3301
  %v3334 = vadd.f32 %v3264, %v3302
  %v3335 = vadd.f32 %v3265, %v3303
  %v3336 = vadd.f32 %v3266, %v3304
  %v3337 = vadd.f32 %v3267, %v3305
  %v3338 = vadd.f32 %v3268, %v3306
  %v3339 = vadd.f32 %v3269, %v3307
  %v3340 = vadd.f32 %v3270, %v3308
  %v3341 = vadd.f32 %v3271, %v3309
  %v3342 = vadd.f32 %v3272, %v3310
  %v3343 = vadd.f32 %v3273, %v3311
  %v3344 = vadd.f32 %v3274, %v3312
  %v3345 = vadd.f32 %v3275, %v3313
  %v3346 = vadd.f32 %v3276, %v3314
  %v3347 = vadd.f32 %v3277, %v3315
  %v3348 = vadd.f32 %v3278, %v3316
  %v3349 = vadd.f32 %v3279, %v3317
  %v3350 = vadd.f32 %v3280, %v3318
  %v3351 = vadd.f32 %v3281, %v3319
  %v3352 = vadd.f32 %v3282, %v3320
  %v3353 = vadd.f32 %v3283, %v3321
  %v3354 = vadd.f32 %v3284, %v3322
  %v3355 = vadd.f32 %v3285, %v3323
  %v3356 = vadd.f32 %v3286, %v3324
  %v3357 = vadd.f32 %v3287, %v3325
  %v3358 = vadd.f32 %v3288, %v3326
  %v3359 = vadd.f32 %v3289, %v3327
  %v3360 = vadd.f32 %v3290, %v3328
  %3362 = vset.pattern.permute.xlu0 0
  %3363 = vperm.xlu0 %3362, %v2033
  %v3364 = vpop.permute.xlu0 %3363
  %3367 = vset.pattern.permute.xlu0 0
  %3368 = vperm.xlu0 %3367, %v2034
  %v3369 = vpop.permute.xlu0 %3368
  %3372 = vset.pattern.permute.xlu0 0
  %3373 = vperm.xlu0 %3372, %v2035
  %v3374 = vpop.permute.xlu0 %3373
  %3377 = vset.pattern.permute.xlu0 0
  %3378 = vperm.xlu0 %3377, %v2036
  %v3379 = vpop.permute.xlu0 %3378
  %3382 = vset.pattern.permute.xlu0 0
  %3383 = vperm.xlu0 %3382, %v2037
  %v3384 = vpop.permute.xlu0 %3383
  %3387 = vset.pattern.permute.xlu0 0
  %3388 = vperm.xlu0 %3387, %v2038
  %v3389 = vpop.permute.xlu0 %3388
  %3392 = vset.pattern.permute.xlu0 0
  %3393 = vperm.xlu0 %3392, %v2039
  %v3394 = vpop.permute.xlu0 %3393
  %3397 = vset.pattern.permute.xlu0 0
  %3398 = vperm.xlu0 %3397, %v2040
  %v3399 = vpop.permute.xlu0 %3398
  %3402 = vset.pattern.permute.xlu0 0
  %3403 = vperm.xlu0 %3402, %v2041
  %v3404 = vpop.permute.xlu0 %3403
  %3407 = vset.pattern.permute.xlu0 0
  %3408 = vperm.xlu0 %3407, %v2042
  %v3409 = vpop.permute.xlu0 %3408
  %3412 = vset.pattern.permute.xlu0 0
  %3413 = vperm.xlu0 %3412, %v2043
  %v3414 = vpop.permute.xlu0 %3413
  %3417 = vset.pattern.permute.xlu0 0
  %3418 = vperm.xlu0 %3417, %v2044
  %v3419 = vpop.permute.xlu0 %3418
  %3422 = vset.pattern.permute.xlu0 0
  %3423 = vperm.xlu0 %3422, %v2045
  %v3424 = vpop.permute.xlu0 %3423
  %3427 = vset.pattern.permute.xlu0 0
  %3428 = vperm.xlu0 %3427, %v2046
  %v3429 = vpop.permute.xlu0 %3428
  %3432 = vset.pattern.permute.xlu0 0
  %3433 = vperm.xlu0 %3432, %v2047
  %v3434 = vpop.permute.xlu0 %3433
  %3437 = vset.pattern.permute.xlu0 0
  %3438 = vperm.xlu0 %3437, %v2048
  %v3439 = vpop.permute.xlu0 %3438
  %3442 = vset.pattern.permute.xlu0 0
  %3443 = vperm.xlu0 %3442, %v2049
  %v3444 = vpop.permute.xlu0 %3443
  %3447 = vset.pattern.permute.xlu0 0
  %3448 = vperm.xlu0 %3447, %v2050
  %v3449 = vpop.permute.xlu0 %3448
  %3452 = vset.pattern.permute.xlu0 0
  %3453 = vperm.xlu0 %3452, %v2051
  %v3454 = vpop.permute.xlu0 %3453
  %3457 = vset.pattern.permute.xlu0 0
  %3458 = vperm.xlu0 %3457, %v2052
  %v3459 = vpop.permute.xlu0 %3458
  %3462 = vset.pattern.permute.xlu0 0
  %3463 = vperm.xlu0 %3462, %v2053
  %v3464 = vpop.permute.xlu0 %3463
  %3467 = vset.pattern.permute.xlu0 0
  %3468 = vperm.xlu0 %3467, %v2054
  %v3469 = vpop.permute.xlu0 %3468
  %3472 = vset.pattern.permute.xlu0 0
  %3473 = vperm.xlu0 %3472, %v2055
  %v3474 = vpop.permute.xlu0 %3473
  %3477 = vset.pattern.permute.xlu0 0
  %3478 = vperm.xlu0 %3477, %v2056
  %v3479 = vpop.permute.xlu0 %3478
  %3482 = vset.pattern.permute.xlu0 0
  %3483 = vperm.xlu0 %3482, %v2057
  %v3484 = vpop.permute.xlu0 %3483
  %3487 = vset.pattern.permute.xlu0 0
  %3488 = vperm.xlu0 %3487, %v2058
  %v3489 = vpop.permute.xlu0 %3488
  %3492 = vset.pattern.permute.xlu0 0
  %3493 = vperm.xlu0 %3492, %v2059
  %v3494 = vpop.permute.xlu0 %3493
  %3497 = vset.pattern.permute.xlu0 0
  %3498 = vperm.xlu0 %3497, %v2060
  %v3499 = vpop.permute.xlu0 %3498
  %3502 = vset.pattern.permute.xlu0 0
  %3503 = vperm.xlu0 %3502, %v2061
  %v3504 = vpop.permute.xlu0 %3503
  %3507 = vset.pattern.permute.xlu0 0
  %3508 = vperm.xlu0 %3507, %v2062
  %v3509 = vpop.permute.xlu0 %3508
  %3512 = vset.pattern.permute.xlu0 0
  %3513 = vperm.xlu0 %3512, %v2063
  %v3514 = vpop.permute.xlu0 %3513
  %3517 = vset.pattern.permute.xlu0 0
  %3518 = vperm.xlu0 %3517, %v2064
  %v3519 = vpop.permute.xlu0 %3518
  %v3521 = vmul.f32 %v3329, %v3364
  %v3522 = vmul.f32 %v3330, %v3369
  %v3523 = vmul.f32 %v3331, %v3374
  %v3524 = vmul.f32 %v3332, %v3379
  %v3525 = vmul.f32 %v3333, %v3384
  %v3526 = vmul.f32 %v3334, %v3389
  %v3527 = vmul.f32 %v3335, %v3394
  %v3528 = vmul.f32 %v3336, %v3399
  %v3529 = vmul.f32 %v3337, %v3404
  %v3530 = vmul.f32 %v3338, %v3409
  %v3531 = vmul.f32 %v3339, %v3414
  %v3532 = vmul.f32 %v3340, %v3419
  %v3533 = vmul.f32 %v3341, %v3424
  %v3534 = vmul.f32 %v3342, %v3429
  %v3535 = vmul.f32 %v3343, %v3434
  %v3536 = vmul.f32 %v3344, %v3439
  %v3537 = vmul.f32 %v3345, %v3444
  %v3538 = vmul.f32 %v3346, %v3449
  %v3539 = vmul.f32 %v3347, %v3454
  %v3540 = vmul.f32 %v3348, %v3459
  %v3541 = vmul.f32 %v3349, %v3464
  %v3542 = vmul.f32 %v3350, %v3469
  %v3543 = vmul.f32 %v3351, %v3474
  %v3544 = vmul.f32 %v3352, %v3479
  %v3545 = vmul.f32 %v3353, %v3484
  %v3546 = vmul.f32 %v3354, %v3489
  %v3547 = vmul.f32 %v3355, %v3494
  %v3548 = vmul.f32 %v3356, %v3499
  %v3549 = vmul.f32 %v3357, %v3504
  %v3550 = vmul.f32 %v3358, %v3509
  %v3551 = vmul.f32 %v3359, %v3514
  %v3552 = vmul.f32 %v3360, %v3519
  %v3553 = vadd.f32 %v2841, %v3521
  %v3554 = vadd.f32 %v2842, %v3522
  %v3555 = vadd.f32 %v2843, %v3523
  %v3556 = vadd.f32 %v2844, %v3524
  %v3557 = vadd.f32 %v2845, %v3525
  %v3558 = vadd.f32 %v2846, %v3526
  %v3559 = vadd.f32 %v2847, %v3527
  %v3560 = vadd.f32 %v2848, %v3528
  %v3561 = vadd.f32 %v2849, %v3529
  %v3562 = vadd.f32 %v2850, %v3530
  %v3563 = vadd.f32 %v2851, %v3531
  %v3564 = vadd.f32 %v2852, %v3532
  %v3565 = vadd.f32 %v2853, %v3533
  %v3566 = vadd.f32 %v2854, %v3534
  %v3567 = vadd.f32 %v2855, %v3535
  %v3568 = vadd.f32 %v2856, %v3536
  %v3569 = vadd.f32 %v2857, %v3537
  %v3570 = vadd.f32 %v2858, %v3538
  %v3571 = vadd.f32 %v2859, %v3539
  %v3572 = vadd.f32 %v2860, %v3540
  %v3573 = vadd.f32 %v2861, %v3541
  %v3574 = vadd.f32 %v2862, %v3542
  %v3575 = vadd.f32 %v2863, %v3543
  %v3576 = vadd.f32 %v2864, %v3544
  %v3577 = vadd.f32 %v2865, %v3545
  %v3578 = vadd.f32 %v2866, %v3546
  %v3579 = vadd.f32 %v2867, %v3547
  %v3580 = vadd.f32 %v2868, %v3548
  %v3581 = vadd.f32 %v2869, %v3549
  %v3582 = vadd.f32 %v2870, %v3550
  %v3583 = vadd.f32 %v2871, %v3551
  %v3584 = vadd.f32 %v2872, %v3552
  %v3585 = vld [vmem:[#allocation2 + $0x7] sm:$0xff]
  %v3586 = vld [vmem:[#allocation2 + $0xf] sm:$0xff]
  %v3587 = vld [vmem:[#allocation2 + $0x17] sm:$0xff]
  %v3588 = vld [vmem:[#allocation2 + $0x1f] sm:$0xff]
  %v3589 = vld [vmem:[#allocation2 + $0x27] sm:$0xff]
  %v3590 = vld [vmem:[#allocation2 + $0x2f] sm:$0xff]
  %v3591 = vld [vmem:[#allocation2 + $0x37] sm:$0xff]
  %v3592 = vld [vmem:[#allocation2 + $0x3f] sm:$0xff]
  %v3593 = vld [vmem:[#allocation2 + $0x47] sm:$0xff]
  %v3594 = vld [vmem:[#allocation2 + $0x4f] sm:$0xff]
  %v3595 = vld [vmem:[#allocation2 + $0x57] sm:$0xff]
  %v3596 = vld [vmem:[#allocation2 + $0x5f] sm:$0xff]
  %v3597 = vld [vmem:[#allocation2 + $0x67] sm:$0xff]
  %v3598 = vld [vmem:[#allocation2 + $0x6f] sm:$0xff]
  %v3599 = vld [vmem:[#allocation2 + $0x77] sm:$0xff]
  %v3600 = vld [vmem:[#allocation2 + $0x7f] sm:$0xff]
  %v3601 = vld [vmem:[#allocation2 + $0x87] sm:$0xff]
  %v3602 = vld [vmem:[#allocation2 + $0x8f] sm:$0xff]
  %v3603 = vld [vmem:[#allocation2 + $0x97] sm:$0xff]
  %v3604 = vld [vmem:[#allocation2 + $0x9f] sm:$0xff]
  %v3605 = vld [vmem:[#allocation2 + $0xa7] sm:$0xff]
  %v3606 = vld [vmem:[#allocation2 + $0xaf] sm:$0xff]
  %v3607 = vld [vmem:[#allocation2 + $0xb7] sm:$0xff]
  %v3608 = vld [vmem:[#allocation2 + $0xbf] sm:$0xff]
  %v3609 = vld [vmem:[#allocation2 + $0xc7] sm:$0xff]
  %v3610 = vld [vmem:[#allocation2 + $0xcf] sm:$0xff]
  %v3611 = vld [vmem:[#allocation2 + $0xd7] sm:$0xff]
  %v3612 = vld [vmem:[#allocation2 + $0xdf] sm:$0xff]
  %v3613 = vld [vmem:[#allocation2 + $0xe7] sm:$0xff]
  %v3614 = vld [vmem:[#allocation2 + $0xef] sm:$0xff]
  %v3615 = vld [vmem:[#allocation2 + $0xf7] sm:$0xff]
  %v3616 = vld [vmem:[#allocation2 + $0xff] sm:$0xff]
  %v3617 = vlaneseq
  %v3618 = vshrl.u32 %v3617, 7
  %v3619 = vsub.s32 2, %v3618
  %v3620 = vrot.slane %v1994, %v3619
  %v3621 = vmul.f32 %v3585, %v3620
  %v3622 = vmul.f32 %v3586, %v3620
  %v3623 = vmul.f32 %v3587, %v3620
  %v3624 = vmul.f32 %v3588, %v3620
  %v3625 = vmul.f32 %v3589, %v3620
  %v3626 = vmul.f32 %v3590, %v3620
  %v3627 = vmul.f32 %v3591, %v3620
  %v3628 = vmul.f32 %v3592, %v3620
  %v3629 = vmul.f32 %v3593, %v3620
  %v3630 = vmul.f32 %v3594, %v3620
  %v3631 = vmul.f32 %v3595, %v3620
  %v3632 = vmul.f32 %v3596, %v3620
  %v3633 = vmul.f32 %v3597, %v3620
  %v3634 = vmul.f32 %v3598, %v3620
  %v3635 = vmul.f32 %v3599, %v3620
  %v3636 = vmul.f32 %v3600, %v3620
  %v3637 = vmul.f32 %v3601, %v3620
  %v3638 = vmul.f32 %v3602, %v3620
  %v3639 = vmul.f32 %v3603, %v3620
  %v3640 = vmul.f32 %v3604, %v3620
  %v3641 = vmul.f32 %v3605, %v3620
  %v3642 = vmul.f32 %v3606, %v3620
  %v3643 = vmul.f32 %v3607, %v3620
  %v3644 = vmul.f32 %v3608, %v3620
  %v3645 = vmul.f32 %v3609, %v3620
  %v3646 = vmul.f32 %v3610, %v3620
  %v3647 = vmul.f32 %v3611, %v3620
  %v3648 = vmul.f32 %v3612, %v3620
  %v3649 = vmul.f32 %v3613, %v3620
  %v3650 = vmul.f32 %v3614, %v3620
  %v3651 = vmul.f32 %v3615, %v3620
  %v3652 = vmul.f32 %v3616, %v3620
  %v3653 = vld [vmem:[#allocation2 + $0x107] sm:$0xff]
  %v3654 = vld [vmem:[#allocation2 + $0x10f] sm:$0xff]
  %v3655 = vlaneseq
  %v3656 = vshrl.u32 %v3655, 7
  %v3657 = vsub.s32 1, %v3656
  %v3658 = vrot.slane %v1995, %v3657
  %v3659 = vmul.f32 %v3587, %v3658
  %v3660 = vmul.f32 %v3588, %v3658
  %v3661 = vmul.f32 %v3589, %v3658
  %v3662 = vmul.f32 %v3590, %v3658
  %v3663 = vmul.f32 %v3591, %v3658
  %v3664 = vmul.f32 %v3592, %v3658
  %v3665 = vmul.f32 %v3593, %v3658
  %v3666 = vmul.f32 %v3594, %v3658
  %v3667 = vmul.f32 %v3595, %v3658
  %v3668 = vmul.f32 %v3596, %v3658
  %v3669 = vmul.f32 %v3597, %v3658
  %v3670 = vmul.f32 %v3598, %v3658
  %v3671 = vmul.f32 %v3599, %v3658
  %v3672 = vmul.f32 %v3600, %v3658
  %v3673 = vmul.f32 %v3601, %v3658
  %v3674 = vmul.f32 %v3602, %v3658
  %v3675 = vmul.f32 %v3603, %v3658
  %v3676 = vmul.f32 %v3604, %v3658
  %v3677 = vmul.f32 %v3605, %v3658
  %v3678 = vmul.f32 %v3606, %v3658
  %v3679 = vmul.f32 %v3607, %v3658
  %v3680 = vmul.f32 %v3608, %v3658
  %v3681 = vmul.f32 %v3609, %v3658
  %v3682 = vmul.f32 %v3610, %v3658
  %v3683 = vmul.f32 %v3611, %v3658
  %v3684 = vmul.f32 %v3612, %v3658
  %v3685 = vmul.f32 %v3613, %v3658
  %v3686 = vmul.f32 %v3614, %v3658
  %v3687 = vmul.f32 %v3615, %v3658
  %v3688 = vmul.f32 %v3616, %v3658
  %v3689 = vmul.f32 %v3653, %v3658
  %v3690 = vmul.f32 %v3654, %v3658
  %v3691 = vadd.f32 %v3621, %v3659
  %v3692 = vadd.f32 %v3622, %v3660
  %v3693 = vadd.f32 %v3623, %v3661
  %v3694 = vadd.f32 %v3624, %v3662
  %v3695 = vadd.f32 %v3625, %v3663
  %v3696 = vadd.f32 %v3626, %v3664
  %v3697 = vadd.f32 %v3627, %v3665
  %v3698 = vadd.f32 %v3628, %v3666
  %v3699 = vadd.f32 %v3629, %v3667
  %v3700 = vadd.f32 %v3630, %v3668
  %v3701 = vadd.f32 %v3631, %v3669
  %v3702 = vadd.f32 %v3632, %v3670
  %v3703 = vadd.f32 %v3633, %v3671
  %v3704 = vadd.f32 %v3634, %v3672
  %v3705 = vadd.f32 %v3635, %v3673
  %v3706 = vadd.f32 %v3636, %v3674
  %v3707 = vadd.f32 %v3637, %v3675
  %v3708 = vadd.f32 %v3638, %v3676
  %v3709 = vadd.f32 %v3639, %v3677
  %v3710 = vadd.f32 %v3640, %v3678
  %v3711 = vadd.f32 %v3641, %v3679
  %v3712 = vadd.f32 %v3642, %v3680
  %v3713 = vadd.f32 %v3643, %v3681
  %v3714 = vadd.f32 %v3644, %v3682
  %v3715 = vadd.f32 %v3645, %v3683
  %v3716 = vadd.f32 %v3646, %v3684
  %v3717 = vadd.f32 %v3647, %v3685
  %v3718 = vadd.f32 %v3648, %v3686
  %v3719 = vadd.f32 %v3649, %v3687
  %v3720 = vadd.f32 %v3650, %v3688
  %v3721 = vadd.f32 %v3651, %v3689
  %v3722 = vadd.f32 %v3652, %v3690
  %v3723 = vld [vmem:[#allocation2 + $0x117] sm:$0xff]
  %v3724 = vld [vmem:[#allocation2 + $0x11f] sm:$0xff]
  %v3725 = vlaneseq
  %v3726 = vshrl.u32 %v3725, 7
  %v3727 = vsub.s32 0, %v3726
  %v3728 = vrot.slane %v1996, %v3727
  %v3729 = vmul.f32 %v3589, %v3728
  %v3730 = vmul.f32 %v3590, %v3728
  %v3731 = vmul.f32 %v3591, %v3728
  %v3732 = vmul.f32 %v3592, %v3728
  %v3733 = vmul.f32 %v3593, %v3728
  %v3734 = vmul.f32 %v3594, %v3728
  %v3735 = vmul.f32 %v3595, %v3728
  %v3736 = vmul.f32 %v3596, %v3728
  %v3737 = vmul.f32 %v3597, %v3728
  %v3738 = vmul.f32 %v3598, %v3728
  %v3739 = vmul.f32 %v3599, %v3728
  %v3740 = vmul.f32 %v3600, %v3728
  %v3741 = vmul.f32 %v3601, %v3728
  %v3742 = vmul.f32 %v3602, %v3728
  %v3743 = vmul.f32 %v3603, %v3728
  %v3744 = vmul.f32 %v3604, %v3728
  %v3745 = vmul.f32 %v3605, %v3728
  %v3746 = vmul.f32 %v3606, %v3728
  %v3747 = vmul.f32 %v3607, %v3728
  %v3748 = vmul.f32 %v3608, %v3728
  %v3749 = vmul.f32 %v3609, %v3728
  %v3750 = vmul.f32 %v3610, %v3728
  %v3751 = vmul.f32 %v3611, %v3728
  %v3752 = vmul.f32 %v3612, %v3728
  %v3753 = vmul.f32 %v3613, %v3728
  %v3754 = vmul.f32 %v3614, %v3728
  %v3755 = vmul.f32 %v3615, %v3728
  %v3756 = vmul.f32 %v3616, %v3728
  %v3757 = vmul.f32 %v3653, %v3728
  %v3758 = vmul.f32 %v3654, %v3728
  %v3759 = vmul.f32 %v3723, %v3728
  %v3760 = vmul.f32 %v3724, %v3728
  %v3761 = vadd.f32 %v3691, %v3729
  %v3762 = vadd.f32 %v3692, %v3730
  %v3763 = vadd.f32 %v3693, %v3731
  %v3764 = vadd.f32 %v3694, %v3732
  %v3765 = vadd.f32 %v3695, %v3733
  %v3766 = vadd.f32 %v3696, %v3734
  %v3767 = vadd.f32 %v3697, %v3735
  %v3768 = vadd.f32 %v3698, %v3736
  %v3769 = vadd.f32 %v3699, %v3737
  %v3770 = vadd.f32 %v3700, %v3738
  %v3771 = vadd.f32 %v3701, %v3739
  %v3772 = vadd.f32 %v3702, %v3740
  %v3773 = vadd.f32 %v3703, %v3741
  %v3774 = vadd.f32 %v3704, %v3742
  %v3775 = vadd.f32 %v3705, %v3743
  %v3776 = vadd.f32 %v3706, %v3744
  %v3777 = vadd.f32 %v3707, %v3745
  %v3778 = vadd.f32 %v3708, %v3746
  %v3779 = vadd.f32 %v3709, %v3747
  %v3780 = vadd.f32 %v3710, %v3748
  %v3781 = vadd.f32 %v3711, %v3749
  %v3782 = vadd.f32 %v3712, %v3750
  %v3783 = vadd.f32 %v3713, %v3751
  %v3784 = vadd.f32 %v3714, %v3752
  %v3785 = vadd.f32 %v3715, %v3753
  %v3786 = vadd.f32 %v3716, %v3754
  %v3787 = vadd.f32 %v3717, %v3755
  %v3788 = vadd.f32 %v3718, %v3756
  %v3789 = vadd.f32 %v3719, %v3757
  %v3790 = vadd.f32 %v3720, %v3758
  %v3791 = vadd.f32 %v3721, %v3759
  %v3792 = vadd.f32 %v3722, %v3760
  %v3793 = vld [vmem:[#allocation2 + $0x127] sm:$0xff]
  %v3794 = vld [vmem:[#allocation2 + $0x12f] sm:$0xff]
  %v3795 = vlaneseq
  %v3796 = vshrl.u32 %v3795, 7
  %v3797 = vsub.s32 7, %v3796
  %v3798 = vrot.slane %v1996, %v3797
  %v3799 = vmul.f32 %v3591, %v3798
  %v3800 = vmul.f32 %v3592, %v3798
  %v3801 = vmul.f32 %v3593, %v3798
  %v3802 = vmul.f32 %v3594, %v3798
  %v3803 = vmul.f32 %v3595, %v3798
  %v3804 = vmul.f32 %v3596, %v3798
  %v3805 = vmul.f32 %v3597, %v3798
  %v3806 = vmul.f32 %v3598, %v3798
  %v3807 = vmul.f32 %v3599, %v3798
  %v3808 = vmul.f32 %v3600, %v3798
  %v3809 = vmul.f32 %v3601, %v3798
  %v3810 = vmul.f32 %v3602, %v3798
  %v3811 = vmul.f32 %v3603, %v3798
  %v3812 = vmul.f32 %v3604, %v3798
  %v3813 = vmul.f32 %v3605, %v3798
  %v3814 = vmul.f32 %v3606, %v3798
  %v3815 = vmul.f32 %v3607, %v3798
  %v3816 = vmul.f32 %v3608, %v3798
  %v3817 = vmul.f32 %v3609, %v3798
  %v3818 = vmul.f32 %v3610, %v3798
  %v3819 = vmul.f32 %v3611, %v3798
  %v3820 = vmul.f32 %v3612, %v3798
  %v3821 = vmul.f32 %v3613, %v3798
  %v3822 = vmul.f32 %v3614, %v3798
  %v3823 = vmul.f32 %v3615, %v3798
  %v3824 = vmul.f32 %v3616, %v3798
  %v3825 = vmul.f32 %v3653, %v3798
  %v3826 = vmul.f32 %v3654, %v3798
  %v3827 = vmul.f32 %v3723, %v3798
  %v3828 = vmul.f32 %v3724, %v3798
  %v3829 = vmul.f32 %v3793, %v3798
  %v3830 = vmul.f32 %v3794, %v3798
  %v3831 = vadd.f32 %v3761, %v3799
  %v3832 = vadd.f32 %v3762, %v3800
  %v3833 = vadd.f32 %v3763, %v3801
  %v3834 = vadd.f32 %v3764, %v3802
  %v3835 = vadd.f32 %v3765, %v3803
  %v3836 = vadd.f32 %v3766, %v3804
  %v3837 = vadd.f32 %v3767, %v3805
  %v3838 = vadd.f32 %v3768, %v3806
  %v3839 = vadd.f32 %v3769, %v3807
  %v3840 = vadd.f32 %v3770, %v3808
  %v3841 = vadd.f32 %v3771, %v3809
  %v3842 = vadd.f32 %v3772, %v3810
  %v3843 = vadd.f32 %v3773, %v3811
  %v3844 = vadd.f32 %v3774, %v3812
  %v3845 = vadd.f32 %v3775, %v3813
  %v3846 = vadd.f32 %v3776, %v3814
  %v3847 = vadd.f32 %v3777, %v3815
  %v3848 = vadd.f32 %v3778, %v3816
  %v3849 = vadd.f32 %v3779, %v3817
  %v3850 = vadd.f32 %v3780, %v3818
  %v3851 = vadd.f32 %v3781, %v3819
  %v3852 = vadd.f32 %v3782, %v3820
  %v3853 = vadd.f32 %v3783, %v3821
  %v3854 = vadd.f32 %v3784, %v3822
  %v3855 = vadd.f32 %v3785, %v3823
  %v3856 = vadd.f32 %v3786, %v3824
  %v3857 = vadd.f32 %v3787, %v3825
  %v3858 = vadd.f32 %v3788, %v3826
  %v3859 = vadd.f32 %v3789, %v3827
  %v3860 = vadd.f32 %v3790, %v3828
  %v3861 = vadd.f32 %v3791, %v3829
  %v3862 = vadd.f32 %v3792, %v3830
  %v3863 = vld [vmem:[#allocation2 + $0x137] sm:$0xff]
  %v3864 = vld [vmem:[#allocation2 + $0x13f] sm:$0xff]
  %v3865 = vlaneseq
  %v3866 = vshrl.u32 %v3865, 7
  %v3867 = vsub.s32 6, %v3866
  %v3868 = vrot.slane %v1997, %v3867
  %v3869 = vmul.f32 %v3593, %v3868
  %v3870 = vmul.f32 %v3594, %v3868
  %v3871 = vmul.f32 %v3595, %v3868
  %v3872 = vmul.f32 %v3596, %v3868
  %v3873 = vmul.f32 %v3597, %v3868
  %v3874 = vmul.f32 %v3598, %v3868
  %v3875 = vmul.f32 %v3599, %v3868
  %v3876 = vmul.f32 %v3600, %v3868
  %v3877 = vmul.f32 %v3601, %v3868
  %v3878 = vmul.f32 %v3602, %v3868
  %v3879 = vmul.f32 %v3603, %v3868
  %v3880 = vmul.f32 %v3604, %v3868
  %v3881 = vmul.f32 %v3605, %v3868
  %v3882 = vmul.f32 %v3606, %v3868
  %v3883 = vmul.f32 %v3607, %v3868
  %v3884 = vmul.f32 %v3608, %v3868
  %v3885 = vmul.f32 %v3609, %v3868
  %v3886 = vmul.f32 %v3610, %v3868
  %v3887 = vmul.f32 %v3611, %v3868
  %v3888 = vmul.f32 %v3612, %v3868
  %v3889 = vmul.f32 %v3613, %v3868
  %v3890 = vmul.f32 %v3614, %v3868
  %v3891 = vmul.f32 %v3615, %v3868
  %v3892 = vmul.f32 %v3616, %v3868
  %v3893 = vmul.f32 %v3653, %v3868
  %v3894 = vmul.f32 %v3654, %v3868
  %v3895 = vmul.f32 %v3723, %v3868
  %v3896 = vmul.f32 %v3724, %v3868
  %v3897 = vmul.f32 %v3793, %v3868
  %v3898 = vmul.f32 %v3794, %v3868
  %v3899 = vmul.f32 %v3863, %v3868
  %v3900 = vmul.f32 %v3864, %v3868
  %v3901 = vadd.f32 %v3831, %v3869
  %v3902 = vadd.f32 %v3832, %v3870
  %v3903 = vadd.f32 %v3833, %v3871
  %v3904 = vadd.f32 %v3834, %v3872
  %v3905 = vadd.f32 %v3835, %v3873
  %v3906 = vadd.f32 %v3836, %v3874
  %v3907 = vadd.f32 %v3837, %v3875
  %v3908 = vadd.f32 %v3838, %v3876
  %v3909 = vadd.f32 %v3839, %v3877
  %v3910 = vadd.f32 %v3840, %v3878
  %v3911 = vadd.f32 %v3841, %v3879
  %v3912 = vadd.f32 %v3842, %v3880
  %v3913 = vadd.f32 %v3843, %v3881
  %v3914 = vadd.f32 %v3844, %v3882
  %v3915 = vadd.f32 %v3845, %v3883
  %v3916 = vadd.f32 %v3846, %v3884
  %v3917 = vadd.f32 %v3847, %v3885
  %v3918 = vadd.f32 %v3848, %v3886
  %v3919 = vadd.f32 %v3849, %v3887
  %v3920 = vadd.f32 %v3850, %v3888
  %v3921 = vadd.f32 %v3851, %v3889
  %v3922 = vadd.f32 %v3852, %v3890
  %v3923 = vadd.f32 %v3853, %v3891
  %v3924 = vadd.f32 %v3854, %v3892
  %v3925 = vadd.f32 %v3855, %v3893
  %v3926 = vadd.f32 %v3856, %v3894
  %v3927 = vadd.f32 %v3857, %v3895
  %v3928 = vadd.f32 %v3858, %v3896
  %v3929 = vadd.f32 %v3859, %v3897
  %v3930 = vadd.f32 %v3860, %v3898
  %v3931 = vadd.f32 %v3861, %v3899
  %v3932 = vadd.f32 %v3862, %v3900
  %v3933 = vld [vmem:[#allocation2 + $0x147] sm:$0xff]
  %v3934 = vld [vmem:[#allocation2 + $0x14f] sm:$0xff]
  %v3935 = vlaneseq
  %v3936 = vshrl.u32 %v3935, 7
  %v3937 = vsub.s32 5, %v3936
  %v3938 = vrot.slane %v1998, %v3937
  %v3939 = vmul.f32 %v3595, %v3938
  %v3940 = vmul.f32 %v3596, %v3938
  %v3941 = vmul.f32 %v3597, %v3938
  %v3942 = vmul.f32 %v3598, %v3938
  %v3943 = vmul.f32 %v3599, %v3938
  %v3944 = vmul.f32 %v3600, %v3938
  %v3945 = vmul.f32 %v3601, %v3938
  %v3946 = vmul.f32 %v3602, %v3938
  %v3947 = vmul.f32 %v3603, %v3938
  %v3948 = vmul.f32 %v3604, %v3938
  %v3949 = vmul.f32 %v3605, %v3938
  %v3950 = vmul.f32 %v3606, %v3938
  %v3951 = vmul.f32 %v3607, %v3938
  %v3952 = vmul.f32 %v3608, %v3938
  %v3953 = vmul.f32 %v3609, %v3938
  %v3954 = vmul.f32 %v3610, %v3938
  %v3955 = vmul.f32 %v3611, %v3938
  %v3956 = vmul.f32 %v3612, %v3938
  %v3957 = vmul.f32 %v3613, %v3938
  %v3958 = vmul.f32 %v3614, %v3938
  %v3959 = vmul.f32 %v3615, %v3938
  %v3960 = vmul.f32 %v3616, %v3938
  %v3961 = vmul.f32 %v3653, %v3938
  %v3962 = vmul.f32 %v3654, %v3938
  %v3963 = vmul.f32 %v3723, %v3938
  %v3964 = vmul.f32 %v3724, %v3938
  %v3965 = vmul.f32 %v3793, %v3938
  %v3966 = vmul.f32 %v3794, %v3938
  %v3967 = vmul.f32 %v3863, %v3938
  %v3968 = vmul.f32 %v3864, %v3938
  %v3969 = vmul.f32 %v3933, %v3938
  %v3970 = vmul.f32 %v3934, %v3938
  %v3971 = vadd.f32 %v3901, %v3939
  %v3972 = vadd.f32 %v3902, %v3940
  %v3973 = vadd.f32 %v3903, %v3941
  %v3974 = vadd.f32 %v3904, %v3942
  %v3975 = vadd.f32 %v3905, %v3943
  %v3976 = vadd.f32 %v3906, %v3944
  %v3977 = vadd.f32 %v3907, %v3945
  %v3978 = vadd.f32 %v3908, %v3946
  %v3979 = vadd.f32 %v3909, %v3947
  %v3980 = vadd.f32 %v3910, %v3948
  %v3981 = vadd.f32 %v3911, %v3949
  %v3982 = vadd.f32 %v3912, %v3950
  %v3983 = vadd.f32 %v3913, %v3951
  %v3984 = vadd.f32 %v3914, %v3952
  %v3985 = vadd.f32 %v3915, %v3953
  %v3986 = vadd.f32 %v3916, %v3954
  %v3987 = vadd.f32 %v3917, %v3955
  %v3988 = vadd.f32 %v3918, %v3956
  %v3989 = vadd.f32 %v3919, %v3957
  %v3990 = vadd.f32 %v3920, %v3958
  %v3991 = vadd.f32 %v3921, %v3959
  %v3992 = vadd.f32 %v3922, %v3960
  %v3993 = vadd.f32 %v3923, %v3961
  %v3994 = vadd.f32 %v3924, %v3962
  %v3995 = vadd.f32 %v3925, %v3963
  %v3996 = vadd.f32 %v3926, %v3964
  %v3997 = vadd.f32 %v3927, %v3965
  %v3998 = vadd.f32 %v3928, %v3966
  %v3999 = vadd.f32 %v3929, %v3967
  %v4000 = vadd.f32 %v3930, %v3968
  %v4001 = vadd.f32 %v3931, %v3969
  %v4002 = vadd.f32 %v3932, %v3970
  %v4003 = vld [vmem:[#allocation2 + $0x157] sm:$0xff]
  %v4004 = vld [vmem:[#allocation2 + $0x15f] sm:$0xff]
  %v4005 = vlaneseq
  %v4006 = vshrl.u32 %v4005, 7
  %v4007 = vsub.s32 4, %v4006
  %v4008 = vrot.slane %v1999, %v4007
  %v4009 = vmul.f32 %v3597, %v4008
  %v4010 = vmul.f32 %v3598, %v4008
  %v4011 = vmul.f32 %v3599, %v4008
  %v4012 = vmul.f32 %v3600, %v4008
  %v4013 = vmul.f32 %v3601, %v4008
  %v4014 = vmul.f32 %v3602, %v4008
  %v4015 = vmul.f32 %v3603, %v4008
  %v4016 = vmul.f32 %v3604, %v4008
  %v4017 = vmul.f32 %v3605, %v4008
  %v4018 = vmul.f32 %v3606, %v4008
  %v4019 = vmul.f32 %v3607, %v4008
  %v4020 = vmul.f32 %v3608, %v4008
  %v4021 = vmul.f32 %v3609, %v4008
  %v4022 = vmul.f32 %v3610, %v4008
  %v4023 = vmul.f32 %v3611, %v4008
  %v4024 = vmul.f32 %v3612, %v4008
  %v4025 = vmul.f32 %v3613, %v4008
  %v4026 = vmul.f32 %v3614, %v4008
  %v4027 = vmul.f32 %v3615, %v4008
  %v4028 = vmul.f32 %v3616, %v4008
  %v4029 = vmul.f32 %v3653, %v4008
  %v4030 = vmul.f32 %v3654, %v4008
  %v4031 = vmul.f32 %v3723, %v4008
  %v4032 = vmul.f32 %v3724, %v4008
  %v4033 = vmul.f32 %v3793, %v4008
  %v4034 = vmul.f32 %v3794, %v4008
  %v4035 = vmul.f32 %v3863, %v4008
  %v4036 = vmul.f32 %v3864, %v4008
  %v4037 = vmul.f32 %v3933, %v4008
  %v4038 = vmul.f32 %v3934, %v4008
  %v4039 = vmul.f32 %v4003, %v4008
  %v4040 = vmul.f32 %v4004, %v4008
  %v4041 = vadd.f32 %v3971, %v4009
  %v4042 = vadd.f32 %v3972, %v4010
  %v4043 = vadd.f32 %v3973, %v4011
  %v4044 = vadd.f32 %v3974, %v4012
  %v4045 = vadd.f32 %v3975, %v4013
  %v4046 = vadd.f32 %v3976, %v4014
  %v4047 = vadd.f32 %v3977, %v4015
  %v4048 = vadd.f32 %v3978, %v4016
  %v4049 = vadd.f32 %v3979, %v4017
  %v4050 = vadd.f32 %v3980, %v4018
  %v4051 = vadd.f32 %v3981, %v4019
  %v4052 = vadd.f32 %v3982, %v4020
  %v4053 = vadd.f32 %v3983, %v4021
  %v4054 = vadd.f32 %v3984, %v4022
  %v4055 = vadd.f32 %v3985, %v4023
  %v4056 = vadd.f32 %v3986, %v4024
  %v4057 = vadd.f32 %v3987, %v4025
  %v4058 = vadd.f32 %v3988, %v4026
  %v4059 = vadd.f32 %v3989, %v4027
  %v4060 = vadd.f32 %v3990, %v4028
  %v4061 = vadd.f32 %v3991, %v4029
  %v4062 = vadd.f32 %v3992, %v4030
  %v4063 = vadd.f32 %v3993, %v4031
  %v4064 = vadd.f32 %v3994, %v4032
  %v4065 = vadd.f32 %v3995, %v4033
  %v4066 = vadd.f32 %v3996, %v4034
  %v4067 = vadd.f32 %v3997, %v4035
  %v4068 = vadd.f32 %v3998, %v4036
  %v4069 = vadd.f32 %v3999, %v4037
  %v4070 = vadd.f32 %v4000, %v4038
  %v4071 = vadd.f32 %v4001, %v4039
  %v4072 = vadd.f32 %v4002, %v4040
  %4074 = vset.pattern.permute.xlu0 0
  %4075 = vperm.xlu0 %4074, %v2065
  %v4076 = vpop.permute.xlu0 %4075
  %4079 = vset.pattern.permute.xlu0 0
  %4080 = vperm.xlu0 %4079, %v2066
  %v4081 = vpop.permute.xlu0 %4080
  %4084 = vset.pattern.permute.xlu0 0
  %4085 = vperm.xlu0 %4084, %v2067
  %v4086 = vpop.permute.xlu0 %4085
  %4089 = vset.pattern.permute.xlu0 0
  %4090 = vperm.xlu0 %4089, %v2068
  %v4091 = vpop.permute.xlu0 %4090
  %4094 = vset.pattern.permute.xlu0 0
  %4095 = vperm.xlu0 %4094, %v2069
  %v4096 = vpop.permute.xlu0 %4095
  %4099 = vset.pattern.permute.xlu0 0
  %4100 = vperm.xlu0 %4099, %v2070
  %v4101 = vpop.permute.xlu0 %4100
  %4104 = vset.pattern.permute.xlu0 0
  %4105 = vperm.xlu0 %4104, %v2071
  %v4106 = vpop.permute.xlu0 %4105
  %4109 = vset.pattern.permute.xlu0 0
  %4110 = vperm.xlu0 %4109, %v2072
  %v4111 = vpop.permute.xlu0 %4110
  %4114 = vset.pattern.permute.xlu0 0
  %4115 = vperm.xlu0 %4114, %v2073
  %v4116 = vpop.permute.xlu0 %4115
  %4119 = vset.pattern.permute.xlu0 0
  %4120 = vperm.xlu0 %4119, %v2074
  %v4121 = vpop.permute.xlu0 %4120
  %4124 = vset.pattern.permute.xlu0 0
  %4125 = vperm.xlu0 %4124, %v2075
  %v4126 = vpop.permute.xlu0 %4125
  %4129 = vset.pattern.permute.xlu0 0
  %4130 = vperm.xlu0 %4129, %v2076
  %v4131 = vpop.permute.xlu0 %4130
  %4134 = vset.pattern.permute.xlu0 0
  %4135 = vperm.xlu0 %4134, %v2077
  %v4136 = vpop.permute.xlu0 %4135
  %4139 = vset.pattern.permute.xlu0 0
  %4140 = vperm.xlu0 %4139, %v2078
  %v4141 = vpop.permute.xlu0 %4140
  %4144 = vset.pattern.permute.xlu0 0
  %4145 = vperm.xlu0 %4144, %v2079
  %v4146 = vpop.permute.xlu0 %4145
  %4149 = vset.pattern.permute.xlu0 0
  %4150 = vperm.xlu0 %4149, %v2080
  %v4151 = vpop.permute.xlu0 %4150
  %4154 = vset.pattern.permute.xlu0 0
  %4155 = vperm.xlu0 %4154, %v2081
  %v4156 = vpop.permute.xlu0 %4155
  %4159 = vset.pattern.permute.xlu0 0
  %4160 = vperm.xlu0 %4159, %v2082
  %v4161 = vpop.permute.xlu0 %4160
  %4164 = vset.pattern.permute.xlu0 0
  %4165 = vperm.xlu0 %4164, %v2083
  %v4166 = vpop.permute.xlu0 %4165
  %4169 = vset.pattern.permute.xlu0 0
  %4170 = vperm.xlu0 %4169, %v2084
  %v4171 = vpop.permute.xlu0 %4170
  %4174 = vset.pattern.permute.xlu0 0
  %4175 = vperm.xlu0 %4174, %v2085
  %v4176 = vpop.permute.xlu0 %4175
  %4179 = vset.pattern.permute.xlu0 0
  %4180 = vperm.xlu0 %4179, %v2086
  %v4181 = vpop.permute.xlu0 %4180
  %4184 = vset.pattern.permute.xlu0 0
  %4185 = vperm.xlu0 %4184, %v2087
  %v4186 = vpop.permute.xlu0 %4185
  %4189 = vset.pattern.permute.xlu0 0
  %4190 = vperm.xlu0 %4189, %v2088
  %v4191 = vpop.permute.xlu0 %4190
  %4194 = vset.pattern.permute.xlu0 0
  %4195 = vperm.xlu0 %4194, %v2089
  %v4196 = vpop.permute.xlu0 %4195
  %4199 = vset.pattern.permute.xlu0 0
  %4200 = vperm.xlu0 %4199, %v2090
  %v4201 = vpop.permute.xlu0 %4200
  %4204 = vset.pattern.permute.xlu0 0
  %4205 = vperm.xlu0 %4204, %v2091
  %v4206 = vpop.permute.xlu0 %4205
  %4209 = vset.pattern.permute.xlu0 0
  %4210 = vperm.xlu0 %4209, %v2092
  %v4211 = vpop.permute.xlu0 %4210
  %4214 = vset.pattern.permute.xlu0 0
  %4215 = vperm.xlu0 %4214, %v2093
  %v4216 = vpop.permute.xlu0 %4215
  %4219 = vset.pattern.permute.xlu0 0
  %4220 = vperm.xlu0 %4219, %v2094
  %v4221 = vpop.permute.xlu0 %4220
  %4224 = vset.pattern.permute.xlu0 0
  %4225 = vperm.xlu0 %4224, %v2095
  %v4226 = vpop.permute.xlu0 %4225
  %4229 = vset.pattern.permute.xlu0 0
  %4230 = vperm.xlu0 %4229, %v2096
  %v4231 = vpop.permute.xlu0 %4230
  %v4233 = vmul.f32 %v4041, %v4076
  %v4234 = vmul.f32 %v4042, %v4081
  %v4235 = vmul.f32 %v4043, %v4086
  %v4236 = vmul.f32 %v4044, %v4091
  %v4237 = vmul.f32 %v4045, %v4096
  %v4238 = vmul.f32 %v4046, %v4101
  %v4239 = vmul.f32 %v4047, %v4106
  %v4240 = vmul.f32 %v4048, %v4111
  %v4241 = vmul.f32 %v4049, %v4116
  %v4242 = vmul.f32 %v4050, %v4121
  %v4243 = vmul.f32 %v4051, %v4126
  %v4244 = vmul.f32 %v4052, %v4131
  %v4245 = vmul.f32 %v4053, %v4136
  %v4246 = vmul.f32 %v4054, %v4141
  %v4247 = vmul.f32 %v4055, %v4146
  %v4248 = vmul.f32 %v4056, %v4151
  %v4249 = vmul.f32 %v4057, %v4156
  %v4250 = vmul.f32 %v4058, %v4161
  %v4251 = vmul.f32 %v4059, %v4166
  %v4252 = vmul.f32 %v4060, %v4171
  %v4253 = vmul.f32 %v4061, %v4176
  %v4254 = vmul.f32 %v4062, %v4181
  %v4255 = vmul.f32 %v4063, %v4186
  %v4256 = vmul.f32 %v4064, %v4191
  %v4257 = vmul.f32 %v4065, %v4196
  %v4258 = vmul.f32 %v4066, %v4201
  %v4259 = vmul.f32 %v4067, %v4206
  %v4260 = vmul.f32 %v4068, %v4211
  %v4261 = vmul.f32 %v4069, %v4216
  %v4262 = vmul.f32 %v4070, %v4221
  %v4263 = vmul.f32 %v4071, %v4226
  %v4264 = vmul.f32 %v4072, %v4231
  %v4265 = vadd.f32 %v3553, %v4233
  %v4266 = vadd.f32 %v3554, %v4234
  %v4267 = vadd.f32 %v3555, %v4235
  %v4268 = vadd.f32 %v3556, %v4236
  %v4269 = vadd.f32 %v3557, %v4237
  %v4270 = vadd.f32 %v3558, %v4238
  %v4271 = vadd.f32 %v3559, %v4239
  %v4272 = vadd.f32 %v3560, %v4240
  %v4273 = vadd.f32 %v3561, %v4241
  %v4274 = vadd.f32 %v3562, %v4242
  %v4275 = vadd.f32 %v3563, %v4243
  %v4276 = vadd.f32 %v3564, %v4244
  %v4277 = vadd.f32 %v3565, %v4245
  %v4278 = vadd.f32 %v3566, %v4246
  %v4279 = vadd.f32 %v3567, %v4247
  %v4280 = vadd.f32 %v3568, %v4248
  %v4281 = vadd.f32 %v3569, %v4249
  %v4282 = vadd.f32 %v3570, %v4250
  %v4283 = vadd.f32 %v3571, %v4251
  %v4284 = vadd.f32 %v3572, %v4252
  %v4285 = vadd.f32 %v3573, %v4253
  %v4286 = vadd.f32 %v3574, %v4254
  %v4287 = vadd.f32 %v3575, %v4255
  %v4288 = vadd.f32 %v3576, %v4256
  %v4289 = vadd.f32 %v3577, %v4257
  %v4290 = vadd.f32 %v3578, %v4258
  %v4291 = vadd.f32 %v3579, %v4259
  %v4292 = vadd.f32 %v3580, %v4260
  %v4293 = vadd.f32 %v3581, %v4261
  %v4294 = vadd.f32 %v3582, %v4262
  %v4295 = vadd.f32 %v3583, %v4263
  %v4296 = vadd.f32 %v3584, %v4264
  %v4297 = vld [vmem:[#allocation2 + $0x8] sm:$0xff]
  %v4298 = vld [vmem:[#allocation2 + $0x10] sm:$0xff]
  %v4299 = vld [vmem:[#allocation2 + $0x18] sm:$0xff]
  %v4300 = vld [vmem:[#allocation2 + $0x20] sm:$0xff]
  %v4301 = vld [vmem:[#allocation2 + $0x28] sm:$0xff]
  %v4302 = vld [vmem:[#allocation2 + $0x30] sm:$0xff]
  %v4303 = vld [vmem:[#allocation2 + $0x38] sm:$0xff]
  %v4304 = vld [vmem:[#allocation2 + $0x40] sm:$0xff]
  %v4305 = vld [vmem:[#allocation2 + $0x48] sm:$0xff]
  %v4306 = vld [vmem:[#allocation2 + $0x50] sm:$0xff]
  %v4307 = vld [vmem:[#allocation2 + $0x58] sm:$0xff]
  %v4308 = vld [vmem:[#allocation2 + $0x60] sm:$0xff]
  %v4309 = vld [vmem:[#allocation2 + $0x68] sm:$0xff]
  %v4310 = vld [vmem:[#allocation2 + $0x70] sm:$0xff]
  %v4311 = vld [vmem:[#allocation2 + $0x78] sm:$0xff]
  %v4312 = vld [vmem:[#allocation2 + $0x80] sm:$0xff]
  %v4313 = vld [vmem:[#allocation2 + $0x88] sm:$0xff]
  %v4314 = vld [vmem:[#allocation2 + $0x90] sm:$0xff]
  %v4315 = vld [vmem:[#allocation2 + $0x98] sm:$0xff]
  %v4316 = vld [vmem:[#allocation2 + $0xa0] sm:$0xff]
  %v4317 = vld [vmem:[#allocation2 + $0xa8] sm:$0xff]
  %v4318 = vld [vmem:[#allocation2 + $0xb0] sm:$0xff]
  %v4319 = vld [vmem:[#allocation2 + $0xb8] sm:$0xff]
  %v4320 = vld [vmem:[#allocation2 + $0xc0] sm:$0xff]
  %v4321 = vld [vmem:[#allocation2 + $0xc8] sm:$0xff]
  %v4322 = vld [vmem:[#allocation2 + $0xd0] sm:$0xff]
  %v4323 = vld [vmem:[#allocation2 + $0xd8] sm:$0xff]
  %v4324 = vld [vmem:[#allocation2 + $0xe0] sm:$0xff]
  %v4325 = vld [vmem:[#allocation2 + $0xe8] sm:$0xff]
  %v4326 = vld [vmem:[#allocation2 + $0xf0] sm:$0xff]
  %v4327 = vld [vmem:[#allocation2 + $0xf8] sm:$0xff]
  %v4328 = vld [vmem:[#allocation2 + $0x100] sm:$0xff]
  %v4329 = vlaneseq
  %v4330 = vshrl.u32 %v4329, 7
  %v4331 = vsub.s32 3, %v4330
  %v4332 = vrot.slane %v1994, %v4331
  %v4333 = vmul.f32 %v4297, %v4332
  %v4334 = vmul.f32 %v4298, %v4332
  %v4335 = vmul.f32 %v4299, %v4332
  %v4336 = vmul.f32 %v4300, %v4332
  %v4337 = vmul.f32 %v4301, %v4332
  %v4338 = vmul.f32 %v4302, %v4332
  %v4339 = vmul.f32 %v4303, %v4332
  %v4340 = vmul.f32 %v4304, %v4332
  %v4341 = vmul.f32 %v4305, %v4332
  %v4342 = vmul.f32 %v4306, %v4332
  %v4343 = vmul.f32 %v4307, %v4332
  %v4344 = vmul.f32 %v4308, %v4332
  %v4345 = vmul.f32 %v4309, %v4332
  %v4346 = vmul.f32 %v4310, %v4332
  %v4347 = vmul.f32 %v4311, %v4332
  %v4348 = vmul.f32 %v4312, %v4332
  %v4349 = vmul.f32 %v4313, %v4332
  %v4350 = vmul.f32 %v4314, %v4332
  %v4351 = vmul.f32 %v4315, %v4332
  %v4352 = vmul.f32 %v4316, %v4332
  %v4353 = vmul.f32 %v4317, %v4332
  %v4354 = vmul.f32 %v4318, %v4332
  %v4355 = vmul.f32 %v4319, %v4332
  %v4356 = vmul.f32 %v4320, %v4332
  %v4357 = vmul.f32 %v4321, %v4332
  %v4358 = vmul.f32 %v4322, %v4332
  %v4359 = vmul.f32 %v4323, %v4332
  %v4360 = vmul.f32 %v4324, %v4332
  %v4361 = vmul.f32 %v4325, %v4332
  %v4362 = vmul.f32 %v4326, %v4332
  %v4363 = vmul.f32 %v4327, %v4332
  %v4364 = vmul.f32 %v4328, %v4332
  %v4365 = vld [vmem:[#allocation2 + $0x108] sm:$0xff]
  %v4366 = vld [vmem:[#allocation2 + $0x110] sm:$0xff]
  %v4367 = vlaneseq
  %v4368 = vshrl.u32 %v4367, 7
  %v4369 = vsub.s32 2, %v4368
  %v4370 = vrot.slane %v1995, %v4369
  %v4371 = vmul.f32 %v4299, %v4370
  %v4372 = vmul.f32 %v4300, %v4370
  %v4373 = vmul.f32 %v4301, %v4370
  %v4374 = vmul.f32 %v4302, %v4370
  %v4375 = vmul.f32 %v4303, %v4370
  %v4376 = vmul.f32 %v4304, %v4370
  %v4377 = vmul.f32 %v4305, %v4370
  %v4378 = vmul.f32 %v4306, %v4370
  %v4379 = vmul.f32 %v4307, %v4370
  %v4380 = vmul.f32 %v4308, %v4370
  %v4381 = vmul.f32 %v4309, %v4370
  %v4382 = vmul.f32 %v4310, %v4370
  %v4383 = vmul.f32 %v4311, %v4370
  %v4384 = vmul.f32 %v4312, %v4370
  %v4385 = vmul.f32 %v4313, %v4370
  %v4386 = vmul.f32 %v4314, %v4370
  %v4387 = vmul.f32 %v4315, %v4370
  %v4388 = vmul.f32 %v4316, %v4370
  %v4389 = vmul.f32 %v4317, %v4370
  %v4390 = vmul.f32 %v4318, %v4370
  %v4391 = vmul.f32 %v4319, %v4370
  %v4392 = vmul.f32 %v4320, %v4370
  %v4393 = vmul.f32 %v4321, %v4370
  %v4394 = vmul.f32 %v4322, %v4370
  %v4395 = vmul.f32 %v4323, %v4370
  %v4396 = vmul.f32 %v4324, %v4370
  %v4397 = vmul.f32 %v4325, %v4370
  %v4398 = vmul.f32 %v4326, %v4370
  %v4399 = vmul.f32 %v4327, %v4370
  %v4400 = vmul.f32 %v4328, %v4370
  %v4401 = vmul.f32 %v4365, %v4370
  %v4402 = vmul.f32 %v4366, %v4370
  %v4403 = vadd.f32 %v4333, %v4371
  %v4404 = vadd.f32 %v4334, %v4372
  %v4405 = vadd.f32 %v4335, %v4373
  %v4406 = vadd.f32 %v4336, %v4374
  %v4407 = vadd.f32 %v4337, %v4375
  %v4408 = vadd.f32 %v4338, %v4376
  %v4409 = vadd.f32 %v4339, %v4377
  %v4410 = vadd.f32 %v4340, %v4378
  %v4411 = vadd.f32 %v4341, %v4379
  %v4412 = vadd.f32 %v4342, %v4380
  %v4413 = vadd.f32 %v4343, %v4381
  %v4414 = vadd.f32 %v4344, %v4382
  %v4415 = vadd.f32 %v4345, %v4383
  %v4416 = vadd.f32 %v4346, %v4384
  %v4417 = vadd.f32 %v4347, %v4385
  %v4418 = vadd.f32 %v4348, %v4386
  %v4419 = vadd.f32 %v4349, %v4387
  %v4420 = vadd.f32 %v4350, %v4388
  %v4421 = vadd.f32 %v4351, %v4389
  %v4422 = vadd.f32 %v4352, %v4390
  %v4423 = vadd.f32 %v4353, %v4391
  %v4424 = vadd.f32 %v4354, %v4392
  %v4425 = vadd.f32 %v4355, %v4393
  %v4426 = vadd.f32 %v4356, %v4394
  %v4427 = vadd.f32 %v4357, %v4395
  %v4428 = vadd.f32 %v4358, %v4396
  %v4429 = vadd.f32 %v4359, %v4397
  %v4430 = vadd.f32 %v4360, %v4398
  %v4431 = vadd.f32 %v4361, %v4399
  %v4432 = vadd.f32 %v4362, %v4400
  %v4433 = vadd.f32 %v4363, %v4401
  %v4434 = vadd.f32 %v4364, %v4402
  %v4435 = vld [vmem:[#allocation2 + $0x118] sm:$0xff]
  %v4436 = vld [vmem:[#allocation2 + $0x120] sm:$0xff]
  %v4437 = vlaneseq
  %v4438 = vshrl.u32 %v4437, 7
  %v4439 = vsub.s32 1, %v4438
  %v4440 = vrot.slane %v1996, %v4439
  %v4441 = vmul.f32 %v4301, %v4440
  %v4442 = vmul.f32 %v4302, %v4440
  %v4443 = vmul.f32 %v4303, %v4440
  %v4444 = vmul.f32 %v4304, %v4440
  %v4445 = vmul.f32 %v4305, %v4440
  %v4446 = vmul.f32 %v4306, %v4440
  %v4447 = vmul.f32 %v4307, %v4440
  %v4448 = vmul.f32 %v4308, %v4440
  %v4449 = vmul.f32 %v4309, %v4440
  %v4450 = vmul.f32 %v4310, %v4440
  %v4451 = vmul.f32 %v4311, %v4440
  %v4452 = vmul.f32 %v4312, %v4440
  %v4453 = vmul.f32 %v4313, %v4440
  %v4454 = vmul.f32 %v4314, %v4440
  %v4455 = vmul.f32 %v4315, %v4440
  %v4456 = vmul.f32 %v4316, %v4440
  %v4457 = vmul.f32 %v4317, %v4440
  %v4458 = vmul.f32 %v4318, %v4440
  %v4459 = vmul.f32 %v4319, %v4440
  %v4460 = vmul.f32 %v4320, %v4440
  %v4461 = vmul.f32 %v4321, %v4440
  %v4462 = vmul.f32 %v4322, %v4440
  %v4463 = vmul.f32 %v4323, %v4440
  %v4464 = vmul.f32 %v4324, %v4440
  %v4465 = vmul.f32 %v4325, %v4440
  %v4466 = vmul.f32 %v4326, %v4440
  %v4467 = vmul.f32 %v4327, %v4440
  %v4468 = vmul.f32 %v4328, %v4440
  %v4469 = vmul.f32 %v4365, %v4440
  %v4470 = vmul.f32 %v4366, %v4440
  %v4471 = vmul.f32 %v4435, %v4440
  %v4472 = vmul.f32 %v4436, %v4440
  %v4473 = vadd.f32 %v4403, %v4441
  %v4474 = vadd.f32 %v4404, %v4442
  %v4475 = vadd.f32 %v4405, %v4443
  %v4476 = vadd.f32 %v4406, %v4444
  %v4477 = vadd.f32 %v4407, %v4445
  %v4478 = vadd.f32 %v4408, %v4446
  %v4479 = vadd.f32 %v4409, %v4447
  %v4480 = vadd.f32 %v4410, %v4448
  %v4481 = vadd.f32 %v4411, %v4449
  %v4482 = vadd.f32 %v4412, %v4450
  %v4483 = vadd.f32 %v4413, %v4451
  %v4484 = vadd.f32 %v4414, %v4452
  %v4485 = vadd.f32 %v4415, %v4453
  %v4486 = vadd.f32 %v4416, %v4454
  %v4487 = vadd.f32 %v4417, %v4455
  %v4488 = vadd.f32 %v4418, %v4456
  %v4489 = vadd.f32 %v4419, %v4457
  %v4490 = vadd.f32 %v4420, %v4458
  %v4491 = vadd.f32 %v4421, %v4459
  %v4492 = vadd.f32 %v4422, %v4460
  %v4493 = vadd.f32 %v4423, %v4461
  %v4494 = vadd.f32 %v4424, %v4462
  %v4495 = vadd.f32 %v4425, %v4463
  %v4496 = vadd.f32 %v4426, %v4464
  %v4497 = vadd.f32 %v4427, %v4465
  %v4498 = vadd.f32 %v4428, %v4466
  %v4499 = vadd.f32 %v4429, %v4467
  %v4500 = vadd.f32 %v4430, %v4468
  %v4501 = vadd.f32 %v4431, %v4469
  %v4502 = vadd.f32 %v4432, %v4470
  %v4503 = vadd.f32 %v4433, %v4471
  %v4504 = vadd.f32 %v4434, %v4472
  %v4505 = vld [vmem:[#allocation2 + $0x128] sm:$0xff]
  %v4506 = vld [vmem:[#allocation2 + $0x130] sm:$0xff]
  %v4507 = vlaneseq
  %v4508 = vshrl.u32 %v4507, 7
  %v4509 = vsub.s32 0, %v4508
  %v4510 = vrot.slane %v1997, %v4509
  %v4511 = vmul.f32 %v4303, %v4510
  %v4512 = vmul.f32 %v4304, %v4510
  %v4513 = vmul.f32 %v4305, %v4510
  %v4514 = vmul.f32 %v4306, %v4510
  %v4515 = vmul.f32 %v4307, %v4510
  %v4516 = vmul.f32 %v4308, %v4510
  %v4517 = vmul.f32 %v4309, %v4510
  %v4518 = vmul.f32 %v4310, %v4510
  %v4519 = vmul.f32 %v4311, %v4510
  %v4520 = vmul.f32 %v4312, %v4510
  %v4521 = vmul.f32 %v4313, %v4510
  %v4522 = vmul.f32 %v4314, %v4510
  %v4523 = vmul.f32 %v4315, %v4510
  %v4524 = vmul.f32 %v4316, %v4510
  %v4525 = vmul.f32 %v4317, %v4510
  %v4526 = vmul.f32 %v4318, %v4510
  %v4527 = vmul.f32 %v4319, %v4510
  %v4528 = vmul.f32 %v4320, %v4510
  %v4529 = vmul.f32 %v4321, %v4510
  %v4530 = vmul.f32 %v4322, %v4510
  %v4531 = vmul.f32 %v4323, %v4510
  %v4532 = vmul.f32 %v4324, %v4510
  %v4533 = vmul.f32 %v4325, %v4510
  %v4534 = vmul.f32 %v4326, %v4510
  %v4535 = vmul.f32 %v4327, %v4510
  %v4536 = vmul.f32 %v4328, %v4510
  %v4537 = vmul.f32 %v4365, %v4510
  %v4538 = vmul.f32 %v4366, %v4510
  %v4539 = vmul.f32 %v4435, %v4510
  %v4540 = vmul.f32 %v4436, %v4510
  %v4541 = vmul.f32 %v4505, %v4510
  %v4542 = vmul.f32 %v4506, %v4510
  %v4543 = vadd.f32 %v4473, %v4511
  %v4544 = vadd.f32 %v4474, %v4512
  %v4545 = vadd.f32 %v4475, %v4513
  %v4546 = vadd.f32 %v4476, %v4514
  %v4547 = vadd.f32 %v4477, %v4515
  %v4548 = vadd.f32 %v4478, %v4516
  %v4549 = vadd.f32 %v4479, %v4517
  %v4550 = vadd.f32 %v4480, %v4518
  %v4551 = vadd.f32 %v4481, %v4519
  %v4552 = vadd.f32 %v4482, %v4520
  %v4553 = vadd.f32 %v4483, %v4521
  %v4554 = vadd.f32 %v4484, %v4522
  %v4555 = vadd.f32 %v4485, %v4523
  %v4556 = vadd.f32 %v4486, %v4524
  %v4557 = vadd.f32 %v4487, %v4525
  %v4558 = vadd.f32 %v4488, %v4526
  %v4559 = vadd.f32 %v4489, %v4527
  %v4560 = vadd.f32 %v4490, %v4528
  %v4561 = vadd.f32 %v4491, %v4529
  %v4562 = vadd.f32 %v4492, %v4530
  %v4563 = vadd.f32 %v4493, %v4531
  %v4564 = vadd.f32 %v4494, %v4532
  %v4565 = vadd.f32 %v4495, %v4533
  %v4566 = vadd.f32 %v4496, %v4534
  %v4567 = vadd.f32 %v4497, %v4535
  %v4568 = vadd.f32 %v4498, %v4536
  %v4569 = vadd.f32 %v4499, %v4537
  %v4570 = vadd.f32 %v4500, %v4538
  %v4571 = vadd.f32 %v4501, %v4539
  %v4572 = vadd.f32 %v4502, %v4540
  %v4573 = vadd.f32 %v4503, %v4541
  %v4574 = vadd.f32 %v4504, %v4542
  %v4575 = vld [vmem:[#allocation2 + $0x138] sm:$0xff]
  %v4576 = vld [vmem:[#allocation2 + $0x140] sm:$0xff]
  %v4577 = vlaneseq
  %v4578 = vshrl.u32 %v4577, 7
  %v4579 = vsub.s32 7, %v4578
  %v4580 = vrot.slane %v1997, %v4579
  %v4581 = vmul.f32 %v4305, %v4580
  %v4582 = vmul.f32 %v4306, %v4580
  %v4583 = vmul.f32 %v4307, %v4580
  %v4584 = vmul.f32 %v4308, %v4580
  %v4585 = vmul.f32 %v4309, %v4580
  %v4586 = vmul.f32 %v4310, %v4580
  %v4587 = vmul.f32 %v4311, %v4580
  %v4588 = vmul.f32 %v4312, %v4580
  %v4589 = vmul.f32 %v4313, %v4580
  %v4590 = vmul.f32 %v4314, %v4580
  %v4591 = vmul.f32 %v4315, %v4580
  %v4592 = vmul.f32 %v4316, %v4580
  %v4593 = vmul.f32 %v4317, %v4580
  %v4594 = vmul.f32 %v4318, %v4580
  %v4595 = vmul.f32 %v4319, %v4580
  %v4596 = vmul.f32 %v4320, %v4580
  %v4597 = vmul.f32 %v4321, %v4580
  %v4598 = vmul.f32 %v4322, %v4580
  %v4599 = vmul.f32 %v4323, %v4580
  %v4600 = vmul.f32 %v4324, %v4580
  %v4601 = vmul.f32 %v4325, %v4580
  %v4602 = vmul.f32 %v4326, %v4580
  %v4603 = vmul.f32 %v4327, %v4580
  %v4604 = vmul.f32 %v4328, %v4580
  %v4605 = vmul.f32 %v4365, %v4580
  %v4606 = vmul.f32 %v4366, %v4580
  %v4607 = vmul.f32 %v4435, %v4580
  %v4608 = vmul.f32 %v4436, %v4580
  %v4609 = vmul.f32 %v4505, %v4580
  %v4610 = vmul.f32 %v4506, %v4580
  %v4611 = vmul.f32 %v4575, %v4580
  %v4612 = vmul.f32 %v4576, %v4580
  %v4613 = vadd.f32 %v4543, %v4581
  %v4614 = vadd.f32 %v4544, %v4582
  %v4615 = vadd.f32 %v4545, %v4583
  %v4616 = vadd.f32 %v4546, %v4584
  %v4617 = vadd.f32 %v4547, %v4585
  %v4618 = vadd.f32 %v4548, %v4586
  %v4619 = vadd.f32 %v4549, %v4587
  %v4620 = vadd.f32 %v4550, %v4588
  %v4621 = vadd.f32 %v4551, %v4589
  %v4622 = vadd.f32 %v4552, %v4590
  %v4623 = vadd.f32 %v4553, %v4591
  %v4624 = vadd.f32 %v4554, %v4592
  %v4625 = vadd.f32 %v4555, %v4593
  %v4626 = vadd.f32 %v4556, %v4594
  %v4627 = vadd.f32 %v4557, %v4595
  %v4628 = vadd.f32 %v4558, %v4596
  %v4629 = vadd.f32 %v4559, %v4597
  %v4630 = vadd.f32 %v4560, %v4598
  %v4631 = vadd.f32 %v4561, %v4599
  %v4632 = vadd.f32 %v4562, %v4600
  %v4633 = vadd.f32 %v4563, %v4601
  %v4634 = vadd.f32 %v4564, %v4602
  %v4635 = vadd.f32 %v4565, %v4603
  %v4636 = vadd.f32 %v4566, %v4604
  %v4637 = vadd.f32 %v4567, %v4605
  %v4638 = vadd.f32 %v4568, %v4606
  %v4639 = vadd.f32 %v4569, %v4607
  %v4640 = vadd.f32 %v4570, %v4608
  %v4641 = vadd.f32 %v4571, %v4609
  %v4642 = vadd.f32 %v4572, %v4610
  %v4643 = vadd.f32 %v4573, %v4611
  %v4644 = vadd.f32 %v4574, %v4612
  %v4645 = vld [vmem:[#allocation2 + $0x148] sm:$0xff]
  %v4646 = vld [vmem:[#allocation2 + $0x150] sm:$0xff]
  %v4647 = vlaneseq
  %v4648 = vshrl.u32 %v4647, 7
  %v4649 = vsub.s32 6, %v4648
  %v4650 = vrot.slane %v1998, %v4649
  %v4651 = vmul.f32 %v4307, %v4650
  %v4652 = vmul.f32 %v4308, %v4650
  %v4653 = vmul.f32 %v4309, %v4650
  %v4654 = vmul.f32 %v4310, %v4650
  %v4655 = vmul.f32 %v4311, %v4650
  %v4656 = vmul.f32 %v4312, %v4650
  %v4657 = vmul.f32 %v4313, %v4650
  %v4658 = vmul.f32 %v4314, %v4650
  %v4659 = vmul.f32 %v4315, %v4650
  %v4660 = vmul.f32 %v4316, %v4650
  %v4661 = vmul.f32 %v4317, %v4650
  %v4662 = vmul.f32 %v4318, %v4650
  %v4663 = vmul.f32 %v4319, %v4650
  %v4664 = vmul.f32 %v4320, %v4650
  %v4665 = vmul.f32 %v4321, %v4650
  %v4666 = vmul.f32 %v4322, %v4650
  %v4667 = vmul.f32 %v4323, %v4650
  %v4668 = vmul.f32 %v4324, %v4650
  %v4669 = vmul.f32 %v4325, %v4650
  %v4670 = vmul.f32 %v4326, %v4650
  %v4671 = vmul.f32 %v4327, %v4650
  %v4672 = vmul.f32 %v4328, %v4650
  %v4673 = vmul.f32 %v4365, %v4650
  %v4674 = vmul.f32 %v4366, %v4650
  %v4675 = vmul.f32 %v4435, %v4650
  %v4676 = vmul.f32 %v4436, %v4650
  %v4677 = vmul.f32 %v4505, %v4650
  %v4678 = vmul.f32 %v4506, %v4650
  %v4679 = vmul.f32 %v4575, %v4650
  %v4680 = vmul.f32 %v4576, %v4650
  %v4681 = vmul.f32 %v4645, %v4650
  %v4682 = vmul.f32 %v4646, %v4650
  %v4683 = vadd.f32 %v4613, %v4651
  %v4684 = vadd.f32 %v4614, %v4652
  %v4685 = vadd.f32 %v4615, %v4653
  %v4686 = vadd.f32 %v4616, %v4654
  %v4687 = vadd.f32 %v4617, %v4655
  %v4688 = vadd.f32 %v4618, %v4656
  %v4689 = vadd.f32 %v4619, %v4657
  %v4690 = vadd.f32 %v4620, %v4658
  %v4691 = vadd.f32 %v4621, %v4659
  %v4692 = vadd.f32 %v4622, %v4660
  %v4693 = vadd.f32 %v4623, %v4661
  %v4694 = vadd.f32 %v4624, %v4662
  %v4695 = vadd.f32 %v4625, %v4663
  %v4696 = vadd.f32 %v4626, %v4664
  %v4697 = vadd.f32 %v4627, %v4665
  %v4698 = vadd.f32 %v4628, %v4666
  %v4699 = vadd.f32 %v4629, %v4667
  %v4700 = vadd.f32 %v4630, %v4668
  %v4701 = vadd.f32 %v4631, %v4669
  %v4702 = vadd.f32 %v4632, %v4670
  %v4703 = vadd.f32 %v4633, %v4671
  %v4704 = vadd.f32 %v4634, %v4672
  %v4705 = vadd.f32 %v4635, %v4673
  %v4706 = vadd.f32 %v4636, %v4674
  %v4707 = vadd.f32 %v4637, %v4675
  %v4708 = vadd.f32 %v4638, %v4676
  %v4709 = vadd.f32 %v4639, %v4677
  %v4710 = vadd.f32 %v4640, %v4678
  %v4711 = vadd.f32 %v4641, %v4679
  %v4712 = vadd.f32 %v4642, %v4680
  %v4713 = vadd.f32 %v4643, %v4681
  %v4714 = vadd.f32 %v4644, %v4682
  %v4715 = vld [vmem:[#allocation2 + $0x158] sm:$0xff]
  %v4716 = vld [vmem:[#allocation2 + $0x160] sm:$0xff]
  %v4717 = vlaneseq
  %v4718 = vshrl.u32 %v4717, 7
  %v4719 = vsub.s32 5, %v4718
  %v4720 = vrot.slane %v1999, %v4719
  %v4721 = vmul.f32 %v4309, %v4720
  %v4722 = vmul.f32 %v4310, %v4720
  %v4723 = vmul.f32 %v4311, %v4720
  %v4724 = vmul.f32 %v4312, %v4720
  %v4725 = vmul.f32 %v4313, %v4720
  %v4726 = vmul.f32 %v4314, %v4720
  %v4727 = vmul.f32 %v4315, %v4720
  %v4728 = vmul.f32 %v4316, %v4720
  %v4729 = vmul.f32 %v4317, %v4720
  %v4730 = vmul.f32 %v4318, %v4720
  %v4731 = vmul.f32 %v4319, %v4720
  %v4732 = vmul.f32 %v4320, %v4720
  %v4733 = vmul.f32 %v4321, %v4720
  %v4734 = vmul.f32 %v4322, %v4720
  %v4735 = vmul.f32 %v4323, %v4720
  %v4736 = vmul.f32 %v4324, %v4720
  %v4737 = vmul.f32 %v4325, %v4720
  %v4738 = vmul.f32 %v4326, %v4720
  %v4739 = vmul.f32 %v4327, %v4720
  %v4740 = vmul.f32 %v4328, %v4720
  %v4741 = vmul.f32 %v4365, %v4720
  %v4742 = vmul.f32 %v4366, %v4720
  %v4743 = vmul.f32 %v4435, %v4720
  %v4744 = vmul.f32 %v4436, %v4720
  %v4745 = vmul.f32 %v4505, %v4720
  %v4746 = vmul.f32 %v4506, %v4720
  %v4747 = vmul.f32 %v4575, %v4720
  %v4748 = vmul.f32 %v4576, %v4720
  %v4749 = vmul.f32 %v4645, %v4720
  %v4750 = vmul.f32 %v4646, %v4720
  %v4751 = vmul.f32 %v4715, %v4720
  %v4752 = vmul.f32 %v4716, %v4720
  %v4753 = vadd.f32 %v4683, %v4721
  %v4754 = vadd.f32 %v4684, %v4722
  %v4755 = vadd.f32 %v4685, %v4723
  %v4756 = vadd.f32 %v4686, %v4724
  %v4757 = vadd.f32 %v4687, %v4725
  %v4758 = vadd.f32 %v4688, %v4726
  %v4759 = vadd.f32 %v4689, %v4727
  %v4760 = vadd.f32 %v4690, %v4728
  %v4761 = vadd.f32 %v4691, %v4729
  %v4762 = vadd.f32 %v4692, %v4730
  %v4763 = vadd.f32 %v4693, %v4731
  %v4764 = vadd.f32 %v4694, %v4732
  %v4765 = vadd.f32 %v4695, %v4733
  %v4766 = vadd.f32 %v4696, %v4734
  %v4767 = vadd.f32 %v4697, %v4735
  %v4768 = vadd.f32 %v4698, %v4736
  %v4769 = vadd.f32 %v4699, %v4737
  %v4770 = vadd.f32 %v4700, %v4738
  %v4771 = vadd.f32 %v4701, %v4739
  %v4772 = vadd.f32 %v4702, %v4740
  %v4773 = vadd.f32 %v4703, %v4741
  %v4774 = vadd.f32 %v4704, %v4742
  %v4775 = vadd.f32 %v4705, %v4743
  %v4776 = vadd.f32 %v4706, %v4744
  %v4777 = vadd.f32 %v4707, %v4745
  %v4778 = vadd.f32 %v4708, %v4746
  %v4779 = vadd.f32 %v4709, %v4747
  %v4780 = vadd.f32 %v4710, %v4748
  %v4781 = vadd.f32 %v4711, %v4749
  %v4782 = vadd.f32 %v4712, %v4750
  %v4783 = vadd.f32 %v4713, %v4751
  %v4784 = vadd.f32 %v4714, %v4752
  %v4785 = vadd.f32 %v4265, %v4753
  %v4786 = vadd.f32 %v4266, %v4754
  %v4787 = vadd.f32 %v4267, %v4755
  %v4788 = vadd.f32 %v4268, %v4756
  %v4789 = vadd.f32 %v4269, %v4757
  %v4790 = vadd.f32 %v4270, %v4758
  %v4791 = vadd.f32 %v4271, %v4759
  %v4792 = vadd.f32 %v4272, %v4760
  %v4793 = vadd.f32 %v4273, %v4761
  %v4794 = vadd.f32 %v4274, %v4762
  %v4795 = vadd.f32 %v4275, %v4763
  %v4796 = vadd.f32 %v4276, %v4764
  %v4797 = vadd.f32 %v4277, %v4765
  %v4798 = vadd.f32 %v4278, %v4766
  %v4799 = vadd.f32 %v4279, %v4767
  %v4800 = vadd.f32 %v4280, %v4768
  %v4801 = vadd.f32 %v4281, %v4769
  %v4802 = vadd.f32 %v4282, %v4770
  %v4803 = vadd.f32 %v4283, %v4771
  %v4804 = vadd.f32 %v4284, %v4772
  %v4805 = vadd.f32 %v4285, %v4773
  %v4806 = vadd.f32 %v4286, %v4774
  %v4807 = vadd.f32 %v4287, %v4775
  %v4808 = vadd.f32 %v4288, %v4776
  %v4809 = vadd.f32 %v4289, %v4777
  %v4810 = vadd.f32 %v4290, %v4778
  %v4811 = vadd.f32 %v4291, %v4779
  %v4812 = vadd.f32 %v4292, %v4780
  %v4813 = vadd.f32 %v4293, %v4781
  %v4814 = vadd.f32 %v4294, %v4782
  %v4815 = vadd.f32 %v4295, %v4783
  %v4816 = vadd.f32 %v4296, %v4784
  %v4817 = vld [vmem:[#allocation2 + $0x9] sm:$0xff]
  %v4818 = vld [vmem:[#allocation2 + $0x11] sm:$0xff]
  %v4819 = vld [vmem:[#allocation2 + $0x19] sm:$0xff]
  %v4820 = vld [vmem:[#allocation2 + $0x21] sm:$0xff]
  %v4821 = vld [vmem:[#allocation2 + $0x29] sm:$0xff]
  %v4822 = vld [vmem:[#allocation2 + $0x31] sm:$0xff]
  %v4823 = vld [vmem:[#allocation2 + $0x39] sm:$0xff]
  %v4824 = vld [vmem:[#allocation2 + $0x41] sm:$0xff]
  %v4825 = vld [vmem:[#allocation2 + $0x49] sm:$0xff]
  %v4826 = vld [vmem:[#allocation2 + $0x51] sm:$0xff]
  %v4827 = vld [vmem:[#allocation2 + $0x59] sm:$0xff]
  %v4828 = vld [vmem:[#allocation2 + $0x61] sm:$0xff]
  %v4829 = vld [vmem:[#allocation2 + $0x69] sm:$0xff]
  %v4830 = vld [vmem:[#allocation2 + $0x71] sm:$0xff]
  %v4831 = vld [vmem:[#allocation2 + $0x79] sm:$0xff]
  %v4832 = vld [vmem:[#allocation2 + $0x81] sm:$0xff]
  %v4833 = vld [vmem:[#allocation2 + $0x89] sm:$0xff]
  %v4834 = vld [vmem:[#allocation2 + $0x91] sm:$0xff]
  %v4835 = vld [vmem:[#allocation2 + $0x99] sm:$0xff]
  %v4836 = vld [vmem:[#allocation2 + $0xa1] sm:$0xff]
  %v4837 = vld [vmem:[#allocation2 + $0xa9] sm:$0xff]
  %v4838 = vld [vmem:[#allocation2 + $0xb1] sm:$0xff]
  %v4839 = vld [vmem:[#allocation2 + $0xb9] sm:$0xff]
  %v4840 = vld [vmem:[#allocation2 + $0xc1] sm:$0xff]
  %v4841 = vld [vmem:[#allocation2 + $0xc9] sm:$0xff]
  %v4842 = vld [vmem:[#allocation2 + $0xd1] sm:$0xff]
  %v4843 = vld [vmem:[#allocation2 + $0xd9] sm:$0xff]
  %v4844 = vld [vmem:[#allocation2 + $0xe1] sm:$0xff]
  %v4845 = vld [vmem:[#allocation2 + $0xe9] sm:$0xff]
  %v4846 = vld [vmem:[#allocation2 + $0xf1] sm:$0xff]
  %v4847 = vld [vmem:[#allocation2 + $0xf9] sm:$0xff]
  %v4848 = vld [vmem:[#allocation2 + $0x101] sm:$0xff]
  %v4849 = vlaneseq
  %v4850 = vshrl.u32 %v4849, 7
  %v4851 = vsub.s32 4, %v4850
  %v4852 = vrot.slane %v1994, %v4851
  %v4853 = vmul.f32 %v4817, %v4852
  %v4854 = vmul.f32 %v4818, %v4852
  %v4855 = vmul.f32 %v4819, %v4852
  %v4856 = vmul.f32 %v4820, %v4852
  %v4857 = vmul.f32 %v4821, %v4852
  %v4858 = vmul.f32 %v4822, %v4852
  %v4859 = vmul.f32 %v4823, %v4852
  %v4860 = vmul.f32 %v4824, %v4852
  %v4861 = vmul.f32 %v4825, %v4852
  %v4862 = vmul.f32 %v4826, %v4852
  %v4863 = vmul.f32 %v4827, %v4852
  %v4864 = vmul.f32 %v4828, %v4852
  %v4865 = vmul.f32 %v4829, %v4852
  %v4866 = vmul.f32 %v4830, %v4852
  %v4867 = vmul.f32 %v4831, %v4852
  %v4868 = vmul.f32 %v4832, %v4852
  %v4869 = vmul.f32 %v4833, %v4852
  %v4870 = vmul.f32 %v4834, %v4852
  %v4871 = vmul.f32 %v4835, %v4852
  %v4872 = vmul.f32 %v4836, %v4852
  %v4873 = vmul.f32 %v4837, %v4852
  %v4874 = vmul.f32 %v4838, %v4852
  %v4875 = vmul.f32 %v4839, %v4852
  %v4876 = vmul.f32 %v4840, %v4852
  %v4877 = vmul.f32 %v4841, %v4852
  %v4878 = vmul.f32 %v4842, %v4852
  %v4879 = vmul.f32 %v4843, %v4852
  %v4880 = vmul.f32 %v4844, %v4852
  %v4881 = vmul.f32 %v4845, %v4852
  %v4882 = vmul.f32 %v4846, %v4852
  %v4883 = vmul.f32 %v4847, %v4852
  %v4884 = vmul.f32 %v4848, %v4852
  %v4885 = vld [vmem:[#allocation2 + $0x109] sm:$0xff]
  %v4886 = vld [vmem:[#allocation2 + $0x111] sm:$0xff]
  %v4887 = vlaneseq
  %v4888 = vshrl.u32 %v4887, 7
  %v4889 = vsub.s32 3, %v4888
  %v4890 = vrot.slane %v1995, %v4889
  %v4891 = vmul.f32 %v4819, %v4890
  %v4892 = vmul.f32 %v4820, %v4890
  %v4893 = vmul.f32 %v4821, %v4890
  %v4894 = vmul.f32 %v4822, %v4890
  %v4895 = vmul.f32 %v4823, %v4890
  %v4896 = vmul.f32 %v4824, %v4890
  %v4897 = vmul.f32 %v4825, %v4890
  %v4898 = vmul.f32 %v4826, %v4890
  %v4899 = vmul.f32 %v4827, %v4890
  %v4900 = vmul.f32 %v4828, %v4890
  %v4901 = vmul.f32 %v4829, %v4890
  %v4902 = vmul.f32 %v4830, %v4890
  %v4903 = vmul.f32 %v4831, %v4890
  %v4904 = vmul.f32 %v4832, %v4890
  %v4905 = vmul.f32 %v4833, %v4890
  %v4906 = vmul.f32 %v4834, %v4890
  %v4907 = vmul.f32 %v4835, %v4890
  %v4908 = vmul.f32 %v4836, %v4890
  %v4909 = vmul.f32 %v4837, %v4890
  %v4910 = vmul.f32 %v4838, %v4890
  %v4911 = vmul.f32 %v4839, %v4890
  %v4912 = vmul.f32 %v4840, %v4890
  %v4913 = vmul.f32 %v4841, %v4890
  %v4914 = vmul.f32 %v4842, %v4890
  %v4915 = vmul.f32 %v4843, %v4890
  %v4916 = vmul.f32 %v4844, %v4890
  %v4917 = vmul.f32 %v4845, %v4890
  %v4918 = vmul.f32 %v4846, %v4890
  %v4919 = vmul.f32 %v4847, %v4890
  %v4920 = vmul.f32 %v4848, %v4890
  %v4921 = vmul.f32 %v4885, %v4890
  %v4922 = vmul.f32 %v4886, %v4890
  %v4923 = vadd.f32 %v4853, %v4891
  %v4924 = vadd.f32 %v4854, %v4892
  %v4925 = vadd.f32 %v4855, %v4893
  %v4926 = vadd.f32 %v4856, %v4894
  %v4927 = vadd.f32 %v4857, %v4895
  %v4928 = vadd.f32 %v4858, %v4896
  %v4929 = vadd.f32 %v4859, %v4897
  %v4930 = vadd.f32 %v4860, %v4898
  %v4931 = vadd.f32 %v4861, %v4899
  %v4932 = vadd.f32 %v4862, %v4900
  %v4933 = vadd.f32 %v4863, %v4901
  %v4934 = vadd.f32 %v4864, %v4902
  %v4935 = vadd.f32 %v4865, %v4903
  %v4936 = vadd.f32 %v4866, %v4904
  %v4937 = vadd.f32 %v4867, %v4905
  %v4938 = vadd.f32 %v4868, %v4906
  %v4939 = vadd.f32 %v4869, %v4907
  %v4940 = vadd.f32 %v4870, %v4908
  %v4941 = vadd.f32 %v4871, %v4909
  %v4942 = vadd.f32 %v4872, %v4910
  %v4943 = vadd.f32 %v4873, %v4911
  %v4944 = vadd.f32 %v4874, %v4912
  %v4945 = vadd.f32 %v4875, %v4913
  %v4946 = vadd.f32 %v4876, %v4914
  %v4947 = vadd.f32 %v4877, %v4915
  %v4948 = vadd.f32 %v4878, %v4916
  %v4949 = vadd.f32 %v4879, %v4917
  %v4950 = vadd.f32 %v4880, %v4918
  %v4951 = vadd.f32 %v4881, %v4919
  %v4952 = vadd.f32 %v4882, %v4920
  %v4953 = vadd.f32 %v4883, %v4921
  %v4954 = vadd.f32 %v4884, %v4922
  %v4955 = vld [vmem:[#allocation2 + $0x119] sm:$0xff]
  %v4956 = vld [vmem:[#allocation2 + $0x121] sm:$0xff]
  %v4957 = vlaneseq
  %v4958 = vshrl.u32 %v4957, 7
  %v4959 = vsub.s32 2, %v4958
  %v4960 = vrot.slane %v1996, %v4959
  %v4961 = vmul.f32 %v4821, %v4960
  %v4962 = vmul.f32 %v4822, %v4960
  %v4963 = vmul.f32 %v4823, %v4960
  %v4964 = vmul.f32 %v4824, %v4960
  %v4965 = vmul.f32 %v4825, %v4960
  %v4966 = vmul.f32 %v4826, %v4960
  %v4967 = vmul.f32 %v4827, %v4960
  %v4968 = vmul.f32 %v4828, %v4960
  %v4969 = vmul.f32 %v4829, %v4960
  %v4970 = vmul.f32 %v4830, %v4960
  %v4971 = vmul.f32 %v4831, %v4960
  %v4972 = vmul.f32 %v4832, %v4960
  %v4973 = vmul.f32 %v4833, %v4960
  %v4974 = vmul.f32 %v4834, %v4960
  %v4975 = vmul.f32 %v4835, %v4960
  %v4976 = vmul.f32 %v4836, %v4960
  %v4977 = vmul.f32 %v4837, %v4960
  %v4978 = vmul.f32 %v4838, %v4960
  %v4979 = vmul.f32 %v4839, %v4960
  %v4980 = vmul.f32 %v4840, %v4960
  %v4981 = vmul.f32 %v4841, %v4960
  %v4982 = vmul.f32 %v4842, %v4960
  %v4983 = vmul.f32 %v4843, %v4960
  %v4984 = vmul.f32 %v4844, %v4960
  %v4985 = vmul.f32 %v4845, %v4960
  %v4986 = vmul.f32 %v4846, %v4960
  %v4987 = vmul.f32 %v4847, %v4960
  %v4988 = vmul.f32 %v4848, %v4960
  %v4989 = vmul.f32 %v4885, %v4960
  %v4990 = vmul.f32 %v4886, %v4960
  %v4991 = vmul.f32 %v4955, %v4960
  %v4992 = vmul.f32 %v4956, %v4960
  %v4993 = vadd.f32 %v4923, %v4961
  %v4994 = vadd.f32 %v4924, %v4962
  %v4995 = vadd.f32 %v4925, %v4963
  %v4996 = vadd.f32 %v4926, %v4964
  %v4997 = vadd.f32 %v4927, %v4965
  %v4998 = vadd.f32 %v4928, %v4966
  %v4999 = vadd.f32 %v4929, %v4967
  %v5000 = vadd.f32 %v4930, %v4968
  %v5001 = vadd.f32 %v4931, %v4969
  %v5002 = vadd.f32 %v4932, %v4970
  %v5003 = vadd.f32 %v4933, %v4971
  %v5004 = vadd.f32 %v4934, %v4972
  %v5005 = vadd.f32 %v4935, %v4973
  %v5006 = vadd.f32 %v4936, %v4974
  %v5007 = vadd.f32 %v4937, %v4975
  %v5008 = vadd.f32 %v4938, %v4976
  %v5009 = vadd.f32 %v4939, %v4977
  %v5010 = vadd.f32 %v4940, %v4978
  %v5011 = vadd.f32 %v4941, %v4979
  %v5012 = vadd.f32 %v4942, %v4980
  %v5013 = vadd.f32 %v4943, %v4981
  %v5014 = vadd.f32 %v4944, %v4982
  %v5015 = vadd.f32 %v4945, %v4983
  %v5016 = vadd.f32 %v4946, %v4984
  %v5017 = vadd.f32 %v4947, %v4985
  %v5018 = vadd.f32 %v4948, %v4986
  %v5019 = vadd.f32 %v4949, %v4987
  %v5020 = vadd.f32 %v4950, %v4988
  %v5021 = vadd.f32 %v4951, %v4989
  %v5022 = vadd.f32 %v4952, %v4990
  %v5023 = vadd.f32 %v4953, %v4991
  %v5024 = vadd.f32 %v4954, %v4992
  %v5025 = vld [vmem:[#allocation2 + $0x129] sm:$0xff]
  %v5026 = vld [vmem:[#allocation2 + $0x131] sm:$0xff]
  %v5027 = vlaneseq
  %v5028 = vshrl.u32 %v5027, 7
  %v5029 = vsub.s32 1, %v5028
  %v5030 = vrot.slane %v1997, %v5029
  %v5031 = vmul.f32 %v4823, %v5030
  %v5032 = vmul.f32 %v4824, %v5030
  %v5033 = vmul.f32 %v4825, %v5030
  %v5034 = vmul.f32 %v4826, %v5030
  %v5035 = vmul.f32 %v4827, %v5030
  %v5036 = vmul.f32 %v4828, %v5030
  %v5037 = vmul.f32 %v4829, %v5030
  %v5038 = vmul.f32 %v4830, %v5030
  %v5039 = vmul.f32 %v4831, %v5030
  %v5040 = vmul.f32 %v4832, %v5030
  %v5041 = vmul.f32 %v4833, %v5030
  %v5042 = vmul.f32 %v4834, %v5030
  %v5043 = vmul.f32 %v4835, %v5030
  %v5044 = vmul.f32 %v4836, %v5030
  %v5045 = vmul.f32 %v4837, %v5030
  %v5046 = vmul.f32 %v4838, %v5030
  %v5047 = vmul.f32 %v4839, %v5030
  %v5048 = vmul.f32 %v4840, %v5030
  %v5049 = vmul.f32 %v4841, %v5030
  %v5050 = vmul.f32 %v4842, %v5030
  %v5051 = vmul.f32 %v4843, %v5030
  %v5052 = vmul.f32 %v4844, %v5030
  %v5053 = vmul.f32 %v4845, %v5030
  %v5054 = vmul.f32 %v4846, %v5030
  %v5055 = vmul.f32 %v4847, %v5030
  %v5056 = vmul.f32 %v4848, %v5030
  %v5057 = vmul.f32 %v4885, %v5030
  %v5058 = vmul.f32 %v4886, %v5030
  %v5059 = vmul.f32 %v4955, %v5030
  %v5060 = vmul.f32 %v4956, %v5030
  %v5061 = vmul.f32 %v5025, %v5030
  %v5062 = vmul.f32 %v5026, %v5030
  %v5063 = vadd.f32 %v4993, %v5031
  %v5064 = vadd.f32 %v4994, %v5032
  %v5065 = vadd.f32 %v4995, %v5033
  %v5066 = vadd.f32 %v4996, %v5034
  %v5067 = vadd.f32 %v4997, %v5035
  %v5068 = vadd.f32 %v4998, %v5036
  %v5069 = vadd.f32 %v4999, %v5037
  %v5070 = vadd.f32 %v5000, %v5038
  %v5071 = vadd.f32 %v5001, %v5039
  %v5072 = vadd.f32 %v5002, %v5040
  %v5073 = vadd.f32 %v5003, %v5041
  %v5074 = vadd.f32 %v5004, %v5042
  %v5075 = vadd.f32 %v5005, %v5043
  %v5076 = vadd.f32 %v5006, %v5044
  %v5077 = vadd.f32 %v5007, %v5045
  %v5078 = vadd.f32 %v5008, %v5046
  %v5079 = vadd.f32 %v5009, %v5047
  %v5080 = vadd.f32 %v5010, %v5048
  %v5081 = vadd.f32 %v5011, %v5049
  %v5082 = vadd.f32 %v5012, %v5050
  %v5083 = vadd.f32 %v5013, %v5051
  %v5084 = vadd.f32 %v5014, %v5052
  %v5085 = vadd.f32 %v5015, %v5053
  %v5086 = vadd.f32 %v5016, %v5054
  %v5087 = vadd.f32 %v5017, %v5055
  %v5088 = vadd.f32 %v5018, %v5056
  %v5089 = vadd.f32 %v5019, %v5057
  %v5090 = vadd.f32 %v5020, %v5058
  %v5091 = vadd.f32 %v5021, %v5059
  %v5092 = vadd.f32 %v5022, %v5060
  %v5093 = vadd.f32 %v5023, %v5061
  %v5094 = vadd.f32 %v5024, %v5062
  %v5095 = vld [vmem:[#allocation2 + $0x139] sm:$0xff]
  %v5096 = vld [vmem:[#allocation2 + $0x141] sm:$0xff]
  %v5097 = vlaneseq
  %v5098 = vshrl.u32 %v5097, 7
  %v5099 = vsub.s32 0, %v5098
  %v5100 = vrot.slane %v1998, %v5099
  %v5101 = vmul.f32 %v4825, %v5100
  %v5102 = vmul.f32 %v4826, %v5100
  %v5103 = vmul.f32 %v4827, %v5100
  %v5104 = vmul.f32 %v4828, %v5100
  %v5105 = vmul.f32 %v4829, %v5100
  %v5106 = vmul.f32 %v4830, %v5100
  %v5107 = vmul.f32 %v4831, %v5100
  %v5108 = vmul.f32 %v4832, %v5100
  %v5109 = vmul.f32 %v4833, %v5100
  %v5110 = vmul.f32 %v4834, %v5100
  %v5111 = vmul.f32 %v4835, %v5100
  %v5112 = vmul.f32 %v4836, %v5100
  %v5113 = vmul.f32 %v4837, %v5100
  %v5114 = vmul.f32 %v4838, %v5100
  %v5115 = vmul.f32 %v4839, %v5100
  %v5116 = vmul.f32 %v4840, %v5100
  %v5117 = vmul.f32 %v4841, %v5100
  %v5118 = vmul.f32 %v4842, %v5100
  %v5119 = vmul.f32 %v4843, %v5100
  %v5120 = vmul.f32 %v4844, %v5100
  %v5121 = vmul.f32 %v4845, %v5100
  %v5122 = vmul.f32 %v4846, %v5100
  %v5123 = vmul.f32 %v4847, %v5100
  %v5124 = vmul.f32 %v4848, %v5100
  %v5125 = vmul.f32 %v4885, %v5100
  %v5126 = vmul.f32 %v4886, %v5100
  %v5127 = vmul.f32 %v4955, %v5100
  %v5128 = vmul.f32 %v4956, %v5100
  %v5129 = vmul.f32 %v5025, %v5100
  %v5130 = vmul.f32 %v5026, %v5100
  %v5131 = vmul.f32 %v5095, %v5100
  %v5132 = vmul.f32 %v5096, %v5100
  %v5133 = vadd.f32 %v5063, %v5101
  %v5134 = vadd.f32 %v5064, %v5102
  %v5135 = vadd.f32 %v5065, %v5103
  %v5136 = vadd.f32 %v5066, %v5104
  %v5137 = vadd.f32 %v5067, %v5105
  %v5138 = vadd.f32 %v5068, %v5106
  %v5139 = vadd.f32 %v5069, %v5107
  %v5140 = vadd.f32 %v5070, %v5108
  %v5141 = vadd.f32 %v5071, %v5109
  %v5142 = vadd.f32 %v5072, %v5110
  %v5143 = vadd.f32 %v5073, %v5111
  %v5144 = vadd.f32 %v5074, %v5112
  %v5145 = vadd.f32 %v5075, %v5113
  %v5146 = vadd.f32 %v5076, %v5114
  %v5147 = vadd.f32 %v5077, %v5115
  %v5148 = vadd.f32 %v5078, %v5116
  %v5149 = vadd.f32 %v5079, %v5117
  %v5150 = vadd.f32 %v5080, %v5118
  %v5151 = vadd.f32 %v5081, %v5119
  %v5152 = vadd.f32 %v5082, %v5120
  %v5153 = vadd.f32 %v5083, %v5121
  %v5154 = vadd.f32 %v5084, %v5122
  %v5155 = vadd.f32 %v5085, %v5123
  %v5156 = vadd.f32 %v5086, %v5124
  %v5157 = vadd.f32 %v5087, %v5125
  %v5158 = vadd.f32 %v5088, %v5126
  %v5159 = vadd.f32 %v5089, %v5127
  %v5160 = vadd.f32 %v5090, %v5128
  %v5161 = vadd.f32 %v5091, %v5129
  %v5162 = vadd.f32 %v5092, %v5130
  %v5163 = vadd.f32 %v5093, %v5131
  %v5164 = vadd.f32 %v5094, %v5132
  %v5165 = vld [vmem:[#allocation2 + $0x149] sm:$0xff]
  %v5166 = vld [vmem:[#allocation2 + $0x151] sm:$0xff]
  %v5167 = vlaneseq
  %v5168 = vshrl.u32 %v5167, 7
  %v5169 = vsub.s32 7, %v5168
  %v5170 = vrot.slane %v1998, %v5169
  %v5171 = vmul.f32 %v4827, %v5170
  %v5172 = vmul.f32 %v4828, %v5170
  %v5173 = vmul.f32 %v4829, %v5170
  %v5174 = vmul.f32 %v4830, %v5170
  %v5175 = vmul.f32 %v4831, %v5170
  %v5176 = vmul.f32 %v4832, %v5170
  %v5177 = vmul.f32 %v4833, %v5170
  %v5178 = vmul.f32 %v4834, %v5170
  %v5179 = vmul.f32 %v4835, %v5170
  %v5180 = vmul.f32 %v4836, %v5170
  %v5181 = vmul.f32 %v4837, %v5170
  %v5182 = vmul.f32 %v4838, %v5170
  %v5183 = vmul.f32 %v4839, %v5170
  %v5184 = vmul.f32 %v4840, %v5170
  %v5185 = vmul.f32 %v4841, %v5170
  %v5186 = vmul.f32 %v4842, %v5170
  %v5187 = vmul.f32 %v4843, %v5170
  %v5188 = vmul.f32 %v4844, %v5170
  %v5189 = vmul.f32 %v4845, %v5170
  %v5190 = vmul.f32 %v4846, %v5170
  %v5191 = vmul.f32 %v4847, %v5170
  %v5192 = vmul.f32 %v4848, %v5170
  %v5193 = vmul.f32 %v4885, %v5170
  %v5194 = vmul.f32 %v4886, %v5170
  %v5195 = vmul.f32 %v4955, %v5170
  %v5196 = vmul.f32 %v4956, %v5170
  %v5197 = vmul.f32 %v5025, %v5170
  %v5198 = vmul.f32 %v5026, %v5170
  %v5199 = vmul.f32 %v5095, %v5170
  %v5200 = vmul.f32 %v5096, %v5170
  %v5201 = vmul.f32 %v5165, %v5170
  %v5202 = vmul.f32 %v5166, %v5170
  %v5203 = vadd.f32 %v5133, %v5171
  %v5204 = vadd.f32 %v5134, %v5172
  %v5205 = vadd.f32 %v5135, %v5173
  %v5206 = vadd.f32 %v5136, %v5174
  %v5207 = vadd.f32 %v5137, %v5175
  %v5208 = vadd.f32 %v5138, %v5176
  %v5209 = vadd.f32 %v5139, %v5177
  %v5210 = vadd.f32 %v5140, %v5178
  %v5211 = vadd.f32 %v5141, %v5179
  %v5212 = vadd.f32 %v5142, %v5180
  %v5213 = vadd.f32 %v5143, %v5181
  %v5214 = vadd.f32 %v5144, %v5182
  %v5215 = vadd.f32 %v5145, %v5183
  %v5216 = vadd.f32 %v5146, %v5184
  %v5217 = vadd.f32 %v5147, %v5185
  %v5218 = vadd.f32 %v5148, %v5186
  %v5219 = vadd.f32 %v5149, %v5187
  %v5220 = vadd.f32 %v5150, %v5188
  %v5221 = vadd.f32 %v5151, %v5189
  %v5222 = vadd.f32 %v5152, %v5190
  %v5223 = vadd.f32 %v5153, %v5191
  %v5224 = vadd.f32 %v5154, %v5192
  %v5225 = vadd.f32 %v5155, %v5193
  %v5226 = vadd.f32 %v5156, %v5194
  %v5227 = vadd.f32 %v5157, %v5195
  %v5228 = vadd.f32 %v5158, %v5196
  %v5229 = vadd.f32 %v5159, %v5197
  %v5230 = vadd.f32 %v5160, %v5198
  %v5231 = vadd.f32 %v5161, %v5199
  %v5232 = vadd.f32 %v5162, %v5200
  %v5233 = vadd.f32 %v5163, %v5201
  %v5234 = vadd.f32 %v5164, %v5202
  %v5235 = vld [vmem:[#allocation2 + $0x159] sm:$0xff]
  %v5236 = vld [vmem:[#allocation2 + $0x161] sm:$0xff]
  %v5237 = vlaneseq
  %v5238 = vshrl.u32 %v5237, 7
  %v5239 = vsub.s32 6, %v5238
  %v5240 = vrot.slane %v1999, %v5239
  %v5241 = vmul.f32 %v4829, %v5240
  %v5242 = vmul.f32 %v4830, %v5240
  %v5243 = vmul.f32 %v4831, %v5240
  %v5244 = vmul.f32 %v4832, %v5240
  %v5245 = vmul.f32 %v4833, %v5240
  %v5246 = vmul.f32 %v4834, %v5240
  %v5247 = vmul.f32 %v4835, %v5240
  %v5248 = vmul.f32 %v4836, %v5240
  %v5249 = vmul.f32 %v4837, %v5240
  %v5250 = vmul.f32 %v4838, %v5240
  %v5251 = vmul.f32 %v4839, %v5240
  %v5252 = vmul.f32 %v4840, %v5240
  %v5253 = vmul.f32 %v4841, %v5240
  %v5254 = vmul.f32 %v4842, %v5240
  %v5255 = vmul.f32 %v4843, %v5240
  %v5256 = vmul.f32 %v4844, %v5240
  %v5257 = vmul.f32 %v4845, %v5240
  %v5258 = vmul.f32 %v4846, %v5240
  %v5259 = vmul.f32 %v4847, %v5240
  %v5260 = vmul.f32 %v4848, %v5240
  %v5261 = vmul.f32 %v4885, %v5240
  %v5262 = vmul.f32 %v4886, %v5240
  %v5263 = vmul.f32 %v4955, %v5240
  %v5264 = vmul.f32 %v4956, %v5240
  %v5265 = vmul.f32 %v5025, %v5240
  %v5266 = vmul.f32 %v5026, %v5240
  %v5267 = vmul.f32 %v5095, %v5240
  %v5268 = vmul.f32 %v5096, %v5240
  %v5269 = vmul.f32 %v5165, %v5240
  %v5270 = vmul.f32 %v5166, %v5240
  %v5271 = vmul.f32 %v5235, %v5240
  %v5272 = vmul.f32 %v5236, %v5240
  %v5273 = vadd.f32 %v5203, %v5241
  %v5274 = vadd.f32 %v5204, %v5242
  %v5275 = vadd.f32 %v5205, %v5243
  %v5276 = vadd.f32 %v5206, %v5244
  %v5277 = vadd.f32 %v5207, %v5245
  %v5278 = vadd.f32 %v5208, %v5246
  %v5279 = vadd.f32 %v5209, %v5247
  %v5280 = vadd.f32 %v5210, %v5248
  %v5281 = vadd.f32 %v5211, %v5249
  %v5282 = vadd.f32 %v5212, %v5250
  %v5283 = vadd.f32 %v5213, %v5251
  %v5284 = vadd.f32 %v5214, %v5252
  %v5285 = vadd.f32 %v5215, %v5253
  %v5286 = vadd.f32 %v5216, %v5254
  %v5287 = vadd.f32 %v5217, %v5255
  %v5288 = vadd.f32 %v5218, %v5256
  %v5289 = vadd.f32 %v5219, %v5257
  %v5290 = vadd.f32 %v5220, %v5258
  %v5291 = vadd.f32 %v5221, %v5259
  %v5292 = vadd.f32 %v5222, %v5260
  %v5293 = vadd.f32 %v5223, %v5261
  %v5294 = vadd.f32 %v5224, %v5262
  %v5295 = vadd.f32 %v5225, %v5263
  %v5296 = vadd.f32 %v5226, %v5264
  %v5297 = vadd.f32 %v5227, %v5265
  %v5298 = vadd.f32 %v5228, %v5266
  %v5299 = vadd.f32 %v5229, %v5267
  %v5300 = vadd.f32 %v5230, %v5268
  %v5301 = vadd.f32 %v5231, %v5269
  %v5302 = vadd.f32 %v5232, %v5270
  %v5303 = vadd.f32 %v5233, %v5271
  %v5304 = vadd.f32 %v5234, %v5272
  %5306 = vset.pattern.permute.xlu0 0
  %5307 = vperm.xlu0 %5306, %v2097
  %v5308 = vpop.permute.xlu0 %5307
  %5311 = vset.pattern.permute.xlu0 0
  %5312 = vperm.xlu0 %5311, %v2098
  %v5313 = vpop.permute.xlu0 %5312
  %5316 = vset.pattern.permute.xlu0 0
  %5317 = vperm.xlu0 %5316, %v2099
  %v5318 = vpop.permute.xlu0 %5317
  %5321 = vset.pattern.permute.xlu0 0
  %5322 = vperm.xlu0 %5321, %v2100
  %v5323 = vpop.permute.xlu0 %5322
  %5326 = vset.pattern.permute.xlu0 0
  %5327 = vperm.xlu0 %5326, %v2101
  %v5328 = vpop.permute.xlu0 %5327
  %5331 = vset.pattern.permute.xlu0 0
  %5332 = vperm.xlu0 %5331, %v2102
  %v5333 = vpop.permute.xlu0 %5332
  %5336 = vset.pattern.permute.xlu0 0
  %5337 = vperm.xlu0 %5336, %v2103
  %v5338 = vpop.permute.xlu0 %5337
  %5341 = vset.pattern.permute.xlu0 0
  %5342 = vperm.xlu0 %5341, %v2104
  %v5343 = vpop.permute.xlu0 %5342
  %5346 = vset.pattern.permute.xlu0 0
  %5347 = vperm.xlu0 %5346, %v2105
  %v5348 = vpop.permute.xlu0 %5347
  %5351 = vset.pattern.permute.xlu0 0
  %5352 = vperm.xlu0 %5351, %v2106
  %v5353 = vpop.permute.xlu0 %5352
  %5356 = vset.pattern.permute.xlu0 0
  %5357 = vperm.xlu0 %5356, %v2107
  %v5358 = vpop.permute.xlu0 %5357
  %5361 = vset.pattern.permute.xlu0 0
  %5362 = vperm.xlu0 %5361, %v2108
  %v5363 = vpop.permute.xlu0 %5362
  %5366 = vset.pattern.permute.xlu0 0
  %5367 = vperm.xlu0 %5366, %v2109
  %v5368 = vpop.permute.xlu0 %5367
  %5371 = vset.pattern.permute.xlu0 0
  %5372 = vperm.xlu0 %5371, %v2110
  %v5373 = vpop.permute.xlu0 %5372
  %5376 = vset.pattern.permute.xlu0 0
  %5377 = vperm.xlu0 %5376, %v2111
  %v5378 = vpop.permute.xlu0 %5377
  %5381 = vset.pattern.permute.xlu0 0
  %5382 = vperm.xlu0 %5381, %v2112
  %v5383 = vpop.permute.xlu0 %5382
  %5386 = vset.pattern.permute.xlu0 0
  %5387 = vperm.xlu0 %5386, %v2113
  %v5388 = vpop.permute.xlu0 %5387
  %5391 = vset.pattern.permute.xlu0 0
  %5392 = vperm.xlu0 %5391, %v2114
  %v5393 = vpop.permute.xlu0 %5392
  %5396 = vset.pattern.permute.xlu0 0
  %5397 = vperm.xlu0 %5396, %v2115
  %v5398 = vpop.permute.xlu0 %5397
  %5401 = vset.pattern.permute.xlu0 0
  %5402 = vperm.xlu0 %5401, %v2116
  %v5403 = vpop.permute.xlu0 %5402
  %5406 = vset.pattern.permute.xlu0 0
  %5407 = vperm.xlu0 %5406, %v2117
  %v5408 = vpop.permute.xlu0 %5407
  %5411 = vset.pattern.permute.xlu0 0
  %5412 = vperm.xlu0 %5411, %v2118
  %v5413 = vpop.permute.xlu0 %5412
  %5416 = vset.pattern.permute.xlu0 0
  %5417 = vperm.xlu0 %5416, %v2119
  %v5418 = vpop.permute.xlu0 %5417
  %5421 = vset.pattern.permute.xlu0 0
  %5422 = vperm.xlu0 %5421, %v2120
  %v5423 = vpop.permute.xlu0 %5422
  %5426 = vset.pattern.permute.xlu0 0
  %5427 = vperm.xlu0 %5426, %v2121
  %v5428 = vpop.permute.xlu0 %5427
  %5431 = vset.pattern.permute.xlu0 0
  %5432 = vperm.xlu0 %5431, %v2122
  %v5433 = vpop.permute.xlu0 %5432
  %5436 = vset.pattern.permute.xlu0 0
  %5437 = vperm.xlu0 %5436, %v2123
  %v5438 = vpop.permute.xlu0 %5437
  %5441 = vset.pattern.permute.xlu0 0
  %5442 = vperm.xlu0 %5441, %v2124
  %v5443 = vpop.permute.xlu0 %5442
  %5446 = vset.pattern.permute.xlu0 0
  %5447 = vperm.xlu0 %5446, %v2125
  %v5448 = vpop.permute.xlu0 %5447
  %5451 = vset.pattern.permute.xlu0 0
  %5452 = vperm.xlu0 %5451, %v2126
  %v5453 = vpop.permute.xlu0 %5452
  %5456 = vset.pattern.permute.xlu0 0
  %5457 = vperm.xlu0 %5456, %v2127
  %v5458 = vpop.permute.xlu0 %5457
  %5461 = vset.pattern.permute.xlu0 0
  %5462 = vperm.xlu0 %5461, %v2128
  %v5463 = vpop.permute.xlu0 %5462
  %v5465 = vmul.f32 %v5273, %v5308
  %v5466 = vmul.f32 %v5274, %v5313
  %v5467 = vmul.f32 %v5275, %v5318
  %v5468 = vmul.f32 %v5276, %v5323
  %v5469 = vmul.f32 %v5277, %v5328
  %v5470 = vmul.f32 %v5278, %v5333
  %v5471 = vmul.f32 %v5279, %v5338
  %v5472 = vmul.f32 %v5280, %v5343
  %v5473 = vmul.f32 %v5281, %v5348
  %v5474 = vmul.f32 %v5282, %v5353
  %v5475 = vmul.f32 %v5283, %v5358
  %v5476 = vmul.f32 %v5284, %v5363
  %v5477 = vmul.f32 %v5285, %v5368
  %v5478 = vmul.f32 %v5286, %v5373
  %v5479 = vmul.f32 %v5287, %v5378
  %v5480 = vmul.f32 %v5288, %v5383
  %v5481 = vmul.f32 %v5289, %v5388
  %v5482 = vmul.f32 %v5290, %v5393
  %v5483 = vmul.f32 %v5291, %v5398
  %v5484 = vmul.f32 %v5292, %v5403
  %v5485 = vmul.f32 %v5293, %v5408
  %v5486 = vmul.f32 %v5294, %v5413
  %v5487 = vmul.f32 %v5295, %v5418
  %v5488 = vmul.f32 %v5296, %v5423
  %v5489 = vmul.f32 %v5297, %v5428
  %v5490 = vmul.f32 %v5298, %v5433
  %v5491 = vmul.f32 %v5299, %v5438
  %v5492 = vmul.f32 %v5300, %v5443
  %v5493 = vmul.f32 %v5301, %v5448
  %v5494 = vmul.f32 %v5302, %v5453
  %v5495 = vmul.f32 %v5303, %v5458
  %v5496 = vmul.f32 %v5304, %v5463
  %v5497 = vadd.f32 %v4785, %v5465
  %v5498 = vadd.f32 %v4786, %v5466
  %v5499 = vadd.f32 %v4787, %v5467
  %v5500 = vadd.f32 %v4788, %v5468
  %v5501 = vadd.f32 %v4789, %v5469
  %v5502 = vadd.f32 %v4790, %v5470
  %v5503 = vadd.f32 %v4791, %v5471
  %v5504 = vadd.f32 %v4792, %v5472
  %v5505 = vadd.f32 %v4793, %v5473
  %v5506 = vadd.f32 %v4794, %v5474
  %v5507 = vadd.f32 %v4795, %v5475
  %v5508 = vadd.f32 %v4796, %v5476
  %v5509 = vadd.f32 %v4797, %v5477
  %v5510 = vadd.f32 %v4798, %v5478
  %v5511 = vadd.f32 %v4799, %v5479
  %v5512 = vadd.f32 %v4800, %v5480
  %v5513 = vadd.f32 %v4801, %v5481
  %v5514 = vadd.f32 %v4802, %v5482
  %v5515 = vadd.f32 %v4803, %v5483
  %v5516 = vadd.f32 %v4804, %v5484
  %v5517 = vadd.f32 %v4805, %v5485
  %v5518 = vadd.f32 %v4806, %v5486
  %v5519 = vadd.f32 %v4807, %v5487
  %v5520 = vadd.f32 %v4808, %v5488
  %v5521 = vadd.f32 %v4809, %v5489
  %v5522 = vadd.f32 %v4810, %v5490
  %v5523 = vadd.f32 %v4811, %v5491
  %v5524 = vadd.f32 %v4812, %v5492
  %v5525 = vadd.f32 %v4813, %v5493
  %v5526 = vadd.f32 %v4814, %v5494
  %v5527 = vadd.f32 %v4815, %v5495
  %v5528 = vadd.f32 %v4816, %v5496
  %v5529 = vld [vmem:[#allocation2 + $0xa] sm:$0xff]
  %v5530 = vld [vmem:[#allocation2 + $0x12] sm:$0xff]
  %v5531 = vld [vmem:[#allocation2 + $0x1a] sm:$0xff]
  %v5532 = vld [vmem:[#allocation2 + $0x22] sm:$0xff]
  %v5533 = vld [vmem:[#allocation2 + $0x2a] sm:$0xff]
  %v5534 = vld [vmem:[#allocation2 + $0x32] sm:$0xff]
  %v5535 = vld [vmem:[#allocation2 + $0x3a] sm:$0xff]
  %v5536 = vld [vmem:[#allocation2 + $0x42] sm:$0xff]
  %v5537 = vld [vmem:[#allocation2 + $0x4a] sm:$0xff]
  %v5538 = vld [vmem:[#allocation2 + $0x52] sm:$0xff]
  %v5539 = vld [vmem:[#allocation2 + $0x5a] sm:$0xff]
  %v5540 = vld [vmem:[#allocation2 + $0x62] sm:$0xff]
  %v5541 = vld [vmem:[#allocation2 + $0x6a] sm:$0xff]
  %v5542 = vld [vmem:[#allocation2 + $0x72] sm:$0xff]
  %v5543 = vld [vmem:[#allocation2 + $0x7a] sm:$0xff]
  %v5544 = vld [vmem:[#allocation2 + $0x82] sm:$0xff]
  %v5545 = vld [vmem:[#allocation2 + $0x8a] sm:$0xff]
  %v5546 = vld [vmem:[#allocation2 + $0x92] sm:$0xff]
  %v5547 = vld [vmem:[#allocation2 + $0x9a] sm:$0xff]
  %v5548 = vld [vmem:[#allocation2 + $0xa2] sm:$0xff]
  %v5549 = vld [vmem:[#allocation2 + $0xaa] sm:$0xff]
  %v5550 = vld [vmem:[#allocation2 + $0xb2] sm:$0xff]
  %v5551 = vld [vmem:[#allocation2 + $0xba] sm:$0xff]
  %v5552 = vld [vmem:[#allocation2 + $0xc2] sm:$0xff]
  %v5553 = vld [vmem:[#allocation2 + $0xca] sm:$0xff]
  %v5554 = vld [vmem:[#allocation2 + $0xd2] sm:$0xff]
  %v5555 = vld [vmem:[#allocation2 + $0xda] sm:$0xff]
  %v5556 = vld [vmem:[#allocation2 + $0xe2] sm:$0xff]
  %v5557 = vld [vmem:[#allocation2 + $0xea] sm:$0xff]
  %v5558 = vld [vmem:[#allocation2 + $0xf2] sm:$0xff]
  %v5559 = vld [vmem:[#allocation2 + $0xfa] sm:$0xff]
  %v5560 = vld [vmem:[#allocation2 + $0x102] sm:$0xff]
  %v5561 = vlaneseq
  %v5562 = vshrl.u32 %v5561, 7
  %v5563 = vsub.s32 5, %v5562
  %v5564 = vrot.slane %v1994, %v5563
  %v5565 = vmul.f32 %v5529, %v5564
  %v5566 = vmul.f32 %v5530, %v5564
  %v5567 = vmul.f32 %v5531, %v5564
  %v5568 = vmul.f32 %v5532, %v5564
  %v5569 = vmul.f32 %v5533, %v5564
  %v5570 = vmul.f32 %v5534, %v5564
  %v5571 = vmul.f32 %v5535, %v5564
  %v5572 = vmul.f32 %v5536, %v5564
  %v5573 = vmul.f32 %v5537, %v5564
  %v5574 = vmul.f32 %v5538, %v5564
  %v5575 = vmul.f32 %v5539, %v5564
  %v5576 = vmul.f32 %v5540, %v5564
  %v5577 = vmul.f32 %v5541, %v5564
  %v5578 = vmul.f32 %v5542, %v5564
  %v5579 = vmul.f32 %v5543, %v5564
  %v5580 = vmul.f32 %v5544, %v5564
  %v5581 = vmul.f32 %v5545, %v5564
  %v5582 = vmul.f32 %v5546, %v5564
  %v5583 = vmul.f32 %v5547, %v5564
  %v5584 = vmul.f32 %v5548, %v5564
  %v5585 = vmul.f32 %v5549, %v5564
  %v5586 = vmul.f32 %v5550, %v5564
  %v5587 = vmul.f32 %v5551, %v5564
  %v5588 = vmul.f32 %v5552, %v5564
  %v5589 = vmul.f32 %v5553, %v5564
  %v5590 = vmul.f32 %v5554, %v5564
  %v5591 = vmul.f32 %v5555, %v5564
  %v5592 = vmul.f32 %v5556, %v5564
  %v5593 = vmul.f32 %v5557, %v5564
  %v5594 = vmul.f32 %v5558, %v5564
  %v5595 = vmul.f32 %v5559, %v5564
  %v5596 = vmul.f32 %v5560, %v5564
  %v5597 = vld [vmem:[#allocation2 + $0x10a] sm:$0xff]
  %v5598 = vld [vmem:[#allocation2 + $0x112] sm:$0xff]
  %v5599 = vlaneseq
  %v5600 = vshrl.u32 %v5599, 7
  %v5601 = vsub.s32 4, %v5600
  %v5602 = vrot.slane %v1995, %v5601
  %v5603 = vmul.f32 %v5531, %v5602
  %v5604 = vmul.f32 %v5532, %v5602
  %v5605 = vmul.f32 %v5533, %v5602
  %v5606 = vmul.f32 %v5534, %v5602
  %v5607 = vmul.f32 %v5535, %v5602
  %v5608 = vmul.f32 %v5536, %v5602
  %v5609 = vmul.f32 %v5537, %v5602
  %v5610 = vmul.f32 %v5538, %v5602
  %v5611 = vmul.f32 %v5539, %v5602
  %v5612 = vmul.f32 %v5540, %v5602
  %v5613 = vmul.f32 %v5541, %v5602
  %v5614 = vmul.f32 %v5542, %v5602
  %v5615 = vmul.f32 %v5543, %v5602
  %v5616 = vmul.f32 %v5544, %v5602
  %v5617 = vmul.f32 %v5545, %v5602
  %v5618 = vmul.f32 %v5546, %v5602
  %v5619 = vmul.f32 %v5547, %v5602
  %v5620 = vmul.f32 %v5548, %v5602
  %v5621 = vmul.f32 %v5549, %v5602
  %v5622 = vmul.f32 %v5550, %v5602
  %v5623 = vmul.f32 %v5551, %v5602
  %v5624 = vmul.f32 %v5552, %v5602
  %v5625 = vmul.f32 %v5553, %v5602
  %v5626 = vmul.f32 %v5554, %v5602
  %v5627 = vmul.f32 %v5555, %v5602
  %v5628 = vmul.f32 %v5556, %v5602
  %v5629 = vmul.f32 %v5557, %v5602
  %v5630 = vmul.f32 %v5558, %v5602
  %v5631 = vmul.f32 %v5559, %v5602
  %v5632 = vmul.f32 %v5560, %v5602
  %v5633 = vmul.f32 %v5597, %v5602
  %v5634 = vmul.f32 %v5598, %v5602
  %v5635 = vadd.f32 %v5565, %v5603
  %v5636 = vadd.f32 %v5566, %v5604
  %v5637 = vadd.f32 %v5567, %v5605
  %v5638 = vadd.f32 %v5568, %v5606
  %v5639 = vadd.f32 %v5569, %v5607
  %v5640 = vadd.f32 %v5570, %v5608
  %v5641 = vadd.f32 %v5571, %v5609
  %v5642 = vadd.f32 %v5572, %v5610
  %v5643 = vadd.f32 %v5573, %v5611
  %v5644 = vadd.f32 %v5574, %v5612
  %v5645 = vadd.f32 %v5575, %v5613
  %v5646 = vadd.f32 %v5576, %v5614
  %v5647 = vadd.f32 %v5577, %v5615
  %v5648 = vadd.f32 %v5578, %v5616
  %v5649 = vadd.f32 %v5579, %v5617
  %v5650 = vadd.f32 %v5580, %v5618
  %v5651 = vadd.f32 %v5581, %v5619
  %v5652 = vadd.f32 %v5582, %v5620
  %v5653 = vadd.f32 %v5583, %v5621
  %v5654 = vadd.f32 %v5584, %v5622
  %v5655 = vadd.f32 %v5585, %v5623
  %v5656 = vadd.f32 %v5586, %v5624
  %v5657 = vadd.f32 %v5587, %v5625
  %v5658 = vadd.f32 %v5588, %v5626
  %v5659 = vadd.f32 %v5589, %v5627
  %v5660 = vadd.f32 %v5590, %v5628
  %v5661 = vadd.f32 %v5591, %v5629
  %v5662 = vadd.f32 %v5592, %v5630
  %v5663 = vadd.f32 %v5593, %v5631
  %v5664 = vadd.f32 %v5594, %v5632
  %v5665 = vadd.f32 %v5595, %v5633
  %v5666 = vadd.f32 %v5596, %v5634
  %v5667 = vld [vmem:[#allocation2 + $0x11a] sm:$0xff]
  %v5668 = vld [vmem:[#allocation2 + $0x122] sm:$0xff]
  %v5669 = vlaneseq
  %v5670 = vshrl.u32 %v5669, 7
  %v5671 = vsub.s32 3, %v5670
  %v5672 = vrot.slane %v1996, %v5671
  %v5673 = vmul.f32 %v5533, %v5672
  %v5674 = vmul.f32 %v5534, %v5672
  %v5675 = vmul.f32 %v5535, %v5672
  %v5676 = vmul.f32 %v5536, %v5672
  %v5677 = vmul.f32 %v5537, %v5672
  %v5678 = vmul.f32 %v5538, %v5672
  %v5679 = vmul.f32 %v5539, %v5672
  %v5680 = vmul.f32 %v5540, %v5672
  %v5681 = vmul.f32 %v5541, %v5672
  %v5682 = vmul.f32 %v5542, %v5672
  %v5683 = vmul.f32 %v5543, %v5672
  %v5684 = vmul.f32 %v5544, %v5672
  %v5685 = vmul.f32 %v5545, %v5672
  %v5686 = vmul.f32 %v5546, %v5672
  %v5687 = vmul.f32 %v5547, %v5672
  %v5688 = vmul.f32 %v5548, %v5672
  %v5689 = vmul.f32 %v5549, %v5672
  %v5690 = vmul.f32 %v5550, %v5672
  %v5691 = vmul.f32 %v5551, %v5672
  %v5692 = vmul.f32 %v5552, %v5672
  %v5693 = vmul.f32 %v5553, %v5672
  %v5694 = vmul.f32 %v5554, %v5672
  %v5695 = vmul.f32 %v5555, %v5672
  %v5696 = vmul.f32 %v5556, %v5672
  %v5697 = vmul.f32 %v5557, %v5672
  %v5698 = vmul.f32 %v5558, %v5672
  %v5699 = vmul.f32 %v5559, %v5672
  %v5700 = vmul.f32 %v5560, %v5672
  %v5701 = vmul.f32 %v5597, %v5672
  %v5702 = vmul.f32 %v5598, %v5672
  %v5703 = vmul.f32 %v5667, %v5672
  %v5704 = vmul.f32 %v5668, %v5672
  %v5705 = vadd.f32 %v5635, %v5673
  %v5706 = vadd.f32 %v5636, %v5674
  %v5707 = vadd.f32 %v5637, %v5675
  %v5708 = vadd.f32 %v5638, %v5676
  %v5709 = vadd.f32 %v5639, %v5677
  %v5710 = vadd.f32 %v5640, %v5678
  %v5711 = vadd.f32 %v5641, %v5679
  %v5712 = vadd.f32 %v5642, %v5680
  %v5713 = vadd.f32 %v5643, %v5681
  %v5714 = vadd.f32 %v5644, %v5682
  %v5715 = vadd.f32 %v5645, %v5683
  %v5716 = vadd.f32 %v5646, %v5684
  %v5717 = vadd.f32 %v5647, %v5685
  %v5718 = vadd.f32 %v5648, %v5686
  %v5719 = vadd.f32 %v5649, %v5687
  %v5720 = vadd.f32 %v5650, %v5688
  %v5721 = vadd.f32 %v5651, %v5689
  %v5722 = vadd.f32 %v5652, %v5690
  %v5723 = vadd.f32 %v5653, %v5691
  %v5724 = vadd.f32 %v5654, %v5692
  %v5725 = vadd.f32 %v5655, %v5693
  %v5726 = vadd.f32 %v5656, %v5694
  %v5727 = vadd.f32 %v5657, %v5695
  %v5728 = vadd.f32 %v5658, %v5696
  %v5729 = vadd.f32 %v5659, %v5697
  %v5730 = vadd.f32 %v5660, %v5698
  %v5731 = vadd.f32 %v5661, %v5699
  %v5732 = vadd.f32 %v5662, %v5700
  %v5733 = vadd.f32 %v5663, %v5701
  %v5734 = vadd.f32 %v5664, %v5702
  %v5735 = vadd.f32 %v5665, %v5703
  %v5736 = vadd.f32 %v5666, %v5704
  %v5737 = vld [vmem:[#allocation2 + $0x12a] sm:$0xff]
  %v5738 = vld [vmem:[#allocation2 + $0x132] sm:$0xff]
  %v5739 = vlaneseq
  %v5740 = vshrl.u32 %v5739, 7
  %v5741 = vsub.s32 2, %v5740
  %v5742 = vrot.slane %v1997, %v5741
  %v5743 = vmul.f32 %v5535, %v5742
  %v5744 = vmul.f32 %v5536, %v5742
  %v5745 = vmul.f32 %v5537, %v5742
  %v5746 = vmul.f32 %v5538, %v5742
  %v5747 = vmul.f32 %v5539, %v5742
  %v5748 = vmul.f32 %v5540, %v5742
  %v5749 = vmul.f32 %v5541, %v5742
  %v5750 = vmul.f32 %v5542, %v5742
  %v5751 = vmul.f32 %v5543, %v5742
  %v5752 = vmul.f32 %v5544, %v5742
  %v5753 = vmul.f32 %v5545, %v5742
  %v5754 = vmul.f32 %v5546, %v5742
  %v5755 = vmul.f32 %v5547, %v5742
  %v5756 = vmul.f32 %v5548, %v5742
  %v5757 = vmul.f32 %v5549, %v5742
  %v5758 = vmul.f32 %v5550, %v5742
  %v5759 = vmul.f32 %v5551, %v5742
  %v5760 = vmul.f32 %v5552, %v5742
  %v5761 = vmul.f32 %v5553, %v5742
  %v5762 = vmul.f32 %v5554, %v5742
  %v5763 = vmul.f32 %v5555, %v5742
  %v5764 = vmul.f32 %v5556, %v5742
  %v5765 = vmul.f32 %v5557, %v5742
  %v5766 = vmul.f32 %v5558, %v5742
  %v5767 = vmul.f32 %v5559, %v5742
  %v5768 = vmul.f32 %v5560, %v5742
  %v5769 = vmul.f32 %v5597, %v5742
  %v5770 = vmul.f32 %v5598, %v5742
  %v5771 = vmul.f32 %v5667, %v5742
  %v5772 = vmul.f32 %v5668, %v5742
  %v5773 = vmul.f32 %v5737, %v5742
  %v5774 = vmul.f32 %v5738, %v5742
  %v5775 = vadd.f32 %v5705, %v5743
  %v5776 = vadd.f32 %v5706, %v5744
  %v5777 = vadd.f32 %v5707, %v5745
  %v5778 = vadd.f32 %v5708, %v5746
  %v5779 = vadd.f32 %v5709, %v5747
  %v5780 = vadd.f32 %v5710, %v5748
  %v5781 = vadd.f32 %v5711, %v5749
  %v5782 = vadd.f32 %v5712, %v5750
  %v5783 = vadd.f32 %v5713, %v5751
  %v5784 = vadd.f32 %v5714, %v5752
  %v5785 = vadd.f32 %v5715, %v5753
  %v5786 = vadd.f32 %v5716, %v5754
  %v5787 = vadd.f32 %v5717, %v5755
  %v5788 = vadd.f32 %v5718, %v5756
  %v5789 = vadd.f32 %v5719, %v5757
  %v5790 = vadd.f32 %v5720, %v5758
  %v5791 = vadd.f32 %v5721, %v5759
  %v5792 = vadd.f32 %v5722, %v5760
  %v5793 = vadd.f32 %v5723, %v5761
  %v5794 = vadd.f32 %v5724, %v5762
  %v5795 = vadd.f32 %v5725, %v5763
  %v5796 = vadd.f32 %v5726, %v5764
  %v5797 = vadd.f32 %v5727, %v5765
  %v5798 = vadd.f32 %v5728, %v5766
  %v5799 = vadd.f32 %v5729, %v5767
  %v5800 = vadd.f32 %v5730, %v5768
  %v5801 = vadd.f32 %v5731, %v5769
  %v5802 = vadd.f32 %v5732, %v5770
  %v5803 = vadd.f32 %v5733, %v5771
  %v5804 = vadd.f32 %v5734, %v5772
  %v5805 = vadd.f32 %v5735, %v5773
  %v5806 = vadd.f32 %v5736, %v5774
  %v5807 = vld [vmem:[#allocation2 + $0x13a] sm:$0xff]
  %v5808 = vld [vmem:[#allocation2 + $0x142] sm:$0xff]
  %v5809 = vlaneseq
  %v5810 = vshrl.u32 %v5809, 7
  %v5811 = vsub.s32 1, %v5810
  %v5812 = vrot.slane %v1998, %v5811
  %v5813 = vmul.f32 %v5537, %v5812
  %v5814 = vmul.f32 %v5538, %v5812
  %v5815 = vmul.f32 %v5539, %v5812
  %v5816 = vmul.f32 %v5540, %v5812
  %v5817 = vmul.f32 %v5541, %v5812
  %v5818 = vmul.f32 %v5542, %v5812
  %v5819 = vmul.f32 %v5543, %v5812
  %v5820 = vmul.f32 %v5544, %v5812
  %v5821 = vmul.f32 %v5545, %v5812
  %v5822 = vmul.f32 %v5546, %v5812
  %v5823 = vmul.f32 %v5547, %v5812
  %v5824 = vmul.f32 %v5548, %v5812
  %v5825 = vmul.f32 %v5549, %v5812
  %v5826 = vmul.f32 %v5550, %v5812
  %v5827 = vmul.f32 %v5551, %v5812
  %v5828 = vmul.f32 %v5552, %v5812
  %v5829 = vmul.f32 %v5553, %v5812
  %v5830 = vmul.f32 %v5554, %v5812
  %v5831 = vmul.f32 %v5555, %v5812
  %v5832 = vmul.f32 %v5556, %v5812
  %v5833 = vmul.f32 %v5557, %v5812
  %v5834 = vmul.f32 %v5558, %v5812
  %v5835 = vmul.f32 %v5559, %v5812
  %v5836 = vmul.f32 %v5560, %v5812
  %v5837 = vmul.f32 %v5597, %v5812
  %v5838 = vmul.f32 %v5598, %v5812
  %v5839 = vmul.f32 %v5667, %v5812
  %v5840 = vmul.f32 %v5668, %v5812
  %v5841 = vmul.f32 %v5737, %v5812
  %v5842 = vmul.f32 %v5738, %v5812
  %v5843 = vmul.f32 %v5807, %v5812
  %v5844 = vmul.f32 %v5808, %v5812
  %v5845 = vadd.f32 %v5775, %v5813
  %v5846 = vadd.f32 %v5776, %v5814
  %v5847 = vadd.f32 %v5777, %v5815
  %v5848 = vadd.f32 %v5778, %v5816
  %v5849 = vadd.f32 %v5779, %v5817
  %v5850 = vadd.f32 %v5780, %v5818
  %v5851 = vadd.f32 %v5781, %v5819
  %v5852 = vadd.f32 %v5782, %v5820
  %v5853 = vadd.f32 %v5783, %v5821
  %v5854 = vadd.f32 %v5784, %v5822
  %v5855 = vadd.f32 %v5785, %v5823
  %v5856 = vadd.f32 %v5786, %v5824
  %v5857 = vadd.f32 %v5787, %v5825
  %v5858 = vadd.f32 %v5788, %v5826
  %v5859 = vadd.f32 %v5789, %v5827
  %v5860 = vadd.f32 %v5790, %v5828
  %v5861 = vadd.f32 %v5791, %v5829
  %v5862 = vadd.f32 %v5792, %v5830
  %v5863 = vadd.f32 %v5793, %v5831
  %v5864 = vadd.f32 %v5794, %v5832
  %v5865 = vadd.f32 %v5795, %v5833
  %v5866 = vadd.f32 %v5796, %v5834
  %v5867 = vadd.f32 %v5797, %v5835
  %v5868 = vadd.f32 %v5798, %v5836
  %v5869 = vadd.f32 %v5799, %v5837
  %v5870 = vadd.f32 %v5800, %v5838
  %v5871 = vadd.f32 %v5801, %v5839
  %v5872 = vadd.f32 %v5802, %v5840
  %v5873 = vadd.f32 %v5803, %v5841
  %v5874 = vadd.f32 %v5804, %v5842
  %v5875 = vadd.f32 %v5805, %v5843
  %v5876 = vadd.f32 %v5806, %v5844
  %v5877 = vld [vmem:[#allocation2 + $0x14a] sm:$0xff]
  %v5878 = vld [vmem:[#allocation2 + $0x152] sm:$0xff]
  %v5879 = vlaneseq
  %v5880 = vshrl.u32 %v5879, 7
  %v5881 = vsub.s32 0, %v5880
  %v5882 = vrot.slane %v1999, %v5881
  %v5883 = vmul.f32 %v5539, %v5882
  %v5884 = vmul.f32 %v5540, %v5882
  %v5885 = vmul.f32 %v5541, %v5882
  %v5886 = vmul.f32 %v5542, %v5882
  %v5887 = vmul.f32 %v5543, %v5882
  %v5888 = vmul.f32 %v5544, %v5882
  %v5889 = vmul.f32 %v5545, %v5882
  %v5890 = vmul.f32 %v5546, %v5882
  %v5891 = vmul.f32 %v5547, %v5882
  %v5892 = vmul.f32 %v5548, %v5882
  %v5893 = vmul.f32 %v5549, %v5882
  %v5894 = vmul.f32 %v5550, %v5882
  %v5895 = vmul.f32 %v5551, %v5882
  %v5896 = vmul.f32 %v5552, %v5882
  %v5897 = vmul.f32 %v5553, %v5882
  %v5898 = vmul.f32 %v5554, %v5882
  %v5899 = vmul.f32 %v5555, %v5882
  %v5900 = vmul.f32 %v5556, %v5882
  %v5901 = vmul.f32 %v5557, %v5882
  %v5902 = vmul.f32 %v5558, %v5882
  %v5903 = vmul.f32 %v5559, %v5882
  %v5904 = vmul.f32 %v5560, %v5882
  %v5905 = vmul.f32 %v5597, %v5882
  %v5906 = vmul.f32 %v5598, %v5882
  %v5907 = vmul.f32 %v5667, %v5882
  %v5908 = vmul.f32 %v5668, %v5882
  %v5909 = vmul.f32 %v5737, %v5882
  %v5910 = vmul.f32 %v5738, %v5882
  %v5911 = vmul.f32 %v5807, %v5882
  %v5912 = vmul.f32 %v5808, %v5882
  %v5913 = vmul.f32 %v5877, %v5882
  %v5914 = vmul.f32 %v5878, %v5882
  %v5915 = vadd.f32 %v5845, %v5883
  %v5916 = vadd.f32 %v5846, %v5884
  %v5917 = vadd.f32 %v5847, %v5885
  %v5918 = vadd.f32 %v5848, %v5886
  %v5919 = vadd.f32 %v5849, %v5887
  %v5920 = vadd.f32 %v5850, %v5888
  %v5921 = vadd.f32 %v5851, %v5889
  %v5922 = vadd.f32 %v5852, %v5890
  %v5923 = vadd.f32 %v5853, %v5891
  %v5924 = vadd.f32 %v5854, %v5892
  %v5925 = vadd.f32 %v5855, %v5893
  %v5926 = vadd.f32 %v5856, %v5894
  %v5927 = vadd.f32 %v5857, %v5895
  %v5928 = vadd.f32 %v5858, %v5896
  %v5929 = vadd.f32 %v5859, %v5897
  %v5930 = vadd.f32 %v5860, %v5898
  %v5931 = vadd.f32 %v5861, %v5899
  %v5932 = vadd.f32 %v5862, %v5900
  %v5933 = vadd.f32 %v5863, %v5901
  %v5934 = vadd.f32 %v5864, %v5902
  %v5935 = vadd.f32 %v5865, %v5903
  %v5936 = vadd.f32 %v5866, %v5904
  %v5937 = vadd.f32 %v5867, %v5905
  %v5938 = vadd.f32 %v5868, %v5906
  %v5939 = vadd.f32 %v5869, %v5907
  %v5940 = vadd.f32 %v5870, %v5908
  %v5941 = vadd.f32 %v5871, %v5909
  %v5942 = vadd.f32 %v5872, %v5910
  %v5943 = vadd.f32 %v5873, %v5911
  %v5944 = vadd.f32 %v5874, %v5912
  %v5945 = vadd.f32 %v5875, %v5913
  %v5946 = vadd.f32 %v5876, %v5914
  %v5947 = vld [vmem:[#allocation2 + $0x15a] sm:$0xff]
  %v5948 = vld [vmem:[#allocation2 + $0x162] sm:$0xff]
  %v5949 = vlaneseq
  %v5950 = vshrl.u32 %v5949, 7
  %v5951 = vsub.s32 7, %v5950
  %v5952 = vrot.slane %v1999, %v5951
  %v5953 = vmul.f32 %v5541, %v5952
  %v5954 = vmul.f32 %v5542, %v5952
  %v5955 = vmul.f32 %v5543, %v5952
  %v5956 = vmul.f32 %v5544, %v5952
  %v5957 = vmul.f32 %v5545, %v5952
  %v5958 = vmul.f32 %v5546, %v5952
  %v5959 = vmul.f32 %v5547, %v5952
  %v5960 = vmul.f32 %v5548, %v5952
  %v5961 = vmul.f32 %v5549, %v5952
  %v5962 = vmul.f32 %v5550, %v5952
  %v5963 = vmul.f32 %v5551, %v5952
  %v5964 = vmul.f32 %v5552, %v5952
  %v5965 = vmul.f32 %v5553, %v5952
  %v5966 = vmul.f32 %v5554, %v5952
  %v5967 = vmul.f32 %v5555, %v5952
  %v5968 = vmul.f32 %v5556, %v5952
  %v5969 = vmul.f32 %v5557, %v5952
  %v5970 = vmul.f32 %v5558, %v5952
  %v5971 = vmul.f32 %v5559, %v5952
  %v5972 = vmul.f32 %v5560, %v5952
  %v5973 = vmul.f32 %v5597, %v5952
  %v5974 = vmul.f32 %v5598, %v5952
  %v5975 = vmul.f32 %v5667, %v5952
  %v5976 = vmul.f32 %v5668, %v5952
  %v5977 = vmul.f32 %v5737, %v5952
  %v5978 = vmul.f32 %v5738, %v5952
  %v5979 = vmul.f32 %v5807, %v5952
  %v5980 = vmul.f32 %v5808, %v5952
  %v5981 = vmul.f32 %v5877, %v5952
  %v5982 = vmul.f32 %v5878, %v5952
  %v5983 = vmul.f32 %v5947, %v5952
  %v5984 = vmul.f32 %v5948, %v5952
  %v5985 = vadd.f32 %v5915, %v5953
  %v5986 = vadd.f32 %v5916, %v5954
  %v5987 = vadd.f32 %v5917, %v5955
  %v5988 = vadd.f32 %v5918, %v5956
  %v5989 = vadd.f32 %v5919, %v5957
  %v5990 = vadd.f32 %v5920, %v5958
  %v5991 = vadd.f32 %v5921, %v5959
  %v5992 = vadd.f32 %v5922, %v5960
  %v5993 = vadd.f32 %v5923, %v5961
  %v5994 = vadd.f32 %v5924, %v5962
  %v5995 = vadd.f32 %v5925, %v5963
  %v5996 = vadd.f32 %v5926, %v5964
  %v5997 = vadd.f32 %v5927, %v5965
  %v5998 = vadd.f32 %v5928, %v5966
  %v5999 = vadd.f32 %v5929, %v5967
  %v6000 = vadd.f32 %v5930, %v5968
  %v6001 = vadd.f32 %v5931, %v5969
  %v6002 = vadd.f32 %v5932, %v5970
  %v6003 = vadd.f32 %v5933, %v5971
  %v6004 = vadd.f32 %v5934, %v5972
  %v6005 = vadd.f32 %v5935, %v5973
  %v6006 = vadd.f32 %v5936, %v5974
  %v6007 = vadd.f32 %v5937, %v5975
  %v6008 = vadd.f32 %v5938, %v5976
  %v6009 = vadd.f32 %v5939, %v5977
  %v6010 = vadd.f32 %v5940, %v5978
  %v6011 = vadd.f32 %v5941, %v5979
  %v6012 = vadd.f32 %v5942, %v5980
  %v6013 = vadd.f32 %v5943, %v5981
  %v6014 = vadd.f32 %v5944, %v5982
  %v6015 = vadd.f32 %v5945, %v5983
  %v6016 = vadd.f32 %v5946, %v5984
  %6018 = vset.pattern.permute.xlu0 0
  %6019 = vperm.xlu0 %6018, %v2129
  %v6020 = vpop.permute.xlu0 %6019
  %6023 = vset.pattern.permute.xlu0 0
  %6024 = vperm.xlu0 %6023, %v2130
  %v6025 = vpop.permute.xlu0 %6024
  %6028 = vset.pattern.permute.xlu0 0
  %6029 = vperm.xlu0 %6028, %v2131
  %v6030 = vpop.permute.xlu0 %6029
  %6033 = vset.pattern.permute.xlu0 0
  %6034 = vperm.xlu0 %6033, %v2132
  %v6035 = vpop.permute.xlu0 %6034
  %6038 = vset.pattern.permute.xlu0 0
  %6039 = vperm.xlu0 %6038, %v2133
  %v6040 = vpop.permute.xlu0 %6039
  %6043 = vset.pattern.permute.xlu0 0
  %6044 = vperm.xlu0 %6043, %v2134
  %v6045 = vpop.permute.xlu0 %6044
  %6048 = vset.pattern.permute.xlu0 0
  %6049 = vperm.xlu0 %6048, %v2135
  %v6050 = vpop.permute.xlu0 %6049
  %6053 = vset.pattern.permute.xlu0 0
  %6054 = vperm.xlu0 %6053, %v2136
  %v6055 = vpop.permute.xlu0 %6054
  %6058 = vset.pattern.permute.xlu0 0
  %6059 = vperm.xlu0 %6058, %v2137
  %v6060 = vpop.permute.xlu0 %6059
  %6063 = vset.pattern.permute.xlu0 0
  %6064 = vperm.xlu0 %6063, %v2138
  %v6065 = vpop.permute.xlu0 %6064
  %6068 = vset.pattern.permute.xlu0 0
  %6069 = vperm.xlu0 %6068, %v2139
  %v6070 = vpop.permute.xlu0 %6069
  %6073 = vset.pattern.permute.xlu0 0
  %6074 = vperm.xlu0 %6073, %v2140
  %v6075 = vpop.permute.xlu0 %6074
  %6078 = vset.pattern.permute.xlu0 0
  %6079 = vperm.xlu0 %6078, %v2141
  %v6080 = vpop.permute.xlu0 %6079
  %6083 = vset.pattern.permute.xlu0 0
  %6084 = vperm.xlu0 %6083, %v2142
  %v6085 = vpop.permute.xlu0 %6084
  %6088 = vset.pattern.permute.xlu0 0
  %6089 = vperm.xlu0 %6088, %v2143
  %v6090 = vpop.permute.xlu0 %6089
  %6093 = vset.pattern.permute.xlu0 0
  %6094 = vperm.xlu0 %6093, %v2144
  %v6095 = vpop.permute.xlu0 %6094
  %6098 = vset.pattern.permute.xlu0 0
  %6099 = vperm.xlu0 %6098, %v2145
  %v6100 = vpop.permute.xlu0 %6099
  %6103 = vset.pattern.permute.xlu0 0
  %6104 = vperm.xlu0 %6103, %v2146
  %v6105 = vpop.permute.xlu0 %6104
  %6108 = vset.pattern.permute.xlu0 0
  %6109 = vperm.xlu0 %6108, %v2147
  %v6110 = vpop.permute.xlu0 %6109
  %6113 = vset.pattern.permute.xlu0 0
  %6114 = vperm.xlu0 %6113, %v2148
  %v6115 = vpop.permute.xlu0 %6114
  %6118 = vset.pattern.permute.xlu0 0
  %6119 = vperm.xlu0 %6118, %v2149
  %v6120 = vpop.permute.xlu0 %6119
  %6123 = vset.pattern.permute.xlu0 0
  %6124 = vperm.xlu0 %6123, %v2150
  %v6125 = vpop.permute.xlu0 %6124
  %6128 = vset.pattern.permute.xlu0 0
  %6129 = vperm.xlu0 %6128, %v2151
  %v6130 = vpop.permute.xlu0 %6129
  %6133 = vset.pattern.permute.xlu0 0
  %6134 = vperm.xlu0 %6133, %v2152
  %v6135 = vpop.permute.xlu0 %6134
  %6138 = vset.pattern.permute.xlu0 0
  %6139 = vperm.xlu0 %6138, %v2153
  %v6140 = vpop.permute.xlu0 %6139
  %6143 = vset.pattern.permute.xlu0 0
  %6144 = vperm.xlu0 %6143, %v2154
  %v6145 = vpop.permute.xlu0 %6144
  %6148 = vset.pattern.permute.xlu0 0
  %6149 = vperm.xlu0 %6148, %v2155
  %v6150 = vpop.permute.xlu0 %6149
  %6153 = vset.pattern.permute.xlu0 0
  %6154 = vperm.xlu0 %6153, %v2156
  %v6155 = vpop.permute.xlu0 %6154
  %6158 = vset.pattern.permute.xlu0 0
  %6159 = vperm.xlu0 %6158, %v2157
  %v6160 = vpop.permute.xlu0 %6159
  %6163 = vset.pattern.permute.xlu0 0
  %6164 = vperm.xlu0 %6163, %v2158
  %v6165 = vpop.permute.xlu0 %6164
  %6168 = vset.pattern.permute.xlu0 0
  %6169 = vperm.xlu0 %6168, %v2159
  %v6170 = vpop.permute.xlu0 %6169
  %6173 = vset.pattern.permute.xlu0 0
  %6174 = vperm.xlu0 %6173, %v2160
  %v6175 = vpop.permute.xlu0 %6174
  %v6177 = vmul.f32 %v5985, %v6020
  %v6178 = vmul.f32 %v5986, %v6025
  %v6179 = vmul.f32 %v5987, %v6030
  %v6180 = vmul.f32 %v5988, %v6035
  %v6181 = vmul.f32 %v5989, %v6040
  %v6182 = vmul.f32 %v5990, %v6045
  %v6183 = vmul.f32 %v5991, %v6050
  %v6184 = vmul.f32 %v5992, %v6055
  %v6185 = vmul.f32 %v5993, %v6060
  %v6186 = vmul.f32 %v5994, %v6065
  %v6187 = vmul.f32 %v5995, %v6070
  %v6188 = vmul.f32 %v5996, %v6075
  %v6189 = vmul.f32 %v5997, %v6080
  %v6190 = vmul.f32 %v5998, %v6085
  %v6191 = vmul.f32 %v5999, %v6090
  %v6192 = vmul.f32 %v6000, %v6095
  %v6193 = vmul.f32 %v6001, %v6100
  %v6194 = vmul.f32 %v6002, %v6105
  %v6195 = vmul.f32 %v6003, %v6110
  %v6196 = vmul.f32 %v6004, %v6115
  %v6197 = vmul.f32 %v6005, %v6120
  %v6198 = vmul.f32 %v6006, %v6125
  %v6199 = vmul.f32 %v6007, %v6130
  %v6200 = vmul.f32 %v6008, %v6135
  %v6201 = vmul.f32 %v6009, %v6140
  %v6202 = vmul.f32 %v6010, %v6145
  %v6203 = vmul.f32 %v6011, %v6150
  %v6204 = vmul.f32 %v6012, %v6155
  %v6205 = vmul.f32 %v6013, %v6160
  %v6206 = vmul.f32 %v6014, %v6165
  %v6207 = vmul.f32 %v6015, %v6170
  %v6208 = vmul.f32 %v6016, %v6175
  %v6209 = vadd.f32 %v5497, %v6177
  %v6210 = vadd.f32 %v5498, %v6178
  %v6211 = vadd.f32 %v5499, %v6179
  %v6212 = vadd.f32 %v5500, %v6180
  %v6213 = vadd.f32 %v5501, %v6181
  %v6214 = vadd.f32 %v5502, %v6182
  %v6215 = vadd.f32 %v5503, %v6183
  %v6216 = vadd.f32 %v5504, %v6184
  %v6217 = vadd.f32 %v5505, %v6185
  %v6218 = vadd.f32 %v5506, %v6186
  %v6219 = vadd.f32 %v5507, %v6187
  %v6220 = vadd.f32 %v5508, %v6188
  %v6221 = vadd.f32 %v5509, %v6189
  %v6222 = vadd.f32 %v5510, %v6190
  %v6223 = vadd.f32 %v5511, %v6191
  %v6224 = vadd.f32 %v5512, %v6192
  %v6225 = vadd.f32 %v5513, %v6193
  %v6226 = vadd.f32 %v5514, %v6194
  %v6227 = vadd.f32 %v5515, %v6195
  %v6228 = vadd.f32 %v5516, %v6196
  %v6229 = vadd.f32 %v5517, %v6197
  %v6230 = vadd.f32 %v5518, %v6198
  %v6231 = vadd.f32 %v5519, %v6199
  %v6232 = vadd.f32 %v5520, %v6200
  %v6233 = vadd.f32 %v5521, %v6201
  %v6234 = vadd.f32 %v5522, %v6202
  %v6235 = vadd.f32 %v5523, %v6203
  %v6236 = vadd.f32 %v5524, %v6204
  %v6237 = vadd.f32 %v5525, %v6205
  %v6238 = vadd.f32 %v5526, %v6206
  %v6239 = vadd.f32 %v5527, %v6207
  %v6240 = vadd.f32 %v5528, %v6208
  %v6241 = vld [vmem:[#allocation2 + $0xb] sm:$0xff]
  %v6242 = vld [vmem:[#allocation2 + $0x13] sm:$0xff]
  %v6243 = vld [vmem:[#allocation2 + $0x1b] sm:$0xff]
  %v6244 = vld [vmem:[#allocation2 + $0x23] sm:$0xff]
  %v6245 = vld [vmem:[#allocation2 + $0x2b] sm:$0xff]
  %v6246 = vld [vmem:[#allocation2 + $0x33] sm:$0xff]
  %v6247 = vld [vmem:[#allocation2 + $0x3b] sm:$0xff]
  %v6248 = vld [vmem:[#allocation2 + $0x43] sm:$0xff]
  %v6249 = vld [vmem:[#allocation2 + $0x4b] sm:$0xff]
  %v6250 = vld [vmem:[#allocation2 + $0x53] sm:$0xff]
  %v6251 = vld [vmem:[#allocation2 + $0x5b] sm:$0xff]
  %v6252 = vld [vmem:[#allocation2 + $0x63] sm:$0xff]
  %v6253 = vld [vmem:[#allocation2 + $0x6b] sm:$0xff]
  %v6254 = vld [vmem:[#allocation2 + $0x73] sm:$0xff]
  %v6255 = vld [vmem:[#allocation2 + $0x7b] sm:$0xff]
  %v6256 = vld [vmem:[#allocation2 + $0x83] sm:$0xff]
  %v6257 = vld [vmem:[#allocation2 + $0x8b] sm:$0xff]
  %v6258 = vld [vmem:[#allocation2 + $0x93] sm:$0xff]
  %v6259 = vld [vmem:[#allocation2 + $0x9b] sm:$0xff]
  %v6260 = vld [vmem:[#allocation2 + $0xa3] sm:$0xff]
  %v6261 = vld [vmem:[#allocation2 + $0xab] sm:$0xff]
  %v6262 = vld [vmem:[#allocation2 + $0xb3] sm:$0xff]
  %v6263 = vld [vmem:[#allocation2 + $0xbb] sm:$0xff]
  %v6264 = vld [vmem:[#allocation2 + $0xc3] sm:$0xff]
  %v6265 = vld [vmem:[#allocation2 + $0xcb] sm:$0xff]
  %v6266 = vld [vmem:[#allocation2 + $0xd3] sm:$0xff]
  %v6267 = vld [vmem:[#allocation2 + $0xdb] sm:$0xff]
  %v6268 = vld [vmem:[#allocation2 + $0xe3] sm:$0xff]
  %v6269 = vld [vmem:[#allocation2 + $0xeb] sm:$0xff]
  %v6270 = vld [vmem:[#allocation2 + $0xf3] sm:$0xff]
  %v6271 = vld [vmem:[#allocation2 + $0xfb] sm:$0xff]
  %v6272 = vld [vmem:[#allocation2 + $0x103] sm:$0xff]
  %v6273 = vlaneseq
  %v6274 = vshrl.u32 %v6273, 7
  %v6275 = vsub.s32 6, %v6274
  %v6276 = vrot.slane %v1994, %v6275
  %v6277 = vmul.f32 %v6241, %v6276
  %v6278 = vmul.f32 %v6242, %v6276
  %v6279 = vmul.f32 %v6243, %v6276
  %v6280 = vmul.f32 %v6244, %v6276
  %v6281 = vmul.f32 %v6245, %v6276
  %v6282 = vmul.f32 %v6246, %v6276
  %v6283 = vmul.f32 %v6247, %v6276
  %v6284 = vmul.f32 %v6248, %v6276
  %v6285 = vmul.f32 %v6249, %v6276
  %v6286 = vmul.f32 %v6250, %v6276
  %v6287 = vmul.f32 %v6251, %v6276
  %v6288 = vmul.f32 %v6252, %v6276
  %v6289 = vmul.f32 %v6253, %v6276
  %v6290 = vmul.f32 %v6254, %v6276
  %v6291 = vmul.f32 %v6255, %v6276
  %v6292 = vmul.f32 %v6256, %v6276
  %v6293 = vmul.f32 %v6257, %v6276
  %v6294 = vmul.f32 %v6258, %v6276
  %v6295 = vmul.f32 %v6259, %v6276
  %v6296 = vmul.f32 %v6260, %v6276
  %v6297 = vmul.f32 %v6261, %v6276
  %v6298 = vmul.f32 %v6262, %v6276
  %v6299 = vmul.f32 %v6263, %v6276
  %v6300 = vmul.f32 %v6264, %v6276
  %v6301 = vmul.f32 %v6265, %v6276
  %v6302 = vmul.f32 %v6266, %v6276
  %v6303 = vmul.f32 %v6267, %v6276
  %v6304 = vmul.f32 %v6268, %v6276
  %v6305 = vmul.f32 %v6269, %v6276
  %v6306 = vmul.f32 %v6270, %v6276
  %v6307 = vmul.f32 %v6271, %v6276
  %v6308 = vmul.f32 %v6272, %v6276
  %v6309 = vld [vmem:[#allocation2 + $0x10b] sm:$0xff]
  %v6310 = vld [vmem:[#allocation2 + $0x113] sm:$0xff]
  %v6311 = vlaneseq
  %v6312 = vshrl.u32 %v6311, 7
  %v6313 = vsub.s32 5, %v6312
  %v6314 = vrot.slane %v1995, %v6313
  %v6315 = vmul.f32 %v6243, %v6314
  %v6316 = vmul.f32 %v6244, %v6314
  %v6317 = vmul.f32 %v6245, %v6314
  %v6318 = vmul.f32 %v6246, %v6314
  %v6319 = vmul.f32 %v6247, %v6314
  %v6320 = vmul.f32 %v6248, %v6314
  %v6321 = vmul.f32 %v6249, %v6314
  %v6322 = vmul.f32 %v6250, %v6314
  %v6323 = vmul.f32 %v6251, %v6314
  %v6324 = vmul.f32 %v6252, %v6314
  %v6325 = vmul.f32 %v6253, %v6314
  %v6326 = vmul.f32 %v6254, %v6314
  %v6327 = vmul.f32 %v6255, %v6314
  %v6328 = vmul.f32 %v6256, %v6314
  %v6329 = vmul.f32 %v6257, %v6314
  %v6330 = vmul.f32 %v6258, %v6314
  %v6331 = vmul.f32 %v6259, %v6314
  %v6332 = vmul.f32 %v6260, %v6314
  %v6333 = vmul.f32 %v6261, %v6314
  %v6334 = vmul.f32 %v6262, %v6314
  %v6335 = vmul.f32 %v6263, %v6314
  %v6336 = vmul.f32 %v6264, %v6314
  %v6337 = vmul.f32 %v6265, %v6314
  %v6338 = vmul.f32 %v6266, %v6314
  %v6339 = vmul.f32 %v6267, %v6314
  %v6340 = vmul.f32 %v6268, %v6314
  %v6341 = vmul.f32 %v6269, %v6314
  %v6342 = vmul.f32 %v6270, %v6314
  %v6343 = vmul.f32 %v6271, %v6314
  %v6344 = vmul.f32 %v6272, %v6314
  %v6345 = vmul.f32 %v6309, %v6314
  %v6346 = vmul.f32 %v6310, %v6314
  %v6347 = vadd.f32 %v6277, %v6315
  %v6348 = vadd.f32 %v6278, %v6316
  %v6349 = vadd.f32 %v6279, %v6317
  %v6350 = vadd.f32 %v6280, %v6318
  %v6351 = vadd.f32 %v6281, %v6319
  %v6352 = vadd.f32 %v6282, %v6320
  %v6353 = vadd.f32 %v6283, %v6321
  %v6354 = vadd.f32 %v6284, %v6322
  %v6355 = vadd.f32 %v6285, %v6323
  %v6356 = vadd.f32 %v6286, %v6324
  %v6357 = vadd.f32 %v6287, %v6325
  %v6358 = vadd.f32 %v6288, %v6326
  %v6359 = vadd.f32 %v6289, %v6327
  %v6360 = vadd.f32 %v6290, %v6328
  %v6361 = vadd.f32 %v6291, %v6329
  %v6362 = vadd.f32 %v6292, %v6330
  %v6363 = vadd.f32 %v6293, %v6331
  %v6364 = vadd.f32 %v6294, %v6332
  %v6365 = vadd.f32 %v6295, %v6333
  %v6366 = vadd.f32 %v6296, %v6334
  %v6367 = vadd.f32 %v6297, %v6335
  %v6368 = vadd.f32 %v6298, %v6336
  %v6369 = vadd.f32 %v6299, %v6337
  %v6370 = vadd.f32 %v6300, %v6338
  %v6371 = vadd.f32 %v6301, %v6339
  %v6372 = vadd.f32 %v6302, %v6340
  %v6373 = vadd.f32 %v6303, %v6341
  %v6374 = vadd.f32 %v6304, %v6342
  %v6375 = vadd.f32 %v6305, %v6343
  %v6376 = vadd.f32 %v6306, %v6344
  %v6377 = vadd.f32 %v6307, %v6345
  %v6378 = vadd.f32 %v6308, %v6346
  %v6379 = vld [vmem:[#allocation2 + $0x11b] sm:$0xff]
  %v6380 = vld [vmem:[#allocation2 + $0x123] sm:$0xff]
  %v6381 = vlaneseq
  %v6382 = vshrl.u32 %v6381, 7
  %v6383 = vsub.s32 4, %v6382
  %v6384 = vrot.slane %v1996, %v6383
  %v6385 = vmul.f32 %v6245, %v6384
  %v6386 = vmul.f32 %v6246, %v6384
  %v6387 = vmul.f32 %v6247, %v6384
  %v6388 = vmul.f32 %v6248, %v6384
  %v6389 = vmul.f32 %v6249, %v6384
  %v6390 = vmul.f32 %v6250, %v6384
  %v6391 = vmul.f32 %v6251, %v6384
  %v6392 = vmul.f32 %v6252, %v6384
  %v6393 = vmul.f32 %v6253, %v6384
  %v6394 = vmul.f32 %v6254, %v6384
  %v6395 = vmul.f32 %v6255, %v6384
  %v6396 = vmul.f32 %v6256, %v6384
  %v6397 = vmul.f32 %v6257, %v6384
  %v6398 = vmul.f32 %v6258, %v6384
  %v6399 = vmul.f32 %v6259, %v6384
  %v6400 = vmul.f32 %v6260, %v6384
  %v6401 = vmul.f32 %v6261, %v6384
  %v6402 = vmul.f32 %v6262, %v6384
  %v6403 = vmul.f32 %v6263, %v6384
  %v6404 = vmul.f32 %v6264, %v6384
  %v6405 = vmul.f32 %v6265, %v6384
  %v6406 = vmul.f32 %v6266, %v6384
  %v6407 = vmul.f32 %v6267, %v6384
  %v6408 = vmul.f32 %v6268, %v6384
  %v6409 = vmul.f32 %v6269, %v6384
  %v6410 = vmul.f32 %v6270, %v6384
  %v6411 = vmul.f32 %v6271, %v6384
  %v6412 = vmul.f32 %v6272, %v6384
  %v6413 = vmul.f32 %v6309, %v6384
  %v6414 = vmul.f32 %v6310, %v6384
  %v6415 = vmul.f32 %v6379, %v6384
  %v6416 = vmul.f32 %v6380, %v6384
  %v6417 = vadd.f32 %v6347, %v6385
  %v6418 = vadd.f32 %v6348, %v6386
  %v6419 = vadd.f32 %v6349, %v6387
  %v6420 = vadd.f32 %v6350, %v6388
  %v6421 = vadd.f32 %v6351, %v6389
  %v6422 = vadd.f32 %v6352, %v6390
  %v6423 = vadd.f32 %v6353, %v6391
  %v6424 = vadd.f32 %v6354, %v6392
  %v6425 = vadd.f32 %v6355, %v6393
  %v6426 = vadd.f32 %v6356, %v6394
  %v6427 = vadd.f32 %v6357, %v6395
  %v6428 = vadd.f32 %v6358, %v6396
  %v6429 = vadd.f32 %v6359, %v6397
  %v6430 = vadd.f32 %v6360, %v6398
  %v6431 = vadd.f32 %v6361, %v6399
  %v6432 = vadd.f32 %v6362, %v6400
  %v6433 = vadd.f32 %v6363, %v6401
  %v6434 = vadd.f32 %v6364, %v6402
  %v6435 = vadd.f32 %v6365, %v6403
  %v6436 = vadd.f32 %v6366, %v6404
  %v6437 = vadd.f32 %v6367, %v6405
  %v6438 = vadd.f32 %v6368, %v6406
  %v6439 = vadd.f32 %v6369, %v6407
  %v6440 = vadd.f32 %v6370, %v6408
  %v6441 = vadd.f32 %v6371, %v6409
  %v6442 = vadd.f32 %v6372, %v6410
  %v6443 = vadd.f32 %v6373, %v6411
  %v6444 = vadd.f32 %v6374, %v6412
  %v6445 = vadd.f32 %v6375, %v6413
  %v6446 = vadd.f32 %v6376, %v6414
  %v6447 = vadd.f32 %v6377, %v6415
  %v6448 = vadd.f32 %v6378, %v6416
  %v6449 = vld [vmem:[#allocation2 + $0x12b] sm:$0xff]
  %v6450 = vld [vmem:[#allocation2 + $0x133] sm:$0xff]
  %v6451 = vlaneseq
  %v6452 = vshrl.u32 %v6451, 7
  %v6453 = vsub.s32 3, %v6452
  %v6454 = vrot.slane %v1997, %v6453
  %v6455 = vmul.f32 %v6247, %v6454
  %v6456 = vmul.f32 %v6248, %v6454
  %v6457 = vmul.f32 %v6249, %v6454
  %v6458 = vmul.f32 %v6250, %v6454
  %v6459 = vmul.f32 %v6251, %v6454
  %v6460 = vmul.f32 %v6252, %v6454
  %v6461 = vmul.f32 %v6253, %v6454
  %v6462 = vmul.f32 %v6254, %v6454
  %v6463 = vmul.f32 %v6255, %v6454
  %v6464 = vmul.f32 %v6256, %v6454
  %v6465 = vmul.f32 %v6257, %v6454
  %v6466 = vmul.f32 %v6258, %v6454
  %v6467 = vmul.f32 %v6259, %v6454
  %v6468 = vmul.f32 %v6260, %v6454
  %v6469 = vmul.f32 %v6261, %v6454
  %v6470 = vmul.f32 %v6262, %v6454
  %v6471 = vmul.f32 %v6263, %v6454
  %v6472 = vmul.f32 %v6264, %v6454
  %v6473 = vmul.f32 %v6265, %v6454
  %v6474 = vmul.f32 %v6266, %v6454
  %v6475 = vmul.f32 %v6267, %v6454
  %v6476 = vmul.f32 %v6268, %v6454
  %v6477 = vmul.f32 %v6269, %v6454
  %v6478 = vmul.f32 %v6270, %v6454
  %v6479 = vmul.f32 %v6271, %v6454
  %v6480 = vmul.f32 %v6272, %v6454
  %v6481 = vmul.f32 %v6309, %v6454
  %v6482 = vmul.f32 %v6310, %v6454
  %v6483 = vmul.f32 %v6379, %v6454
  %v6484 = vmul.f32 %v6380, %v6454
  %v6485 = vmul.f32 %v6449, %v6454
  %v6486 = vmul.f32 %v6450, %v6454
  %v6487 = vadd.f32 %v6417, %v6455
  %v6488 = vadd.f32 %v6418, %v6456
  %v6489 = vadd.f32 %v6419, %v6457
  %v6490 = vadd.f32 %v6420, %v6458
  %v6491 = vadd.f32 %v6421, %v6459
  %v6492 = vadd.f32 %v6422, %v6460
  %v6493 = vadd.f32 %v6423, %v6461
  %v6494 = vadd.f32 %v6424, %v6462
  %v6495 = vadd.f32 %v6425, %v6463
  %v6496 = vadd.f32 %v6426, %v6464
  %v6497 = vadd.f32 %v6427, %v6465
  %v6498 = vadd.f32 %v6428, %v6466
  %v6499 = vadd.f32 %v6429, %v6467
  %v6500 = vadd.f32 %v6430, %v6468
  %v6501 = vadd.f32 %v6431, %v6469
  %v6502 = vadd.f32 %v6432, %v6470
  %v6503 = vadd.f32 %v6433, %v6471
  %v6504 = vadd.f32 %v6434, %v6472
  %v6505 = vadd.f32 %v6435, %v6473
  %v6506 = vadd.f32 %v6436, %v6474
  %v6507 = vadd.f32 %v6437, %v6475
  %v6508 = vadd.f32 %v6438, %v6476
  %v6509 = vadd.f32 %v6439, %v6477
  %v6510 = vadd.f32 %v6440, %v6478
  %v6511 = vadd.f32 %v6441, %v6479
  %v6512 = vadd.f32 %v6442, %v6480
  %v6513 = vadd.f32 %v6443, %v6481
  %v6514 = vadd.f32 %v6444, %v6482
  %v6515 = vadd.f32 %v6445, %v6483
  %v6516 = vadd.f32 %v6446, %v6484
  %v6517 = vadd.f32 %v6447, %v6485
  %v6518 = vadd.f32 %v6448, %v6486
  %v6519 = vld [vmem:[#allocation2 + $0x13b] sm:$0xff]
  %v6520 = vld [vmem:[#allocation2 + $0x143] sm:$0xff]
  %v6521 = vlaneseq
  %v6522 = vshrl.u32 %v6521, 7
  %v6523 = vsub.s32 2, %v6522
  %v6524 = vrot.slane %v1998, %v6523
  %v6525 = vmul.f32 %v6249, %v6524
  %v6526 = vmul.f32 %v6250, %v6524
  %v6527 = vmul.f32 %v6251, %v6524
  %v6528 = vmul.f32 %v6252, %v6524
  %v6529 = vmul.f32 %v6253, %v6524
  %v6530 = vmul.f32 %v6254, %v6524
  %v6531 = vmul.f32 %v6255, %v6524
  %v6532 = vmul.f32 %v6256, %v6524
  %v6533 = vmul.f32 %v6257, %v6524
  %v6534 = vmul.f32 %v6258, %v6524
  %v6535 = vmul.f32 %v6259, %v6524
  %v6536 = vmul.f32 %v6260, %v6524
  %v6537 = vmul.f32 %v6261, %v6524
  %v6538 = vmul.f32 %v6262, %v6524
  %v6539 = vmul.f32 %v6263, %v6524
  %v6540 = vmul.f32 %v6264, %v6524
  %v6541 = vmul.f32 %v6265, %v6524
  %v6542 = vmul.f32 %v6266, %v6524
  %v6543 = vmul.f32 %v6267, %v6524
  %v6544 = vmul.f32 %v6268, %v6524
  %v6545 = vmul.f32 %v6269, %v6524
  %v6546 = vmul.f32 %v6270, %v6524
  %v6547 = vmul.f32 %v6271, %v6524
  %v6548 = vmul.f32 %v6272, %v6524
  %v6549 = vmul.f32 %v6309, %v6524
  %v6550 = vmul.f32 %v6310, %v6524
  %v6551 = vmul.f32 %v6379, %v6524
  %v6552 = vmul.f32 %v6380, %v6524
  %v6553 = vmul.f32 %v6449, %v6524
  %v6554 = vmul.f32 %v6450, %v6524
  %v6555 = vmul.f32 %v6519, %v6524
  %v6556 = vmul.f32 %v6520, %v6524
  %v6557 = vadd.f32 %v6487, %v6525
  %v6558 = vadd.f32 %v6488, %v6526
  %v6559 = vadd.f32 %v6489, %v6527
  %v6560 = vadd.f32 %v6490, %v6528
  %v6561 = vadd.f32 %v6491, %v6529
  %v6562 = vadd.f32 %v6492, %v6530
  %v6563 = vadd.f32 %v6493, %v6531
  %v6564 = vadd.f32 %v6494, %v6532
  %v6565 = vadd.f32 %v6495, %v6533
  %v6566 = vadd.f32 %v6496, %v6534
  %v6567 = vadd.f32 %v6497, %v6535
  %v6568 = vadd.f32 %v6498, %v6536
  %v6569 = vadd.f32 %v6499, %v6537
  %v6570 = vadd.f32 %v6500, %v6538
  %v6571 = vadd.f32 %v6501, %v6539
  %v6572 = vadd.f32 %v6502, %v6540
  %v6573 = vadd.f32 %v6503, %v6541
  %v6574 = vadd.f32 %v6504, %v6542
  %v6575 = vadd.f32 %v6505, %v6543
  %v6576 = vadd.f32 %v6506, %v6544
  %v6577 = vadd.f32 %v6507, %v6545
  %v6578 = vadd.f32 %v6508, %v6546
  %v6579 = vadd.f32 %v6509, %v6547
  %v6580 = vadd.f32 %v6510, %v6548
  %v6581 = vadd.f32 %v6511, %v6549
  %v6582 = vadd.f32 %v6512, %v6550
  %v6583 = vadd.f32 %v6513, %v6551
  %v6584 = vadd.f32 %v6514, %v6552
  %v6585 = vadd.f32 %v6515, %v6553
  %v6586 = vadd.f32 %v6516, %v6554
  %v6587 = vadd.f32 %v6517, %v6555
  %v6588 = vadd.f32 %v6518, %v6556
  %v6589 = vld [vmem:[#allocation2 + $0x14b] sm:$0xff]
  %v6590 = vld [vmem:[#allocation2 + $0x153] sm:$0xff]
  %v6591 = vlaneseq
  %v6592 = vshrl.u32 %v6591, 7
  %v6593 = vsub.s32 1, %v6592
  %v6594 = vrot.slane %v1999, %v6593
  %v6595 = vmul.f32 %v6251, %v6594
  %v6596 = vmul.f32 %v6252, %v6594
  %v6597 = vmul.f32 %v6253, %v6594
  %v6598 = vmul.f32 %v6254, %v6594
  %v6599 = vmul.f32 %v6255, %v6594
  %v6600 = vmul.f32 %v6256, %v6594
  %v6601 = vmul.f32 %v6257, %v6594
  %v6602 = vmul.f32 %v6258, %v6594
  %v6603 = vmul.f32 %v6259, %v6594
  %v6604 = vmul.f32 %v6260, %v6594
  %v6605 = vmul.f32 %v6261, %v6594
  %v6606 = vmul.f32 %v6262, %v6594
  %v6607 = vmul.f32 %v6263, %v6594
  %v6608 = vmul.f32 %v6264, %v6594
  %v6609 = vmul.f32 %v6265, %v6594
  %v6610 = vmul.f32 %v6266, %v6594
  %v6611 = vmul.f32 %v6267, %v6594
  %v6612 = vmul.f32 %v6268, %v6594
  %v6613 = vmul.f32 %v6269, %v6594
  %v6614 = vmul.f32 %v6270, %v6594
  %v6615 = vmul.f32 %v6271, %v6594
  %v6616 = vmul.f32 %v6272, %v6594
  %v6617 = vmul.f32 %v6309, %v6594
  %v6618 = vmul.f32 %v6310, %v6594
  %v6619 = vmul.f32 %v6379, %v6594
  %v6620 = vmul.f32 %v6380, %v6594
  %v6621 = vmul.f32 %v6449, %v6594
  %v6622 = vmul.f32 %v6450, %v6594
  %v6623 = vmul.f32 %v6519, %v6594
  %v6624 = vmul.f32 %v6520, %v6594
  %v6625 = vmul.f32 %v6589, %v6594
  %v6626 = vmul.f32 %v6590, %v6594
  %v6627 = vadd.f32 %v6557, %v6595
  %v6628 = vadd.f32 %v6558, %v6596
  %v6629 = vadd.f32 %v6559, %v6597
  %v6630 = vadd.f32 %v6560, %v6598
  %v6631 = vadd.f32 %v6561, %v6599
  %v6632 = vadd.f32 %v6562, %v6600
  %v6633 = vadd.f32 %v6563, %v6601
  %v6634 = vadd.f32 %v6564, %v6602
  %v6635 = vadd.f32 %v6565, %v6603
  %v6636 = vadd.f32 %v6566, %v6604
  %v6637 = vadd.f32 %v6567, %v6605
  %v6638 = vadd.f32 %v6568, %v6606
  %v6639 = vadd.f32 %v6569, %v6607
  %v6640 = vadd.f32 %v6570, %v6608
  %v6641 = vadd.f32 %v6571, %v6609
  %v6642 = vadd.f32 %v6572, %v6610
  %v6643 = vadd.f32 %v6573, %v6611
  %v6644 = vadd.f32 %v6574, %v6612
  %v6645 = vadd.f32 %v6575, %v6613
  %v6646 = vadd.f32 %v6576, %v6614
  %v6647 = vadd.f32 %v6577, %v6615
  %v6648 = vadd.f32 %v6578, %v6616
  %v6649 = vadd.f32 %v6579, %v6617
  %v6650 = vadd.f32 %v6580, %v6618
  %v6651 = vadd.f32 %v6581, %v6619
  %v6652 = vadd.f32 %v6582, %v6620
  %v6653 = vadd.f32 %v6583, %v6621
  %v6654 = vadd.f32 %v6584, %v6622
  %v6655 = vadd.f32 %v6585, %v6623
  %v6656 = vadd.f32 %v6586, %v6624
  %v6657 = vadd.f32 %v6587, %v6625
  %v6658 = vadd.f32 %v6588, %v6626
  %v6659 = vld [vmem:[#allocation2 + $0x15b] sm:$0xff]
  %v6660 = vld [vmem:[#allocation2 + $0x163] sm:$0xff]
  %v6661 = vlaneseq
  %v6662 = vshrl.u32 %v6661, 7
  %v6663 = vsub.s32 0, %v6662
  %v6664 = vrot.slane %v2000, %v6663
  %v6665 = vmul.f32 %v6253, %v6664
  %v6666 = vmul.f32 %v6254, %v6664
  %v6667 = vmul.f32 %v6255, %v6664
  %v6668 = vmul.f32 %v6256, %v6664
  %v6669 = vmul.f32 %v6257, %v6664
  %v6670 = vmul.f32 %v6258, %v6664
  %v6671 = vmul.f32 %v6259, %v6664
  %v6672 = vmul.f32 %v6260, %v6664
  %v6673 = vmul.f32 %v6261, %v6664
  %v6674 = vmul.f32 %v6262, %v6664
  %v6675 = vmul.f32 %v6263, %v6664
  %v6676 = vmul.f32 %v6264, %v6664
  %v6677 = vmul.f32 %v6265, %v6664
  %v6678 = vmul.f32 %v6266, %v6664
  %v6679 = vmul.f32 %v6267, %v6664
  %v6680 = vmul.f32 %v6268, %v6664
  %v6681 = vmul.f32 %v6269, %v6664
  %v6682 = vmul.f32 %v6270, %v6664
  %v6683 = vmul.f32 %v6271, %v6664
  %v6684 = vmul.f32 %v6272, %v6664
  %v6685 = vmul.f32 %v6309, %v6664
  %v6686 = vmul.f32 %v6310, %v6664
  %v6687 = vmul.f32 %v6379, %v6664
  %v6688 = vmul.f32 %v6380, %v6664
  %v6689 = vmul.f32 %v6449, %v6664
  %v6690 = vmul.f32 %v6450, %v6664
  %v6691 = vmul.f32 %v6519, %v6664
  %v6692 = vmul.f32 %v6520, %v6664
  %v6693 = vmul.f32 %v6589, %v6664
  %v6694 = vmul.f32 %v6590, %v6664
  %v6695 = vmul.f32 %v6659, %v6664
  %v6696 = vmul.f32 %v6660, %v6664
  %v6697 = vadd.f32 %v6627, %v6665
  %v6698 = vadd.f32 %v6628, %v6666
  %v6699 = vadd.f32 %v6629, %v6667
  %v6700 = vadd.f32 %v6630, %v6668
  %v6701 = vadd.f32 %v6631, %v6669
  %v6702 = vadd.f32 %v6632, %v6670
  %v6703 = vadd.f32 %v6633, %v6671
  %v6704 = vadd.f32 %v6634, %v6672
  %v6705 = vadd.f32 %v6635, %v6673
  %v6706 = vadd.f32 %v6636, %v6674
  %v6707 = vadd.f32 %v6637, %v6675
  %v6708 = vadd.f32 %v6638, %v6676
  %v6709 = vadd.f32 %v6639, %v6677
  %v6710 = vadd.f32 %v6640, %v6678
  %v6711 = vadd.f32 %v6641, %v6679
  %v6712 = vadd.f32 %v6642, %v6680
  %v6713 = vadd.f32 %v6643, %v6681
  %v6714 = vadd.f32 %v6644, %v6682
  %v6715 = vadd.f32 %v6645, %v6683
  %v6716 = vadd.f32 %v6646, %v6684
  %v6717 = vadd.f32 %v6647, %v6685
  %v6718 = vadd.f32 %v6648, %v6686
  %v6719 = vadd.f32 %v6649, %v6687
  %v6720 = vadd.f32 %v6650, %v6688
  %v6721 = vadd.f32 %v6651, %v6689
  %v6722 = vadd.f32 %v6652, %v6690
  %v6723 = vadd.f32 %v6653, %v6691
  %v6724 = vadd.f32 %v6654, %v6692
  %v6725 = vadd.f32 %v6655, %v6693
  %v6726 = vadd.f32 %v6656, %v6694
  %v6727 = vadd.f32 %v6657, %v6695
  %v6728 = vadd.f32 %v6658, %v6696
  %6730 = vset.pattern.permute.xlu0 0
  %6731 = vperm.xlu0 %6730, %v2161
  %v6732 = vpop.permute.xlu0 %6731
  %6735 = vset.pattern.permute.xlu0 0
  %6736 = vperm.xlu0 %6735, %v2162
  %v6737 = vpop.permute.xlu0 %6736
  %6740 = vset.pattern.permute.xlu0 0
  %6741 = vperm.xlu0 %6740, %v2163
  %v6742 = vpop.permute.xlu0 %6741
  %6745 = vset.pattern.permute.xlu0 0
  %6746 = vperm.xlu0 %6745, %v2164
  %v6747 = vpop.permute.xlu0 %6746
  %6750 = vset.pattern.permute.xlu0 0
  %6751 = vperm.xlu0 %6750, %v2165
  %v6752 = vpop.permute.xlu0 %6751
  %6755 = vset.pattern.permute.xlu0 0
  %6756 = vperm.xlu0 %6755, %v2166
  %v6757 = vpop.permute.xlu0 %6756
  %6760 = vset.pattern.permute.xlu0 0
  %6761 = vperm.xlu0 %6760, %v2167
  %v6762 = vpop.permute.xlu0 %6761
  %6765 = vset.pattern.permute.xlu0 0
  %6766 = vperm.xlu0 %6765, %v2168
  %v6767 = vpop.permute.xlu0 %6766
  %6770 = vset.pattern.permute.xlu0 0
  %6771 = vperm.xlu0 %6770, %v2169
  %v6772 = vpop.permute.xlu0 %6771
  %6775 = vset.pattern.permute.xlu0 0
  %6776 = vperm.xlu0 %6775, %v2170
  %v6777 = vpop.permute.xlu0 %6776
  %6780 = vset.pattern.permute.xlu0 0
  %6781 = vperm.xlu0 %6780, %v2171
  %v6782 = vpop.permute.xlu0 %6781
  %6785 = vset.pattern.permute.xlu0 0
  %6786 = vperm.xlu0 %6785, %v2172
  %v6787 = vpop.permute.xlu0 %6786
  %6790 = vset.pattern.permute.xlu0 0
  %6791 = vperm.xlu0 %6790, %v2173
  %v6792 = vpop.permute.xlu0 %6791
  %6795 = vset.pattern.permute.xlu0 0
  %6796 = vperm.xlu0 %6795, %v2174
  %v6797 = vpop.permute.xlu0 %6796
  %6800 = vset.pattern.permute.xlu0 0
  %6801 = vperm.xlu0 %6800, %v2175
  %v6802 = vpop.permute.xlu0 %6801
  %6805 = vset.pattern.permute.xlu0 0
  %6806 = vperm.xlu0 %6805, %v2176
  %v6807 = vpop.permute.xlu0 %6806
  %6810 = vset.pattern.permute.xlu0 0
  %6811 = vperm.xlu0 %6810, %v2177
  %v6812 = vpop.permute.xlu0 %6811
  %6815 = vset.pattern.permute.xlu0 0
  %6816 = vperm.xlu0 %6815, %v2178
  %v6817 = vpop.permute.xlu0 %6816
  %6820 = vset.pattern.permute.xlu0 0
  %6821 = vperm.xlu0 %6820, %v2179
  %v6822 = vpop.permute.xlu0 %6821
  %6825 = vset.pattern.permute.xlu0 0
  %6826 = vperm.xlu0 %6825, %v2180
  %v6827 = vpop.permute.xlu0 %6826
  %6830 = vset.pattern.permute.xlu0 0
  %6831 = vperm.xlu0 %6830, %v2181
  %v6832 = vpop.permute.xlu0 %6831
  %6835 = vset.pattern.permute.xlu0 0
  %6836 = vperm.xlu0 %6835, %v2182
  %v6837 = vpop.permute.xlu0 %6836
  %6840 = vset.pattern.permute.xlu0 0
  %6841 = vperm.xlu0 %6840, %v2183
  %v6842 = vpop.permute.xlu0 %6841
  %6845 = vset.pattern.permute.xlu0 0
  %6846 = vperm.xlu0 %6845, %v2184
  %v6847 = vpop.permute.xlu0 %6846
  %6850 = vset.pattern.permute.xlu0 0
  %6851 = vperm.xlu0 %6850, %v2185
  %v6852 = vpop.permute.xlu0 %6851
  %6855 = vset.pattern.permute.xlu0 0
  %6856 = vperm.xlu0 %6855, %v2186
  %v6857 = vpop.permute.xlu0 %6856
  %6860 = vset.pattern.permute.xlu0 0
  %6861 = vperm.xlu0 %6860, %v2187
  %v6862 = vpop.permute.xlu0 %6861
  %6865 = vset.pattern.permute.xlu0 0
  %6866 = vperm.xlu0 %6865, %v2188
  %v6867 = vpop.permute.xlu0 %6866
  %6870 = vset.pattern.permute.xlu0 0
  %6871 = vperm.xlu0 %6870, %v2189
  %v6872 = vpop.permute.xlu0 %6871
  %6875 = vset.pattern.permute.xlu0 0
  %6876 = vperm.xlu0 %6875, %v2190
  %v6877 = vpop.permute.xlu0 %6876
  %6880 = vset.pattern.permute.xlu0 0
  %6881 = vperm.xlu0 %6880, %v2191
  %v6882 = vpop.permute.xlu0 %6881
  %6885 = vset.pattern.permute.xlu0 0
  %6886 = vperm.xlu0 %6885, %v2192
  %v6887 = vpop.permute.xlu0 %6886
  %v6889 = vmul.f32 %v6697, %v6732
  %v6890 = vmul.f32 %v6698, %v6737
  %v6891 = vmul.f32 %v6699, %v6742
  %v6892 = vmul.f32 %v6700, %v6747
  %v6893 = vmul.f32 %v6701, %v6752
  %v6894 = vmul.f32 %v6702, %v6757
  %v6895 = vmul.f32 %v6703, %v6762
  %v6896 = vmul.f32 %v6704, %v6767
  %v6897 = vmul.f32 %v6705, %v6772
  %v6898 = vmul.f32 %v6706, %v6777
  %v6899 = vmul.f32 %v6707, %v6782
  %v6900 = vmul.f32 %v6708, %v6787
  %v6901 = vmul.f32 %v6709, %v6792
  %v6902 = vmul.f32 %v6710, %v6797
  %v6903 = vmul.f32 %v6711, %v6802
  %v6904 = vmul.f32 %v6712, %v6807
  %v6905 = vmul.f32 %v6713, %v6812
  %v6906 = vmul.f32 %v6714, %v6817
  %v6907 = vmul.f32 %v6715, %v6822
  %v6908 = vmul.f32 %v6716, %v6827
  %v6909 = vmul.f32 %v6717, %v6832
  %v6910 = vmul.f32 %v6718, %v6837
  %v6911 = vmul.f32 %v6719, %v6842
  %v6912 = vmul.f32 %v6720, %v6847
  %v6913 = vmul.f32 %v6721, %v6852
  %v6914 = vmul.f32 %v6722, %v6857
  %v6915 = vmul.f32 %v6723, %v6862
  %v6916 = vmul.f32 %v6724, %v6867
  %v6917 = vmul.f32 %v6725, %v6872
  %v6918 = vmul.f32 %v6726, %v6877
  %v6919 = vmul.f32 %v6727, %v6882
  %v6920 = vmul.f32 %v6728, %v6887
  %v6921 = vadd.f32 %v6209, %v6889
  %v6922 = vadd.f32 %v6210, %v6890
  %v6923 = vadd.f32 %v6211, %v6891
  %v6924 = vadd.f32 %v6212, %v6892
  %v6925 = vadd.f32 %v6213, %v6893
  %v6926 = vadd.f32 %v6214, %v6894
  %v6927 = vadd.f32 %v6215, %v6895
  %v6928 = vadd.f32 %v6216, %v6896
  %v6929 = vadd.f32 %v6217, %v6897
  %v6930 = vadd.f32 %v6218, %v6898
  %v6931 = vadd.f32 %v6219, %v6899
  %v6932 = vadd.f32 %v6220, %v6900
  %v6933 = vadd.f32 %v6221, %v6901
  %v6934 = vadd.f32 %v6222, %v6902
  %v6935 = vadd.f32 %v6223, %v6903
  %v6936 = vadd.f32 %v6224, %v6904
  %v6937 = vadd.f32 %v6225, %v6905
  %v6938 = vadd.f32 %v6226, %v6906
  %v6939 = vadd.f32 %v6227, %v6907
  %v6940 = vadd.f32 %v6228, %v6908
  %v6941 = vadd.f32 %v6229, %v6909
  %v6942 = vadd.f32 %v6230, %v6910
  %v6943 = vadd.f32 %v6231, %v6911
  %v6944 = vadd.f32 %v6232, %v6912
  %v6945 = vadd.f32 %v6233, %v6913
  %v6946 = vadd.f32 %v6234, %v6914
  %v6947 = vadd.f32 %v6235, %v6915
  %v6948 = vadd.f32 %v6236, %v6916
  %v6949 = vadd.f32 %v6237, %v6917
  %v6950 = vadd.f32 %v6238, %v6918
  %v6951 = vadd.f32 %v6239, %v6919
  %v6952 = vadd.f32 %v6240, %v6920
  %v6953 = vld [vmem:[#allocation2 + $0x145] sm:$0xff]
  %v6954 = vld [vmem:[#allocation2 + $0x14d] sm:$0xff]
  %v6955 = vld [vmem:[#allocation2 + $0x155] sm:$0xff]
  %v6956 = vld [vmem:[#allocation2 + $0x15d] sm:$0xff]
  %v6957 = vld [vmem:[#allocation2 + $0x165] sm:$0xff]
  %v6958 = vld [vmem:[#allocation2 + $0x16d] sm:$0xff]
  %v6959 = vld [vmem:[#allocation2 + $0x175] sm:$0xff]
  %v6960 = vld [vmem:[#allocation2 + $0x17d] sm:$0xff]
  %v6961 = vld [vmem:[#allocation2 + $0x185] sm:$0xff]
  %v6962 = vld [vmem:[#allocation2 + $0x18d] sm:$0xff]
  %v6963 = vld [vmem:[#allocation2 + $0x195] sm:$0xff]
  %v6964 = vld [vmem:[#allocation2 + $0x19d] sm:$0xff]
  %v6965 = vld [vmem:[#allocation2 + $0x1a5] sm:$0xff]
  %v6966 = vld [vmem:[#allocation2 + $0x1ad] sm:$0xff]
  %v6967 = vld [vmem:[#allocation2 + $0x1b5] sm:$0xff]
  %v6968 = vld [vmem:[#allocation2 + $0x1bd] sm:$0xff]
  %v6969 = vld [vmem:[#allocation2 + $0x1c5] sm:$0xff]
  %v6970 = vld [vmem:[#allocation2 + $0x1cd] sm:$0xff]
  %v6971 = vld [vmem:[#allocation2 + $0x1d5] sm:$0xff]
  %v6972 = vld [vmem:[#allocation2 + $0x1dd] sm:$0xff]
  %v6973 = vld [vmem:[#allocation2 + $0x1e5] sm:$0xff]
  %v6974 = vld [vmem:[#allocation2 + $0x1ed] sm:$0xff]
  %v6975 = vld [vmem:[#allocation2 + $0x1f5] sm:$0xff]
  %v6976 = vld [vmem:[#allocation2 + $0x1fd] sm:$0xff]
  %v6977 = vld [vmem:[#allocation2 + $0x205] sm:$0xff]
  %v6978 = vld [vmem:[#allocation2 + $0x20d] sm:$0xff]
  %v6979 = vld [vmem:[#allocation2 + $0x215] sm:$0xff]
  %v6980 = vld [vmem:[#allocation2 + $0x21d] sm:$0xff]
  %v6981 = vld [vmem:[#allocation2 + $0x225] sm:$0xff]
  %v6982 = vld [vmem:[#allocation2 + $0x22d] sm:$0xff]
  %v6983 = vld [vmem:[#allocation2 + $0x235] sm:$0xff]
  %v6984 = vld [vmem:[#allocation2 + $0x23d] sm:$0xff]
  %v6985 = vmul.f32 %v6953, %v2228
  %v6986 = vmul.f32 %v6954, %v2228
  %v6987 = vmul.f32 %v6955, %v2228
  %v6988 = vmul.f32 %v6956, %v2228
  %v6989 = vmul.f32 %v6957, %v2228
  %v6990 = vmul.f32 %v6958, %v2228
  %v6991 = vmul.f32 %v6959, %v2228
  %v6992 = vmul.f32 %v6960, %v2228
  %v6993 = vmul.f32 %v6961, %v2228
  %v6994 = vmul.f32 %v6962, %v2228
  %v6995 = vmul.f32 %v6963, %v2228
  %v6996 = vmul.f32 %v6964, %v2228
  %v6997 = vmul.f32 %v6965, %v2228
  %v6998 = vmul.f32 %v6966, %v2228
  %v6999 = vmul.f32 %v6967, %v2228
  %v7000 = vmul.f32 %v6968, %v2228
  %v7001 = vmul.f32 %v6969, %v2228
  %v7002 = vmul.f32 %v6970, %v2228
  %v7003 = vmul.f32 %v6971, %v2228
  %v7004 = vmul.f32 %v6972, %v2228
  %v7005 = vmul.f32 %v6973, %v2228
  %v7006 = vmul.f32 %v6974, %v2228
  %v7007 = vmul.f32 %v6975, %v2228
  %v7008 = vmul.f32 %v6976, %v2228
  %v7009 = vmul.f32 %v6977, %v2228
  %v7010 = vmul.f32 %v6978, %v2228
  %v7011 = vmul.f32 %v6979, %v2228
  %v7012 = vmul.f32 %v6980, %v2228
  %v7013 = vmul.f32 %v6981, %v2228
  %v7014 = vmul.f32 %v6982, %v2228
  %v7015 = vmul.f32 %v6983, %v2228
  %v7016 = vmul.f32 %v6984, %v2228
  %v7017 = vld [vmem:[#allocation2 + $0x245] sm:$0xff]
  %v7018 = vld [vmem:[#allocation2 + $0x24d] sm:$0xff]
  %v7019 = vmul.f32 %v6955, %v2266
  %v7020 = vmul.f32 %v6956, %v2266
  %v7021 = vmul.f32 %v6957, %v2266
  %v7022 = vmul.f32 %v6958, %v2266
  %v7023 = vmul.f32 %v6959, %v2266
  %v7024 = vmul.f32 %v6960, %v2266
  %v7025 = vmul.f32 %v6961, %v2266
  %v7026 = vmul.f32 %v6962, %v2266
  %v7027 = vmul.f32 %v6963, %v2266
  %v7028 = vmul.f32 %v6964, %v2266
  %v7029 = vmul.f32 %v6965, %v2266
  %v7030 = vmul.f32 %v6966, %v2266
  %v7031 = vmul.f32 %v6967, %v2266
  %v7032 = vmul.f32 %v6968, %v2266
  %v7033 = vmul.f32 %v6969, %v2266
  %v7034 = vmul.f32 %v6970, %v2266
  %v7035 = vmul.f32 %v6971, %v2266
  %v7036 = vmul.f32 %v6972, %v2266
  %v7037 = vmul.f32 %v6973, %v2266
  %v7038 = vmul.f32 %v6974, %v2266
  %v7039 = vmul.f32 %v6975, %v2266
  %v7040 = vmul.f32 %v6976, %v2266
  %v7041 = vmul.f32 %v6977, %v2266
  %v7042 = vmul.f32 %v6978, %v2266
  %v7043 = vmul.f32 %v6979, %v2266
  %v7044 = vmul.f32 %v6980, %v2266
  %v7045 = vmul.f32 %v6981, %v2266
  %v7046 = vmul.f32 %v6982, %v2266
  %v7047 = vmul.f32 %v6983, %v2266
  %v7048 = vmul.f32 %v6984, %v2266
  %v7049 = vmul.f32 %v7017, %v2266
  %v7050 = vmul.f32 %v7018, %v2266
  %v7051 = vadd.f32 %v6985, %v7019
  %v7052 = vadd.f32 %v6986, %v7020
  %v7053 = vadd.f32 %v6987, %v7021
  %v7054 = vadd.f32 %v6988, %v7022
  %v7055 = vadd.f32 %v6989, %v7023
  %v7056 = vadd.f32 %v6990, %v7024
  %v7057 = vadd.f32 %v6991, %v7025
  %v7058 = vadd.f32 %v6992, %v7026
  %v7059 = vadd.f32 %v6993, %v7027
  %v7060 = vadd.f32 %v6994, %v7028
  %v7061 = vadd.f32 %v6995, %v7029
  %v7062 = vadd.f32 %v6996, %v7030
  %v7063 = vadd.f32 %v6997, %v7031
  %v7064 = vadd.f32 %v6998, %v7032
  %v7065 = vadd.f32 %v6999, %v7033
  %v7066 = vadd.f32 %v7000, %v7034
  %v7067 = vadd.f32 %v7001, %v7035
  %v7068 = vadd.f32 %v7002, %v7036
  %v7069 = vadd.f32 %v7003, %v7037
  %v7070 = vadd.f32 %v7004, %v7038
  %v7071 = vadd.f32 %v7005, %v7039
  %v7072 = vadd.f32 %v7006, %v7040
  %v7073 = vadd.f32 %v7007, %v7041
  %v7074 = vadd.f32 %v7008, %v7042
  %v7075 = vadd.f32 %v7009, %v7043
  %v7076 = vadd.f32 %v7010, %v7044
  %v7077 = vadd.f32 %v7011, %v7045
  %v7078 = vadd.f32 %v7012, %v7046
  %v7079 = vadd.f32 %v7013, %v7047
  %v7080 = vadd.f32 %v7014, %v7048
  %v7081 = vadd.f32 %v7015, %v7049
  %v7082 = vadd.f32 %v7016, %v7050
  %v7083 = vld [vmem:[#allocation2 + $0x255] sm:$0xff]
  %v7084 = vld [vmem:[#allocation2 + $0x25d] sm:$0xff]
  %v7085 = vmul.f32 %v6957, %v2336
  %v7086 = vmul.f32 %v6958, %v2336
  %v7087 = vmul.f32 %v6959, %v2336
  %v7088 = vmul.f32 %v6960, %v2336
  %v7089 = vmul.f32 %v6961, %v2336
  %v7090 = vmul.f32 %v6962, %v2336
  %v7091 = vmul.f32 %v6963, %v2336
  %v7092 = vmul.f32 %v6964, %v2336
  %v7093 = vmul.f32 %v6965, %v2336
  %v7094 = vmul.f32 %v6966, %v2336
  %v7095 = vmul.f32 %v6967, %v2336
  %v7096 = vmul.f32 %v6968, %v2336
  %v7097 = vmul.f32 %v6969, %v2336
  %v7098 = vmul.f32 %v6970, %v2336
  %v7099 = vmul.f32 %v6971, %v2336
  %v7100 = vmul.f32 %v6972, %v2336
  %v7101 = vmul.f32 %v6973, %v2336
  %v7102 = vmul.f32 %v6974, %v2336
  %v7103 = vmul.f32 %v6975, %v2336
  %v7104 = vmul.f32 %v6976, %v2336
  %v7105 = vmul.f32 %v6977, %v2336
  %v7106 = vmul.f32 %v6978, %v2336
  %v7107 = vmul.f32 %v6979, %v2336
  %v7108 = vmul.f32 %v6980, %v2336
  %v7109 = vmul.f32 %v6981, %v2336
  %v7110 = vmul.f32 %v6982, %v2336
  %v7111 = vmul.f32 %v6983, %v2336
  %v7112 = vmul.f32 %v6984, %v2336
  %v7113 = vmul.f32 %v7017, %v2336
  %v7114 = vmul.f32 %v7018, %v2336
  %v7115 = vmul.f32 %v7083, %v2336
  %v7116 = vmul.f32 %v7084, %v2336
  %v7117 = vadd.f32 %v7051, %v7085
  %v7118 = vadd.f32 %v7052, %v7086
  %v7119 = vadd.f32 %v7053, %v7087
  %v7120 = vadd.f32 %v7054, %v7088
  %v7121 = vadd.f32 %v7055, %v7089
  %v7122 = vadd.f32 %v7056, %v7090
  %v7123 = vadd.f32 %v7057, %v7091
  %v7124 = vadd.f32 %v7058, %v7092
  %v7125 = vadd.f32 %v7059, %v7093
  %v7126 = vadd.f32 %v7060, %v7094
  %v7127 = vadd.f32 %v7061, %v7095
  %v7128 = vadd.f32 %v7062, %v7096
  %v7129 = vadd.f32 %v7063, %v7097
  %v7130 = vadd.f32 %v7064, %v7098
  %v7131 = vadd.f32 %v7065, %v7099
  %v7132 = vadd.f32 %v7066, %v7100
  %v7133 = vadd.f32 %v7067, %v7101
  %v7134 = vadd.f32 %v7068, %v7102
  %v7135 = vadd.f32 %v7069, %v7103
  %v7136 = vadd.f32 %v7070, %v7104
  %v7137 = vadd.f32 %v7071, %v7105
  %v7138 = vadd.f32 %v7072, %v7106
  %v7139 = vadd.f32 %v7073, %v7107
  %v7140 = vadd.f32 %v7074, %v7108
  %v7141 = vadd.f32 %v7075, %v7109
  %v7142 = vadd.f32 %v7076, %v7110
  %v7143 = vadd.f32 %v7077, %v7111
  %v7144 = vadd.f32 %v7078, %v7112
  %v7145 = vadd.f32 %v7079, %v7113
  %v7146 = vadd.f32 %v7080, %v7114
  %v7147 = vadd.f32 %v7081, %v7115
  %v7148 = vadd.f32 %v7082, %v7116
  %v7149 = vld [vmem:[#allocation2 + $0x265] sm:$0xff]
  %v7150 = vld [vmem:[#allocation2 + $0x26d] sm:$0xff]
  %v7151 = vmul.f32 %v6959, %v2406
  %v7152 = vmul.f32 %v6960, %v2406
  %v7153 = vmul.f32 %v6961, %v2406
  %v7154 = vmul.f32 %v6962, %v2406
  %v7155 = vmul.f32 %v6963, %v2406
  %v7156 = vmul.f32 %v6964, %v2406
  %v7157 = vmul.f32 %v6965, %v2406
  %v7158 = vmul.f32 %v6966, %v2406
  %v7159 = vmul.f32 %v6967, %v2406
  %v7160 = vmul.f32 %v6968, %v2406
  %v7161 = vmul.f32 %v6969, %v2406
  %v7162 = vmul.f32 %v6970, %v2406
  %v7163 = vmul.f32 %v6971, %v2406
  %v7164 = vmul.f32 %v6972, %v2406
  %v7165 = vmul.f32 %v6973, %v2406
  %v7166 = vmul.f32 %v6974, %v2406
  %v7167 = vmul.f32 %v6975, %v2406
  %v7168 = vmul.f32 %v6976, %v2406
  %v7169 = vmul.f32 %v6977, %v2406
  %v7170 = vmul.f32 %v6978, %v2406
  %v7171 = vmul.f32 %v6979, %v2406
  %v7172 = vmul.f32 %v6980, %v2406
  %v7173 = vmul.f32 %v6981, %v2406
  %v7174 = vmul.f32 %v6982, %v2406
  %v7175 = vmul.f32 %v6983, %v2406
  %v7176 = vmul.f32 %v6984, %v2406
  %v7177 = vmul.f32 %v7017, %v2406
  %v7178 = vmul.f32 %v7018, %v2406
  %v7179 = vmul.f32 %v7083, %v2406
  %v7180 = vmul.f32 %v7084, %v2406
  %v7181 = vmul.f32 %v7149, %v2406
  %v7182 = vmul.f32 %v7150, %v2406
  %v7183 = vadd.f32 %v7117, %v7151
  %v7184 = vadd.f32 %v7118, %v7152
  %v7185 = vadd.f32 %v7119, %v7153
  %v7186 = vadd.f32 %v7120, %v7154
  %v7187 = vadd.f32 %v7121, %v7155
  %v7188 = vadd.f32 %v7122, %v7156
  %v7189 = vadd.f32 %v7123, %v7157
  %v7190 = vadd.f32 %v7124, %v7158
  %v7191 = vadd.f32 %v7125, %v7159
  %v7192 = vadd.f32 %v7126, %v7160
  %v7193 = vadd.f32 %v7127, %v7161
  %v7194 = vadd.f32 %v7128, %v7162
  %v7195 = vadd.f32 %v7129, %v7163
  %v7196 = vadd.f32 %v7130, %v7164
  %v7197 = vadd.f32 %v7131, %v7165
  %v7198 = vadd.f32 %v7132, %v7166
  %v7199 = vadd.f32 %v7133, %v7167
  %v7200 = vadd.f32 %v7134, %v7168
  %v7201 = vadd.f32 %v7135, %v7169
  %v7202 = vadd.f32 %v7136, %v7170
  %v7203 = vadd.f32 %v7137, %v7171
  %v7204 = vadd.f32 %v7138, %v7172
  %v7205 = vadd.f32 %v7139, %v7173
  %v7206 = vadd.f32 %v7140, %v7174
  %v7207 = vadd.f32 %v7141, %v7175
  %v7208 = vadd.f32 %v7142, %v7176
  %v7209 = vadd.f32 %v7143, %v7177
  %v7210 = vadd.f32 %v7144, %v7178
  %v7211 = vadd.f32 %v7145, %v7179
  %v7212 = vadd.f32 %v7146, %v7180
  %v7213 = vadd.f32 %v7147, %v7181
  %v7214 = vadd.f32 %v7148, %v7182
  %v7215 = vld [vmem:[#allocation2 + $0x275] sm:$0xff]
  %v7216 = vld [vmem:[#allocation2 + $0x27d] sm:$0xff]
  %v7217 = vmul.f32 %v6961, %v2476
  %v7218 = vmul.f32 %v6962, %v2476
  %v7219 = vmul.f32 %v6963, %v2476
  %v7220 = vmul.f32 %v6964, %v2476
  %v7221 = vmul.f32 %v6965, %v2476
  %v7222 = vmul.f32 %v6966, %v2476
  %v7223 = vmul.f32 %v6967, %v2476
  %v7224 = vmul.f32 %v6968, %v2476
  %v7225 = vmul.f32 %v6969, %v2476
  %v7226 = vmul.f32 %v6970, %v2476
  %v7227 = vmul.f32 %v6971, %v2476
  %v7228 = vmul.f32 %v6972, %v2476
  %v7229 = vmul.f32 %v6973, %v2476
  %v7230 = vmul.f32 %v6974, %v2476
  %v7231 = vmul.f32 %v6975, %v2476
  %v7232 = vmul.f32 %v6976, %v2476
  %v7233 = vmul.f32 %v6977, %v2476
  %v7234 = vmul.f32 %v6978, %v2476
  %v7235 = vmul.f32 %v6979, %v2476
  %v7236 = vmul.f32 %v6980, %v2476
  %v7237 = vmul.f32 %v6981, %v2476
  %v7238 = vmul.f32 %v6982, %v2476
  %v7239 = vmul.f32 %v6983, %v2476
  %v7240 = vmul.f32 %v6984, %v2476
  %v7241 = vmul.f32 %v7017, %v2476
  %v7242 = vmul.f32 %v7018, %v2476
  %v7243 = vmul.f32 %v7083, %v2476
  %v7244 = vmul.f32 %v7084, %v2476
  %v7245 = vmul.f32 %v7149, %v2476
  %v7246 = vmul.f32 %v7150, %v2476
  %v7247 = vmul.f32 %v7215, %v2476
  %v7248 = vmul.f32 %v7216, %v2476
  %v7249 = vadd.f32 %v7183, %v7217
  %v7250 = vadd.f32 %v7184, %v7218
  %v7251 = vadd.f32 %v7185, %v7219
  %v7252 = vadd.f32 %v7186, %v7220
  %v7253 = vadd.f32 %v7187, %v7221
  %v7254 = vadd.f32 %v7188, %v7222
  %v7255 = vadd.f32 %v7189, %v7223
  %v7256 = vadd.f32 %v7190, %v7224
  %v7257 = vadd.f32 %v7191, %v7225
  %v7258 = vadd.f32 %v7192, %v7226
  %v7259 = vadd.f32 %v7193, %v7227
  %v7260 = vadd.f32 %v7194, %v7228
  %v7261 = vadd.f32 %v7195, %v7229
  %v7262 = vadd.f32 %v7196, %v7230
  %v7263 = vadd.f32 %v7197, %v7231
  %v7264 = vadd.f32 %v7198, %v7232
  %v7265 = vadd.f32 %v7199, %v7233
  %v7266 = vadd.f32 %v7200, %v7234
  %v7267 = vadd.f32 %v7201, %v7235
  %v7268 = vadd.f32 %v7202, %v7236
  %v7269 = vadd.f32 %v7203, %v7237
  %v7270 = vadd.f32 %v7204, %v7238
  %v7271 = vadd.f32 %v7205, %v7239
  %v7272 = vadd.f32 %v7206, %v7240
  %v7273 = vadd.f32 %v7207, %v7241
  %v7274 = vadd.f32 %v7208, %v7242
  %v7275 = vadd.f32 %v7209, %v7243
  %v7276 = vadd.f32 %v7210, %v7244
  %v7277 = vadd.f32 %v7211, %v7245
  %v7278 = vadd.f32 %v7212, %v7246
  %v7279 = vadd.f32 %v7213, %v7247
  %v7280 = vadd.f32 %v7214, %v7248
  %v7281 = vld [vmem:[#allocation2 + $0x285] sm:$0xff]
  %v7282 = vld [vmem:[#allocation2 + $0x28d] sm:$0xff]
  %v7283 = vmul.f32 %v6963, %v2546
  %v7284 = vmul.f32 %v6964, %v2546
  %v7285 = vmul.f32 %v6965, %v2546
  %v7286 = vmul.f32 %v6966, %v2546
  %v7287 = vmul.f32 %v6967, %v2546
  %v7288 = vmul.f32 %v6968, %v2546
  %v7289 = vmul.f32 %v6969, %v2546
  %v7290 = vmul.f32 %v6970, %v2546
  %v7291 = vmul.f32 %v6971, %v2546
  %v7292 = vmul.f32 %v6972, %v2546
  %v7293 = vmul.f32 %v6973, %v2546
  %v7294 = vmul.f32 %v6974, %v2546
  %v7295 = vmul.f32 %v6975, %v2546
  %v7296 = vmul.f32 %v6976, %v2546
  %v7297 = vmul.f32 %v6977, %v2546
  %v7298 = vmul.f32 %v6978, %v2546
  %v7299 = vmul.f32 %v6979, %v2546
  %v7300 = vmul.f32 %v6980, %v2546
  %v7301 = vmul.f32 %v6981, %v2546
  %v7302 = vmul.f32 %v6982, %v2546
  %v7303 = vmul.f32 %v6983, %v2546
  %v7304 = vmul.f32 %v6984, %v2546
  %v7305 = vmul.f32 %v7017, %v2546
  %v7306 = vmul.f32 %v7018, %v2546
  %v7307 = vmul.f32 %v7083, %v2546
  %v7308 = vmul.f32 %v7084, %v2546
  %v7309 = vmul.f32 %v7149, %v2546
  %v7310 = vmul.f32 %v7150, %v2546
  %v7311 = vmul.f32 %v7215, %v2546
  %v7312 = vmul.f32 %v7216, %v2546
  %v7313 = vmul.f32 %v7281, %v2546
  %v7314 = vmul.f32 %v7282, %v2546
  %v7315 = vadd.f32 %v7249, %v7283
  %v7316 = vadd.f32 %v7250, %v7284
  %v7317 = vadd.f32 %v7251, %v7285
  %v7318 = vadd.f32 %v7252, %v7286
  %v7319 = vadd.f32 %v7253, %v7287
  %v7320 = vadd.f32 %v7254, %v7288
  %v7321 = vadd.f32 %v7255, %v7289
  %v7322 = vadd.f32 %v7256, %v7290
  %v7323 = vadd.f32 %v7257, %v7291
  %v7324 = vadd.f32 %v7258, %v7292
  %v7325 = vadd.f32 %v7259, %v7293
  %v7326 = vadd.f32 %v7260, %v7294
  %v7327 = vadd.f32 %v7261, %v7295
  %v7328 = vadd.f32 %v7262, %v7296
  %v7329 = vadd.f32 %v7263, %v7297
  %v7330 = vadd.f32 %v7264, %v7298
  %v7331 = vadd.f32 %v7265, %v7299
  %v7332 = vadd.f32 %v7266, %v7300
  %v7333 = vadd.f32 %v7267, %v7301
  %v7334 = vadd.f32 %v7268, %v7302
  %v7335 = vadd.f32 %v7269, %v7303
  %v7336 = vadd.f32 %v7270, %v7304
  %v7337 = vadd.f32 %v7271, %v7305
  %v7338 = vadd.f32 %v7272, %v7306
  %v7339 = vadd.f32 %v7273, %v7307
  %v7340 = vadd.f32 %v7274, %v7308
  %v7341 = vadd.f32 %v7275, %v7309
  %v7342 = vadd.f32 %v7276, %v7310
  %v7343 = vadd.f32 %v7277, %v7311
  %v7344 = vadd.f32 %v7278, %v7312
  %v7345 = vadd.f32 %v7279, %v7313
  %v7346 = vadd.f32 %v7280, %v7314
  %v7347 = vld [vmem:[#allocation2 + $0x295] sm:$0xff]
  %v7348 = vld [vmem:[#allocation2 + $0x29d] sm:$0xff]
  %v7349 = vmul.f32 %v6965, %v2616
  %v7350 = vmul.f32 %v6966, %v2616
  %v7351 = vmul.f32 %v6967, %v2616
  %v7352 = vmul.f32 %v6968, %v2616
  %v7353 = vmul.f32 %v6969, %v2616
  %v7354 = vmul.f32 %v6970, %v2616
  %v7355 = vmul.f32 %v6971, %v2616
  %v7356 = vmul.f32 %v6972, %v2616
  %v7357 = vmul.f32 %v6973, %v2616
  %v7358 = vmul.f32 %v6974, %v2616
  %v7359 = vmul.f32 %v6975, %v2616
  %v7360 = vmul.f32 %v6976, %v2616
  %v7361 = vmul.f32 %v6977, %v2616
  %v7362 = vmul.f32 %v6978, %v2616
  %v7363 = vmul.f32 %v6979, %v2616
  %v7364 = vmul.f32 %v6980, %v2616
  %v7365 = vmul.f32 %v6981, %v2616
  %v7366 = vmul.f32 %v6982, %v2616
  %v7367 = vmul.f32 %v6983, %v2616
  %v7368 = vmul.f32 %v6984, %v2616
  %v7369 = vmul.f32 %v7017, %v2616
  %v7370 = vmul.f32 %v7018, %v2616
  %v7371 = vmul.f32 %v7083, %v2616
  %v7372 = vmul.f32 %v7084, %v2616
  %v7373 = vmul.f32 %v7149, %v2616
  %v7374 = vmul.f32 %v7150, %v2616
  %v7375 = vmul.f32 %v7215, %v2616
  %v7376 = vmul.f32 %v7216, %v2616
  %v7377 = vmul.f32 %v7281, %v2616
  %v7378 = vmul.f32 %v7282, %v2616
  %v7379 = vmul.f32 %v7347, %v2616
  %v7380 = vmul.f32 %v7348, %v2616
  %v7381 = vadd.f32 %v7315, %v7349
  %v7382 = vadd.f32 %v7316, %v7350
  %v7383 = vadd.f32 %v7317, %v7351
  %v7384 = vadd.f32 %v7318, %v7352
  %v7385 = vadd.f32 %v7319, %v7353
  %v7386 = vadd.f32 %v7320, %v7354
  %v7387 = vadd.f32 %v7321, %v7355
  %v7388 = vadd.f32 %v7322, %v7356
  %v7389 = vadd.f32 %v7323, %v7357
  %v7390 = vadd.f32 %v7324, %v7358
  %v7391 = vadd.f32 %v7325, %v7359
  %v7392 = vadd.f32 %v7326, %v7360
  %v7393 = vadd.f32 %v7327, %v7361
  %v7394 = vadd.f32 %v7328, %v7362
  %v7395 = vadd.f32 %v7329, %v7363
  %v7396 = vadd.f32 %v7330, %v7364
  %v7397 = vadd.f32 %v7331, %v7365
  %v7398 = vadd.f32 %v7332, %v7366
  %v7399 = vadd.f32 %v7333, %v7367
  %v7400 = vadd.f32 %v7334, %v7368
  %v7401 = vadd.f32 %v7335, %v7369
  %v7402 = vadd.f32 %v7336, %v7370
  %v7403 = vadd.f32 %v7337, %v7371
  %v7404 = vadd.f32 %v7338, %v7372
  %v7405 = vadd.f32 %v7339, %v7373
  %v7406 = vadd.f32 %v7340, %v7374
  %v7407 = vadd.f32 %v7341, %v7375
  %v7408 = vadd.f32 %v7342, %v7376
  %v7409 = vadd.f32 %v7343, %v7377
  %v7410 = vadd.f32 %v7344, %v7378
  %v7411 = vadd.f32 %v7345, %v7379
  %v7412 = vadd.f32 %v7346, %v7380
  %v7413 = vmul.f32 %v7381, %v2684
  %v7414 = vmul.f32 %v7382, %v2689
  %v7415 = vmul.f32 %v7383, %v2694
  %v7416 = vmul.f32 %v7384, %v2699
  %v7417 = vmul.f32 %v7385, %v2704
  %v7418 = vmul.f32 %v7386, %v2709
  %v7419 = vmul.f32 %v7387, %v2714
  %v7420 = vmul.f32 %v7388, %v2719
  %v7421 = vmul.f32 %v7389, %v2724
  %v7422 = vmul.f32 %v7390, %v2729
  %v7423 = vmul.f32 %v7391, %v2734
  %v7424 = vmul.f32 %v7392, %v2739
  %v7425 = vmul.f32 %v7393, %v2744
  %v7426 = vmul.f32 %v7394, %v2749
  %v7427 = vmul.f32 %v7395, %v2754
  %v7428 = vmul.f32 %v7396, %v2759
  %v7429 = vmul.f32 %v7397, %v2764
  %v7430 = vmul.f32 %v7398, %v2769
  %v7431 = vmul.f32 %v7399, %v2774
  %v7432 = vmul.f32 %v7400, %v2779
  %v7433 = vmul.f32 %v7401, %v2784
  %v7434 = vmul.f32 %v7402, %v2789
  %v7435 = vmul.f32 %v7403, %v2794
  %v7436 = vmul.f32 %v7404, %v2799
  %v7437 = vmul.f32 %v7405, %v2804
  %v7438 = vmul.f32 %v7406, %v2809
  %v7439 = vmul.f32 %v7407, %v2814
  %v7440 = vmul.f32 %v7408, %v2819
  %v7441 = vmul.f32 %v7409, %v2824
  %v7442 = vmul.f32 %v7410, %v2829
  %v7443 = vmul.f32 %v7411, %v2834
  %v7444 = vmul.f32 %v7412, %v2839
  %v7445 = vld [vmem:[#allocation2 + $0x146] sm:$0xff]
  %v7446 = vld [vmem:[#allocation2 + $0x14e] sm:$0xff]
  %v7447 = vld [vmem:[#allocation2 + $0x156] sm:$0xff]
  %v7448 = vld [vmem:[#allocation2 + $0x15e] sm:$0xff]
  %v7449 = vld [vmem:[#allocation2 + $0x166] sm:$0xff]
  %v7450 = vld [vmem:[#allocation2 + $0x16e] sm:$0xff]
  %v7451 = vld [vmem:[#allocation2 + $0x176] sm:$0xff]
  %v7452 = vld [vmem:[#allocation2 + $0x17e] sm:$0xff]
  %v7453 = vld [vmem:[#allocation2 + $0x186] sm:$0xff]
  %v7454 = vld [vmem:[#allocation2 + $0x18e] sm:$0xff]
  %v7455 = vld [vmem:[#allocation2 + $0x196] sm:$0xff]
  %v7456 = vld [vmem:[#allocation2 + $0x19e] sm:$0xff]
  %v7457 = vld [vmem:[#allocation2 + $0x1a6] sm:$0xff]
  %v7458 = vld [vmem:[#allocation2 + $0x1ae] sm:$0xff]
  %v7459 = vld [vmem:[#allocation2 + $0x1b6] sm:$0xff]
  %v7460 = vld [vmem:[#allocation2 + $0x1be] sm:$0xff]
  %v7461 = vld [vmem:[#allocation2 + $0x1c6] sm:$0xff]
  %v7462 = vld [vmem:[#allocation2 + $0x1ce] sm:$0xff]
  %v7463 = vld [vmem:[#allocation2 + $0x1d6] sm:$0xff]
  %v7464 = vld [vmem:[#allocation2 + $0x1de] sm:$0xff]
  %v7465 = vld [vmem:[#allocation2 + $0x1e6] sm:$0xff]
  %v7466 = vld [vmem:[#allocation2 + $0x1ee] sm:$0xff]
  %v7467 = vld [vmem:[#allocation2 + $0x1f6] sm:$0xff]
  %v7468 = vld [vmem:[#allocation2 + $0x1fe] sm:$0xff]
  %v7469 = vld [vmem:[#allocation2 + $0x206] sm:$0xff]
  %v7470 = vld [vmem:[#allocation2 + $0x20e] sm:$0xff]
  %v7471 = vld [vmem:[#allocation2 + $0x216] sm:$0xff]
  %v7472 = vld [vmem:[#allocation2 + $0x21e] sm:$0xff]
  %v7473 = vld [vmem:[#allocation2 + $0x226] sm:$0xff]
  %v7474 = vld [vmem:[#allocation2 + $0x22e] sm:$0xff]
  %v7475 = vld [vmem:[#allocation2 + $0x236] sm:$0xff]
  %v7476 = vld [vmem:[#allocation2 + $0x23e] sm:$0xff]
  %v7477 = vmul.f32 %v7445, %v2908
  %v7478 = vmul.f32 %v7446, %v2908
  %v7479 = vmul.f32 %v7447, %v2908
  %v7480 = vmul.f32 %v7448, %v2908
  %v7481 = vmul.f32 %v7449, %v2908
  %v7482 = vmul.f32 %v7450, %v2908
  %v7483 = vmul.f32 %v7451, %v2908
  %v7484 = vmul.f32 %v7452, %v2908
  %v7485 = vmul.f32 %v7453, %v2908
  %v7486 = vmul.f32 %v7454, %v2908
  %v7487 = vmul.f32 %v7455, %v2908
  %v7488 = vmul.f32 %v7456, %v2908
  %v7489 = vmul.f32 %v7457, %v2908
  %v7490 = vmul.f32 %v7458, %v2908
  %v7491 = vmul.f32 %v7459, %v2908
  %v7492 = vmul.f32 %v7460, %v2908
  %v7493 = vmul.f32 %v7461, %v2908
  %v7494 = vmul.f32 %v7462, %v2908
  %v7495 = vmul.f32 %v7463, %v2908
  %v7496 = vmul.f32 %v7464, %v2908
  %v7497 = vmul.f32 %v7465, %v2908
  %v7498 = vmul.f32 %v7466, %v2908
  %v7499 = vmul.f32 %v7467, %v2908
  %v7500 = vmul.f32 %v7468, %v2908
  %v7501 = vmul.f32 %v7469, %v2908
  %v7502 = vmul.f32 %v7470, %v2908
  %v7503 = vmul.f32 %v7471, %v2908
  %v7504 = vmul.f32 %v7472, %v2908
  %v7505 = vmul.f32 %v7473, %v2908
  %v7506 = vmul.f32 %v7474, %v2908
  %v7507 = vmul.f32 %v7475, %v2908
  %v7508 = vmul.f32 %v7476, %v2908
  %v7509 = vld [vmem:[#allocation2 + $0x246] sm:$0xff]
  %v7510 = vld [vmem:[#allocation2 + $0x24e] sm:$0xff]
  %v7511 = vmul.f32 %v7447, %v2946
  %v7512 = vmul.f32 %v7448, %v2946
  %v7513 = vmul.f32 %v7449, %v2946
  %v7514 = vmul.f32 %v7450, %v2946
  %v7515 = vmul.f32 %v7451, %v2946
  %v7516 = vmul.f32 %v7452, %v2946
  %v7517 = vmul.f32 %v7453, %v2946
  %v7518 = vmul.f32 %v7454, %v2946
  %v7519 = vmul.f32 %v7455, %v2946
  %v7520 = vmul.f32 %v7456, %v2946
  %v7521 = vmul.f32 %v7457, %v2946
  %v7522 = vmul.f32 %v7458, %v2946
  %v7523 = vmul.f32 %v7459, %v2946
  %v7524 = vmul.f32 %v7460, %v2946
  %v7525 = vmul.f32 %v7461, %v2946
  %v7526 = vmul.f32 %v7462, %v2946
  %v7527 = vmul.f32 %v7463, %v2946
  %v7528 = vmul.f32 %v7464, %v2946
  %v7529 = vmul.f32 %v7465, %v2946
  %v7530 = vmul.f32 %v7466, %v2946
  %v7531 = vmul.f32 %v7467, %v2946
  %v7532 = vmul.f32 %v7468, %v2946
  %v7533 = vmul.f32 %v7469, %v2946
  %v7534 = vmul.f32 %v7470, %v2946
  %v7535 = vmul.f32 %v7471, %v2946
  %v7536 = vmul.f32 %v7472, %v2946
  %v7537 = vmul.f32 %v7473, %v2946
  %v7538 = vmul.f32 %v7474, %v2946
  %v7539 = vmul.f32 %v7475, %v2946
  %v7540 = vmul.f32 %v7476, %v2946
  %v7541 = vmul.f32 %v7509, %v2946
  %v7542 = vmul.f32 %v7510, %v2946
  %v7543 = vadd.f32 %v7477, %v7511
  %v7544 = vadd.f32 %v7478, %v7512
  %v7545 = vadd.f32 %v7479, %v7513
  %v7546 = vadd.f32 %v7480, %v7514
  %v7547 = vadd.f32 %v7481, %v7515
  %v7548 = vadd.f32 %v7482, %v7516
  %v7549 = vadd.f32 %v7483, %v7517
  %v7550 = vadd.f32 %v7484, %v7518
  %v7551 = vadd.f32 %v7485, %v7519
  %v7552 = vadd.f32 %v7486, %v7520
  %v7553 = vadd.f32 %v7487, %v7521
  %v7554 = vadd.f32 %v7488, %v7522
  %v7555 = vadd.f32 %v7489, %v7523
  %v7556 = vadd.f32 %v7490, %v7524
  %v7557 = vadd.f32 %v7491, %v7525
  %v7558 = vadd.f32 %v7492, %v7526
  %v7559 = vadd.f32 %v7493, %v7527
  %v7560 = vadd.f32 %v7494, %v7528
  %v7561 = vadd.f32 %v7495, %v7529
  %v7562 = vadd.f32 %v7496, %v7530
  %v7563 = vadd.f32 %v7497, %v7531
  %v7564 = vadd.f32 %v7498, %v7532
  %v7565 = vadd.f32 %v7499, %v7533
  %v7566 = vadd.f32 %v7500, %v7534
  %v7567 = vadd.f32 %v7501, %v7535
  %v7568 = vadd.f32 %v7502, %v7536
  %v7569 = vadd.f32 %v7503, %v7537
  %v7570 = vadd.f32 %v7504, %v7538
  %v7571 = vadd.f32 %v7505, %v7539
  %v7572 = vadd.f32 %v7506, %v7540
  %v7573 = vadd.f32 %v7507, %v7541
  %v7574 = vadd.f32 %v7508, %v7542
  %v7575 = vld [vmem:[#allocation2 + $0x256] sm:$0xff]
  %v7576 = vld [vmem:[#allocation2 + $0x25e] sm:$0xff]
  %v7577 = vmul.f32 %v7449, %v3016
  %v7578 = vmul.f32 %v7450, %v3016
  %v7579 = vmul.f32 %v7451, %v3016
  %v7580 = vmul.f32 %v7452, %v3016
  %v7581 = vmul.f32 %v7453, %v3016
  %v7582 = vmul.f32 %v7454, %v3016
  %v7583 = vmul.f32 %v7455, %v3016
  %v7584 = vmul.f32 %v7456, %v3016
  %v7585 = vmul.f32 %v7457, %v3016
  %v7586 = vmul.f32 %v7458, %v3016
  %v7587 = vmul.f32 %v7459, %v3016
  %v7588 = vmul.f32 %v7460, %v3016
  %v7589 = vmul.f32 %v7461, %v3016
  %v7590 = vmul.f32 %v7462, %v3016
  %v7591 = vmul.f32 %v7463, %v3016
  %v7592 = vmul.f32 %v7464, %v3016
  %v7593 = vmul.f32 %v7465, %v3016
  %v7594 = vmul.f32 %v7466, %v3016
  %v7595 = vmul.f32 %v7467, %v3016
  %v7596 = vmul.f32 %v7468, %v3016
  %v7597 = vmul.f32 %v7469, %v3016
  %v7598 = vmul.f32 %v7470, %v3016
  %v7599 = vmul.f32 %v7471, %v3016
  %v7600 = vmul.f32 %v7472, %v3016
  %v7601 = vmul.f32 %v7473, %v3016
  %v7602 = vmul.f32 %v7474, %v3016
  %v7603 = vmul.f32 %v7475, %v3016
  %v7604 = vmul.f32 %v7476, %v3016
  %v7605 = vmul.f32 %v7509, %v3016
  %v7606 = vmul.f32 %v7510, %v3016
  %v7607 = vmul.f32 %v7575, %v3016
  %v7608 = vmul.f32 %v7576, %v3016
  %v7609 = vadd.f32 %v7543, %v7577
  %v7610 = vadd.f32 %v7544, %v7578
  %v7611 = vadd.f32 %v7545, %v7579
  %v7612 = vadd.f32 %v7546, %v7580
  %v7613 = vadd.f32 %v7547, %v7581
  %v7614 = vadd.f32 %v7548, %v7582
  %v7615 = vadd.f32 %v7549, %v7583
  %v7616 = vadd.f32 %v7550, %v7584
  %v7617 = vadd.f32 %v7551, %v7585
  %v7618 = vadd.f32 %v7552, %v7586
  %v7619 = vadd.f32 %v7553, %v7587
  %v7620 = vadd.f32 %v7554, %v7588
  %v7621 = vadd.f32 %v7555, %v7589
  %v7622 = vadd.f32 %v7556, %v7590
  %v7623 = vadd.f32 %v7557, %v7591
  %v7624 = vadd.f32 %v7558, %v7592
  %v7625 = vadd.f32 %v7559, %v7593
  %v7626 = vadd.f32 %v7560, %v7594
  %v7627 = vadd.f32 %v7561, %v7595
  %v7628 = vadd.f32 %v7562, %v7596
  %v7629 = vadd.f32 %v7563, %v7597
  %v7630 = vadd.f32 %v7564, %v7598
  %v7631 = vadd.f32 %v7565, %v7599
  %v7632 = vadd.f32 %v7566, %v7600
  %v7633 = vadd.f32 %v7567, %v7601
  %v7634 = vadd.f32 %v7568, %v7602
  %v7635 = vadd.f32 %v7569, %v7603
  %v7636 = vadd.f32 %v7570, %v7604
  %v7637 = vadd.f32 %v7571, %v7605
  %v7638 = vadd.f32 %v7572, %v7606
  %v7639 = vadd.f32 %v7573, %v7607
  %v7640 = vadd.f32 %v7574, %v7608
  %v7641 = vld [vmem:[#allocation2 + $0x266] sm:$0xff]
  %v7642 = vld [vmem:[#allocation2 + $0x26e] sm:$0xff]
  %v7643 = vmul.f32 %v7451, %v3086
  %v7644 = vmul.f32 %v7452, %v3086
  %v7645 = vmul.f32 %v7453, %v3086
  %v7646 = vmul.f32 %v7454, %v3086
  %v7647 = vmul.f32 %v7455, %v3086
  %v7648 = vmul.f32 %v7456, %v3086
  %v7649 = vmul.f32 %v7457, %v3086
  %v7650 = vmul.f32 %v7458, %v3086
  %v7651 = vmul.f32 %v7459, %v3086
  %v7652 = vmul.f32 %v7460, %v3086
  %v7653 = vmul.f32 %v7461, %v3086
  %v7654 = vmul.f32 %v7462, %v3086
  %v7655 = vmul.f32 %v7463, %v3086
  %v7656 = vmul.f32 %v7464, %v3086
  %v7657 = vmul.f32 %v7465, %v3086
  %v7658 = vmul.f32 %v7466, %v3086
  %v7659 = vmul.f32 %v7467, %v3086
  %v7660 = vmul.f32 %v7468, %v3086
  %v7661 = vmul.f32 %v7469, %v3086
  %v7662 = vmul.f32 %v7470, %v3086
  %v7663 = vmul.f32 %v7471, %v3086
  %v7664 = vmul.f32 %v7472, %v3086
  %v7665 = vmul.f32 %v7473, %v3086
  %v7666 = vmul.f32 %v7474, %v3086
  %v7667 = vmul.f32 %v7475, %v3086
  %v7668 = vmul.f32 %v7476, %v3086
  %v7669 = vmul.f32 %v7509, %v3086
  %v7670 = vmul.f32 %v7510, %v3086
  %v7671 = vmul.f32 %v7575, %v3086
  %v7672 = vmul.f32 %v7576, %v3086
  %v7673 = vmul.f32 %v7641, %v3086
  %v7674 = vmul.f32 %v7642, %v3086
  %v7675 = vadd.f32 %v7609, %v7643
  %v7676 = vadd.f32 %v7610, %v7644
  %v7677 = vadd.f32 %v7611, %v7645
  %v7678 = vadd.f32 %v7612, %v7646
  %v7679 = vadd.f32 %v7613, %v7647
  %v7680 = vadd.f32 %v7614, %v7648
  %v7681 = vadd.f32 %v7615, %v7649
  %v7682 = vadd.f32 %v7616, %v7650
  %v7683 = vadd.f32 %v7617, %v7651
  %v7684 = vadd.f32 %v7618, %v7652
  %v7685 = vadd.f32 %v7619, %v7653
  %v7686 = vadd.f32 %v7620, %v7654
  %v7687 = vadd.f32 %v7621, %v7655
  %v7688 = vadd.f32 %v7622, %v7656
  %v7689 = vadd.f32 %v7623, %v7657
  %v7690 = vadd.f32 %v7624, %v7658
  %v7691 = vadd.f32 %v7625, %v7659
  %v7692 = vadd.f32 %v7626, %v7660
  %v7693 = vadd.f32 %v7627, %v7661
  %v7694 = vadd.f32 %v7628, %v7662
  %v7695 = vadd.f32 %v7629, %v7663
  %v7696 = vadd.f32 %v7630, %v7664
  %v7697 = vadd.f32 %v7631, %v7665
  %v7698 = vadd.f32 %v7632, %v7666
  %v7699 = vadd.f32 %v7633, %v7667
  %v7700 = vadd.f32 %v7634, %v7668
  %v7701 = vadd.f32 %v7635, %v7669
  %v7702 = vadd.f32 %v7636, %v7670
  %v7703 = vadd.f32 %v7637, %v7671
  %v7704 = vadd.f32 %v7638, %v7672
  %v7705 = vadd.f32 %v7639, %v7673
  %v7706 = vadd.f32 %v7640, %v7674
  %v7707 = vld [vmem:[#allocation2 + $0x276] sm:$0xff]
  %v7708 = vld [vmem:[#allocation2 + $0x27e] sm:$0xff]
  %v7709 = vmul.f32 %v7453, %v3156
  %v7710 = vmul.f32 %v7454, %v3156
  %v7711 = vmul.f32 %v7455, %v3156
  %v7712 = vmul.f32 %v7456, %v3156
  %v7713 = vmul.f32 %v7457, %v3156
  %v7714 = vmul.f32 %v7458, %v3156
  %v7715 = vmul.f32 %v7459, %v3156
  %v7716 = vmul.f32 %v7460, %v3156
  %v7717 = vmul.f32 %v7461, %v3156
  %v7718 = vmul.f32 %v7462, %v3156
  %v7719 = vmul.f32 %v7463, %v3156
  %v7720 = vmul.f32 %v7464, %v3156
  %v7721 = vmul.f32 %v7465, %v3156
  %v7722 = vmul.f32 %v7466, %v3156
  %v7723 = vmul.f32 %v7467, %v3156
  %v7724 = vmul.f32 %v7468, %v3156
  %v7725 = vmul.f32 %v7469, %v3156
  %v7726 = vmul.f32 %v7470, %v3156
  %v7727 = vmul.f32 %v7471, %v3156
  %v7728 = vmul.f32 %v7472, %v3156
  %v7729 = vmul.f32 %v7473, %v3156
  %v7730 = vmul.f32 %v7474, %v3156
  %v7731 = vmul.f32 %v7475, %v3156
  %v7732 = vmul.f32 %v7476, %v3156
  %v7733 = vmul.f32 %v7509, %v3156
  %v7734 = vmul.f32 %v7510, %v3156
  %v7735 = vmul.f32 %v7575, %v3156
  %v7736 = vmul.f32 %v7576, %v3156
  %v7737 = vmul.f32 %v7641, %v3156
  %v7738 = vmul.f32 %v7642, %v3156
  %v7739 = vmul.f32 %v7707, %v3156
  %v7740 = vmul.f32 %v7708, %v3156
  %v7741 = vadd.f32 %v7675, %v7709
  %v7742 = vadd.f32 %v7676, %v7710
  %v7743 = vadd.f32 %v7677, %v7711
  %v7744 = vadd.f32 %v7678, %v7712
  %v7745 = vadd.f32 %v7679, %v7713
  %v7746 = vadd.f32 %v7680, %v7714
  %v7747 = vadd.f32 %v7681, %v7715
  %v7748 = vadd.f32 %v7682, %v7716
  %v7749 = vadd.f32 %v7683, %v7717
  %v7750 = vadd.f32 %v7684, %v7718
  %v7751 = vadd.f32 %v7685, %v7719
  %v7752 = vadd.f32 %v7686, %v7720
  %v7753 = vadd.f32 %v7687, %v7721
  %v7754 = vadd.f32 %v7688, %v7722
  %v7755 = vadd.f32 %v7689, %v7723
  %v7756 = vadd.f32 %v7690, %v7724
  %v7757 = vadd.f32 %v7691, %v7725
  %v7758 = vadd.f32 %v7692, %v7726
  %v7759 = vadd.f32 %v7693, %v7727
  %v7760 = vadd.f32 %v7694, %v7728
  %v7761 = vadd.f32 %v7695, %v7729
  %v7762 = vadd.f32 %v7696, %v7730
  %v7763 = vadd.f32 %v7697, %v7731
  %v7764 = vadd.f32 %v7698, %v7732
  %v7765 = vadd.f32 %v7699, %v7733
  %v7766 = vadd.f32 %v7700, %v7734
  %v7767 = vadd.f32 %v7701, %v7735
  %v7768 = vadd.f32 %v7702, %v7736
  %v7769 = vadd.f32 %v7703, %v7737
  %v7770 = vadd.f32 %v7704, %v7738
  %v7771 = vadd.f32 %v7705, %v7739
  %v7772 = vadd.f32 %v7706, %v7740
  %v7773 = vld [vmem:[#allocation2 + $0x286] sm:$0xff]
  %v7774 = vld [vmem:[#allocation2 + $0x28e] sm:$0xff]
  %v7775 = vmul.f32 %v7455, %v3226
  %v7776 = vmul.f32 %v7456, %v3226
  %v7777 = vmul.f32 %v7457, %v3226
  %v7778 = vmul.f32 %v7458, %v3226
  %v7779 = vmul.f32 %v7459, %v3226
  %v7780 = vmul.f32 %v7460, %v3226
  %v7781 = vmul.f32 %v7461, %v3226
  %v7782 = vmul.f32 %v7462, %v3226
  %v7783 = vmul.f32 %v7463, %v3226
  %v7784 = vmul.f32 %v7464, %v3226
  %v7785 = vmul.f32 %v7465, %v3226
  %v7786 = vmul.f32 %v7466, %v3226
  %v7787 = vmul.f32 %v7467, %v3226
  %v7788 = vmul.f32 %v7468, %v3226
  %v7789 = vmul.f32 %v7469, %v3226
  %v7790 = vmul.f32 %v7470, %v3226
  %v7791 = vmul.f32 %v7471, %v3226
  %v7792 = vmul.f32 %v7472, %v3226
  %v7793 = vmul.f32 %v7473, %v3226
  %v7794 = vmul.f32 %v7474, %v3226
  %v7795 = vmul.f32 %v7475, %v3226
  %v7796 = vmul.f32 %v7476, %v3226
  %v7797 = vmul.f32 %v7509, %v3226
  %v7798 = vmul.f32 %v7510, %v3226
  %v7799 = vmul.f32 %v7575, %v3226
  %v7800 = vmul.f32 %v7576, %v3226
  %v7801 = vmul.f32 %v7641, %v3226
  %v7802 = vmul.f32 %v7642, %v3226
  %v7803 = vmul.f32 %v7707, %v3226
  %v7804 = vmul.f32 %v7708, %v3226
  %v7805 = vmul.f32 %v7773, %v3226
  %v7806 = vmul.f32 %v7774, %v3226
  %v7807 = vadd.f32 %v7741, %v7775
  %v7808 = vadd.f32 %v7742, %v7776
  %v7809 = vadd.f32 %v7743, %v7777
  %v7810 = vadd.f32 %v7744, %v7778
  %v7811 = vadd.f32 %v7745, %v7779
  %v7812 = vadd.f32 %v7746, %v7780
  %v7813 = vadd.f32 %v7747, %v7781
  %v7814 = vadd.f32 %v7748, %v7782
  %v7815 = vadd.f32 %v7749, %v7783
  %v7816 = vadd.f32 %v7750, %v7784
  %v7817 = vadd.f32 %v7751, %v7785
  %v7818 = vadd.f32 %v7752, %v7786
  %v7819 = vadd.f32 %v7753, %v7787
  %v7820 = vadd.f32 %v7754, %v7788
  %v7821 = vadd.f32 %v7755, %v7789
  %v7822 = vadd.f32 %v7756, %v7790
  %v7823 = vadd.f32 %v7757, %v7791
  %v7824 = vadd.f32 %v7758, %v7792
  %v7825 = vadd.f32 %v7759, %v7793
  %v7826 = vadd.f32 %v7760, %v7794
  %v7827 = vadd.f32 %v7761, %v7795
  %v7828 = vadd.f32 %v7762, %v7796
  %v7829 = vadd.f32 %v7763, %v7797
  %v7830 = vadd.f32 %v7764, %v7798
  %v7831 = vadd.f32 %v7765, %v7799
  %v7832 = vadd.f32 %v7766, %v7800
  %v7833 = vadd.f32 %v7767, %v7801
  %v7834 = vadd.f32 %v7768, %v7802
  %v7835 = vadd.f32 %v7769, %v7803
  %v7836 = vadd.f32 %v7770, %v7804
  %v7837 = vadd.f32 %v7771, %v7805
  %v7838 = vadd.f32 %v7772, %v7806
  %v7839 = vld [vmem:[#allocation2 + $0x296] sm:$0xff]
  %v7840 = vld [vmem:[#allocation2 + $0x29e] sm:$0xff]
  %v7841 = vmul.f32 %v7457, %v3296
  %v7842 = vmul.f32 %v7458, %v3296
  %v7843 = vmul.f32 %v7459, %v3296
  %v7844 = vmul.f32 %v7460, %v3296
  %v7845 = vmul.f32 %v7461, %v3296
  %v7846 = vmul.f32 %v7462, %v3296
  %v7847 = vmul.f32 %v7463, %v3296
  %v7848 = vmul.f32 %v7464, %v3296
  %v7849 = vmul.f32 %v7465, %v3296
  %v7850 = vmul.f32 %v7466, %v3296
  %v7851 = vmul.f32 %v7467, %v3296
  %v7852 = vmul.f32 %v7468, %v3296
  %v7853 = vmul.f32 %v7469, %v3296
  %v7854 = vmul.f32 %v7470, %v3296
  %v7855 = vmul.f32 %v7471, %v3296
  %v7856 = vmul.f32 %v7472, %v3296
  %v7857 = vmul.f32 %v7473, %v3296
  %v7858 = vmul.f32 %v7474, %v3296
  %v7859 = vmul.f32 %v7475, %v3296
  %v7860 = vmul.f32 %v7476, %v3296
  %v7861 = vmul.f32 %v7509, %v3296
  %v7862 = vmul.f32 %v7510, %v3296
  %v7863 = vmul.f32 %v7575, %v3296
  %v7864 = vmul.f32 %v7576, %v3296
  %v7865 = vmul.f32 %v7641, %v3296
  %v7866 = vmul.f32 %v7642, %v3296
  %v7867 = vmul.f32 %v7707, %v3296
  %v7868 = vmul.f32 %v7708, %v3296
  %v7869 = vmul.f32 %v7773, %v3296
  %v7870 = vmul.f32 %v7774, %v3296
  %v7871 = vmul.f32 %v7839, %v3296
  %v7872 = vmul.f32 %v7840, %v3296
  %v7873 = vadd.f32 %v7807, %v7841
  %v7874 = vadd.f32 %v7808, %v7842
  %v7875 = vadd.f32 %v7809, %v7843
  %v7876 = vadd.f32 %v7810, %v7844
  %v7877 = vadd.f32 %v7811, %v7845
  %v7878 = vadd.f32 %v7812, %v7846
  %v7879 = vadd.f32 %v7813, %v7847
  %v7880 = vadd.f32 %v7814, %v7848
  %v7881 = vadd.f32 %v7815, %v7849
  %v7882 = vadd.f32 %v7816, %v7850
  %v7883 = vadd.f32 %v7817, %v7851
  %v7884 = vadd.f32 %v7818, %v7852
  %v7885 = vadd.f32 %v7819, %v7853
  %v7886 = vadd.f32 %v7820, %v7854
  %v7887 = vadd.f32 %v7821, %v7855
  %v7888 = vadd.f32 %v7822, %v7856
  %v7889 = vadd.f32 %v7823, %v7857
  %v7890 = vadd.f32 %v7824, %v7858
  %v7891 = vadd.f32 %v7825, %v7859
  %v7892 = vadd.f32 %v7826, %v7860
  %v7893 = vadd.f32 %v7827, %v7861
  %v7894 = vadd.f32 %v7828, %v7862
  %v7895 = vadd.f32 %v7829, %v7863
  %v7896 = vadd.f32 %v7830, %v7864
  %v7897 = vadd.f32 %v7831, %v7865
  %v7898 = vadd.f32 %v7832, %v7866
  %v7899 = vadd.f32 %v7833, %v7867
  %v7900 = vadd.f32 %v7834, %v7868
  %v7901 = vadd.f32 %v7835, %v7869
  %v7902 = vadd.f32 %v7836, %v7870
  %v7903 = vadd.f32 %v7837, %v7871
  %v7904 = vadd.f32 %v7838, %v7872
  %v7905 = vmul.f32 %v7873, %v3364
  %v7906 = vmul.f32 %v7874, %v3369
  %v7907 = vmul.f32 %v7875, %v3374
  %v7908 = vmul.f32 %v7876, %v3379
  %v7909 = vmul.f32 %v7877, %v3384
  %v7910 = vmul.f32 %v7878, %v3389
  %v7911 = vmul.f32 %v7879, %v3394
  %v7912 = vmul.f32 %v7880, %v3399
  %v7913 = vmul.f32 %v7881, %v3404
  %v7914 = vmul.f32 %v7882, %v3409
  %v7915 = vmul.f32 %v7883, %v3414
  %v7916 = vmul.f32 %v7884, %v3419
  %v7917 = vmul.f32 %v7885, %v3424
  %v7918 = vmul.f32 %v7886, %v3429
  %v7919 = vmul.f32 %v7887, %v3434
  %v7920 = vmul.f32 %v7888, %v3439
  %v7921 = vmul.f32 %v7889, %v3444
  %v7922 = vmul.f32 %v7890, %v3449
  %v7923 = vmul.f32 %v7891, %v3454
  %v7924 = vmul.f32 %v7892, %v3459
  %v7925 = vmul.f32 %v7893, %v3464
  %v7926 = vmul.f32 %v7894, %v3469
  %v7927 = vmul.f32 %v7895, %v3474
  %v7928 = vmul.f32 %v7896, %v3479
  %v7929 = vmul.f32 %v7897, %v3484
  %v7930 = vmul.f32 %v7898, %v3489
  %v7931 = vmul.f32 %v7899, %v3494
  %v7932 = vmul.f32 %v7900, %v3499
  %v7933 = vmul.f32 %v7901, %v3504
  %v7934 = vmul.f32 %v7902, %v3509
  %v7935 = vmul.f32 %v7903, %v3514
  %v7936 = vmul.f32 %v7904, %v3519
  %v7937 = vadd.f32 %v7413, %v7905
  %v7938 = vadd.f32 %v7414, %v7906
  %v7939 = vadd.f32 %v7415, %v7907
  %v7940 = vadd.f32 %v7416, %v7908
  %v7941 = vadd.f32 %v7417, %v7909
  %v7942 = vadd.f32 %v7418, %v7910
  %v7943 = vadd.f32 %v7419, %v7911
  %v7944 = vadd.f32 %v7420, %v7912
  %v7945 = vadd.f32 %v7421, %v7913
  %v7946 = vadd.f32 %v7422, %v7914
  %v7947 = vadd.f32 %v7423, %v7915
  %v7948 = vadd.f32 %v7424, %v7916
  %v7949 = vadd.f32 %v7425, %v7917
  %v7950 = vadd.f32 %v7426, %v7918
  %v7951 = vadd.f32 %v7427, %v7919
  %v7952 = vadd.f32 %v7428, %v7920
  %v7953 = vadd.f32 %v7429, %v7921
  %v7954 = vadd.f32 %v7430, %v7922
  %v7955 = vadd.f32 %v7431, %v7923
  %v7956 = vadd.f32 %v7432, %v7924
  %v7957 = vadd.f32 %v7433, %v7925
  %v7958 = vadd.f32 %v7434, %v7926
  %v7959 = vadd.f32 %v7435, %v7927
  %v7960 = vadd.f32 %v7436, %v7928
  %v7961 = vadd.f32 %v7437, %v7929
  %v7962 = vadd.f32 %v7438, %v7930
  %v7963 = vadd.f32 %v7439, %v7931
  %v7964 = vadd.f32 %v7440, %v7932
  %v7965 = vadd.f32 %v7441, %v7933
  %v7966 = vadd.f32 %v7442, %v7934
  %v7967 = vadd.f32 %v7443, %v7935
  %v7968 = vadd.f32 %v7444, %v7936
  %v7969 = vld [vmem:[#allocation2 + $0x147] sm:$0xff]
  %v7970 = vld [vmem:[#allocation2 + $0x14f] sm:$0xff]
  %v7971 = vld [vmem:[#allocation2 + $0x157] sm:$0xff]
  %v7972 = vld [vmem:[#allocation2 + $0x15f] sm:$0xff]
  %v7973 = vld [vmem:[#allocation2 + $0x167] sm:$0xff]
  %v7974 = vld [vmem:[#allocation2 + $0x16f] sm:$0xff]
  %v7975 = vld [vmem:[#allocation2 + $0x177] sm:$0xff]
  %v7976 = vld [vmem:[#allocation2 + $0x17f] sm:$0xff]
  %v7977 = vld [vmem:[#allocation2 + $0x187] sm:$0xff]
  %v7978 = vld [vmem:[#allocation2 + $0x18f] sm:$0xff]
  %v7979 = vld [vmem:[#allocation2 + $0x197] sm:$0xff]
  %v7980 = vld [vmem:[#allocation2 + $0x19f] sm:$0xff]
  %v7981 = vld [vmem:[#allocation2 + $0x1a7] sm:$0xff]
  %v7982 = vld [vmem:[#allocation2 + $0x1af] sm:$0xff]
  %v7983 = vld [vmem:[#allocation2 + $0x1b7] sm:$0xff]
  %v7984 = vld [vmem:[#allocation2 + $0x1bf] sm:$0xff]
  %v7985 = vld [vmem:[#allocation2 + $0x1c7] sm:$0xff]
  %v7986 = vld [vmem:[#allocation2 + $0x1cf] sm:$0xff]
  %v7987 = vld [vmem:[#allocation2 + $0x1d7] sm:$0xff]
  %v7988 = vld [vmem:[#allocation2 + $0x1df] sm:$0xff]
  %v7989 = vld [vmem:[#allocation2 + $0x1e7] sm:$0xff]
  %v7990 = vld [vmem:[#allocation2 + $0x1ef] sm:$0xff]
  %v7991 = vld [vmem:[#allocation2 + $0x1f7] sm:$0xff]
  %v7992 = vld [vmem:[#allocation2 + $0x1ff] sm:$0xff]
  %v7993 = vld [vmem:[#allocation2 + $0x207] sm:$0xff]
  %v7994 = vld [vmem:[#allocation2 + $0x20f] sm:$0xff]
  %v7995 = vld [vmem:[#allocation2 + $0x217] sm:$0xff]
  %v7996 = vld [vmem:[#allocation2 + $0x21f] sm:$0xff]
  %v7997 = vld [vmem:[#allocation2 + $0x227] sm:$0xff]
  %v7998 = vld [vmem:[#allocation2 + $0x22f] sm:$0xff]
  %v7999 = vld [vmem:[#allocation2 + $0x237] sm:$0xff]
  %v8000 = vld [vmem:[#allocation2 + $0x23f] sm:$0xff]
  %v8001 = vmul.f32 %v7969, %v3620
  %v8002 = vmul.f32 %v7970, %v3620
  %v8003 = vmul.f32 %v7971, %v3620
  %v8004 = vmul.f32 %v7972, %v3620
  %v8005 = vmul.f32 %v7973, %v3620
  %v8006 = vmul.f32 %v7974, %v3620
  %v8007 = vmul.f32 %v7975, %v3620
  %v8008 = vmul.f32 %v7976, %v3620
  %v8009 = vmul.f32 %v7977, %v3620
  %v8010 = vmul.f32 %v7978, %v3620
  %v8011 = vmul.f32 %v7979, %v3620
  %v8012 = vmul.f32 %v7980, %v3620
  %v8013 = vmul.f32 %v7981, %v3620
  %v8014 = vmul.f32 %v7982, %v3620
  %v8015 = vmul.f32 %v7983, %v3620
  %v8016 = vmul.f32 %v7984, %v3620
  %v8017 = vmul.f32 %v7985, %v3620
  %v8018 = vmul.f32 %v7986, %v3620
  %v8019 = vmul.f32 %v7987, %v3620
  %v8020 = vmul.f32 %v7988, %v3620
  %v8021 = vmul.f32 %v7989, %v3620
  %v8022 = vmul.f32 %v7990, %v3620
  %v8023 = vmul.f32 %v7991, %v3620
  %v8024 = vmul.f32 %v7992, %v3620
  %v8025 = vmul.f32 %v7993, %v3620
  %v8026 = vmul.f32 %v7994, %v3620
  %v8027 = vmul.f32 %v7995, %v3620
  %v8028 = vmul.f32 %v7996, %v3620
  %v8029 = vmul.f32 %v7997, %v3620
  %v8030 = vmul.f32 %v7998, %v3620
  %v8031 = vmul.f32 %v7999, %v3620
  %v8032 = vmul.f32 %v8000, %v3620
  %v8033 = vld [vmem:[#allocation2 + $0x247] sm:$0xff]
  %v8034 = vld [vmem:[#allocation2 + $0x24f] sm:$0xff]
  %v8035 = vmul.f32 %v7971, %v3658
  %v8036 = vmul.f32 %v7972, %v3658
  %v8037 = vmul.f32 %v7973, %v3658
  %v8038 = vmul.f32 %v7974, %v3658
  %v8039 = vmul.f32 %v7975, %v3658
  %v8040 = vmul.f32 %v7976, %v3658
  %v8041 = vmul.f32 %v7977, %v3658
  %v8042 = vmul.f32 %v7978, %v3658
  %v8043 = vmul.f32 %v7979, %v3658
  %v8044 = vmul.f32 %v7980, %v3658
  %v8045 = vmul.f32 %v7981, %v3658
  %v8046 = vmul.f32 %v7982, %v3658
  %v8047 = vmul.f32 %v7983, %v3658
  %v8048 = vmul.f32 %v7984, %v3658
  %v8049 = vmul.f32 %v7985, %v3658
  %v8050 = vmul.f32 %v7986, %v3658
  %v8051 = vmul.f32 %v7987, %v3658
  %v8052 = vmul.f32 %v7988, %v3658
  %v8053 = vmul.f32 %v7989, %v3658
  %v8054 = vmul.f32 %v7990, %v3658
  %v8055 = vmul.f32 %v7991, %v3658
  %v8056 = vmul.f32 %v7992, %v3658
  %v8057 = vmul.f32 %v7993, %v3658
  %v8058 = vmul.f32 %v7994, %v3658
  %v8059 = vmul.f32 %v7995, %v3658
  %v8060 = vmul.f32 %v7996, %v3658
  %v8061 = vmul.f32 %v7997, %v3658
  %v8062 = vmul.f32 %v7998, %v3658
  %v8063 = vmul.f32 %v7999, %v3658
  %v8064 = vmul.f32 %v8000, %v3658
  %v8065 = vmul.f32 %v8033, %v3658
  %v8066 = vmul.f32 %v8034, %v3658
  %v8067 = vadd.f32 %v8001, %v8035
  %v8068 = vadd.f32 %v8002, %v8036
  %v8069 = vadd.f32 %v8003, %v8037
  %v8070 = vadd.f32 %v8004, %v8038
  %v8071 = vadd.f32 %v8005, %v8039
  %v8072 = vadd.f32 %v8006, %v8040
  %v8073 = vadd.f32 %v8007, %v8041
  %v8074 = vadd.f32 %v8008, %v8042
  %v8075 = vadd.f32 %v8009, %v8043
  %v8076 = vadd.f32 %v8010, %v8044
  %v8077 = vadd.f32 %v8011, %v8045
  %v8078 = vadd.f32 %v8012, %v8046
  %v8079 = vadd.f32 %v8013, %v8047
  %v8080 = vadd.f32 %v8014, %v8048
  %v8081 = vadd.f32 %v8015, %v8049
  %v8082 = vadd.f32 %v8016, %v8050
  %v8083 = vadd.f32 %v8017, %v8051
  %v8084 = vadd.f32 %v8018, %v8052
  %v8085 = vadd.f32 %v8019, %v8053
  %v8086 = vadd.f32 %v8020, %v8054
  %v8087 = vadd.f32 %v8021, %v8055
  %v8088 = vadd.f32 %v8022, %v8056
  %v8089 = vadd.f32 %v8023, %v8057
  %v8090 = vadd.f32 %v8024, %v8058
  %v8091 = vadd.f32 %v8025, %v8059
  %v8092 = vadd.f32 %v8026, %v8060
  %v8093 = vadd.f32 %v8027, %v8061
  %v8094 = vadd.f32 %v8028, %v8062
  %v8095 = vadd.f32 %v8029, %v8063
  %v8096 = vadd.f32 %v8030, %v8064
  %v8097 = vadd.f32 %v8031, %v8065
  %v8098 = vadd.f32 %v8032, %v8066
  %v8099 = vld [vmem:[#allocation2 + $0x257] sm:$0xff]
  %v8100 = vld [vmem:[#allocation2 + $0x25f] sm:$0xff]
  %v8101 = vmul.f32 %v7973, %v3728
  %v8102 = vmul.f32 %v7974, %v3728
  %v8103 = vmul.f32 %v7975, %v3728
  %v8104 = vmul.f32 %v7976, %v3728
  %v8105 = vmul.f32 %v7977, %v3728
  %v8106 = vmul.f32 %v7978, %v3728
  %v8107 = vmul.f32 %v7979, %v3728
  %v8108 = vmul.f32 %v7980, %v3728
  %v8109 = vmul.f32 %v7981, %v3728
  %v8110 = vmul.f32 %v7982, %v3728
  %v8111 = vmul.f32 %v7983, %v3728
  %v8112 = vmul.f32 %v7984, %v3728
  %v8113 = vmul.f32 %v7985, %v3728
  %v8114 = vmul.f32 %v7986, %v3728
  %v8115 = vmul.f32 %v7987, %v3728
  %v8116 = vmul.f32 %v7988, %v3728
  %v8117 = vmul.f32 %v7989, %v3728
  %v8118 = vmul.f32 %v7990, %v3728
  %v8119 = vmul.f32 %v7991, %v3728
  %v8120 = vmul.f32 %v7992, %v3728
  %v8121 = vmul.f32 %v7993, %v3728
  %v8122 = vmul.f32 %v7994, %v3728
  %v8123 = vmul.f32 %v7995, %v3728
  %v8124 = vmul.f32 %v7996, %v3728
  %v8125 = vmul.f32 %v7997, %v3728
  %v8126 = vmul.f32 %v7998, %v3728
  %v8127 = vmul.f32 %v7999, %v3728
  %v8128 = vmul.f32 %v8000, %v3728
  %v8129 = vmul.f32 %v8033, %v3728
  %v8130 = vmul.f32 %v8034, %v3728
  %v8131 = vmul.f32 %v8099, %v3728
  %v8132 = vmul.f32 %v8100, %v3728
  %v8133 = vadd.f32 %v8067, %v8101
  %v8134 = vadd.f32 %v8068, %v8102
  %v8135 = vadd.f32 %v8069, %v8103
  %v8136 = vadd.f32 %v8070, %v8104
  %v8137 = vadd.f32 %v8071, %v8105
  %v8138 = vadd.f32 %v8072, %v8106
  %v8139 = vadd.f32 %v8073, %v8107
  %v8140 = vadd.f32 %v8074, %v8108
  %v8141 = vadd.f32 %v8075, %v8109
  %v8142 = vadd.f32 %v8076, %v8110
  %v8143 = vadd.f32 %v8077, %v8111
  %v8144 = vadd.f32 %v8078, %v8112
  %v8145 = vadd.f32 %v8079, %v8113
  %v8146 = vadd.f32 %v8080, %v8114
  %v8147 = vadd.f32 %v8081, %v8115
  %v8148 = vadd.f32 %v8082, %v8116
  %v8149 = vadd.f32 %v8083, %v8117
  %v8150 = vadd.f32 %v8084, %v8118
  %v8151 = vadd.f32 %v8085, %v8119
  %v8152 = vadd.f32 %v8086, %v8120
  %v8153 = vadd.f32 %v8087, %v8121
  %v8154 = vadd.f32 %v8088, %v8122
  %v8155 = vadd.f32 %v8089, %v8123
  %v8156 = vadd.f32 %v8090, %v8124
  %v8157 = vadd.f32 %v8091, %v8125
  %v8158 = vadd.f32 %v8092, %v8126
  %v8159 = vadd.f32 %v8093, %v8127
  %v8160 = vadd.f32 %v8094, %v8128
  %v8161 = vadd.f32 %v8095, %v8129
  %v8162 = vadd.f32 %v8096, %v8130
  %v8163 = vadd.f32 %v8097, %v8131
  %v8164 = vadd.f32 %v8098, %v8132
  %v8165 = vld [vmem:[#allocation2 + $0x267] sm:$0xff]
  %v8166 = vld [vmem:[#allocation2 + $0x26f] sm:$0xff]
  %v8167 = vmul.f32 %v7975, %v3798
  %v8168 = vmul.f32 %v7976, %v3798
  %v8169 = vmul.f32 %v7977, %v3798
  %v8170 = vmul.f32 %v7978, %v3798
  %v8171 = vmul.f32 %v7979, %v3798
  %v8172 = vmul.f32 %v7980, %v3798
  %v8173 = vmul.f32 %v7981, %v3798
  %v8174 = vmul.f32 %v7982, %v3798
  %v8175 = vmul.f32 %v7983, %v3798
  %v8176 = vmul.f32 %v7984, %v3798
  %v8177 = vmul.f32 %v7985, %v3798
  %v8178 = vmul.f32 %v7986, %v3798
  %v8179 = vmul.f32 %v7987, %v3798
  %v8180 = vmul.f32 %v7988, %v3798
  %v8181 = vmul.f32 %v7989, %v3798
  %v8182 = vmul.f32 %v7990, %v3798
  %v8183 = vmul.f32 %v7991, %v3798
  %v8184 = vmul.f32 %v7992, %v3798
  %v8185 = vmul.f32 %v7993, %v3798
  %v8186 = vmul.f32 %v7994, %v3798
  %v8187 = vmul.f32 %v7995, %v3798
  %v8188 = vmul.f32 %v7996, %v3798
  %v8189 = vmul.f32 %v7997, %v3798
  %v8190 = vmul.f32 %v7998, %v3798
  %v8191 = vmul.f32 %v7999, %v3798
  %v8192 = vmul.f32 %v8000, %v3798
  %v8193 = vmul.f32 %v8033, %v3798
  %v8194 = vmul.f32 %v8034, %v3798
  %v8195 = vmul.f32 %v8099, %v3798
  %v8196 = vmul.f32 %v8100, %v3798
  %v8197 = vmul.f32 %v8165, %v3798
  %v8198 = vmul.f32 %v8166, %v3798
  %v8199 = vadd.f32 %v8133, %v8167
  %v8200 = vadd.f32 %v8134, %v8168
  %v8201 = vadd.f32 %v8135, %v8169
  %v8202 = vadd.f32 %v8136, %v8170
  %v8203 = vadd.f32 %v8137, %v8171
  %v8204 = vadd.f32 %v8138, %v8172
  %v8205 = vadd.f32 %v8139, %v8173
  %v8206 = vadd.f32 %v8140, %v8174
  %v8207 = vadd.f32 %v8141, %v8175
  %v8208 = vadd.f32 %v8142, %v8176
  %v8209 = vadd.f32 %v8143, %v8177
  %v8210 = vadd.f32 %v8144, %v8178
  %v8211 = vadd.f32 %v8145, %v8179
  %v8212 = vadd.f32 %v8146, %v8180
  %v8213 = vadd.f32 %v8147, %v8181
  %v8214 = vadd.f32 %v8148, %v8182
  %v8215 = vadd.f32 %v8149, %v8183
  %v8216 = vadd.f32 %v8150, %v8184
  %v8217 = vadd.f32 %v8151, %v8185
  %v8218 = vadd.f32 %v8152, %v8186
  %v8219 = vadd.f32 %v8153, %v8187
  %v8220 = vadd.f32 %v8154, %v8188
  %v8221 = vadd.f32 %v8155, %v8189
  %v8222 = vadd.f32 %v8156, %v8190
  %v8223 = vadd.f32 %v8157, %v8191
  %v8224 = vadd.f32 %v8158, %v8192
  %v8225 = vadd.f32 %v8159, %v8193
  %v8226 = vadd.f32 %v8160, %v8194
  %v8227 = vadd.f32 %v8161, %v8195
  %v8228 = vadd.f32 %v8162, %v8196
  %v8229 = vadd.f32 %v8163, %v8197
  %v8230 = vadd.f32 %v8164, %v8198
  %v8231 = vld [vmem:[#allocation2 + $0x277] sm:$0xff]
  %v8232 = vld [vmem:[#allocation2 + $0x27f] sm:$0xff]
  %v8233 = vmul.f32 %v7977, %v3868
  %v8234 = vmul.f32 %v7978, %v3868
  %v8235 = vmul.f32 %v7979, %v3868
  %v8236 = vmul.f32 %v7980, %v3868
  %v8237 = vmul.f32 %v7981, %v3868
  %v8238 = vmul.f32 %v7982, %v3868
  %v8239 = vmul.f32 %v7983, %v3868
  %v8240 = vmul.f32 %v7984, %v3868
  %v8241 = vmul.f32 %v7985, %v3868
  %v8242 = vmul.f32 %v7986, %v3868
  %v8243 = vmul.f32 %v7987, %v3868
  %v8244 = vmul.f32 %v7988, %v3868
  %v8245 = vmul.f32 %v7989, %v3868
  %v8246 = vmul.f32 %v7990, %v3868
  %v8247 = vmul.f32 %v7991, %v3868
  %v8248 = vmul.f32 %v7992, %v3868
  %v8249 = vmul.f32 %v7993, %v3868
  %v8250 = vmul.f32 %v7994, %v3868
  %v8251 = vmul.f32 %v7995, %v3868
  %v8252 = vmul.f32 %v7996, %v3868
  %v8253 = vmul.f32 %v7997, %v3868
  %v8254 = vmul.f32 %v7998, %v3868
  %v8255 = vmul.f32 %v7999, %v3868
  %v8256 = vmul.f32 %v8000, %v3868
  %v8257 = vmul.f32 %v8033, %v3868
  %v8258 = vmul.f32 %v8034, %v3868
  %v8259 = vmul.f32 %v8099, %v3868
  %v8260 = vmul.f32 %v8100, %v3868
  %v8261 = vmul.f32 %v8165, %v3868
  %v8262 = vmul.f32 %v8166, %v3868
  %v8263 = vmul.f32 %v8231, %v3868
  %v8264 = vmul.f32 %v8232, %v3868
  %v8265 = vadd.f32 %v8199, %v8233
  %v8266 = vadd.f32 %v8200, %v8234
  %v8267 = vadd.f32 %v8201, %v8235
  %v8268 = vadd.f32 %v8202, %v8236
  %v8269 = vadd.f32 %v8203, %v8237
  %v8270 = vadd.f32 %v8204, %v8238
  %v8271 = vadd.f32 %v8205, %v8239
  %v8272 = vadd.f32 %v8206, %v8240
  %v8273 = vadd.f32 %v8207, %v8241
  %v8274 = vadd.f32 %v8208, %v8242
  %v8275 = vadd.f32 %v8209, %v8243
  %v8276 = vadd.f32 %v8210, %v8244
  %v8277 = vadd.f32 %v8211, %v8245
  %v8278 = vadd.f32 %v8212, %v8246
  %v8279 = vadd.f32 %v8213, %v8247
  %v8280 = vadd.f32 %v8214, %v8248
  %v8281 = vadd.f32 %v8215, %v8249
  %v8282 = vadd.f32 %v8216, %v8250
  %v8283 = vadd.f32 %v8217, %v8251
  %v8284 = vadd.f32 %v8218, %v8252
  %v8285 = vadd.f32 %v8219, %v8253
  %v8286 = vadd.f32 %v8220, %v8254
  %v8287 = vadd.f32 %v8221, %v8255
  %v8288 = vadd.f32 %v8222, %v8256
  %v8289 = vadd.f32 %v8223, %v8257
  %v8290 = vadd.f32 %v8224, %v8258
  %v8291 = vadd.f32 %v8225, %v8259
  %v8292 = vadd.f32 %v8226, %v8260
  %v8293 = vadd.f32 %v8227, %v8261
  %v8294 = vadd.f32 %v8228, %v8262
  %v8295 = vadd.f32 %v8229, %v8263
  %v8296 = vadd.f32 %v8230, %v8264
  %v8297 = vld [vmem:[#allocation2 + $0x287] sm:$0xff]
  %v8298 = vld [vmem:[#allocation2 + $0x28f] sm:$0xff]
  %v8299 = vmul.f32 %v7979, %v3938
  %v8300 = vmul.f32 %v7980, %v3938
  %v8301 = vmul.f32 %v7981, %v3938
  %v8302 = vmul.f32 %v7982, %v3938
  %v8303 = vmul.f32 %v7983, %v3938
  %v8304 = vmul.f32 %v7984, %v3938
  %v8305 = vmul.f32 %v7985, %v3938
  %v8306 = vmul.f32 %v7986, %v3938
  %v8307 = vmul.f32 %v7987, %v3938
  %v8308 = vmul.f32 %v7988, %v3938
  %v8309 = vmul.f32 %v7989, %v3938
  %v8310 = vmul.f32 %v7990, %v3938
  %v8311 = vmul.f32 %v7991, %v3938
  %v8312 = vmul.f32 %v7992, %v3938
  %v8313 = vmul.f32 %v7993, %v3938
  %v8314 = vmul.f32 %v7994, %v3938
  %v8315 = vmul.f32 %v7995, %v3938
  %v8316 = vmul.f32 %v7996, %v3938
  %v8317 = vmul.f32 %v7997, %v3938
  %v8318 = vmul.f32 %v7998, %v3938
  %v8319 = vmul.f32 %v7999, %v3938
  %v8320 = vmul.f32 %v8000, %v3938
  %v8321 = vmul.f32 %v8033, %v3938
  %v8322 = vmul.f32 %v8034, %v3938
  %v8323 = vmul.f32 %v8099, %v3938
  %v8324 = vmul.f32 %v8100, %v3938
  %v8325 = vmul.f32 %v8165, %v3938
  %v8326 = vmul.f32 %v8166, %v3938
  %v8327 = vmul.f32 %v8231, %v3938
  %v8328 = vmul.f32 %v8232, %v3938
  %v8329 = vmul.f32 %v8297, %v3938
  %v8330 = vmul.f32 %v8298, %v3938
  %v8331 = vadd.f32 %v8265, %v8299
  %v8332 = vadd.f32 %v8266, %v8300
  %v8333 = vadd.f32 %v8267, %v8301
  %v8334 = vadd.f32 %v8268, %v8302
  %v8335 = vadd.f32 %v8269, %v8303
  %v8336 = vadd.f32 %v8270, %v8304
  %v8337 = vadd.f32 %v8271, %v8305
  %v8338 = vadd.f32 %v8272, %v8306
  %v8339 = vadd.f32 %v8273, %v8307
  %v8340 = vadd.f32 %v8274, %v8308
  %v8341 = vadd.f32 %v8275, %v8309
  %v8342 = vadd.f32 %v8276, %v8310
  %v8343 = vadd.f32 %v8277, %v8311
  %v8344 = vadd.f32 %v8278, %v8312
  %v8345 = vadd.f32 %v8279, %v8313
  %v8346 = vadd.f32 %v8280, %v8314
  %v8347 = vadd.f32 %v8281, %v8315
  %v8348 = vadd.f32 %v8282, %v8316
  %v8349 = vadd.f32 %v8283, %v8317
  %v8350 = vadd.f32 %v8284, %v8318
  %v8351 = vadd.f32 %v8285, %v8319
  %v8352 = vadd.f32 %v8286, %v8320
  %v8353 = vadd.f32 %v8287, %v8321
  %v8354 = vadd.f32 %v8288, %v8322
  %v8355 = vadd.f32 %v8289, %v8323
  %v8356 = vadd.f32 %v8290, %v8324
  %v8357 = vadd.f32 %v8291, %v8325
  %v8358 = vadd.f32 %v8292, %v8326
  %v8359 = vadd.f32 %v8293, %v8327
  %v8360 = vadd.f32 %v8294, %v8328
  %v8361 = vadd.f32 %v8295, %v8329
  %v8362 = vadd.f32 %v8296, %v8330
  %v8363 = vld [vmem:[#allocation2 + $0x297] sm:$0xff]
  %v8364 = vld [vmem:[#allocation2 + $0x29f] sm:$0xff]
  %v8365 = vmul.f32 %v7981, %v4008
  %v8366 = vmul.f32 %v7982, %v4008
  %v8367 = vmul.f32 %v7983, %v4008
  %v8368 = vmul.f32 %v7984, %v4008
  %v8369 = vmul.f32 %v7985, %v4008
  %v8370 = vmul.f32 %v7986, %v4008
  %v8371 = vmul.f32 %v7987, %v4008
  %v8372 = vmul.f32 %v7988, %v4008
  %v8373 = vmul.f32 %v7989, %v4008
  %v8374 = vmul.f32 %v7990, %v4008
  %v8375 = vmul.f32 %v7991, %v4008
  %v8376 = vmul.f32 %v7992, %v4008
  %v8377 = vmul.f32 %v7993, %v4008
  %v8378 = vmul.f32 %v7994, %v4008
  %v8379 = vmul.f32 %v7995, %v4008
  %v8380 = vmul.f32 %v7996, %v4008
  %v8381 = vmul.f32 %v7997, %v4008
  %v8382 = vmul.f32 %v7998, %v4008
  %v8383 = vmul.f32 %v7999, %v4008
  %v8384 = vmul.f32 %v8000, %v4008
  %v8385 = vmul.f32 %v8033, %v4008
  %v8386 = vmul.f32 %v8034, %v4008
  %v8387 = vmul.f32 %v8099, %v4008
  %v8388 = vmul.f32 %v8100, %v4008
  %v8389 = vmul.f32 %v8165, %v4008
  %v8390 = vmul.f32 %v8166, %v4008
  %v8391 = vmul.f32 %v8231, %v4008
  %v8392 = vmul.f32 %v8232, %v4008
  %v8393 = vmul.f32 %v8297, %v4008
  %v8394 = vmul.f32 %v8298, %v4008
  %v8395 = vmul.f32 %v8363, %v4008
  %v8396 = vmul.f32 %v8364, %v4008
  %v8397 = vadd.f32 %v8331, %v8365
  %v8398 = vadd.f32 %v8332, %v8366
  %v8399 = vadd.f32 %v8333, %v8367
  %v8400 = vadd.f32 %v8334, %v8368
  %v8401 = vadd.f32 %v8335, %v8369
  %v8402 = vadd.f32 %v8336, %v8370
  %v8403 = vadd.f32 %v8337, %v8371
  %v8404 = vadd.f32 %v8338, %v8372
  %v8405 = vadd.f32 %v8339, %v8373
  %v8406 = vadd.f32 %v8340, %v8374
  %v8407 = vadd.f32 %v8341, %v8375
  %v8408 = vadd.f32 %v8342, %v8376
  %v8409 = vadd.f32 %v8343, %v8377
  %v8410 = vadd.f32 %v8344, %v8378
  %v8411 = vadd.f32 %v8345, %v8379
  %v8412 = vadd.f32 %v8346, %v8380
  %v8413 = vadd.f32 %v8347, %v8381
  %v8414 = vadd.f32 %v8348, %v8382
  %v8415 = vadd.f32 %v8349, %v8383
  %v8416 = vadd.f32 %v8350, %v8384
  %v8417 = vadd.f32 %v8351, %v8385
  %v8418 = vadd.f32 %v8352, %v8386
  %v8419 = vadd.f32 %v8353, %v8387
  %v8420 = vadd.f32 %v8354, %v8388
  %v8421 = vadd.f32 %v8355, %v8389
  %v8422 = vadd.f32 %v8356, %v8390
  %v8423 = vadd.f32 %v8357, %v8391
  %v8424 = vadd.f32 %v8358, %v8392
  %v8425 = vadd.f32 %v8359, %v8393
  %v8426 = vadd.f32 %v8360, %v8394
  %v8427 = vadd.f32 %v8361, %v8395
  %v8428 = vadd.f32 %v8362, %v8396
  %v8429 = vmul.f32 %v8397, %v4076
  %v8430 = vmul.f32 %v8398, %v4081
  %v8431 = vmul.f32 %v8399, %v4086
  %v8432 = vmul.f32 %v8400, %v4091
  %v8433 = vmul.f32 %v8401, %v4096
  %v8434 = vmul.f32 %v8402, %v4101
  %v8435 = vmul.f32 %v8403, %v4106
  %v8436 = vmul.f32 %v8404, %v4111
  %v8437 = vmul.f32 %v8405, %v4116
  %v8438 = vmul.f32 %v8406, %v4121
  %v8439 = vmul.f32 %v8407, %v4126
  %v8440 = vmul.f32 %v8408, %v4131
  %v8441 = vmul.f32 %v8409, %v4136
  %v8442 = vmul.f32 %v8410, %v4141
  %v8443 = vmul.f32 %v8411, %v4146
  %v8444 = vmul.f32 %v8412, %v4151
  %v8445 = vmul.f32 %v8413, %v4156
  %v8446 = vmul.f32 %v8414, %v4161
  %v8447 = vmul.f32 %v8415, %v4166
  %v8448 = vmul.f32 %v8416, %v4171
  %v8449 = vmul.f32 %v8417, %v4176
  %v8450 = vmul.f32 %v8418, %v4181
  %v8451 = vmul.f32 %v8419, %v4186
  %v8452 = vmul.f32 %v8420, %v4191
  %v8453 = vmul.f32 %v8421, %v4196
  %v8454 = vmul.f32 %v8422, %v4201
  %v8455 = vmul.f32 %v8423, %v4206
  %v8456 = vmul.f32 %v8424, %v4211
  %v8457 = vmul.f32 %v8425, %v4216
  %v8458 = vmul.f32 %v8426, %v4221
  %v8459 = vmul.f32 %v8427, %v4226
  %v8460 = vmul.f32 %v8428, %v4231
  %v8461 = vadd.f32 %v7937, %v8429
  %v8462 = vadd.f32 %v7938, %v8430
  %v8463 = vadd.f32 %v7939, %v8431
  %v8464 = vadd.f32 %v7940, %v8432
  %v8465 = vadd.f32 %v7941, %v8433
  %v8466 = vadd.f32 %v7942, %v8434
  %v8467 = vadd.f32 %v7943, %v8435
  %v8468 = vadd.f32 %v7944, %v8436
  %v8469 = vadd.f32 %v7945, %v8437
  %v8470 = vadd.f32 %v7946, %v8438
  %v8471 = vadd.f32 %v7947, %v8439
  %v8472 = vadd.f32 %v7948, %v8440
  %v8473 = vadd.f32 %v7949, %v8441
  %v8474 = vadd.f32 %v7950, %v8442
  %v8475 = vadd.f32 %v7951, %v8443
  %v8476 = vadd.f32 %v7952, %v8444
  %v8477 = vadd.f32 %v7953, %v8445
  %v8478 = vadd.f32 %v7954, %v8446
  %v8479 = vadd.f32 %v7955, %v8447
  %v8480 = vadd.f32 %v7956, %v8448
  %v8481 = vadd.f32 %v7957, %v8449
  %v8482 = vadd.f32 %v7958, %v8450
  %v8483 = vadd.f32 %v7959, %v8451
  %v8484 = vadd.f32 %v7960, %v8452
  %v8485 = vadd.f32 %v7961, %v8453
  %v8486 = vadd.f32 %v7962, %v8454
  %v8487 = vadd.f32 %v7963, %v8455
  %v8488 = vadd.f32 %v7964, %v8456
  %v8489 = vadd.f32 %v7965, %v8457
  %v8490 = vadd.f32 %v7966, %v8458
  %v8491 = vadd.f32 %v7967, %v8459
  %v8492 = vadd.f32 %v7968, %v8460
  %v8493 = vld [vmem:[#allocation2 + $0x148] sm:$0xff]
  %v8494 = vld [vmem:[#allocation2 + $0x150] sm:$0xff]
  %v8495 = vld [vmem:[#allocation2 + $0x158] sm:$0xff]
  %v8496 = vld [vmem:[#allocation2 + $0x160] sm:$0xff]
  %v8497 = vld [vmem:[#allocation2 + $0x168] sm:$0xff]
  %v8498 = vld [vmem:[#allocation2 + $0x170] sm:$0xff]
  %v8499 = vld [vmem:[#allocation2 + $0x178] sm:$0xff]
  %v8500 = vld [vmem:[#allocation2 + $0x180] sm:$0xff]
  %v8501 = vld [vmem:[#allocation2 + $0x188] sm:$0xff]
  %v8502 = vld [vmem:[#allocation2 + $0x190] sm:$0xff]
  %v8503 = vld [vmem:[#allocation2 + $0x198] sm:$0xff]
  %v8504 = vld [vmem:[#allocation2 + $0x1a0] sm:$0xff]
  %v8505 = vld [vmem:[#allocation2 + $0x1a8] sm:$0xff]
  %v8506 = vld [vmem:[#allocation2 + $0x1b0] sm:$0xff]
  %v8507 = vld [vmem:[#allocation2 + $0x1b8] sm:$0xff]
  %v8508 = vld [vmem:[#allocation2 + $0x1c0] sm:$0xff]
  %v8509 = vld [vmem:[#allocation2 + $0x1c8] sm:$0xff]
  %v8510 = vld [vmem:[#allocation2 + $0x1d0] sm:$0xff]
  %v8511 = vld [vmem:[#allocation2 + $0x1d8] sm:$0xff]
  %v8512 = vld [vmem:[#allocation2 + $0x1e0] sm:$0xff]
  %v8513 = vld [vmem:[#allocation2 + $0x1e8] sm:$0xff]
  %v8514 = vld [vmem:[#allocation2 + $0x1f0] sm:$0xff]
  %v8515 = vld [vmem:[#allocation2 + $0x1f8] sm:$0xff]
  %v8516 = vld [vmem:[#allocation2 + $0x200] sm:$0xff]
  %v8517 = vld [vmem:[#allocation2 + $0x208] sm:$0xff]
  %v8518 = vld [vmem:[#allocation2 + $0x210] sm:$0xff]
  %v8519 = vld [vmem:[#allocation2 + $0x218] sm:$0xff]
  %v8520 = vld [vmem:[#allocation2 + $0x220] sm:$0xff]
  %v8521 = vld [vmem:[#allocation2 + $0x228] sm:$0xff]
  %v8522 = vld [vmem:[#allocation2 + $0x230] sm:$0xff]
  %v8523 = vld [vmem:[#allocation2 + $0x238] sm:$0xff]
  %v8524 = vld [vmem:[#allocation2 + $0x240] sm:$0xff]
  %v8525 = vmul.f32 %v8493, %v4332
  %v8526 = vmul.f32 %v8494, %v4332
  %v8527 = vmul.f32 %v8495, %v4332
  %v8528 = vmul.f32 %v8496, %v4332
  %v8529 = vmul.f32 %v8497, %v4332
  %v8530 = vmul.f32 %v8498, %v4332
  %v8531 = vmul.f32 %v8499, %v4332
  %v8532 = vmul.f32 %v8500, %v4332
  %v8533 = vmul.f32 %v8501, %v4332
  %v8534 = vmul.f32 %v8502, %v4332
  %v8535 = vmul.f32 %v8503, %v4332
  %v8536 = vmul.f32 %v8504, %v4332
  %v8537 = vmul.f32 %v8505, %v4332
  %v8538 = vmul.f32 %v8506, %v4332
  %v8539 = vmul.f32 %v8507, %v4332
  %v8540 = vmul.f32 %v8508, %v4332
  %v8541 = vmul.f32 %v8509, %v4332
  %v8542 = vmul.f32 %v8510, %v4332
  %v8543 = vmul.f32 %v8511, %v4332
  %v8544 = vmul.f32 %v8512, %v4332
  %v8545 = vmul.f32 %v8513, %v4332
  %v8546 = vmul.f32 %v8514, %v4332
  %v8547 = vmul.f32 %v8515, %v4332
  %v8548 = vmul.f32 %v8516, %v4332
  %v8549 = vmul.f32 %v8517, %v4332
  %v8550 = vmul.f32 %v8518, %v4332
  %v8551 = vmul.f32 %v8519, %v4332
  %v8552 = vmul.f32 %v8520, %v4332
  %v8553 = vmul.f32 %v8521, %v4332
  %v8554 = vmul.f32 %v8522, %v4332
  %v8555 = vmul.f32 %v8523, %v4332
  %v8556 = vmul.f32 %v8524, %v4332
  %v8557 = vld [vmem:[#allocation2 + $0x248] sm:$0xff]
  %v8558 = vld [vmem:[#allocation2 + $0x250] sm:$0xff]
  %v8559 = vmul.f32 %v8495, %v4370
  %v8560 = vmul.f32 %v8496, %v4370
  %v8561 = vmul.f32 %v8497, %v4370
  %v8562 = vmul.f32 %v8498, %v4370
  %v8563 = vmul.f32 %v8499, %v4370
  %v8564 = vmul.f32 %v8500, %v4370
  %v8565 = vmul.f32 %v8501, %v4370
  %v8566 = vmul.f32 %v8502, %v4370
  %v8567 = vmul.f32 %v8503, %v4370
  %v8568 = vmul.f32 %v8504, %v4370
  %v8569 = vmul.f32 %v8505, %v4370
  %v8570 = vmul.f32 %v8506, %v4370
  %v8571 = vmul.f32 %v8507, %v4370
  %v8572 = vmul.f32 %v8508, %v4370
  %v8573 = vmul.f32 %v8509, %v4370
  %v8574 = vmul.f32 %v8510, %v4370
  %v8575 = vmul.f32 %v8511, %v4370
  %v8576 = vmul.f32 %v8512, %v4370
  %v8577 = vmul.f32 %v8513, %v4370
  %v8578 = vmul.f32 %v8514, %v4370
  %v8579 = vmul.f32 %v8515, %v4370
  %v8580 = vmul.f32 %v8516, %v4370
  %v8581 = vmul.f32 %v8517, %v4370
  %v8582 = vmul.f32 %v8518, %v4370
  %v8583 = vmul.f32 %v8519, %v4370
  %v8584 = vmul.f32 %v8520, %v4370
  %v8585 = vmul.f32 %v8521, %v4370
  %v8586 = vmul.f32 %v8522, %v4370
  %v8587 = vmul.f32 %v8523, %v4370
  %v8588 = vmul.f32 %v8524, %v4370
  %v8589 = vmul.f32 %v8557, %v4370
  %v8590 = vmul.f32 %v8558, %v4370
  %v8591 = vadd.f32 %v8525, %v8559
  %v8592 = vadd.f32 %v8526, %v8560
  %v8593 = vadd.f32 %v8527, %v8561
  %v8594 = vadd.f32 %v8528, %v8562
  %v8595 = vadd.f32 %v8529, %v8563
  %v8596 = vadd.f32 %v8530, %v8564
  %v8597 = vadd.f32 %v8531, %v8565
  %v8598 = vadd.f32 %v8532, %v8566
  %v8599 = vadd.f32 %v8533, %v8567
  %v8600 = vadd.f32 %v8534, %v8568
  %v8601 = vadd.f32 %v8535, %v8569
  %v8602 = vadd.f32 %v8536, %v8570
  %v8603 = vadd.f32 %v8537, %v8571
  %v8604 = vadd.f32 %v8538, %v8572
  %v8605 = vadd.f32 %v8539, %v8573
  %v8606 = vadd.f32 %v8540, %v8574
  %v8607 = vadd.f32 %v8541, %v8575
  %v8608 = vadd.f32 %v8542, %v8576
  %v8609 = vadd.f32 %v8543, %v8577
  %v8610 = vadd.f32 %v8544, %v8578
  %v8611 = vadd.f32 %v8545, %v8579
  %v8612 = vadd.f32 %v8546, %v8580
  %v8613 = vadd.f32 %v8547, %v8581
  %v8614 = vadd.f32 %v8548, %v8582
  %v8615 = vadd.f32 %v8549, %v8583
  %v8616 = vadd.f32 %v8550, %v8584
  %v8617 = vadd.f32 %v8551, %v8585
  %v8618 = vadd.f32 %v8552, %v8586
  %v8619 = vadd.f32 %v8553, %v8587
  %v8620 = vadd.f32 %v8554, %v8588
  %v8621 = vadd.f32 %v8555, %v8589
  %v8622 = vadd.f32 %v8556, %v8590
  %v8623 = vld [vmem:[#allocation2 + $0x258] sm:$0xff]
  %v8624 = vld [vmem:[#allocation2 + $0x260] sm:$0xff]
  %v8625 = vmul.f32 %v8497, %v4440
  %v8626 = vmul.f32 %v8498, %v4440
  %v8627 = vmul.f32 %v8499, %v4440
  %v8628 = vmul.f32 %v8500, %v4440
  %v8629 = vmul.f32 %v8501, %v4440
  %v8630 = vmul.f32 %v8502, %v4440
  %v8631 = vmul.f32 %v8503, %v4440
  %v8632 = vmul.f32 %v8504, %v4440
  %v8633 = vmul.f32 %v8505, %v4440
  %v8634 = vmul.f32 %v8506, %v4440
  %v8635 = vmul.f32 %v8507, %v4440
  %v8636 = vmul.f32 %v8508, %v4440
  %v8637 = vmul.f32 %v8509, %v4440
  %v8638 = vmul.f32 %v8510, %v4440
  %v8639 = vmul.f32 %v8511, %v4440
  %v8640 = vmul.f32 %v8512, %v4440
  %v8641 = vmul.f32 %v8513, %v4440
  %v8642 = vmul.f32 %v8514, %v4440
  %v8643 = vmul.f32 %v8515, %v4440
  %v8644 = vmul.f32 %v8516, %v4440
  %v8645 = vmul.f32 %v8517, %v4440
  %v8646 = vmul.f32 %v8518, %v4440
  %v8647 = vmul.f32 %v8519, %v4440
  %v8648 = vmul.f32 %v8520, %v4440
  %v8649 = vmul.f32 %v8521, %v4440
  %v8650 = vmul.f32 %v8522, %v4440
  %v8651 = vmul.f32 %v8523, %v4440
  %v8652 = vmul.f32 %v8524, %v4440
  %v8653 = vmul.f32 %v8557, %v4440
  %v8654 = vmul.f32 %v8558, %v4440
  %v8655 = vmul.f32 %v8623, %v4440
  %v8656 = vmul.f32 %v8624, %v4440
  %v8657 = vadd.f32 %v8591, %v8625
  %v8658 = vadd.f32 %v8592, %v8626
  %v8659 = vadd.f32 %v8593, %v8627
  %v8660 = vadd.f32 %v8594, %v8628
  %v8661 = vadd.f32 %v8595, %v8629
  %v8662 = vadd.f32 %v8596, %v8630
  %v8663 = vadd.f32 %v8597, %v8631
  %v8664 = vadd.f32 %v8598, %v8632
  %v8665 = vadd.f32 %v8599, %v8633
  %v8666 = vadd.f32 %v8600, %v8634
  %v8667 = vadd.f32 %v8601, %v8635
  %v8668 = vadd.f32 %v8602, %v8636
  %v8669 = vadd.f32 %v8603, %v8637
  %v8670 = vadd.f32 %v8604, %v8638
  %v8671 = vadd.f32 %v8605, %v8639
  %v8672 = vadd.f32 %v8606, %v8640
  %v8673 = vadd.f32 %v8607, %v8641
  %v8674 = vadd.f32 %v8608, %v8642
  %v8675 = vadd.f32 %v8609, %v8643
  %v8676 = vadd.f32 %v8610, %v8644
  %v8677 = vadd.f32 %v8611, %v8645
  %v8678 = vadd.f32 %v8612, %v8646
  %v8679 = vadd.f32 %v8613, %v8647
  %v8680 = vadd.f32 %v8614, %v8648
  %v8681 = vadd.f32 %v8615, %v8649
  %v8682 = vadd.f32 %v8616, %v8650
  %v8683 = vadd.f32 %v8617, %v8651
  %v8684 = vadd.f32 %v8618, %v8652
  %v8685 = vadd.f32 %v8619, %v8653
  %v8686 = vadd.f32 %v8620, %v8654
  %v8687 = vadd.f32 %v8621, %v8655
  %v8688 = vadd.f32 %v8622, %v8656
  %v8689 = vld [vmem:[#allocation2 + $0x268] sm:$0xff]
  %v8690 = vld [vmem:[#allocation2 + $0x270] sm:$0xff]
  %v8691 = vmul.f32 %v8499, %v4510
  %v8692 = vmul.f32 %v8500, %v4510
  %v8693 = vmul.f32 %v8501, %v4510
  %v8694 = vmul.f32 %v8502, %v4510
  %v8695 = vmul.f32 %v8503, %v4510
  %v8696 = vmul.f32 %v8504, %v4510
  %v8697 = vmul.f32 %v8505, %v4510
  %v8698 = vmul.f32 %v8506, %v4510
  %v8699 = vmul.f32 %v8507, %v4510
  %v8700 = vmul.f32 %v8508, %v4510
  %v8701 = vmul.f32 %v8509, %v4510
  %v8702 = vmul.f32 %v8510, %v4510
  %v8703 = vmul.f32 %v8511, %v4510
  %v8704 = vmul.f32 %v8512, %v4510
  %v8705 = vmul.f32 %v8513, %v4510
  %v8706 = vmul.f32 %v8514, %v4510
  %v8707 = vmul.f32 %v8515, %v4510
  %v8708 = vmul.f32 %v8516, %v4510
  %v8709 = vmul.f32 %v8517, %v4510
  %v8710 = vmul.f32 %v8518, %v4510
  %v8711 = vmul.f32 %v8519, %v4510
  %v8712 = vmul.f32 %v8520, %v4510
  %v8713 = vmul.f32 %v8521, %v4510
  %v8714 = vmul.f32 %v8522, %v4510
  %v8715 = vmul.f32 %v8523, %v4510
  %v8716 = vmul.f32 %v8524, %v4510
  %v8717 = vmul.f32 %v8557, %v4510
  %v8718 = vmul.f32 %v8558, %v4510
  %v8719 = vmul.f32 %v8623, %v4510
  %v8720 = vmul.f32 %v8624, %v4510
  %v8721 = vmul.f32 %v8689, %v4510
  %v8722 = vmul.f32 %v8690, %v4510
  %v8723 = vadd.f32 %v8657, %v8691
  %v8724 = vadd.f32 %v8658, %v8692
  %v8725 = vadd.f32 %v8659, %v8693
  %v8726 = vadd.f32 %v8660, %v8694
  %v8727 = vadd.f32 %v8661, %v8695
  %v8728 = vadd.f32 %v8662, %v8696
  %v8729 = vadd.f32 %v8663, %v8697
  %v8730 = vadd.f32 %v8664, %v8698
  %v8731 = vadd.f32 %v8665, %v8699
  %v8732 = vadd.f32 %v8666, %v8700
  %v8733 = vadd.f32 %v8667, %v8701
  %v8734 = vadd.f32 %v8668, %v8702
  %v8735 = vadd.f32 %v8669, %v8703
  %v8736 = vadd.f32 %v8670, %v8704
  %v8737 = vadd.f32 %v8671, %v8705
  %v8738 = vadd.f32 %v8672, %v8706
  %v8739 = vadd.f32 %v8673, %v8707
  %v8740 = vadd.f32 %v8674, %v8708
  %v8741 = vadd.f32 %v8675, %v8709
  %v8742 = vadd.f32 %v8676, %v8710
  %v8743 = vadd.f32 %v8677, %v8711
  %v8744 = vadd.f32 %v8678, %v8712
  %v8745 = vadd.f32 %v8679, %v8713
  %v8746 = vadd.f32 %v8680, %v8714
  %v8747 = vadd.f32 %v8681, %v8715
  %v8748 = vadd.f32 %v8682, %v8716
  %v8749 = vadd.f32 %v8683, %v8717
  %v8750 = vadd.f32 %v8684, %v8718
  %v8751 = vadd.f32 %v8685, %v8719
  %v8752 = vadd.f32 %v8686, %v8720
  %v8753 = vadd.f32 %v8687, %v8721
  %v8754 = vadd.f32 %v8688, %v8722
  %v8755 = vld [vmem:[#allocation2 + $0x278] sm:$0xff]
  %v8756 = vld [vmem:[#allocation2 + $0x280] sm:$0xff]
  %v8757 = vmul.f32 %v8501, %v4580
  %v8758 = vmul.f32 %v8502, %v4580
  %v8759 = vmul.f32 %v8503, %v4580
  %v8760 = vmul.f32 %v8504, %v4580
  %v8761 = vmul.f32 %v8505, %v4580
  %v8762 = vmul.f32 %v8506, %v4580
  %v8763 = vmul.f32 %v8507, %v4580
  %v8764 = vmul.f32 %v8508, %v4580
  %v8765 = vmul.f32 %v8509, %v4580
  %v8766 = vmul.f32 %v8510, %v4580
  %v8767 = vmul.f32 %v8511, %v4580
  %v8768 = vmul.f32 %v8512, %v4580
  %v8769 = vmul.f32 %v8513, %v4580
  %v8770 = vmul.f32 %v8514, %v4580
  %v8771 = vmul.f32 %v8515, %v4580
  %v8772 = vmul.f32 %v8516, %v4580
  %v8773 = vmul.f32 %v8517, %v4580
  %v8774 = vmul.f32 %v8518, %v4580
  %v8775 = vmul.f32 %v8519, %v4580
  %v8776 = vmul.f32 %v8520, %v4580
  %v8777 = vmul.f32 %v8521, %v4580
  %v8778 = vmul.f32 %v8522, %v4580
  %v8779 = vmul.f32 %v8523, %v4580
  %v8780 = vmul.f32 %v8524, %v4580
  %v8781 = vmul.f32 %v8557, %v4580
  %v8782 = vmul.f32 %v8558, %v4580
  %v8783 = vmul.f32 %v8623, %v4580
  %v8784 = vmul.f32 %v8624, %v4580
  %v8785 = vmul.f32 %v8689, %v4580
  %v8786 = vmul.f32 %v8690, %v4580
  %v8787 = vmul.f32 %v8755, %v4580
  %v8788 = vmul.f32 %v8756, %v4580
  %v8789 = vadd.f32 %v8723, %v8757
  %v8790 = vadd.f32 %v8724, %v8758
  %v8791 = vadd.f32 %v8725, %v8759
  %v8792 = vadd.f32 %v8726, %v8760
  %v8793 = vadd.f32 %v8727, %v8761
  %v8794 = vadd.f32 %v8728, %v8762
  %v8795 = vadd.f32 %v8729, %v8763
  %v8796 = vadd.f32 %v8730, %v8764
  %v8797 = vadd.f32 %v8731, %v8765
  %v8798 = vadd.f32 %v8732, %v8766
  %v8799 = vadd.f32 %v8733, %v8767
  %v8800 = vadd.f32 %v8734, %v8768
  %v8801 = vadd.f32 %v8735, %v8769
  %v8802 = vadd.f32 %v8736, %v8770
  %v8803 = vadd.f32 %v8737, %v8771
  %v8804 = vadd.f32 %v8738, %v8772
  %v8805 = vadd.f32 %v8739, %v8773
  %v8806 = vadd.f32 %v8740, %v8774
  %v8807 = vadd.f32 %v8741, %v8775
  %v8808 = vadd.f32 %v8742, %v8776
  %v8809 = vadd.f32 %v8743, %v8777
  %v8810 = vadd.f32 %v8744, %v8778
  %v8811 = vadd.f32 %v8745, %v8779
  %v8812 = vadd.f32 %v8746, %v8780
  %v8813 = vadd.f32 %v8747, %v8781
  %v8814 = vadd.f32 %v8748, %v8782
  %v8815 = vadd.f32 %v8749, %v8783
  %v8816 = vadd.f32 %v8750, %v8784
  %v8817 = vadd.f32 %v8751, %v8785
  %v8818 = vadd.f32 %v8752, %v8786
  %v8819 = vadd.f32 %v8753, %v8787
  %v8820 = vadd.f32 %v8754, %v8788
  %v8821 = vld [vmem:[#allocation2 + $0x288] sm:$0xff]
  %v8822 = vld [vmem:[#allocation2 + $0x290] sm:$0xff]
  %v8823 = vmul.f32 %v8503, %v4650
  %v8824 = vmul.f32 %v8504, %v4650
  %v8825 = vmul.f32 %v8505, %v4650
  %v8826 = vmul.f32 %v8506, %v4650
  %v8827 = vmul.f32 %v8507, %v4650
  %v8828 = vmul.f32 %v8508, %v4650
  %v8829 = vmul.f32 %v8509, %v4650
  %v8830 = vmul.f32 %v8510, %v4650
  %v8831 = vmul.f32 %v8511, %v4650
  %v8832 = vmul.f32 %v8512, %v4650
  %v8833 = vmul.f32 %v8513, %v4650
  %v8834 = vmul.f32 %v8514, %v4650
  %v8835 = vmul.f32 %v8515, %v4650
  %v8836 = vmul.f32 %v8516, %v4650
  %v8837 = vmul.f32 %v8517, %v4650
  %v8838 = vmul.f32 %v8518, %v4650
  %v8839 = vmul.f32 %v8519, %v4650
  %v8840 = vmul.f32 %v8520, %v4650
  %v8841 = vmul.f32 %v8521, %v4650
  %v8842 = vmul.f32 %v8522, %v4650
  %v8843 = vmul.f32 %v8523, %v4650
  %v8844 = vmul.f32 %v8524, %v4650
  %v8845 = vmul.f32 %v8557, %v4650
  %v8846 = vmul.f32 %v8558, %v4650
  %v8847 = vmul.f32 %v8623, %v4650
  %v8848 = vmul.f32 %v8624, %v4650
  %v8849 = vmul.f32 %v8689, %v4650
  %v8850 = vmul.f32 %v8690, %v4650
  %v8851 = vmul.f32 %v8755, %v4650
  %v8852 = vmul.f32 %v8756, %v4650
  %v8853 = vmul.f32 %v8821, %v4650
  %v8854 = vmul.f32 %v8822, %v4650
  %v8855 = vadd.f32 %v8789, %v8823
  %v8856 = vadd.f32 %v8790, %v8824
  %v8857 = vadd.f32 %v8791, %v8825
  %v8858 = vadd.f32 %v8792, %v8826
  %v8859 = vadd.f32 %v8793, %v8827
  %v8860 = vadd.f32 %v8794, %v8828
  %v8861 = vadd.f32 %v8795, %v8829
  %v8862 = vadd.f32 %v8796, %v8830
  %v8863 = vadd.f32 %v8797, %v8831
  %v8864 = vadd.f32 %v8798, %v8832
  %v8865 = vadd.f32 %v8799, %v8833
  %v8866 = vadd.f32 %v8800, %v8834
  %v8867 = vadd.f32 %v8801, %v8835
  %v8868 = vadd.f32 %v8802, %v8836
  %v8869 = vadd.f32 %v8803, %v8837
  %v8870 = vadd.f32 %v8804, %v8838
  %v8871 = vadd.f32 %v8805, %v8839
  %v8872 = vadd.f32 %v8806, %v8840
  %v8873 = vadd.f32 %v8807, %v8841
  %v8874 = vadd.f32 %v8808, %v8842
  %v8875 = vadd.f32 %v8809, %v8843
  %v8876 = vadd.f32 %v8810, %v8844
  %v8877 = vadd.f32 %v8811, %v8845
  %v8878 = vadd.f32 %v8812, %v8846
  %v8879 = vadd.f32 %v8813, %v8847
  %v8880 = vadd.f32 %v8814, %v8848
  %v8881 = vadd.f32 %v8815, %v8849
  %v8882 = vadd.f32 %v8816, %v8850
  %v8883 = vadd.f32 %v8817, %v8851
  %v8884 = vadd.f32 %v8818, %v8852
  %v8885 = vadd.f32 %v8819, %v8853
  %v8886 = vadd.f32 %v8820, %v8854
  %v8887 = vld [vmem:[#allocation2 + $0x298] sm:$0xff]
  %v8888 = vld [vmem:[#allocation2 + $0x2a0] sm:$0xff]
  %v8889 = vmul.f32 %v8505, %v4720
  %v8890 = vmul.f32 %v8506, %v4720
  %v8891 = vmul.f32 %v8507, %v4720
  %v8892 = vmul.f32 %v8508, %v4720
  %v8893 = vmul.f32 %v8509, %v4720
  %v8894 = vmul.f32 %v8510, %v4720
  %v8895 = vmul.f32 %v8511, %v4720
  %v8896 = vmul.f32 %v8512, %v4720
  %v8897 = vmul.f32 %v8513, %v4720
  %v8898 = vmul.f32 %v8514, %v4720
  %v8899 = vmul.f32 %v8515, %v4720
  %v8900 = vmul.f32 %v8516, %v4720
  %v8901 = vmul.f32 %v8517, %v4720
  %v8902 = vmul.f32 %v8518, %v4720
  %v8903 = vmul.f32 %v8519, %v4720
  %v8904 = vmul.f32 %v8520, %v4720
  %v8905 = vmul.f32 %v8521, %v4720
  %v8906 = vmul.f32 %v8522, %v4720
  %v8907 = vmul.f32 %v8523, %v4720
  %v8908 = vmul.f32 %v8524, %v4720
  %v8909 = vmul.f32 %v8557, %v4720
  %v8910 = vmul.f32 %v8558, %v4720
  %v8911 = vmul.f32 %v8623, %v4720
  %v8912 = vmul.f32 %v8624, %v4720
  %v8913 = vmul.f32 %v8689, %v4720
  %v8914 = vmul.f32 %v8690, %v4720
  %v8915 = vmul.f32 %v8755, %v4720
  %v8916 = vmul.f32 %v8756, %v4720
  %v8917 = vmul.f32 %v8821, %v4720
  %v8918 = vmul.f32 %v8822, %v4720
  %v8919 = vmul.f32 %v8887, %v4720
  %v8920 = vmul.f32 %v8888, %v4720
  %v8921 = vadd.f32 %v8855, %v8889
  %v8922 = vadd.f32 %v8856, %v8890
  %v8923 = vadd.f32 %v8857, %v8891
  %v8924 = vadd.f32 %v8858, %v8892
  %v8925 = vadd.f32 %v8859, %v8893
  %v8926 = vadd.f32 %v8860, %v8894
  %v8927 = vadd.f32 %v8861, %v8895
  %v8928 = vadd.f32 %v8862, %v8896
  %v8929 = vadd.f32 %v8863, %v8897
  %v8930 = vadd.f32 %v8864, %v8898
  %v8931 = vadd.f32 %v8865, %v8899
  %v8932 = vadd.f32 %v8866, %v8900
  %v8933 = vadd.f32 %v8867, %v8901
  %v8934 = vadd.f32 %v8868, %v8902
  %v8935 = vadd.f32 %v8869, %v8903
  %v8936 = vadd.f32 %v8870, %v8904
  %v8937 = vadd.f32 %v8871, %v8905
  %v8938 = vadd.f32 %v8872, %v8906
  %v8939 = vadd.f32 %v8873, %v8907
  %v8940 = vadd.f32 %v8874, %v8908
  %v8941 = vadd.f32 %v8875, %v8909
  %v8942 = vadd.f32 %v8876, %v8910
  %v8943 = vadd.f32 %v8877, %v8911
  %v8944 = vadd.f32 %v8878, %v8912
  %v8945 = vadd.f32 %v8879, %v8913
  %v8946 = vadd.f32 %v8880, %v8914
  %v8947 = vadd.f32 %v8881, %v8915
  %v8948 = vadd.f32 %v8882, %v8916
  %v8949 = vadd.f32 %v8883, %v8917
  %v8950 = vadd.f32 %v8884, %v8918
  %v8951 = vadd.f32 %v8885, %v8919
  %v8952 = vadd.f32 %v8886, %v8920
  %v8953 = vadd.f32 %v8461, %v8921
  %v8954 = vadd.f32 %v8462, %v8922
  %v8955 = vadd.f32 %v8463, %v8923
  %v8956 = vadd.f32 %v8464, %v8924
  %v8957 = vadd.f32 %v8465, %v8925
  %v8958 = vadd.f32 %v8466, %v8926
  %v8959 = vadd.f32 %v8467, %v8927
  %v8960 = vadd.f32 %v8468, %v8928
  %v8961 = vadd.f32 %v8469, %v8929
  %v8962 = vadd.f32 %v8470, %v8930
  %v8963 = vadd.f32 %v8471, %v8931
  %v8964 = vadd.f32 %v8472, %v8932
  %v8965 = vadd.f32 %v8473, %v8933
  %v8966 = vadd.f32 %v8474, %v8934
  %v8967 = vadd.f32 %v8475, %v8935
  %v8968 = vadd.f32 %v8476, %v8936
  %v8969 = vadd.f32 %v8477, %v8937
  %v8970 = vadd.f32 %v8478, %v8938
  %v8971 = vadd.f32 %v8479, %v8939
  %v8972 = vadd.f32 %v8480, %v8940
  %v8973 = vadd.f32 %v8481, %v8941
  %v8974 = vadd.f32 %v8482, %v8942
  %v8975 = vadd.f32 %v8483, %v8943
  %v8976 = vadd.f32 %v8484, %v8944
  %v8977 = vadd.f32 %v8485, %v8945
  %v8978 = vadd.f32 %v8486, %v8946
  %v8979 = vadd.f32 %v8487, %v8947
  %v8980 = vadd.f32 %v8488, %v8948
  %v8981 = vadd.f32 %v8489, %v8949
  %v8982 = vadd.f32 %v8490, %v8950
  %v8983 = vadd.f32 %v8491, %v8951
  %v8984 = vadd.f32 %v8492, %v8952
  %v8985 = vld [vmem:[#allocation2 + $0x149] sm:$0xff]
  %v8986 = vld [vmem:[#allocation2 + $0x151] sm:$0xff]
  %v8987 = vld [vmem:[#allocation2 + $0x159] sm:$0xff]
  %v8988 = vld [vmem:[#allocation2 + $0x161] sm:$0xff]
  %v8989 = vld [vmem:[#allocation2 + $0x169] sm:$0xff]
  %v8990 = vld [vmem:[#allocation2 + $0x171] sm:$0xff]
  %v8991 = vld [vmem:[#allocation2 + $0x179] sm:$0xff]
  %v8992 = vld [vmem:[#allocation2 + $0x181] sm:$0xff]
  %v8993 = vld [vmem:[#allocation2 + $0x189] sm:$0xff]
  %v8994 = vld [vmem:[#allocation2 + $0x191] sm:$0xff]
  %v8995 = vld [vmem:[#allocation2 + $0x199] sm:$0xff]
  %v8996 = vld [vmem:[#allocation2 + $0x1a1] sm:$0xff]
  %v8997 = vld [vmem:[#allocation2 + $0x1a9] sm:$0xff]
  %v8998 = vld [vmem:[#allocation2 + $0x1b1] sm:$0xff]
  %v8999 = vld [vmem:[#allocation2 + $0x1b9] sm:$0xff]
  %v9000 = vld [vmem:[#allocation2 + $0x1c1] sm:$0xff]
  %v9001 = vld [vmem:[#allocation2 + $0x1c9] sm:$0xff]
  %v9002 = vld [vmem:[#allocation2 + $0x1d1] sm:$0xff]
  %v9003 = vld [vmem:[#allocation2 + $0x1d9] sm:$0xff]
  %v9004 = vld [vmem:[#allocation2 + $0x1e1] sm:$0xff]
  %v9005 = vld [vmem:[#allocation2 + $0x1e9] sm:$0xff]
  %v9006 = vld [vmem:[#allocation2 + $0x1f1] sm:$0xff]
  %v9007 = vld [vmem:[#allocation2 + $0x1f9] sm:$0xff]
  %v9008 = vld [vmem:[#allocation2 + $0x201] sm:$0xff]
  %v9009 = vld [vmem:[#allocation2 + $0x209] sm:$0xff]
  %v9010 = vld [vmem:[#allocation2 + $0x211] sm:$0xff]
  %v9011 = vld [vmem:[#allocation2 + $0x219] sm:$0xff]
  %v9012 = vld [vmem:[#allocation2 + $0x221] sm:$0xff]
  %v9013 = vld [vmem:[#allocation2 + $0x229] sm:$0xff]
  %v9014 = vld [vmem:[#allocation2 + $0x231] sm:$0xff]
  %v9015 = vld [vmem:[#allocation2 + $0x239] sm:$0xff]
  %v9016 = vld [vmem:[#allocation2 + $0x241] sm:$0xff]
  %v9017 = vmul.f32 %v8985, %v4852
  %v9018 = vmul.f32 %v8986, %v4852
  %v9019 = vmul.f32 %v8987, %v4852
  %v9020 = vmul.f32 %v8988, %v4852
  %v9021 = vmul.f32 %v8989, %v4852
  %v9022 = vmul.f32 %v8990, %v4852
  %v9023 = vmul.f32 %v8991, %v4852
  %v9024 = vmul.f32 %v8992, %v4852
  %v9025 = vmul.f32 %v8993, %v4852
  %v9026 = vmul.f32 %v8994, %v4852
  %v9027 = vmul.f32 %v8995, %v4852
  %v9028 = vmul.f32 %v8996, %v4852
  %v9029 = vmul.f32 %v8997, %v4852
  %v9030 = vmul.f32 %v8998, %v4852
  %v9031 = vmul.f32 %v8999, %v4852
  %v9032 = vmul.f32 %v9000, %v4852
  %v9033 = vmul.f32 %v9001, %v4852
  %v9034 = vmul.f32 %v9002, %v4852
  %v9035 = vmul.f32 %v9003, %v4852
  %v9036 = vmul.f32 %v9004, %v4852
  %v9037 = vmul.f32 %v9005, %v4852
  %v9038 = vmul.f32 %v9006, %v4852
  %v9039 = vmul.f32 %v9007, %v4852
  %v9040 = vmul.f32 %v9008, %v4852
  %v9041 = vmul.f32 %v9009, %v4852
  %v9042 = vmul.f32 %v9010, %v4852
  %v9043 = vmul.f32 %v9011, %v4852
  %v9044 = vmul.f32 %v9012, %v4852
  %v9045 = vmul.f32 %v9013, %v4852
  %v9046 = vmul.f32 %v9014, %v4852
  %v9047 = vmul.f32 %v9015, %v4852
  %v9048 = vmul.f32 %v9016, %v4852
  %v9049 = vld [vmem:[#allocation2 + $0x249] sm:$0xff]
  %v9050 = vld [vmem:[#allocation2 + $0x251] sm:$0xff]
  %v9051 = vmul.f32 %v8987, %v4890
  %v9052 = vmul.f32 %v8988, %v4890
  %v9053 = vmul.f32 %v8989, %v4890
  %v9054 = vmul.f32 %v8990, %v4890
  %v9055 = vmul.f32 %v8991, %v4890
  %v9056 = vmul.f32 %v8992, %v4890
  %v9057 = vmul.f32 %v8993, %v4890
  %v9058 = vmul.f32 %v8994, %v4890
  %v9059 = vmul.f32 %v8995, %v4890
  %v9060 = vmul.f32 %v8996, %v4890
  %v9061 = vmul.f32 %v8997, %v4890
  %v9062 = vmul.f32 %v8998, %v4890
  %v9063 = vmul.f32 %v8999, %v4890
  %v9064 = vmul.f32 %v9000, %v4890
  %v9065 = vmul.f32 %v9001, %v4890
  %v9066 = vmul.f32 %v9002, %v4890
  %v9067 = vmul.f32 %v9003, %v4890
  %v9068 = vmul.f32 %v9004, %v4890
  %v9069 = vmul.f32 %v9005, %v4890
  %v9070 = vmul.f32 %v9006, %v4890
  %v9071 = vmul.f32 %v9007, %v4890
  %v9072 = vmul.f32 %v9008, %v4890
  %v9073 = vmul.f32 %v9009, %v4890
  %v9074 = vmul.f32 %v9010, %v4890
  %v9075 = vmul.f32 %v9011, %v4890
  %v9076 = vmul.f32 %v9012, %v4890
  %v9077 = vmul.f32 %v9013, %v4890
  %v9078 = vmul.f32 %v9014, %v4890
  %v9079 = vmul.f32 %v9015, %v4890
  %v9080 = vmul.f32 %v9016, %v4890
  %v9081 = vmul.f32 %v9049, %v4890
  %v9082 = vmul.f32 %v9050, %v4890
  %v9083 = vadd.f32 %v9017, %v9051
  %v9084 = vadd.f32 %v9018, %v9052
  %v9085 = vadd.f32 %v9019, %v9053
  %v9086 = vadd.f32 %v9020, %v9054
  %v9087 = vadd.f32 %v9021, %v9055
  %v9088 = vadd.f32 %v9022, %v9056
  %v9089 = vadd.f32 %v9023, %v9057
  %v9090 = vadd.f32 %v9024, %v9058
  %v9091 = vadd.f32 %v9025, %v9059
  %v9092 = vadd.f32 %v9026, %v9060
  %v9093 = vadd.f32 %v9027, %v9061
  %v9094 = vadd.f32 %v9028, %v9062
  %v9095 = vadd.f32 %v9029, %v9063
  %v9096 = vadd.f32 %v9030, %v9064
  %v9097 = vadd.f32 %v9031, %v9065
  %v9098 = vadd.f32 %v9032, %v9066
  %v9099 = vadd.f32 %v9033, %v9067
  %v9100 = vadd.f32 %v9034, %v9068
  %v9101 = vadd.f32 %v9035, %v9069
  %v9102 = vadd.f32 %v9036, %v9070
  %v9103 = vadd.f32 %v9037, %v9071
  %v9104 = vadd.f32 %v9038, %v9072
  %v9105 = vadd.f32 %v9039, %v9073
  %v9106 = vadd.f32 %v9040, %v9074
  %v9107 = vadd.f32 %v9041, %v9075
  %v9108 = vadd.f32 %v9042, %v9076
  %v9109 = vadd.f32 %v9043, %v9077
  %v9110 = vadd.f32 %v9044, %v9078
  %v9111 = vadd.f32 %v9045, %v9079
  %v9112 = vadd.f32 %v9046, %v9080
  %v9113 = vadd.f32 %v9047, %v9081
  %v9114 = vadd.f32 %v9048, %v9082
  %v9115 = vld [vmem:[#allocation2 + $0x259] sm:$0xff]
  %v9116 = vld [vmem:[#allocation2 + $0x261] sm:$0xff]
  %v9117 = vmul.f32 %v8989, %v4960
  %v9118 = vmul.f32 %v8990, %v4960
  %v9119 = vmul.f32 %v8991, %v4960
  %v9120 = vmul.f32 %v8992, %v4960
  %v9121 = vmul.f32 %v8993, %v4960
  %v9122 = vmul.f32 %v8994, %v4960
  %v9123 = vmul.f32 %v8995, %v4960
  %v9124 = vmul.f32 %v8996, %v4960
  %v9125 = vmul.f32 %v8997, %v4960
  %v9126 = vmul.f32 %v8998, %v4960
  %v9127 = vmul.f32 %v8999, %v4960
  %v9128 = vmul.f32 %v9000, %v4960
  %v9129 = vmul.f32 %v9001, %v4960
  %v9130 = vmul.f32 %v9002, %v4960
  %v9131 = vmul.f32 %v9003, %v4960
  %v9132 = vmul.f32 %v9004, %v4960
  %v9133 = vmul.f32 %v9005, %v4960
  %v9134 = vmul.f32 %v9006, %v4960
  %v9135 = vmul.f32 %v9007, %v4960
  %v9136 = vmul.f32 %v9008, %v4960
  %v9137 = vmul.f32 %v9009, %v4960
  %v9138 = vmul.f32 %v9010, %v4960
  %v9139 = vmul.f32 %v9011, %v4960
  %v9140 = vmul.f32 %v9012, %v4960
  %v9141 = vmul.f32 %v9013, %v4960
  %v9142 = vmul.f32 %v9014, %v4960
  %v9143 = vmul.f32 %v9015, %v4960
  %v9144 = vmul.f32 %v9016, %v4960
  %v9145 = vmul.f32 %v9049, %v4960
  %v9146 = vmul.f32 %v9050, %v4960
  %v9147 = vmul.f32 %v9115, %v4960
  %v9148 = vmul.f32 %v9116, %v4960
  %v9149 = vadd.f32 %v9083, %v9117
  %v9150 = vadd.f32 %v9084, %v9118
  %v9151 = vadd.f32 %v9085, %v9119
  %v9152 = vadd.f32 %v9086, %v9120
  %v9153 = vadd.f32 %v9087, %v9121
  %v9154 = vadd.f32 %v9088, %v9122
  %v9155 = vadd.f32 %v9089, %v9123
  %v9156 = vadd.f32 %v9090, %v9124
  %v9157 = vadd.f32 %v9091, %v9125
  %v9158 = vadd.f32 %v9092, %v9126
  %v9159 = vadd.f32 %v9093, %v9127
  %v9160 = vadd.f32 %v9094, %v9128
  %v9161 = vadd.f32 %v9095, %v9129
  %v9162 = vadd.f32 %v9096, %v9130
  %v9163 = vadd.f32 %v9097, %v9131
  %v9164 = vadd.f32 %v9098, %v9132
  %v9165 = vadd.f32 %v9099, %v9133
  %v9166 = vadd.f32 %v9100, %v9134
  %v9167 = vadd.f32 %v9101, %v9135
  %v9168 = vadd.f32 %v9102, %v9136
  %v9169 = vadd.f32 %v9103, %v9137
  %v9170 = vadd.f32 %v9104, %v9138
  %v9171 = vadd.f32 %v9105, %v9139
  %v9172 = vadd.f32 %v9106, %v9140
  %v9173 = vadd.f32 %v9107, %v9141
  %v9174 = vadd.f32 %v9108, %v9142
  %v9175 = vadd.f32 %v9109, %v9143
  %v9176 = vadd.f32 %v9110, %v9144
  %v9177 = vadd.f32 %v9111, %v9145
  %v9178 = vadd.f32 %v9112, %v9146
  %v9179 = vadd.f32 %v9113, %v9147
  %v9180 = vadd.f32 %v9114, %v9148
  %v9181 = vld [vmem:[#allocation2 + $0x269] sm:$0xff]
  %v9182 = vld [vmem:[#allocation2 + $0x271] sm:$0xff]
  %v9183 = vmul.f32 %v8991, %v5030
  %v9184 = vmul.f32 %v8992, %v5030
  %v9185 = vmul.f32 %v8993, %v5030
  %v9186 = vmul.f32 %v8994, %v5030
  %v9187 = vmul.f32 %v8995, %v5030
  %v9188 = vmul.f32 %v8996, %v5030
  %v9189 = vmul.f32 %v8997, %v5030
  %v9190 = vmul.f32 %v8998, %v5030
  %v9191 = vmul.f32 %v8999, %v5030
  %v9192 = vmul.f32 %v9000, %v5030
  %v9193 = vmul.f32 %v9001, %v5030
  %v9194 = vmul.f32 %v9002, %v5030
  %v9195 = vmul.f32 %v9003, %v5030
  %v9196 = vmul.f32 %v9004, %v5030
  %v9197 = vmul.f32 %v9005, %v5030
  %v9198 = vmul.f32 %v9006, %v5030
  %v9199 = vmul.f32 %v9007, %v5030
  %v9200 = vmul.f32 %v9008, %v5030
  %v9201 = vmul.f32 %v9009, %v5030
  %v9202 = vmul.f32 %v9010, %v5030
  %v9203 = vmul.f32 %v9011, %v5030
  %v9204 = vmul.f32 %v9012, %v5030
  %v9205 = vmul.f32 %v9013, %v5030
  %v9206 = vmul.f32 %v9014, %v5030
  %v9207 = vmul.f32 %v9015, %v5030
  %v9208 = vmul.f32 %v9016, %v5030
  %v9209 = vmul.f32 %v9049, %v5030
  %v9210 = vmul.f32 %v9050, %v5030
  %v9211 = vmul.f32 %v9115, %v5030
  %v9212 = vmul.f32 %v9116, %v5030
  %v9213 = vmul.f32 %v9181, %v5030
  %v9214 = vmul.f32 %v9182, %v5030
  %v9215 = vadd.f32 %v9149, %v9183
  %v9216 = vadd.f32 %v9150, %v9184
  %v9217 = vadd.f32 %v9151, %v9185
  %v9218 = vadd.f32 %v9152, %v9186
  %v9219 = vadd.f32 %v9153, %v9187
  %v9220 = vadd.f32 %v9154, %v9188
  %v9221 = vadd.f32 %v9155, %v9189
  %v9222 = vadd.f32 %v9156, %v9190
  %v9223 = vadd.f32 %v9157, %v9191
  %v9224 = vadd.f32 %v9158, %v9192
  %v9225 = vadd.f32 %v9159, %v9193
  %v9226 = vadd.f32 %v9160, %v9194
  %v9227 = vadd.f32 %v9161, %v9195
  %v9228 = vadd.f32 %v9162, %v9196
  %v9229 = vadd.f32 %v9163, %v9197
  %v9230 = vadd.f32 %v9164, %v9198
  %v9231 = vadd.f32 %v9165, %v9199
  %v9232 = vadd.f32 %v9166, %v9200
  %v9233 = vadd.f32 %v9167, %v9201
  %v9234 = vadd.f32 %v9168, %v9202
  %v9235 = vadd.f32 %v9169, %v9203
  %v9236 = vadd.f32 %v9170, %v9204
  %v9237 = vadd.f32 %v9171, %v9205
  %v9238 = vadd.f32 %v9172, %v9206
  %v9239 = vadd.f32 %v9173, %v9207
  %v9240 = vadd.f32 %v9174, %v9208
  %v9241 = vadd.f32 %v9175, %v9209
  %v9242 = vadd.f32 %v9176, %v9210
  %v9243 = vadd.f32 %v9177, %v9211
  %v9244 = vadd.f32 %v9178, %v9212
  %v9245 = vadd.f32 %v9179, %v9213
  %v9246 = vadd.f32 %v9180, %v9214
  %v9247 = vld [vmem:[#allocation2 + $0x279] sm:$0xff]
  %v9248 = vld [vmem:[#allocation2 + $0x281] sm:$0xff]
  %v9249 = vmul.f32 %v8993, %v5100
  %v9250 = vmul.f32 %v8994, %v5100
  %v9251 = vmul.f32 %v8995, %v5100
  %v9252 = vmul.f32 %v8996, %v5100
  %v9253 = vmul.f32 %v8997, %v5100
  %v9254 = vmul.f32 %v8998, %v5100
  %v9255 = vmul.f32 %v8999, %v5100
  %v9256 = vmul.f32 %v9000, %v5100
  %v9257 = vmul.f32 %v9001, %v5100
  %v9258 = vmul.f32 %v9002, %v5100
  %v9259 = vmul.f32 %v9003, %v5100
  %v9260 = vmul.f32 %v9004, %v5100
  %v9261 = vmul.f32 %v9005, %v5100
  %v9262 = vmul.f32 %v9006, %v5100
  %v9263 = vmul.f32 %v9007, %v5100
  %v9264 = vmul.f32 %v9008, %v5100
  %v9265 = vmul.f32 %v9009, %v5100
  %v9266 = vmul.f32 %v9010, %v5100
  %v9267 = vmul.f32 %v9011, %v5100
  %v9268 = vmul.f32 %v9012, %v5100
  %v9269 = vmul.f32 %v9013, %v5100
  %v9270 = vmul.f32 %v9014, %v5100
  %v9271 = vmul.f32 %v9015, %v5100
  %v9272 = vmul.f32 %v9016, %v5100
  %v9273 = vmul.f32 %v9049, %v5100
  %v9274 = vmul.f32 %v9050, %v5100
  %v9275 = vmul.f32 %v9115, %v5100
  %v9276 = vmul.f32 %v9116, %v5100
  %v9277 = vmul.f32 %v9181, %v5100
  %v9278 = vmul.f32 %v9182, %v5100
  %v9279 = vmul.f32 %v9247, %v5100
  %v9280 = vmul.f32 %v9248, %v5100
  %v9281 = vadd.f32 %v9215, %v9249
  %v9282 = vadd.f32 %v9216, %v9250
  %v9283 = vadd.f32 %v9217, %v9251
  %v9284 = vadd.f32 %v9218, %v9252
  %v9285 = vadd.f32 %v9219, %v9253
  %v9286 = vadd.f32 %v9220, %v9254
  %v9287 = vadd.f32 %v9221, %v9255
  %v9288 = vadd.f32 %v9222, %v9256
  %v9289 = vadd.f32 %v9223, %v9257
  %v9290 = vadd.f32 %v9224, %v9258
  %v9291 = vadd.f32 %v9225, %v9259
  %v9292 = vadd.f32 %v9226, %v9260
  %v9293 = vadd.f32 %v9227, %v9261
  %v9294 = vadd.f32 %v9228, %v9262
  %v9295 = vadd.f32 %v9229, %v9263
  %v9296 = vadd.f32 %v9230, %v9264
  %v9297 = vadd.f32 %v9231, %v9265
  %v9298 = vadd.f32 %v9232, %v9266
  %v9299 = vadd.f32 %v9233, %v9267
  %v9300 = vadd.f32 %v9234, %v9268
  %v9301 = vadd.f32 %v9235, %v9269
  %v9302 = vadd.f32 %v9236, %v9270
  %v9303 = vadd.f32 %v9237, %v9271
  %v9304 = vadd.f32 %v9238, %v9272
  %v9305 = vadd.f32 %v9239, %v9273
  %v9306 = vadd.f32 %v9240, %v9274
  %v9307 = vadd.f32 %v9241, %v9275
  %v9308 = vadd.f32 %v9242, %v9276
  %v9309 = vadd.f32 %v9243, %v9277
  %v9310 = vadd.f32 %v9244, %v9278
  %v9311 = vadd.f32 %v9245, %v9279
  %v9312 = vadd.f32 %v9246, %v9280
  %v9313 = vld [vmem:[#allocation2 + $0x289] sm:$0xff]
  %v9314 = vld [vmem:[#allocation2 + $0x291] sm:$0xff]
  %v9315 = vmul.f32 %v8995, %v5170
  %v9316 = vmul.f32 %v8996, %v5170
  %v9317 = vmul.f32 %v8997, %v5170
  %v9318 = vmul.f32 %v8998, %v5170
  %v9319 = vmul.f32 %v8999, %v5170
  %v9320 = vmul.f32 %v9000, %v5170
  %v9321 = vmul.f32 %v9001, %v5170
  %v9322 = vmul.f32 %v9002, %v5170
  %v9323 = vmul.f32 %v9003, %v5170
  %v9324 = vmul.f32 %v9004, %v5170
  %v9325 = vmul.f32 %v9005, %v5170
  %v9326 = vmul.f32 %v9006, %v5170
  %v9327 = vmul.f32 %v9007, %v5170
  %v9328 = vmul.f32 %v9008, %v5170
  %v9329 = vmul.f32 %v9009, %v5170
  %v9330 = vmul.f32 %v9010, %v5170
  %v9331 = vmul.f32 %v9011, %v5170
  %v9332 = vmul.f32 %v9012, %v5170
  %v9333 = vmul.f32 %v9013, %v5170
  %v9334 = vmul.f32 %v9014, %v5170
  %v9335 = vmul.f32 %v9015, %v5170
  %v9336 = vmul.f32 %v9016, %v5170
  %v9337 = vmul.f32 %v9049, %v5170
  %v9338 = vmul.f32 %v9050, %v5170
  %v9339 = vmul.f32 %v9115, %v5170
  %v9340 = vmul.f32 %v9116, %v5170
  %v9341 = vmul.f32 %v9181, %v5170
  %v9342 = vmul.f32 %v9182, %v5170
  %v9343 = vmul.f32 %v9247, %v5170
  %v9344 = vmul.f32 %v9248, %v5170
  %v9345 = vmul.f32 %v9313, %v5170
  %v9346 = vmul.f32 %v9314, %v5170
  %v9347 = vadd.f32 %v9281, %v9315
  %v9348 = vadd.f32 %v9282, %v9316
  %v9349 = vadd.f32 %v9283, %v9317
  %v9350 = vadd.f32 %v9284, %v9318
  %v9351 = vadd.f32 %v9285, %v9319
  %v9352 = vadd.f32 %v9286, %v9320
  %v9353 = vadd.f32 %v9287, %v9321
  %v9354 = vadd.f32 %v9288, %v9322
  %v9355 = vadd.f32 %v9289, %v9323
  %v9356 = vadd.f32 %v9290, %v9324
  %v9357 = vadd.f32 %v9291, %v9325
  %v9358 = vadd.f32 %v9292, %v9326
  %v9359 = vadd.f32 %v9293, %v9327
  %v9360 = vadd.f32 %v9294, %v9328
  %v9361 = vadd.f32 %v9295, %v9329
  %v9362 = vadd.f32 %v9296, %v9330
  %v9363 = vadd.f32 %v9297, %v9331
  %v9364 = vadd.f32 %v9298, %v9332
  %v9365 = vadd.f32 %v9299, %v9333
  %v9366 = vadd.f32 %v9300, %v9334
  %v9367 = vadd.f32 %v9301, %v9335
  %v9368 = vadd.f32 %v9302, %v9336
  %v9369 = vadd.f32 %v9303, %v9337
  %v9370 = vadd.f32 %v9304, %v9338
  %v9371 = vadd.f32 %v9305, %v9339
  %v9372 = vadd.f32 %v9306, %v9340
  %v9373 = vadd.f32 %v9307, %v9341
  %v9374 = vadd.f32 %v9308, %v9342
  %v9375 = vadd.f32 %v9309, %v9343
  %v9376 = vadd.f32 %v9310, %v9344
  %v9377 = vadd.f32 %v9311, %v9345
  %v9378 = vadd.f32 %v9312, %v9346
  %v9379 = vld [vmem:[#allocation2 + $0x299] sm:$0xff]
  %v9380 = vld [vmem:[#allocation2 + $0x2a1] sm:$0xff]
  %v9381 = vmul.f32 %v8997, %v5240
  %v9382 = vmul.f32 %v8998, %v5240
  %v9383 = vmul.f32 %v8999, %v5240
  %v9384 = vmul.f32 %v9000, %v5240
  %v9385 = vmul.f32 %v9001, %v5240
  %v9386 = vmul.f32 %v9002, %v5240
  %v9387 = vmul.f32 %v9003, %v5240
  %v9388 = vmul.f32 %v9004, %v5240
  %v9389 = vmul.f32 %v9005, %v5240
  %v9390 = vmul.f32 %v9006, %v5240
  %v9391 = vmul.f32 %v9007, %v5240
  %v9392 = vmul.f32 %v9008, %v5240
  %v9393 = vmul.f32 %v9009, %v5240
  %v9394 = vmul.f32 %v9010, %v5240
  %v9395 = vmul.f32 %v9011, %v5240
  %v9396 = vmul.f32 %v9012, %v5240
  %v9397 = vmul.f32 %v9013, %v5240
  %v9398 = vmul.f32 %v9014, %v5240
  %v9399 = vmul.f32 %v9015, %v5240
  %v9400 = vmul.f32 %v9016, %v5240
  %v9401 = vmul.f32 %v9049, %v5240
  %v9402 = vmul.f32 %v9050, %v5240
  %v9403 = vmul.f32 %v9115, %v5240
  %v9404 = vmul.f32 %v9116, %v5240
  %v9405 = vmul.f32 %v9181, %v5240
  %v9406 = vmul.f32 %v9182, %v5240
  %v9407 = vmul.f32 %v9247, %v5240
  %v9408 = vmul.f32 %v9248, %v5240
  %v9409 = vmul.f32 %v9313, %v5240
  %v9410 = vmul.f32 %v9314, %v5240
  %v9411 = vmul.f32 %v9379, %v5240
  %v9412 = vmul.f32 %v9380, %v5240
  %v9413 = vadd.f32 %v9347, %v9381
  %v9414 = vadd.f32 %v9348, %v9382
  %v9415 = vadd.f32 %v9349, %v9383
  %v9416 = vadd.f32 %v9350, %v9384
  %v9417 = vadd.f32 %v9351, %v9385
  %v9418 = vadd.f32 %v9352, %v9386
  %v9419 = vadd.f32 %v9353, %v9387
  %v9420 = vadd.f32 %v9354, %v9388
  %v9421 = vadd.f32 %v9355, %v9389
  %v9422 = vadd.f32 %v9356, %v9390
  %v9423 = vadd.f32 %v9357, %v9391
  %v9424 = vadd.f32 %v9358, %v9392
  %v9425 = vadd.f32 %v9359, %v9393
  %v9426 = vadd.f32 %v9360, %v9394
  %v9427 = vadd.f32 %v9361, %v9395
  %v9428 = vadd.f32 %v9362, %v9396
  %v9429 = vadd.f32 %v9363, %v9397
  %v9430 = vadd.f32 %v9364, %v9398
  %v9431 = vadd.f32 %v9365, %v9399
  %v9432 = vadd.f32 %v9366, %v9400
  %v9433 = vadd.f32 %v9367, %v9401
  %v9434 = vadd.f32 %v9368, %v9402
  %v9435 = vadd.f32 %v9369, %v9403
  %v9436 = vadd.f32 %v9370, %v9404
  %v9437 = vadd.f32 %v9371, %v9405
  %v9438 = vadd.f32 %v9372, %v9406
  %v9439 = vadd.f32 %v9373, %v9407
  %v9440 = vadd.f32 %v9374, %v9408
  %v9441 = vadd.f32 %v9375, %v9409
  %v9442 = vadd.f32 %v9376, %v9410
  %v9443 = vadd.f32 %v9377, %v9411
  %v9444 = vadd.f32 %v9378, %v9412
  %v9445 = vmul.f32 %v9413, %v5308
  %v9446 = vmul.f32 %v9414, %v5313
  %v9447 = vmul.f32 %v9415, %v5318
  %v9448 = vmul.f32 %v9416, %v5323
  %v9449 = vmul.f32 %v9417, %v5328
  %v9450 = vmul.f32 %v9418, %v5333
  %v9451 = vmul.f32 %v9419, %v5338
  %v9452 = vmul.f32 %v9420, %v5343
  %v9453 = vmul.f32 %v9421, %v5348
  %v9454 = vmul.f32 %v9422, %v5353
  %v9455 = vmul.f32 %v9423, %v5358
  %v9456 = vmul.f32 %v9424, %v5363
  %v9457 = vmul.f32 %v9425, %v5368
  %v9458 = vmul.f32 %v9426, %v5373
  %v9459 = vmul.f32 %v9427, %v5378
  %v9460 = vmul.f32 %v9428, %v5383
  %v9461 = vmul.f32 %v9429, %v5388
  %v9462 = vmul.f32 %v9430, %v5393
  %v9463 = vmul.f32 %v9431, %v5398
  %v9464 = vmul.f32 %v9432, %v5403
  %v9465 = vmul.f32 %v9433, %v5408
  %v9466 = vmul.f32 %v9434, %v5413
  %v9467 = vmul.f32 %v9435, %v5418
  %v9468 = vmul.f32 %v9436, %v5423
  %v9469 = vmul.f32 %v9437, %v5428
  %v9470 = vmul.f32 %v9438, %v5433
  %v9471 = vmul.f32 %v9439, %v5438
  %v9472 = vmul.f32 %v9440, %v5443
  %v9473 = vmul.f32 %v9441, %v5448
  %v9474 = vmul.f32 %v9442, %v5453
  %v9475 = vmul.f32 %v9443, %v5458
  %v9476 = vmul.f32 %v9444, %v5463
  %v9477 = vadd.f32 %v8953, %v9445
  %v9478 = vadd.f32 %v8954, %v9446
  %v9479 = vadd.f32 %v8955, %v9447
  %v9480 = vadd.f32 %v8956, %v9448
  %v9481 = vadd.f32 %v8957, %v9449
  %v9482 = vadd.f32 %v8958, %v9450
  %v9483 = vadd.f32 %v8959, %v9451
  %v9484 = vadd.f32 %v8960, %v9452
  %v9485 = vadd.f32 %v8961, %v9453
  %v9486 = vadd.f32 %v8962, %v9454
  %v9487 = vadd.f32 %v8963, %v9455
  %v9488 = vadd.f32 %v8964, %v9456
  %v9489 = vadd.f32 %v8965, %v9457
  %v9490 = vadd.f32 %v8966, %v9458
  %v9491 = vadd.f32 %v8967, %v9459
  %v9492 = vadd.f32 %v8968, %v9460
  %v9493 = vadd.f32 %v8969, %v9461
  %v9494 = vadd.f32 %v8970, %v9462
  %v9495 = vadd.f32 %v8971, %v9463
  %v9496 = vadd.f32 %v8972, %v9464
  %v9497 = vadd.f32 %v8973, %v9465
  %v9498 = vadd.f32 %v8974, %v9466
  %v9499 = vadd.f32 %v8975, %v9467
  %v9500 = vadd.f32 %v8976, %v9468
  %v9501 = vadd.f32 %v8977, %v9469
  %v9502 = vadd.f32 %v8978, %v9470
  %v9503 = vadd.f32 %v8979, %v9471
  %v9504 = vadd.f32 %v8980, %v9472
  %v9505 = vadd.f32 %v8981, %v9473
  %v9506 = vadd.f32 %v8982, %v9474
  %v9507 = vadd.f32 %v8983, %v9475
  %v9508 = vadd.f32 %v8984, %v9476
  %v9509 = vld [vmem:[#allocation2 + $0x14a] sm:$0xff]
  %v9510 = vld [vmem:[#allocation2 + $0x152] sm:$0xff]
  %v9511 = vld [vmem:[#allocation2 + $0x15a] sm:$0xff]
  %v9512 = vld [vmem:[#allocation2 + $0x162] sm:$0xff]
  %v9513 = vld [vmem:[#allocation2 + $0x16a] sm:$0xff]
  %v9514 = vld [vmem:[#allocation2 + $0x172] sm:$0xff]
  %v9515 = vld [vmem:[#allocation2 + $0x17a] sm:$0xff]
  %v9516 = vld [vmem:[#allocation2 + $0x182] sm:$0xff]
  %v9517 = vld [vmem:[#allocation2 + $0x18a] sm:$0xff]
  %v9518 = vld [vmem:[#allocation2 + $0x192] sm:$0xff]
  %v9519 = vld [vmem:[#allocation2 + $0x19a] sm:$0xff]
  %v9520 = vld [vmem:[#allocation2 + $0x1a2] sm:$0xff]
  %v9521 = vld [vmem:[#allocation2 + $0x1aa] sm:$0xff]
  %v9522 = vld [vmem:[#allocation2 + $0x1b2] sm:$0xff]
  %v9523 = vld [vmem:[#allocation2 + $0x1ba] sm:$0xff]
  %v9524 = vld [vmem:[#allocation2 + $0x1c2] sm:$0xff]
  %v9525 = vld [vmem:[#allocation2 + $0x1ca] sm:$0xff]
  %v9526 = vld [vmem:[#allocation2 + $0x1d2] sm:$0xff]
  %v9527 = vld [vmem:[#allocation2 + $0x1da] sm:$0xff]
  %v9528 = vld [vmem:[#allocation2 + $0x1e2] sm:$0xff]
  %v9529 = vld [vmem:[#allocation2 + $0x1ea] sm:$0xff]
  %v9530 = vld [vmem:[#allocation2 + $0x1f2] sm:$0xff]
  %v9531 = vld [vmem:[#allocation2 + $0x1fa] sm:$0xff]
  %v9532 = vld [vmem:[#allocation2 + $0x202] sm:$0xff]
  %v9533 = vld [vmem:[#allocation2 + $0x20a] sm:$0xff]
  %v9534 = vld [vmem:[#allocation2 + $0x212] sm:$0xff]
  %v9535 = vld [vmem:[#allocation2 + $0x21a] sm:$0xff]
  %v9536 = vld [vmem:[#allocation2 + $0x222] sm:$0xff]
  %v9537 = vld [vmem:[#allocation2 + $0x22a] sm:$0xff]
  %v9538 = vld [vmem:[#allocation2 + $0x232] sm:$0xff]
  %v9539 = vld [vmem:[#allocation2 + $0x23a] sm:$0xff]
  %v9540 = vld [vmem:[#allocation2 + $0x242] sm:$0xff]
  %v9541 = vmul.f32 %v9509, %v5564
  %v9542 = vmul.f32 %v9510, %v5564
  %v9543 = vmul.f32 %v9511, %v5564
  %v9544 = vmul.f32 %v9512, %v5564
  %v9545 = vmul.f32 %v9513, %v5564
  %v9546 = vmul.f32 %v9514, %v5564
  %v9547 = vmul.f32 %v9515, %v5564
  %v9548 = vmul.f32 %v9516, %v5564
  %v9549 = vmul.f32 %v9517, %v5564
  %v9550 = vmul.f32 %v9518, %v5564
  %v9551 = vmul.f32 %v9519, %v5564
  %v9552 = vmul.f32 %v9520, %v5564
  %v9553 = vmul.f32 %v9521, %v5564
  %v9554 = vmul.f32 %v9522, %v5564
  %v9555 = vmul.f32 %v9523, %v5564
  %v9556 = vmul.f32 %v9524, %v5564
  %v9557 = vmul.f32 %v9525, %v5564
  %v9558 = vmul.f32 %v9526, %v5564
  %v9559 = vmul.f32 %v9527, %v5564
  %v9560 = vmul.f32 %v9528, %v5564
  %v9561 = vmul.f32 %v9529, %v5564
  %v9562 = vmul.f32 %v9530, %v5564
  %v9563 = vmul.f32 %v9531, %v5564
  %v9564 = vmul.f32 %v9532, %v5564
  %v9565 = vmul.f32 %v9533, %v5564
  %v9566 = vmul.f32 %v9534, %v5564
  %v9567 = vmul.f32 %v9535, %v5564
  %v9568 = vmul.f32 %v9536, %v5564
  %v9569 = vmul.f32 %v9537, %v5564
  %v9570 = vmul.f32 %v9538, %v5564
  %v9571 = vmul.f32 %v9539, %v5564
  %v9572 = vmul.f32 %v9540, %v5564
  %v9573 = vld [vmem:[#allocation2 + $0x24a] sm:$0xff]
  %v9574 = vld [vmem:[#allocation2 + $0x252] sm:$0xff]
  %v9575 = vmul.f32 %v9511, %v5602
  %v9576 = vmul.f32 %v9512, %v5602
  %v9577 = vmul.f32 %v9513, %v5602
  %v9578 = vmul.f32 %v9514, %v5602
  %v9579 = vmul.f32 %v9515, %v5602
  %v9580 = vmul.f32 %v9516, %v5602
  %v9581 = vmul.f32 %v9517, %v5602
  %v9582 = vmul.f32 %v9518, %v5602
  %v9583 = vmul.f32 %v9519, %v5602
  %v9584 = vmul.f32 %v9520, %v5602
  %v9585 = vmul.f32 %v9521, %v5602
  %v9586 = vmul.f32 %v9522, %v5602
  %v9587 = vmul.f32 %v9523, %v5602
  %v9588 = vmul.f32 %v9524, %v5602
  %v9589 = vmul.f32 %v9525, %v5602
  %v9590 = vmul.f32 %v9526, %v5602
  %v9591 = vmul.f32 %v9527, %v5602
  %v9592 = vmul.f32 %v9528, %v5602
  %v9593 = vmul.f32 %v9529, %v5602
  %v9594 = vmul.f32 %v9530, %v5602
  %v9595 = vmul.f32 %v9531, %v5602
  %v9596 = vmul.f32 %v9532, %v5602
  %v9597 = vmul.f32 %v9533, %v5602
  %v9598 = vmul.f32 %v9534, %v5602
  %v9599 = vmul.f32 %v9535, %v5602
  %v9600 = vmul.f32 %v9536, %v5602
  %v9601 = vmul.f32 %v9537, %v5602
  %v9602 = vmul.f32 %v9538, %v5602
  %v9603 = vmul.f32 %v9539, %v5602
  %v9604 = vmul.f32 %v9540, %v5602
  %v9605 = vmul.f32 %v9573, %v5602
  %v9606 = vmul.f32 %v9574, %v5602
  %v9607 = vadd.f32 %v9541, %v9575
  %v9608 = vadd.f32 %v9542, %v9576
  %v9609 = vadd.f32 %v9543, %v9577
  %v9610 = vadd.f32 %v9544, %v9578
  %v9611 = vadd.f32 %v9545, %v9579
  %v9612 = vadd.f32 %v9546, %v9580
  %v9613 = vadd.f32 %v9547, %v9581
  %v9614 = vadd.f32 %v9548, %v9582
  %v9615 = vadd.f32 %v9549, %v9583
  %v9616 = vadd.f32 %v9550, %v9584
  %v9617 = vadd.f32 %v9551, %v9585
  %v9618 = vadd.f32 %v9552, %v9586
  %v9619 = vadd.f32 %v9553, %v9587
  %v9620 = vadd.f32 %v9554, %v9588
  %v9621 = vadd.f32 %v9555, %v9589
  %v9622 = vadd.f32 %v9556, %v9590
  %v9623 = vadd.f32 %v9557, %v9591
  %v9624 = vadd.f32 %v9558, %v9592
  %v9625 = vadd.f32 %v9559, %v9593
  %v9626 = vadd.f32 %v9560, %v9594
  %v9627 = vadd.f32 %v9561, %v9595
  %v9628 = vadd.f32 %v9562, %v9596
  %v9629 = vadd.f32 %v9563, %v9597
  %v9630 = vadd.f32 %v9564, %v9598
  %v9631 = vadd.f32 %v9565, %v9599
  %v9632 = vadd.f32 %v9566, %v9600
  %v9633 = vadd.f32 %v9567, %v9601
  %v9634 = vadd.f32 %v9568, %v9602
  %v9635 = vadd.f32 %v9569, %v9603
  %v9636 = vadd.f32 %v9570, %v9604
  %v9637 = vadd.f32 %v9571, %v9605
  %v9638 = vadd.f32 %v9572, %v9606
  %v9639 = vld [vmem:[#allocation2 + $0x25a] sm:$0xff]
  %v9640 = vld [vmem:[#allocation2 + $0x262] sm:$0xff]
  %v9641 = vmul.f32 %v9513, %v5672
  %v9642 = vmul.f32 %v9514, %v5672
  %v9643 = vmul.f32 %v9515, %v5672
  %v9644 = vmul.f32 %v9516, %v5672
  %v9645 = vmul.f32 %v9517, %v5672
  %v9646 = vmul.f32 %v9518, %v5672
  %v9647 = vmul.f32 %v9519, %v5672
  %v9648 = vmul.f32 %v9520, %v5672
  %v9649 = vmul.f32 %v9521, %v5672
  %v9650 = vmul.f32 %v9522, %v5672
  %v9651 = vmul.f32 %v9523, %v5672
  %v9652 = vmul.f32 %v9524, %v5672
  %v9653 = vmul.f32 %v9525, %v5672
  %v9654 = vmul.f32 %v9526, %v5672
  %v9655 = vmul.f32 %v9527, %v5672
  %v9656 = vmul.f32 %v9528, %v5672
  %v9657 = vmul.f32 %v9529, %v5672
  %v9658 = vmul.f32 %v9530, %v5672
  %v9659 = vmul.f32 %v9531, %v5672
  %v9660 = vmul.f32 %v9532, %v5672
  %v9661 = vmul.f32 %v9533, %v5672
  %v9662 = vmul.f32 %v9534, %v5672
  %v9663 = vmul.f32 %v9535, %v5672
  %v9664 = vmul.f32 %v9536, %v5672
  %v9665 = vmul.f32 %v9537, %v5672
  %v9666 = vmul.f32 %v9538, %v5672
  %v9667 = vmul.f32 %v9539, %v5672
  %v9668 = vmul.f32 %v9540, %v5672
  %v9669 = vmul.f32 %v9573, %v5672
  %v9670 = vmul.f32 %v9574, %v5672
  %v9671 = vmul.f32 %v9639, %v5672
  %v9672 = vmul.f32 %v9640, %v5672
  %v9673 = vadd.f32 %v9607, %v9641
  %v9674 = vadd.f32 %v9608, %v9642
  %v9675 = vadd.f32 %v9609, %v9643
  %v9676 = vadd.f32 %v9610, %v9644
  %v9677 = vadd.f32 %v9611, %v9645
  %v9678 = vadd.f32 %v9612, %v9646
  %v9679 = vadd.f32 %v9613, %v9647
  %v9680 = vadd.f32 %v9614, %v9648
  %v9681 = vadd.f32 %v9615, %v9649
  %v9682 = vadd.f32 %v9616, %v9650
  %v9683 = vadd.f32 %v9617, %v9651
  %v9684 = vadd.f32 %v9618, %v9652
  %v9685 = vadd.f32 %v9619, %v9653
  %v9686 = vadd.f32 %v9620, %v9654
  %v9687 = vadd.f32 %v9621, %v9655
  %v9688 = vadd.f32 %v9622, %v9656
  %v9689 = vadd.f32 %v9623, %v9657
  %v9690 = vadd.f32 %v9624, %v9658
  %v9691 = vadd.f32 %v9625, %v9659
  %v9692 = vadd.f32 %v9626, %v9660
  %v9693 = vadd.f32 %v9627, %v9661
  %v9694 = vadd.f32 %v9628, %v9662
  %v9695 = vadd.f32 %v9629, %v9663
  %v9696 = vadd.f32 %v9630, %v9664
  %v9697 = vadd.f32 %v9631, %v9665
  %v9698 = vadd.f32 %v9632, %v9666
  %v9699 = vadd.f32 %v9633, %v9667
  %v9700 = vadd.f32 %v9634, %v9668
  %v9701 = vadd.f32 %v9635, %v9669
  %v9702 = vadd.f32 %v9636, %v9670
  %v9703 = vadd.f32 %v9637, %v9671
  %v9704 = vadd.f32 %v9638, %v9672
  %v9705 = vld [vmem:[#allocation2 + $0x26a] sm:$0xff]
  %v9706 = vld [vmem:[#allocation2 + $0x272] sm:$0xff]
  %v9707 = vmul.f32 %v9515, %v5742
  %v9708 = vmul.f32 %v9516, %v5742
  %v9709 = vmul.f32 %v9517, %v5742
  %v9710 = vmul.f32 %v9518, %v5742
  %v9711 = vmul.f32 %v9519, %v5742
  %v9712 = vmul.f32 %v9520, %v5742
  %v9713 = vmul.f32 %v9521, %v5742
  %v9714 = vmul.f32 %v9522, %v5742
  %v9715 = vmul.f32 %v9523, %v5742
  %v9716 = vmul.f32 %v9524, %v5742
  %v9717 = vmul.f32 %v9525, %v5742
  %v9718 = vmul.f32 %v9526, %v5742
  %v9719 = vmul.f32 %v9527, %v5742
  %v9720 = vmul.f32 %v9528, %v5742
  %v9721 = vmul.f32 %v9529, %v5742
  %v9722 = vmul.f32 %v9530, %v5742
  %v9723 = vmul.f32 %v9531, %v5742
  %v9724 = vmul.f32 %v9532, %v5742
  %v9725 = vmul.f32 %v9533, %v5742
  %v9726 = vmul.f32 %v9534, %v5742
  %v9727 = vmul.f32 %v9535, %v5742
  %v9728 = vmul.f32 %v9536, %v5742
  %v9729 = vmul.f32 %v9537, %v5742
  %v9730 = vmul.f32 %v9538, %v5742
  %v9731 = vmul.f32 %v9539, %v5742
  %v9732 = vmul.f32 %v9540, %v5742
  %v9733 = vmul.f32 %v9573, %v5742
  %v9734 = vmul.f32 %v9574, %v5742
  %v9735 = vmul.f32 %v9639, %v5742
  %v9736 = vmul.f32 %v9640, %v5742
  %v9737 = vmul.f32 %v9705, %v5742
  %v9738 = vmul.f32 %v9706, %v5742
  %v9739 = vadd.f32 %v9673, %v9707
  %v9740 = vadd.f32 %v9674, %v9708
  %v9741 = vadd.f32 %v9675, %v9709
  %v9742 = vadd.f32 %v9676, %v9710
  %v9743 = vadd.f32 %v9677, %v9711
  %v9744 = vadd.f32 %v9678, %v9712
  %v9745 = vadd.f32 %v9679, %v9713
  %v9746 = vadd.f32 %v9680, %v9714
  %v9747 = vadd.f32 %v9681, %v9715
  %v9748 = vadd.f32 %v9682, %v9716
  %v9749 = vadd.f32 %v9683, %v9717
  %v9750 = vadd.f32 %v9684, %v9718
  %v9751 = vadd.f32 %v9685, %v9719
  %v9752 = vadd.f32 %v9686, %v9720
  %v9753 = vadd.f32 %v9687, %v9721
  %v9754 = vadd.f32 %v9688, %v9722
  %v9755 = vadd.f32 %v9689, %v9723
  %v9756 = vadd.f32 %v9690, %v9724
  %v9757 = vadd.f32 %v9691, %v9725
  %v9758 = vadd.f32 %v9692, %v9726
  %v9759 = vadd.f32 %v9693, %v9727
  %v9760 = vadd.f32 %v9694, %v9728
  %v9761 = vadd.f32 %v9695, %v9729
  %v9762 = vadd.f32 %v9696, %v9730
  %v9763 = vadd.f32 %v9697, %v9731
  %v9764 = vadd.f32 %v9698, %v9732
  %v9765 = vadd.f32 %v9699, %v9733
  %v9766 = vadd.f32 %v9700, %v9734
  %v9767 = vadd.f32 %v9701, %v9735
  %v9768 = vadd.f32 %v9702, %v9736
  %v9769 = vadd.f32 %v9703, %v9737
  %v9770 = vadd.f32 %v9704, %v9738
  %v9771 = vld [vmem:[#allocation2 + $0x27a] sm:$0xff]
  %v9772 = vld [vmem:[#allocation2 + $0x282] sm:$0xff]
  %v9773 = vmul.f32 %v9517, %v5812
  %v9774 = vmul.f32 %v9518, %v5812
  %v9775 = vmul.f32 %v9519, %v5812
  %v9776 = vmul.f32 %v9520, %v5812
  %v9777 = vmul.f32 %v9521, %v5812
  %v9778 = vmul.f32 %v9522, %v5812
  %v9779 = vmul.f32 %v9523, %v5812
  %v9780 = vmul.f32 %v9524, %v5812
  %v9781 = vmul.f32 %v9525, %v5812
  %v9782 = vmul.f32 %v9526, %v5812
  %v9783 = vmul.f32 %v9527, %v5812
  %v9784 = vmul.f32 %v9528, %v5812
  %v9785 = vmul.f32 %v9529, %v5812
  %v9786 = vmul.f32 %v9530, %v5812
  %v9787 = vmul.f32 %v9531, %v5812
  %v9788 = vmul.f32 %v9532, %v5812
  %v9789 = vmul.f32 %v9533, %v5812
  %v9790 = vmul.f32 %v9534, %v5812
  %v9791 = vmul.f32 %v9535, %v5812
  %v9792 = vmul.f32 %v9536, %v5812
  %v9793 = vmul.f32 %v9537, %v5812
  %v9794 = vmul.f32 %v9538, %v5812
  %v9795 = vmul.f32 %v9539, %v5812
  %v9796 = vmul.f32 %v9540, %v5812
  %v9797 = vmul.f32 %v9573, %v5812
  %v9798 = vmul.f32 %v9574, %v5812
  %v9799 = vmul.f32 %v9639, %v5812
  %v9800 = vmul.f32 %v9640, %v5812
  %v9801 = vmul.f32 %v9705, %v5812
  %v9802 = vmul.f32 %v9706, %v5812
  %v9803 = vmul.f32 %v9771, %v5812
  %v9804 = vmul.f32 %v9772, %v5812
  %v9805 = vadd.f32 %v9739, %v9773
  %v9806 = vadd.f32 %v9740, %v9774
  %v9807 = vadd.f32 %v9741, %v9775
  %v9808 = vadd.f32 %v9742, %v9776
  %v9809 = vadd.f32 %v9743, %v9777
  %v9810 = vadd.f32 %v9744, %v9778
  %v9811 = vadd.f32 %v9745, %v9779
  %v9812 = vadd.f32 %v9746, %v9780
  %v9813 = vadd.f32 %v9747, %v9781
  %v9814 = vadd.f32 %v9748, %v9782
  %v9815 = vadd.f32 %v9749, %v9783
  %v9816 = vadd.f32 %v9750, %v9784
  %v9817 = vadd.f32 %v9751, %v9785
  %v9818 = vadd.f32 %v9752, %v9786
  %v9819 = vadd.f32 %v9753, %v9787
  %v9820 = vadd.f32 %v9754, %v9788
  %v9821 = vadd.f32 %v9755, %v9789
  %v9822 = vadd.f32 %v9756, %v9790
  %v9823 = vadd.f32 %v9757, %v9791
  %v9824 = vadd.f32 %v9758, %v9792
  %v9825 = vadd.f32 %v9759, %v9793
  %v9826 = vadd.f32 %v9760, %v9794
  %v9827 = vadd.f32 %v9761, %v9795
  %v9828 = vadd.f32 %v9762, %v9796
  %v9829 = vadd.f32 %v9763, %v9797
  %v9830 = vadd.f32 %v9764, %v9798
  %v9831 = vadd.f32 %v9765, %v9799
  %v9832 = vadd.f32 %v9766, %v9800
  %v9833 = vadd.f32 %v9767, %v9801
  %v9834 = vadd.f32 %v9768, %v9802
  %v9835 = vadd.f32 %v9769, %v9803
  %v9836 = vadd.f32 %v9770, %v9804
  %v9837 = vld [vmem:[#allocation2 + $0x28a] sm:$0xff]
  %v9838 = vld [vmem:[#allocation2 + $0x292] sm:$0xff]
  %v9839 = vmul.f32 %v9519, %v5882
  %v9840 = vmul.f32 %v9520, %v5882
  %v9841 = vmul.f32 %v9521, %v5882
  %v9842 = vmul.f32 %v9522, %v5882
  %v9843 = vmul.f32 %v9523, %v5882
  %v9844 = vmul.f32 %v9524, %v5882
  %v9845 = vmul.f32 %v9525, %v5882
  %v9846 = vmul.f32 %v9526, %v5882
  %v9847 = vmul.f32 %v9527, %v5882
  %v9848 = vmul.f32 %v9528, %v5882
  %v9849 = vmul.f32 %v9529, %v5882
  %v9850 = vmul.f32 %v9530, %v5882
  %v9851 = vmul.f32 %v9531, %v5882
  %v9852 = vmul.f32 %v9532, %v5882
  %v9853 = vmul.f32 %v9533, %v5882
  %v9854 = vmul.f32 %v9534, %v5882
  %v9855 = vmul.f32 %v9535, %v5882
  %v9856 = vmul.f32 %v9536, %v5882
  %v9857 = vmul.f32 %v9537, %v5882
  %v9858 = vmul.f32 %v9538, %v5882
  %v9859 = vmul.f32 %v9539, %v5882
  %v9860 = vmul.f32 %v9540, %v5882
  %v9861 = vmul.f32 %v9573, %v5882
  %v9862 = vmul.f32 %v9574, %v5882
  %v9863 = vmul.f32 %v9639, %v5882
  %v9864 = vmul.f32 %v9640, %v5882
  %v9865 = vmul.f32 %v9705, %v5882
  %v9866 = vmul.f32 %v9706, %v5882
  %v9867 = vmul.f32 %v9771, %v5882
  %v9868 = vmul.f32 %v9772, %v5882
  %v9869 = vmul.f32 %v9837, %v5882
  %v9870 = vmul.f32 %v9838, %v5882
  %v9871 = vadd.f32 %v9805, %v9839
  %v9872 = vadd.f32 %v9806, %v9840
  %v9873 = vadd.f32 %v9807, %v9841
  %v9874 = vadd.f32 %v9808, %v9842
  %v9875 = vadd.f32 %v9809, %v9843
  %v9876 = vadd.f32 %v9810, %v9844
  %v9877 = vadd.f32 %v9811, %v9845
  %v9878 = vadd.f32 %v9812, %v9846
  %v9879 = vadd.f32 %v9813, %v9847
  %v9880 = vadd.f32 %v9814, %v9848
  %v9881 = vadd.f32 %v9815, %v9849
  %v9882 = vadd.f32 %v9816, %v9850
  %v9883 = vadd.f32 %v9817, %v9851
  %v9884 = vadd.f32 %v9818, %v9852
  %v9885 = vadd.f32 %v9819, %v9853
  %v9886 = vadd.f32 %v9820, %v9854
  %v9887 = vadd.f32 %v9821, %v9855
  %v9888 = vadd.f32 %v9822, %v9856
  %v9889 = vadd.f32 %v9823, %v9857
  %v9890 = vadd.f32 %v9824, %v9858
  %v9891 = vadd.f32 %v9825, %v9859
  %v9892 = vadd.f32 %v9826, %v9860
  %v9893 = vadd.f32 %v9827, %v9861
  %v9894 = vadd.f32 %v9828, %v9862
  %v9895 = vadd.f32 %v9829, %v9863
  %v9896 = vadd.f32 %v9830, %v9864
  %v9897 = vadd.f32 %v9831, %v9865
  %v9898 = vadd.f32 %v9832, %v9866
  %v9899 = vadd.f32 %v9833, %v9867
  %v9900 = vadd.f32 %v9834, %v9868
  %v9901 = vadd.f32 %v9835, %v9869
  %v9902 = vadd.f32 %v9836, %v9870
  %v9903 = vld [vmem:[#allocation2 + $0x29a] sm:$0xff]
  %v9904 = vld [vmem:[#allocation2 + $0x2a2] sm:$0xff]
  %v9905 = vmul.f32 %v9521, %v5952
  %v9906 = vmul.f32 %v9522, %v5952
  %v9907 = vmul.f32 %v9523, %v5952
  %v9908 = vmul.f32 %v9524, %v5952
  %v9909 = vmul.f32 %v9525, %v5952
  %v9910 = vmul.f32 %v9526, %v5952
  %v9911 = vmul.f32 %v9527, %v5952
  %v9912 = vmul.f32 %v9528, %v5952
  %v9913 = vmul.f32 %v9529, %v5952
  %v9914 = vmul.f32 %v9530, %v5952
  %v9915 = vmul.f32 %v9531, %v5952
  %v9916 = vmul.f32 %v9532, %v5952
  %v9917 = vmul.f32 %v9533, %v5952
  %v9918 = vmul.f32 %v9534, %v5952
  %v9919 = vmul.f32 %v9535, %v5952
  %v9920 = vmul.f32 %v9536, %v5952
  %v9921 = vmul.f32 %v9537, %v5952
  %v9922 = vmul.f32 %v9538, %v5952
  %v9923 = vmul.f32 %v9539, %v5952
  %v9924 = vmul.f32 %v9540, %v5952
  %v9925 = vmul.f32 %v9573, %v5952
  %v9926 = vmul.f32 %v9574, %v5952
  %v9927 = vmul.f32 %v9639, %v5952
  %v9928 = vmul.f32 %v9640, %v5952
  %v9929 = vmul.f32 %v9705, %v5952
  %v9930 = vmul.f32 %v9706, %v5952
  %v9931 = vmul.f32 %v9771, %v5952
  %v9932 = vmul.f32 %v9772, %v5952
  %v9933 = vmul.f32 %v9837, %v5952
  %v9934 = vmul.f32 %v9838, %v5952
  %v9935 = vmul.f32 %v9903, %v5952
  %v9936 = vmul.f32 %v9904, %v5952
  %v9937 = vadd.f32 %v9871, %v9905
  %v9938 = vadd.f32 %v9872, %v9906
  %v9939 = vadd.f32 %v9873, %v9907
  %v9940 = vadd.f32 %v9874, %v9908
  %v9941 = vadd.f32 %v9875, %v9909
  %v9942 = vadd.f32 %v9876, %v9910
  %v9943 = vadd.f32 %v9877, %v9911
  %v9944 = vadd.f32 %v9878, %v9912
  %v9945 = vadd.f32 %v9879, %v9913
  %v9946 = vadd.f32 %v9880, %v9914
  %v9947 = vadd.f32 %v9881, %v9915
  %v9948 = vadd.f32 %v9882, %v9916
  %v9949 = vadd.f32 %v9883, %v9917
  %v9950 = vadd.f32 %v9884, %v9918
  %v9951 = vadd.f32 %v9885, %v9919
  %v9952 = vadd.f32 %v9886, %v9920
  %v9953 = vadd.f32 %v9887, %v9921
  %v9954 = vadd.f32 %v9888, %v9922
  %v9955 = vadd.f32 %v9889, %v9923
  %v9956 = vadd.f32 %v9890, %v9924
  %v9957 = vadd.f32 %v9891, %v9925
  %v9958 = vadd.f32 %v9892, %v9926
  %v9959 = vadd.f32 %v9893, %v9927
  %v9960 = vadd.f32 %v9894, %v9928
  %v9961 = vadd.f32 %v9895, %v9929
  %v9962 = vadd.f32 %v9896, %v9930
  %v9963 = vadd.f32 %v9897, %v9931
  %v9964 = vadd.f32 %v9898, %v9932
  %v9965 = vadd.f32 %v9899, %v9933
  %v9966 = vadd.f32 %v9900, %v9934
  %v9967 = vadd.f32 %v9901, %v9935
  %v9968 = vadd.f32 %v9902, %v9936
  %v9969 = vmul.f32 %v9937, %v6020
  %v9970 = vmul.f32 %v9938, %v6025
  %v9971 = vmul.f32 %v9939, %v6030
  %v9972 = vmul.f32 %v9940, %v6035
  %v9973 = vmul.f32 %v9941, %v6040
  %v9974 = vmul.f32 %v9942, %v6045
  %v9975 = vmul.f32 %v9943, %v6050
  %v9976 = vmul.f32 %v9944, %v6055
  %v9977 = vmul.f32 %v9945, %v6060
  %v9978 = vmul.f32 %v9946, %v6065
  %v9979 = vmul.f32 %v9947, %v6070
  %v9980 = vmul.f32 %v9948, %v6075
  %v9981 = vmul.f32 %v9949, %v6080
  %v9982 = vmul.f32 %v9950, %v6085
  %v9983 = vmul.f32 %v9951, %v6090
  %v9984 = vmul.f32 %v9952, %v6095
  %v9985 = vmul.f32 %v9953, %v6100
  %v9986 = vmul.f32 %v9954, %v6105
  %v9987 = vmul.f32 %v9955, %v6110
  %v9988 = vmul.f32 %v9956, %v6115
  %v9989 = vmul.f32 %v9957, %v6120
  %v9990 = vmul.f32 %v9958, %v6125
  %v9991 = vmul.f32 %v9959, %v6130
  %v9992 = vmul.f32 %v9960, %v6135
  %v9993 = vmul.f32 %v9961, %v6140
  %v9994 = vmul.f32 %v9962, %v6145
  %v9995 = vmul.f32 %v9963, %v6150
  %v9996 = vmul.f32 %v9964, %v6155
  %v9997 = vmul.f32 %v9965, %v6160
  %v9998 = vmul.f32 %v9966, %v6165
  %v9999 = vmul.f32 %v9967, %v6170
  %v10000 = vmul.f32 %v9968, %v6175
  %v10001 = vadd.f32 %v9477, %v9969
  %v10002 = vadd.f32 %v9478, %v9970
  %v10003 = vadd.f32 %v9479, %v9971
  %v10004 = vadd.f32 %v9480, %v9972
  %v10005 = vadd.f32 %v9481, %v9973
  %v10006 = vadd.f32 %v9482, %v9974
  %v10007 = vadd.f32 %v9483, %v9975
  %v10008 = vadd.f32 %v9484, %v9976
  %v10009 = vadd.f32 %v9485, %v9977
  %v10010 = vadd.f32 %v9486, %v9978
  %v10011 = vadd.f32 %v9487, %v9979
  %v10012 = vadd.f32 %v9488, %v9980
  %v10013 = vadd.f32 %v9489, %v9981
  %v10014 = vadd.f32 %v9490, %v9982
  %v10015 = vadd.f32 %v9491, %v9983
  %v10016 = vadd.f32 %v9492, %v9984
  %v10017 = vadd.f32 %v9493, %v9985
  %v10018 = vadd.f32 %v9494, %v9986
  %v10019 = vadd.f32 %v9495, %v9987
  %v10020 = vadd.f32 %v9496, %v9988
  %v10021 = vadd.f32 %v9497, %v9989
  %v10022 = vadd.f32 %v9498, %v9990
  %v10023 = vadd.f32 %v9499, %v9991
  %v10024 = vadd.f32 %v9500, %v9992
  %v10025 = vadd.f32 %v9501, %v9993
  %v10026 = vadd.f32 %v9502, %v9994
  %v10027 = vadd.f32 %v9503, %v9995
  %v10028 = vadd.f32 %v9504, %v9996
  %v10029 = vadd.f32 %v9505, %v9997
  %v10030 = vadd.f32 %v9506, %v9998
  %v10031 = vadd.f32 %v9507, %v9999
  %v10032 = vadd.f32 %v9508, %v10000
  %v10033 = vld [vmem:[#allocation2 + $0x14b] sm:$0xff]
  %v10034 = vld [vmem:[#allocation2 + $0x153] sm:$0xff]
  %v10035 = vld [vmem:[#allocation2 + $0x15b] sm:$0xff]
  %v10036 = vld [vmem:[#allocation2 + $0x163] sm:$0xff]
  %v10037 = vld [vmem:[#allocation2 + $0x16b] sm:$0xff]
  %v10038 = vld [vmem:[#allocation2 + $0x173] sm:$0xff]
  %v10039 = vld [vmem:[#allocation2 + $0x17b] sm:$0xff]
  %v10040 = vld [vmem:[#allocation2 + $0x183] sm:$0xff]
  %v10041 = vld [vmem:[#allocation2 + $0x18b] sm:$0xff]
  %v10042 = vld [vmem:[#allocation2 + $0x193] sm:$0xff]
  %v10043 = vld [vmem:[#allocation2 + $0x19b] sm:$0xff]
  %v10044 = vld [vmem:[#allocation2 + $0x1a3] sm:$0xff]
  %v10045 = vld [vmem:[#allocation2 + $0x1ab] sm:$0xff]
  %v10046 = vld [vmem:[#allocation2 + $0x1b3] sm:$0xff]
  %v10047 = vld [vmem:[#allocation2 + $0x1bb] sm:$0xff]
  %v10048 = vld [vmem:[#allocation2 + $0x1c3] sm:$0xff]
  %v10049 = vld [vmem:[#allocation2 + $0x1cb] sm:$0xff]
  %v10050 = vld [vmem:[#allocation2 + $0x1d3] sm:$0xff]
  %v10051 = vld [vmem:[#allocation2 + $0x1db] sm:$0xff]
  %v10052 = vld [vmem:[#allocation2 + $0x1e3] sm:$0xff]
  %v10053 = vld [vmem:[#allocation2 + $0x1eb] sm:$0xff]
  %v10054 = vld [vmem:[#allocation2 + $0x1f3] sm:$0xff]
  %v10055 = vld [vmem:[#allocation2 + $0x1fb] sm:$0xff]
  %v10056 = vld [vmem:[#allocation2 + $0x203] sm:$0xff]
  %v10057 = vld [vmem:[#allocation2 + $0x20b] sm:$0xff]
  %v10058 = vld [vmem:[#allocation2 + $0x213] sm:$0xff]
  %v10059 = vld [vmem:[#allocation2 + $0x21b] sm:$0xff]
  %v10060 = vld [vmem:[#allocation2 + $0x223] sm:$0xff]
  %v10061 = vld [vmem:[#allocation2 + $0x22b] sm:$0xff]
  %v10062 = vld [vmem:[#allocation2 + $0x233] sm:$0xff]
  %v10063 = vld [vmem:[#allocation2 + $0x23b] sm:$0xff]
  %v10064 = vld [vmem:[#allocation2 + $0x243] sm:$0xff]
  %v10065 = vmul.f32 %v10033, %v6276
  %v10066 = vmul.f32 %v10034, %v6276
  %v10067 = vmul.f32 %v10035, %v6276
  %v10068 = vmul.f32 %v10036, %v6276
  %v10069 = vmul.f32 %v10037, %v6276
  %v10070 = vmul.f32 %v10038, %v6276
  %v10071 = vmul.f32 %v10039, %v6276
  %v10072 = vmul.f32 %v10040, %v6276
  %v10073 = vmul.f32 %v10041, %v6276
  %v10074 = vmul.f32 %v10042, %v6276
  %v10075 = vmul.f32 %v10043, %v6276
  %v10076 = vmul.f32 %v10044, %v6276
  %v10077 = vmul.f32 %v10045, %v6276
  %v10078 = vmul.f32 %v10046, %v6276
  %v10079 = vmul.f32 %v10047, %v6276
  %v10080 = vmul.f32 %v10048, %v6276
  %v10081 = vmul.f32 %v10049, %v6276
  %v10082 = vmul.f32 %v10050, %v6276
  %v10083 = vmul.f32 %v10051, %v6276
  %v10084 = vmul.f32 %v10052, %v6276
  %v10085 = vmul.f32 %v10053, %v6276
  %v10086 = vmul.f32 %v10054, %v6276
  %v10087 = vmul.f32 %v10055, %v6276
  %v10088 = vmul.f32 %v10056, %v6276
  %v10089 = vmul.f32 %v10057, %v6276
  %v10090 = vmul.f32 %v10058, %v6276
  %v10091 = vmul.f32 %v10059, %v6276
  %v10092 = vmul.f32 %v10060, %v6276
  %v10093 = vmul.f32 %v10061, %v6276
  %v10094 = vmul.f32 %v10062, %v6276
  %v10095 = vmul.f32 %v10063, %v6276
  %v10096 = vmul.f32 %v10064, %v6276
  %v10097 = vld [vmem:[#allocation2 + $0x24b] sm:$0xff]
  %v10098 = vld [vmem:[#allocation2 + $0x253] sm:$0xff]
  %v10099 = vmul.f32 %v10035, %v6314
  %v10100 = vmul.f32 %v10036, %v6314
  %v10101 = vmul.f32 %v10037, %v6314
  %v10102 = vmul.f32 %v10038, %v6314
  %v10103 = vmul.f32 %v10039, %v6314
  %v10104 = vmul.f32 %v10040, %v6314
  %v10105 = vmul.f32 %v10041, %v6314
  %v10106 = vmul.f32 %v10042, %v6314
  %v10107 = vmul.f32 %v10043, %v6314
  %v10108 = vmul.f32 %v10044, %v6314
  %v10109 = vmul.f32 %v10045, %v6314
  %v10110 = vmul.f32 %v10046, %v6314
  %v10111 = vmul.f32 %v10047, %v6314
  %v10112 = vmul.f32 %v10048, %v6314
  %v10113 = vmul.f32 %v10049, %v6314
  %v10114 = vmul.f32 %v10050, %v6314
  %v10115 = vmul.f32 %v10051, %v6314
  %v10116 = vmul.f32 %v10052, %v6314
  %v10117 = vmul.f32 %v10053, %v6314
  %v10118 = vmul.f32 %v10054, %v6314
  %v10119 = vmul.f32 %v10055, %v6314
  %v10120 = vmul.f32 %v10056, %v6314
  %v10121 = vmul.f32 %v10057, %v6314
  %v10122 = vmul.f32 %v10058, %v6314
  %v10123 = vmul.f32 %v10059, %v6314
  %v10124 = vmul.f32 %v10060, %v6314
  %v10125 = vmul.f32 %v10061, %v6314
  %v10126 = vmul.f32 %v10062, %v6314
  %v10127 = vmul.f32 %v10063, %v6314
  %v10128 = vmul.f32 %v10064, %v6314
  %v10129 = vmul.f32 %v10097, %v6314
  %v10130 = vmul.f32 %v10098, %v6314
  %v10131 = vadd.f32 %v10065, %v10099
  %v10132 = vadd.f32 %v10066, %v10100
  %v10133 = vadd.f32 %v10067, %v10101
  %v10134 = vadd.f32 %v10068, %v10102
  %v10135 = vadd.f32 %v10069, %v10103
  %v10136 = vadd.f32 %v10070, %v10104
  %v10137 = vadd.f32 %v10071, %v10105
  %v10138 = vadd.f32 %v10072, %v10106
  %v10139 = vadd.f32 %v10073, %v10107
  %v10140 = vadd.f32 %v10074, %v10108
  %v10141 = vadd.f32 %v10075, %v10109
  %v10142 = vadd.f32 %v10076, %v10110
  %v10143 = vadd.f32 %v10077, %v10111
  %v10144 = vadd.f32 %v10078, %v10112
  %v10145 = vadd.f32 %v10079, %v10113
  %v10146 = vadd.f32 %v10080, %v10114
  %v10147 = vadd.f32 %v10081, %v10115
  %v10148 = vadd.f32 %v10082, %v10116
  %v10149 = vadd.f32 %v10083, %v10117
  %v10150 = vadd.f32 %v10084, %v10118
  %v10151 = vadd.f32 %v10085, %v10119
  %v10152 = vadd.f32 %v10086, %v10120
  %v10153 = vadd.f32 %v10087, %v10121
  %v10154 = vadd.f32 %v10088, %v10122
  %v10155 = vadd.f32 %v10089, %v10123
  %v10156 = vadd.f32 %v10090, %v10124
  %v10157 = vadd.f32 %v10091, %v10125
  %v10158 = vadd.f32 %v10092, %v10126
  %v10159 = vadd.f32 %v10093, %v10127
  %v10160 = vadd.f32 %v10094, %v10128
  %v10161 = vadd.f32 %v10095, %v10129
  %v10162 = vadd.f32 %v10096, %v10130
  %v10163 = vld [vmem:[#allocation2 + $0x25b] sm:$0xff]
  %v10164 = vld [vmem:[#allocation2 + $0x263] sm:$0xff]
  %v10165 = vmul.f32 %v10037, %v6384
  %v10166 = vmul.f32 %v10038, %v6384
  %v10167 = vmul.f32 %v10039, %v6384
  %v10168 = vmul.f32 %v10040, %v6384
  %v10169 = vmul.f32 %v10041, %v6384
  %v10170 = vmul.f32 %v10042, %v6384
  %v10171 = vmul.f32 %v10043, %v6384
  %v10172 = vmul.f32 %v10044, %v6384
  %v10173 = vmul.f32 %v10045, %v6384
  %v10174 = vmul.f32 %v10046, %v6384
  %v10175 = vmul.f32 %v10047, %v6384
  %v10176 = vmul.f32 %v10048, %v6384
  %v10177 = vmul.f32 %v10049, %v6384
  %v10178 = vmul.f32 %v10050, %v6384
  %v10179 = vmul.f32 %v10051, %v6384
  %v10180 = vmul.f32 %v10052, %v6384
  %v10181 = vmul.f32 %v10053, %v6384
  %v10182 = vmul.f32 %v10054, %v6384
  %v10183 = vmul.f32 %v10055, %v6384
  %v10184 = vmul.f32 %v10056, %v6384
  %v10185 = vmul.f32 %v10057, %v6384
  %v10186 = vmul.f32 %v10058, %v6384
  %v10187 = vmul.f32 %v10059, %v6384
  %v10188 = vmul.f32 %v10060, %v6384
  %v10189 = vmul.f32 %v10061, %v6384
  %v10190 = vmul.f32 %v10062, %v6384
  %v10191 = vmul.f32 %v10063, %v6384
  %v10192 = vmul.f32 %v10064, %v6384
  %v10193 = vmul.f32 %v10097, %v6384
  %v10194 = vmul.f32 %v10098, %v6384
  %v10195 = vmul.f32 %v10163, %v6384
  %v10196 = vmul.f32 %v10164, %v6384
  %v10197 = vadd.f32 %v10131, %v10165
  %v10198 = vadd.f32 %v10132, %v10166
  %v10199 = vadd.f32 %v10133, %v10167
  %v10200 = vadd.f32 %v10134, %v10168
  %v10201 = vadd.f32 %v10135, %v10169
  %v10202 = vadd.f32 %v10136, %v10170
  %v10203 = vadd.f32 %v10137, %v10171
  %v10204 = vadd.f32 %v10138, %v10172
  %v10205 = vadd.f32 %v10139, %v10173
  %v10206 = vadd.f32 %v10140, %v10174
  %v10207 = vadd.f32 %v10141, %v10175
  %v10208 = vadd.f32 %v10142, %v10176
  %v10209 = vadd.f32 %v10143, %v10177
  %v10210 = vadd.f32 %v10144, %v10178
  %v10211 = vadd.f32 %v10145, %v10179
  %v10212 = vadd.f32 %v10146, %v10180
  %v10213 = vadd.f32 %v10147, %v10181
  %v10214 = vadd.f32 %v10148, %v10182
  %v10215 = vadd.f32 %v10149, %v10183
  %v10216 = vadd.f32 %v10150, %v10184
  %v10217 = vadd.f32 %v10151, %v10185
  %v10218 = vadd.f32 %v10152, %v10186
  %v10219 = vadd.f32 %v10153, %v10187
  %v10220 = vadd.f32 %v10154, %v10188
  %v10221 = vadd.f32 %v10155, %v10189
  %v10222 = vadd.f32 %v10156, %v10190
  %v10223 = vadd.f32 %v10157, %v10191
  %v10224 = vadd.f32 %v10158, %v10192
  %v10225 = vadd.f32 %v10159, %v10193
  %v10226 = vadd.f32 %v10160, %v10194
  %v10227 = vadd.f32 %v10161, %v10195
  %v10228 = vadd.f32 %v10162, %v10196
  %v10229 = vld [vmem:[#allocation2 + $0x26b] sm:$0xff]
  %v10230 = vld [vmem:[#allocation2 + $0x273] sm:$0xff]
  %v10231 = vmul.f32 %v10039, %v6454
  %v10232 = vmul.f32 %v10040, %v6454
  %v10233 = vmul.f32 %v10041, %v6454
  %v10234 = vmul.f32 %v10042, %v6454
  %v10235 = vmul.f32 %v10043, %v6454
  %v10236 = vmul.f32 %v10044, %v6454
  %v10237 = vmul.f32 %v10045, %v6454
  %v10238 = vmul.f32 %v10046, %v6454
  %v10239 = vmul.f32 %v10047, %v6454
  %v10240 = vmul.f32 %v10048, %v6454
  %v10241 = vmul.f32 %v10049, %v6454
  %v10242 = vmul.f32 %v10050, %v6454
  %v10243 = vmul.f32 %v10051, %v6454
  %v10244 = vmul.f32 %v10052, %v6454
  %v10245 = vmul.f32 %v10053, %v6454
  %v10246 = vmul.f32 %v10054, %v6454
  %v10247 = vmul.f32 %v10055, %v6454
  %v10248 = vmul.f32 %v10056, %v6454
  %v10249 = vmul.f32 %v10057, %v6454
  %v10250 = vmul.f32 %v10058, %v6454
  %v10251 = vmul.f32 %v10059, %v6454
  %v10252 = vmul.f32 %v10060, %v6454
  %v10253 = vmul.f32 %v10061, %v6454
  %v10254 = vmul.f32 %v10062, %v6454
  %v10255 = vmul.f32 %v10063, %v6454
  %v10256 = vmul.f32 %v10064, %v6454
  %v10257 = vmul.f32 %v10097, %v6454
  %v10258 = vmul.f32 %v10098, %v6454
  %v10259 = vmul.f32 %v10163, %v6454
  %v10260 = vmul.f32 %v10164, %v6454
  %v10261 = vmul.f32 %v10229, %v6454
  %v10262 = vmul.f32 %v10230, %v6454
  %v10263 = vadd.f32 %v10197, %v10231
  %v10264 = vadd.f32 %v10198, %v10232
  %v10265 = vadd.f32 %v10199, %v10233
  %v10266 = vadd.f32 %v10200, %v10234
  %v10267 = vadd.f32 %v10201, %v10235
  %v10268 = vadd.f32 %v10202, %v10236
  %v10269 = vadd.f32 %v10203, %v10237
  %v10270 = vadd.f32 %v10204, %v10238
  %v10271 = vadd.f32 %v10205, %v10239
  %v10272 = vadd.f32 %v10206, %v10240
  %v10273 = vadd.f32 %v10207, %v10241
  %v10274 = vadd.f32 %v10208, %v10242
  %v10275 = vadd.f32 %v10209, %v10243
  %v10276 = vadd.f32 %v10210, %v10244
  %v10277 = vadd.f32 %v10211, %v10245
  %v10278 = vadd.f32 %v10212, %v10246
  %v10279 = vadd.f32 %v10213, %v10247
  %v10280 = vadd.f32 %v10214, %v10248
  %v10281 = vadd.f32 %v10215, %v10249
  %v10282 = vadd.f32 %v10216, %v10250
  %v10283 = vadd.f32 %v10217, %v10251
  %v10284 = vadd.f32 %v10218, %v10252
  %v10285 = vadd.f32 %v10219, %v10253
  %v10286 = vadd.f32 %v10220, %v10254
  %v10287 = vadd.f32 %v10221, %v10255
  %v10288 = vadd.f32 %v10222, %v10256
  %v10289 = vadd.f32 %v10223, %v10257
  %v10290 = vadd.f32 %v10224, %v10258
  %v10291 = vadd.f32 %v10225, %v10259
  %v10292 = vadd.f32 %v10226, %v10260
  %v10293 = vadd.f32 %v10227, %v10261
  %v10294 = vadd.f32 %v10228, %v10262
  %v10295 = vld [vmem:[#allocation2 + $0x27b] sm:$0xff]
  %v10296 = vld [vmem:[#allocation2 + $0x283] sm:$0xff]
  %v10297 = vmul.f32 %v10041, %v6524
  %v10298 = vmul.f32 %v10042, %v6524
  %v10299 = vmul.f32 %v10043, %v6524
  %v10300 = vmul.f32 %v10044, %v6524
  %v10301 = vmul.f32 %v10045, %v6524
  %v10302 = vmul.f32 %v10046, %v6524
  %v10303 = vmul.f32 %v10047, %v6524
  %v10304 = vmul.f32 %v10048, %v6524
  %v10305 = vmul.f32 %v10049, %v6524
  %v10306 = vmul.f32 %v10050, %v6524
  %v10307 = vmul.f32 %v10051, %v6524
  %v10308 = vmul.f32 %v10052, %v6524
  %v10309 = vmul.f32 %v10053, %v6524
  %v10310 = vmul.f32 %v10054, %v6524
  %v10311 = vmul.f32 %v10055, %v6524
  %v10312 = vmul.f32 %v10056, %v6524
  %v10313 = vmul.f32 %v10057, %v6524
  %v10314 = vmul.f32 %v10058, %v6524
  %v10315 = vmul.f32 %v10059, %v6524
  %v10316 = vmul.f32 %v10060, %v6524
  %v10317 = vmul.f32 %v10061, %v6524
  %v10318 = vmul.f32 %v10062, %v6524
  %v10319 = vmul.f32 %v10063, %v6524
  %v10320 = vmul.f32 %v10064, %v6524
  %v10321 = vmul.f32 %v10097, %v6524
  %v10322 = vmul.f32 %v10098, %v6524
  %v10323 = vmul.f32 %v10163, %v6524
  %v10324 = vmul.f32 %v10164, %v6524
  %v10325 = vmul.f32 %v10229, %v6524
  %v10326 = vmul.f32 %v10230, %v6524
  %v10327 = vmul.f32 %v10295, %v6524
  %v10328 = vmul.f32 %v10296, %v6524
  %v10329 = vadd.f32 %v10263, %v10297
  %v10330 = vadd.f32 %v10264, %v10298
  %v10331 = vadd.f32 %v10265, %v10299
  %v10332 = vadd.f32 %v10266, %v10300
  %v10333 = vadd.f32 %v10267, %v10301
  %v10334 = vadd.f32 %v10268, %v10302
  %v10335 = vadd.f32 %v10269, %v10303
  %v10336 = vadd.f32 %v10270, %v10304
  %v10337 = vadd.f32 %v10271, %v10305
  %v10338 = vadd.f32 %v10272, %v10306
  %v10339 = vadd.f32 %v10273, %v10307
  %v10340 = vadd.f32 %v10274, %v10308
  %v10341 = vadd.f32 %v10275, %v10309
  %v10342 = vadd.f32 %v10276, %v10310
  %v10343 = vadd.f32 %v10277, %v10311
  %v10344 = vadd.f32 %v10278, %v10312
  %v10345 = vadd.f32 %v10279, %v10313
  %v10346 = vadd.f32 %v10280, %v10314
  %v10347 = vadd.f32 %v10281, %v10315
  %v10348 = vadd.f32 %v10282, %v10316
  %v10349 = vadd.f32 %v10283, %v10317
  %v10350 = vadd.f32 %v10284, %v10318
  %v10351 = vadd.f32 %v10285, %v10319
  %v10352 = vadd.f32 %v10286, %v10320
  %v10353 = vadd.f32 %v10287, %v10321
  %v10354 = vadd.f32 %v10288, %v10322
  %v10355 = vadd.f32 %v10289, %v10323
  %v10356 = vadd.f32 %v10290, %v10324
  %v10357 = vadd.f32 %v10291, %v10325
  %v10358 = vadd.f32 %v10292, %v10326
  %v10359 = vadd.f32 %v10293, %v10327
  %v10360 = vadd.f32 %v10294, %v10328
  %v10361 = vld [vmem:[#allocation2 + $0x28b] sm:$0xff]
  %v10362 = vld [vmem:[#allocation2 + $0x293] sm:$0xff]
  %v10363 = vmul.f32 %v10043, %v6594
  %v10364 = vmul.f32 %v10044, %v6594
  %v10365 = vmul.f32 %v10045, %v6594
  %v10366 = vmul.f32 %v10046, %v6594
  %v10367 = vmul.f32 %v10047, %v6594
  %v10368 = vmul.f32 %v10048, %v6594
  %v10369 = vmul.f32 %v10049, %v6594
  %v10370 = vmul.f32 %v10050, %v6594
  %v10371 = vmul.f32 %v10051, %v6594
  %v10372 = vmul.f32 %v10052, %v6594
  %v10373 = vmul.f32 %v10053, %v6594
  %v10374 = vmul.f32 %v10054, %v6594
  %v10375 = vmul.f32 %v10055, %v6594
  %v10376 = vmul.f32 %v10056, %v6594
  %v10377 = vmul.f32 %v10057, %v6594
  %v10378 = vmul.f32 %v10058, %v6594
  %v10379 = vmul.f32 %v10059, %v6594
  %v10380 = vmul.f32 %v10060, %v6594
  %v10381 = vmul.f32 %v10061, %v6594
  %v10382 = vmul.f32 %v10062, %v6594
  %v10383 = vmul.f32 %v10063, %v6594
  %v10384 = vmul.f32 %v10064, %v6594
  %v10385 = vmul.f32 %v10097, %v6594
  %v10386 = vmul.f32 %v10098, %v6594
  %v10387 = vmul.f32 %v10163, %v6594
  %v10388 = vmul.f32 %v10164, %v6594
  %v10389 = vmul.f32 %v10229, %v6594
  %v10390 = vmul.f32 %v10230, %v6594
  %v10391 = vmul.f32 %v10295, %v6594
  %v10392 = vmul.f32 %v10296, %v6594
  %v10393 = vmul.f32 %v10361, %v6594
  %v10394 = vmul.f32 %v10362, %v6594
  %v10395 = vadd.f32 %v10329, %v10363
  %v10396 = vadd.f32 %v10330, %v10364
  %v10397 = vadd.f32 %v10331, %v10365
  %v10398 = vadd.f32 %v10332, %v10366
  %v10399 = vadd.f32 %v10333, %v10367
  %v10400 = vadd.f32 %v10334, %v10368
  %v10401 = vadd.f32 %v10335, %v10369
  %v10402 = vadd.f32 %v10336, %v10370
  %v10403 = vadd.f32 %v10337, %v10371
  %v10404 = vadd.f32 %v10338, %v10372
  %v10405 = vadd.f32 %v10339, %v10373
  %v10406 = vadd.f32 %v10340, %v10374
  %v10407 = vadd.f32 %v10341, %v10375
  %v10408 = vadd.f32 %v10342, %v10376
  %v10409 = vadd.f32 %v10343, %v10377
  %v10410 = vadd.f32 %v10344, %v10378
  %v10411 = vadd.f32 %v10345, %v10379
  %v10412 = vadd.f32 %v10346, %v10380
  %v10413 = vadd.f32 %v10347, %v10381
  %v10414 = vadd.f32 %v10348, %v10382
  %v10415 = vadd.f32 %v10349, %v10383
  %v10416 = vadd.f32 %v10350, %v10384
  %v10417 = vadd.f32 %v10351, %v10385
  %v10418 = vadd.f32 %v10352, %v10386
  %v10419 = vadd.f32 %v10353, %v10387
  %v10420 = vadd.f32 %v10354, %v10388
  %v10421 = vadd.f32 %v10355, %v10389
  %v10422 = vadd.f32 %v10356, %v10390
  %v10423 = vadd.f32 %v10357, %v10391
  %v10424 = vadd.f32 %v10358, %v10392
  %v10425 = vadd.f32 %v10359, %v10393
  %v10426 = vadd.f32 %v10360, %v10394
  %v10427 = vld [vmem:[#allocation2 + $0x29b] sm:$0xff]
  %v10428 = vld [vmem:[#allocation2 + $0x2a3] sm:$0xff]
  %v10429 = vmul.f32 %v10045, %v6664
  %v10430 = vmul.f32 %v10046, %v6664
  %v10431 = vmul.f32 %v10047, %v6664
  %v10432 = vmul.f32 %v10048, %v6664
  %v10433 = vmul.f32 %v10049, %v6664
  %v10434 = vmul.f32 %v10050, %v6664
  %v10435 = vmul.f32 %v10051, %v6664
  %v10436 = vmul.f32 %v10052, %v6664
  %v10437 = vmul.f32 %v10053, %v6664
  %v10438 = vmul.f32 %v10054, %v6664
  %v10439 = vmul.f32 %v10055, %v6664
  %v10440 = vmul.f32 %v10056, %v6664
  %v10441 = vmul.f32 %v10057, %v6664
  %v10442 = vmul.f32 %v10058, %v6664
  %v10443 = vmul.f32 %v10059, %v6664
  %v10444 = vmul.f32 %v10060, %v6664
  %v10445 = vmul.f32 %v10061, %v6664
  %v10446 = vmul.f32 %v10062, %v6664
  %v10447 = vmul.f32 %v10063, %v6664
  %v10448 = vmul.f32 %v10064, %v6664
  %v10449 = vmul.f32 %v10097, %v6664
  %v10450 = vmul.f32 %v10098, %v6664
  %v10451 = vmul.f32 %v10163, %v6664
  %v10452 = vmul.f32 %v10164, %v6664
  %v10453 = vmul.f32 %v10229, %v6664
  %v10454 = vmul.f32 %v10230, %v6664
  %v10455 = vmul.f32 %v10295, %v6664
  %v10456 = vmul.f32 %v10296, %v6664
  %v10457 = vmul.f32 %v10361, %v6664
  %v10458 = vmul.f32 %v10362, %v6664
  %v10459 = vmul.f32 %v10427, %v6664
  %v10460 = vmul.f32 %v10428, %v6664
  %v10461 = vadd.f32 %v10395, %v10429
  %v10462 = vadd.f32 %v10396, %v10430
  %v10463 = vadd.f32 %v10397, %v10431
  %v10464 = vadd.f32 %v10398, %v10432
  %v10465 = vadd.f32 %v10399, %v10433
  %v10466 = vadd.f32 %v10400, %v10434
  %v10467 = vadd.f32 %v10401, %v10435
  %v10468 = vadd.f32 %v10402, %v10436
  %v10469 = vadd.f32 %v10403, %v10437
  %v10470 = vadd.f32 %v10404, %v10438
  %v10471 = vadd.f32 %v10405, %v10439
  %v10472 = vadd.f32 %v10406, %v10440
  %v10473 = vadd.f32 %v10407, %v10441
  %v10474 = vadd.f32 %v10408, %v10442
  %v10475 = vadd.f32 %v10409, %v10443
  %v10476 = vadd.f32 %v10410, %v10444
  %v10477 = vadd.f32 %v10411, %v10445
  %v10478 = vadd.f32 %v10412, %v10446
  %v10479 = vadd.f32 %v10413, %v10447
  %v10480 = vadd.f32 %v10414, %v10448
  %v10481 = vadd.f32 %v10415, %v10449
  %v10482 = vadd.f32 %v10416, %v10450
  %v10483 = vadd.f32 %v10417, %v10451
  %v10484 = vadd.f32 %v10418, %v10452
  %v10485 = vadd.f32 %v10419, %v10453
  %v10486 = vadd.f32 %v10420, %v10454
  %v10487 = vadd.f32 %v10421, %v10455
  %v10488 = vadd.f32 %v10422, %v10456
  %v10489 = vadd.f32 %v10423, %v10457
  %v10490 = vadd.f32 %v10424, %v10458
  %v10491 = vadd.f32 %v10425, %v10459
  %v10492 = vadd.f32 %v10426, %v10460
  %v10493 = vmul.f32 %v10461, %v6732
  %v10494 = vmul.f32 %v10462, %v6737
  %v10495 = vmul.f32 %v10463, %v6742
  %v10496 = vmul.f32 %v10464, %v6747
  %v10497 = vmul.f32 %v10465, %v6752
  %v10498 = vmul.f32 %v10466, %v6757
  %v10499 = vmul.f32 %v10467, %v6762
  %v10500 = vmul.f32 %v10468, %v6767
  %v10501 = vmul.f32 %v10469, %v6772
  %v10502 = vmul.f32 %v10470, %v6777
  %v10503 = vmul.f32 %v10471, %v6782
  %v10504 = vmul.f32 %v10472, %v6787
  %v10505 = vmul.f32 %v10473, %v6792
  %v10506 = vmul.f32 %v10474, %v6797
  %v10507 = vmul.f32 %v10475, %v6802
  %v10508 = vmul.f32 %v10476, %v6807
  %v10509 = vmul.f32 %v10477, %v6812
  %v10510 = vmul.f32 %v10478, %v6817
  %v10511 = vmul.f32 %v10479, %v6822
  %v10512 = vmul.f32 %v10480, %v6827
  %v10513 = vmul.f32 %v10481, %v6832
  %v10514 = vmul.f32 %v10482, %v6837
  %v10515 = vmul.f32 %v10483, %v6842
  %v10516 = vmul.f32 %v10484, %v6847
  %v10517 = vmul.f32 %v10485, %v6852
  %v10518 = vmul.f32 %v10486, %v6857
  %v10519 = vmul.f32 %v10487, %v6862
  %v10520 = vmul.f32 %v10488, %v6867
  %v10521 = vmul.f32 %v10489, %v6872
  %v10522 = vmul.f32 %v10490, %v6877
  %v10523 = vmul.f32 %v10491, %v6882
  %v10524 = vmul.f32 %v10492, %v6887
  %v10525 = vadd.f32 %v10001, %v10493
  %v10526 = vadd.f32 %v10002, %v10494
  %v10527 = vadd.f32 %v10003, %v10495
  %v10528 = vadd.f32 %v10004, %v10496
  %v10529 = vadd.f32 %v10005, %v10497
  %v10530 = vadd.f32 %v10006, %v10498
  %v10531 = vadd.f32 %v10007, %v10499
  %v10532 = vadd.f32 %v10008, %v10500
  %v10533 = vadd.f32 %v10009, %v10501
  %v10534 = vadd.f32 %v10010, %v10502
  %v10535 = vadd.f32 %v10011, %v10503
  %v10536 = vadd.f32 %v10012, %v10504
  %v10537 = vadd.f32 %v10013, %v10505
  %v10538 = vadd.f32 %v10014, %v10506
  %v10539 = vadd.f32 %v10015, %v10507
  %v10540 = vadd.f32 %v10016, %v10508
  %v10541 = vadd.f32 %v10017, %v10509
  %v10542 = vadd.f32 %v10018, %v10510
  %v10543 = vadd.f32 %v10019, %v10511
  %v10544 = vadd.f32 %v10020, %v10512
  %v10545 = vadd.f32 %v10021, %v10513
  %v10546 = vadd.f32 %v10022, %v10514
  %v10547 = vadd.f32 %v10023, %v10515
  %v10548 = vadd.f32 %v10024, %v10516
  %v10549 = vadd.f32 %v10025, %v10517
  %v10550 = vadd.f32 %v10026, %v10518
  %v10551 = vadd.f32 %v10027, %v10519
  %v10552 = vadd.f32 %v10028, %v10520
  %v10553 = vadd.f32 %v10029, %v10521
  %v10554 = vadd.f32 %v10030, %v10522
  %v10555 = vadd.f32 %v10031, %v10523
  %v10556 = vadd.f32 %v10032, %v10524
  %v10557 = vld [vmem:[%s5 + $0x2] sm:$0x1]
  %v10558 = vlaneseq
  %v10559 = vshrl.u32 %v10558, 7
  %v10560 = vsub.s32 0, %v10559
  %v10561 = vrot.slane %v10557, %v10560
  %v10562 = vadd.f32 %v6921, %v10561
  %v10563 = vadd.f32 %v6922, %v10561
  %v10564 = vadd.f32 %v6923, %v10561
  %v10565 = vadd.f32 %v6924, %v10561
  %v10566 = vadd.f32 %v6925, %v10561
  %v10567 = vadd.f32 %v6926, %v10561
  %v10568 = vadd.f32 %v6927, %v10561
  %v10569 = vadd.f32 %v6928, %v10561
  %v10570 = vadd.f32 %v6929, %v10561
  %v10571 = vadd.f32 %v6930, %v10561
  %v10572 = vadd.f32 %v6931, %v10561
  %v10573 = vadd.f32 %v6932, %v10561
  %v10574 = vadd.f32 %v6933, %v10561
  %v10575 = vadd.f32 %v6934, %v10561
  %v10576 = vadd.f32 %v6935, %v10561
  %v10577 = vadd.f32 %v6936, %v10561
  %v10578 = vadd.f32 %v6937, %v10561
  %v10579 = vadd.f32 %v6938, %v10561
  %v10580 = vadd.f32 %v6939, %v10561
  %v10581 = vadd.f32 %v6940, %v10561
  %v10582 = vadd.f32 %v6941, %v10561
  %v10583 = vadd.f32 %v6942, %v10561
  %v10584 = vadd.f32 %v6943, %v10561
  %v10585 = vadd.f32 %v6944, %v10561
  %v10586 = vadd.f32 %v6945, %v10561
  %v10587 = vadd.f32 %v6946, %v10561
  %v10588 = vadd.f32 %v6947, %v10561
  %v10589 = vadd.f32 %v6948, %v10561
  %v10590 = vadd.f32 %v6949, %v10561
  %v10591 = vadd.f32 %v6950, %v10561
  %v10592 = vadd.f32 %v6951, %v10561
  %v10593 = vadd.f32 %v6952, %v10561
  %v10594 = vadd.f32 %v10525, %v10561
  %v10595 = vadd.f32 %v10526, %v10561
  %v10596 = vadd.f32 %v10527, %v10561
  %v10597 = vadd.f32 %v10528, %v10561
  %v10598 = vadd.f32 %v10529, %v10561
  %v10599 = vadd.f32 %v10530, %v10561
  %v10600 = vadd.f32 %v10531, %v10561
  %v10601 = vadd.f32 %v10532, %v10561
  %v10602 = vadd.f32 %v10533, %v10561
  %v10603 = vadd.f32 %v10534, %v10561
  %v10604 = vadd.f32 %v10535, %v10561
  %v10605 = vadd.f32 %v10536, %v10561
  %v10606 = vadd.f32 %v10537, %v10561
  %v10607 = vadd.f32 %v10538, %v10561
  %v10608 = vadd.f32 %v10539, %v10561
  %v10609 = vadd.f32 %v10540, %v10561
  %v10610 = vadd.f32 %v10541, %v10561
  %v10611 = vadd.f32 %v10542, %v10561
  %v10612 = vadd.f32 %v10543, %v10561
  %v10613 = vadd.f32 %v10544, %v10561
  %v10614 = vadd.f32 %v10545, %v10561
  %v10615 = vadd.f32 %v10546, %v10561
  %v10616 = vadd.f32 %v10547, %v10561
  %v10617 = vadd.f32 %v10548, %v10561
  %v10618 = vadd.f32 %v10549, %v10561
  %v10619 = vadd.f32 %v10550, %v10561
  %v10620 = vadd.f32 %v10551, %v10561
  %v10621 = vadd.f32 %v10552, %v10561
  %v10622 = vadd.f32 %v10553, %v10561
  %v10623 = vadd.f32 %v10554, %v10561
  %v10624 = vadd.f32 %v10555, %v10561
  %v10625 = vadd.f32 %v10556, %v10561
  %v10626 = vmul.f32 %v1194, 0.5
  %v10627 = vmul.f32 %v1199, 0.5
  %v10628 = vmul.f32 %v1204, 0.5
  %v10629 = vmul.f32 %v1209, 0.5
  %v10630 = vmul.f32 %v1214, 0.5
  %v10631 = vmul.f32 %v1219, 0.5
  %v10632 = vmul.f32 %v1224, 0.5
  %v10633 = vmul.f32 %v1229, 0.5
  %v10634 = vmul.f32 %v1234, 0.5
  %v10635 = vmul.f32 %v1239, 0.5
  %v10636 = vmul.f32 %v1244, 0.5
  %v10637 = vmul.f32 %v1249, 0.5
  %v10638 = vmul.f32 %v1254, 0.5
  %v10639 = vmul.f32 %v1259, 0.5
  %v10640 = vmul.f32 %v1264, 0.5
  %v10641 = vmul.f32 %v1269, 0.5
  %v10642 = vmul.f32 %v1274, 0.5
  %v10643 = vmul.f32 %v1279, 0.5
  %v10644 = vmul.f32 %v1284, 0.5
  %v10645 = vmul.f32 %v1289, 0.5
  %v10646 = vmul.f32 %v1294, 0.5
  %v10647 = vmul.f32 %v1299, 0.5
  %v10648 = vmul.f32 %v1304, 0.5
  %v10649 = vmul.f32 %v1309, 0.5
  %v10650 = vmul.f32 %v1314, 0.5
  %v10651 = vmul.f32 %v1319, 0.5
  %v10652 = vmul.f32 %v1324, 0.5
  %v10653 = vmul.f32 %v1329, 0.5
  %v10654 = vmul.f32 %v1334, 0.5
  %v10655 = vmul.f32 %v1339, 0.5
  %v10656 = vmul.f32 %v1344, 0.5
  %v10657 = vmul.f32 %v1349, 0.5
  %v10658 = vmul.f32 %v1354, 0.5
  %v10659 = vmul.f32 %v1359, 0.5
  %v10660 = vmul.f32 %v1364, 0.5
  %v10661 = vmul.f32 %v1369, 0.5
  %v10662 = vmul.f32 %v1374, 0.5
  %v10663 = vmul.f32 %v1379, 0.5
  %v10664 = vmul.f32 %v1384, 0.5
  %v10665 = vmul.f32 %v1389, 0.5
  %v10666 = vmul.f32 %v1394, 0.5
  %v10667 = vmul.f32 %v1399, 0.5
  %v10668 = vmul.f32 %v1404, 0.5
  %v10669 = vmul.f32 %v1409, 0.5
  %v10670 = vmul.f32 %v1414, 0.5
  %v10671 = vmul.f32 %v1419, 0.5
  %v10672 = vmul.f32 %v1424, 0.5
  %v10673 = vmul.f32 %v1429, 0.5
  %v10674 = vmul.f32 %v1434, 0.5
  %v10675 = vmul.f32 %v1439, 0.5
  %v10676 = vmul.f32 %v1444, 0.5
  %v10677 = vmul.f32 %v1449, 0.5
  %v10678 = vmul.f32 %v1454, 0.5
  %v10679 = vmul.f32 %v1459, 0.5
  %v10680 = vmul.f32 %v1464, 0.5
  %v10681 = vmul.f32 %v1469, 0.5
  %v10682 = vmul.f32 %v1474, 0.5
  %v10683 = vmul.f32 %v1479, 0.5
  %v10684 = vmul.f32 %v1484, 0.5
  %v10685 = vmul.f32 %v1489, 0.5
  %v10686 = vmul.f32 %v1494, 0.5
  %v10687 = vmul.f32 %v1499, 0.5
  %v10688 = vmul.f32 %v1504, 0.5
  %v10689 = vmul.f32 %v1509, 0.5
  %v10690 = vmul.f32 %v1194, 0.70710677
  %v10691 = vmul.f32 %v1199, 0.70710677
  %v10692 = vmul.f32 %v1204, 0.70710677
  %v10693 = vmul.f32 %v1209, 0.70710677
  %v10694 = vmul.f32 %v1214, 0.70710677
  %v10695 = vmul.f32 %v1219, 0.70710677
  %v10696 = vmul.f32 %v1224, 0.70710677
  %v10697 = vmul.f32 %v1229, 0.70710677
  %v10698 = vmul.f32 %v1234, 0.70710677
  %v10699 = vmul.f32 %v1239, 0.70710677
  %v10700 = vmul.f32 %v1244, 0.70710677
  %v10701 = vmul.f32 %v1249, 0.70710677
  %v10702 = vmul.f32 %v1254, 0.70710677
  %v10703 = vmul.f32 %v1259, 0.70710677
  %v10704 = vmul.f32 %v1264, 0.70710677
  %v10705 = vmul.f32 %v1269, 0.70710677
  %v10706 = vmul.f32 %v1274, 0.70710677
  %v10707 = vmul.f32 %v1279, 0.70710677
  %v10708 = vmul.f32 %v1284, 0.70710677
  %v10709 = vmul.f32 %v1289, 0.70710677
  %v10710 = vmul.f32 %v1294, 0.70710677
  %v10711 = vmul.f32 %v1299, 0.70710677
  %v10712 = vmul.f32 %v1304, 0.70710677
  %v10713 = vmul.f32 %v1309, 0.70710677
  %v10714 = vmul.f32 %v1314, 0.70710677
  %v10715 = vmul.f32 %v1319, 0.70710677
  %v10716 = vmul.f32 %v1324, 0.70710677
  %v10717 = vmul.f32 %v1329, 0.70710677
  %v10718 = vmul.f32 %v1334, 0.70710677
  %v10719 = vmul.f32 %v1339, 0.70710677
  %v10720 = vmul.f32 %v1344, 0.70710677
  %v10721 = vmul.f32 %v1349, 0.70710677
  %v10722 = vmul.f32 %v1354, 0.70710677
  %v10723 = vmul.f32 %v1359, 0.70710677
  %v10724 = vmul.f32 %v1364, 0.70710677
  %v10725 = vmul.f32 %v1369, 0.70710677
  %v10726 = vmul.f32 %v1374, 0.70710677
  %v10727 = vmul.f32 %v1379, 0.70710677
  %v10728 = vmul.f32 %v1384, 0.70710677
  %v10729 = vmul.f32 %v1389, 0.70710677
  %v10730 = vmul.f32 %v1394, 0.70710677
  %v10731 = vmul.f32 %v1399, 0.70710677
  %v10732 = vmul.f32 %v1404, 0.70710677
  %v10733 = vmul.f32 %v1409, 0.70710677
  %v10734 = vmul.f32 %v1414, 0.70710677
  %v10735 = vmul.f32 %v1419, 0.70710677
  %v10736 = vmul.f32 %v1424, 0.70710677
  %v10737 = vmul.f32 %v1429, 0.70710677
  %v10738 = vmul.f32 %v1434, 0.70710677
  %v10739 = vmul.f32 %v1439, 0.70710677
  %v10740 = vmul.f32 %v1444, 0.70710677
  %v10741 = vmul.f32 %v1449, 0.70710677
  %v10742 = vmul.f32 %v1454, 0.70710677
  %v10743 = vmul.f32 %v1459, 0.70710677
  %v10744 = vmul.f32 %v1464, 0.70710677
  %v10745 = vmul.f32 %v1469, 0.70710677
  %v10746 = vmul.f32 %v1474, 0.70710677
  %v10747 = vmul.f32 %v1479, 0.70710677
  %v10748 = vmul.f32 %v1484, 0.70710677
  %v10749 = vmul.f32 %v1489, 0.70710677
  %v10750 = vmul.f32 %v1494, 0.70710677
  %v10751 = vmul.f32 %v1499, 0.70710677
  %v10752 = vmul.f32 %v1504, 0.70710677
  %v10753 = vmul.f32 %v1509, 0.70710677
  %v10754 = verf.f32.pop %v10690
  %v10755 = verf.f32.pop %v10691
  %v10756 = verf.f32.pop %v10692
  %v10757 = verf.f32.pop %v10693
  %v10758 = verf.f32.pop %v10694
  %v10759 = verf.f32.pop %v10695
  %v10760 = verf.f32.pop %v10696
  %v10761 = verf.f32.pop %v10697
  %v10762 = verf.f32.pop %v10698
  %v10763 = verf.f32.pop %v10699
  %v10764 = verf.f32.pop %v10700
  %v10765 = verf.f32.pop %v10701
  %v10766 = verf.f32.pop %v10702
  %v10767 = verf.f32.pop %v10703
  %v10768 = verf.f32.pop %v10704
  %v10769 = verf.f32.pop %v10705
  %v10770 = verf.f32.pop %v10706
  %v10771 = verf.f32.pop %v10707
  %v10772 = verf.f32.pop %v10708
  %v10773 = verf.f32.pop %v10709
  %v10774 = verf.f32.pop %v10710
  %v10775 = verf.f32.pop %v10711
  %v10776 = verf.f32.pop %v10712
  %v10777 = verf.f32.pop %v10713
  %v10778 = verf.f32.pop %v10714
  %v10779 = verf.f32.pop %v10715
  %v10780 = verf.f32.pop %v10716
  %v10781 = verf.f32.pop %v10717
  %v10782 = verf.f32.pop %v10718
  %v10783 = verf.f32.pop %v10719
  %v10784 = verf.f32.pop %v10720
  %v10785 = verf.f32.pop %v10721
  %v10786 = verf.f32.pop %v10722
  %v10787 = verf.f32.pop %v10723
  %v10788 = verf.f32.pop %v10724
  %v10789 = verf.f32.pop %v10725
  %v10790 = verf.f32.pop %v10726
  %v10791 = verf.f32.pop %v10727
  %v10792 = verf.f32.pop %v10728
  %v10793 = verf.f32.pop %v10729
  %v10794 = verf.f32.pop %v10730
  %v10795 = verf.f32.pop %v10731
  %v10796 = verf.f32.pop %v10732
  %v10797 = verf.f32.pop %v10733
  %v10798 = verf.f32.pop %v10734
  %v10799 = verf.f32.pop %v10735
  %v10800 = verf.f32.pop %v10736
  %v10801 = verf.f32.pop %v10737
  %v10802 = verf.f32.pop %v10738
  %v10803 = verf.f32.pop %v10739
  %v10804 = verf.f32.pop %v10740
  %v10805 = verf.f32.pop %v10741
  %v10806 = verf.f32.pop %v10742
  %v10807 = verf.f32.pop %v10743
  %v10808 = verf.f32.pop %v10744
  %v10809 = verf.f32.pop %v10745
  %v10810 = verf.f32.pop %v10746
  %v10811 = verf.f32.pop %v10747
  %v10812 = verf.f32.pop %v10748
  %v10813 = verf.f32.pop %v10749
  %v10814 = verf.f32.pop %v10750
  %v10815 = verf.f32.pop %v10751
  %v10816 = verf.f32.pop %v10752
  %v10817 = verf.f32.pop %v10753
  %v10818 = vadd.f32 %v10754, 1.0
  %v10819 = vadd.f32 %v10755, 1.0
  %v10820 = vadd.f32 %v10756, 1.0
  %v10821 = vadd.f32 %v10757, 1.0
  %v10822 = vadd.f32 %v10758, 1.0
  %v10823 = vadd.f32 %v10759, 1.0
  %v10824 = vadd.f32 %v10760, 1.0
  %v10825 = vadd.f32 %v10761, 1.0
  %v10826 = vadd.f32 %v10762, 1.0
  %v10827 = vadd.f32 %v10763, 1.0
  %v10828 = vadd.f32 %v10764, 1.0
  %v10829 = vadd.f32 %v10765, 1.0
  %v10830 = vadd.f32 %v10766, 1.0
  %v10831 = vadd.f32 %v10767, 1.0
  %v10832 = vadd.f32 %v10768, 1.0
  %v10833 = vadd.f32 %v10769, 1.0
  %v10834 = vadd.f32 %v10770, 1.0
  %v10835 = vadd.f32 %v10771, 1.0
  %v10836 = vadd.f32 %v10772, 1.0
  %v10837 = vadd.f32 %v10773, 1.0
  %v10838 = vadd.f32 %v10774, 1.0
  %v10839 = vadd.f32 %v10775, 1.0
  %v10840 = vadd.f32 %v10776, 1.0
  %v10841 = vadd.f32 %v10777, 1.0
  %v10842 = vadd.f32 %v10778, 1.0
  %v10843 = vadd.f32 %v10779, 1.0
  %v10844 = vadd.f32 %v10780, 1.0
  %v10845 = vadd.f32 %v10781, 1.0
  %v10846 = vadd.f32 %v10782, 1.0
  %v10847 = vadd.f32 %v10783, 1.0
  %v10848 = vadd.f32 %v10784, 1.0
  %v10849 = vadd.f32 %v10785, 1.0
  %v10850 = vadd.f32 %v10786, 1.0
  %v10851 = vadd.f32 %v10787, 1.0
  %v10852 = vadd.f32 %v10788, 1.0
  %v10853 = vadd.f32 %v10789, 1.0
  %v10854 = vadd.f32 %v10790, 1.0
  %v10855 = vadd.f32 %v10791, 1.0
  %v10856 = vadd.f32 %v10792, 1.0
  %v10857 = vadd.f32 %v10793, 1.0
  %v10858 = vadd.f32 %v10794, 1.0
  %v10859 = vadd.f32 %v10795, 1.0
  %v10860 = vadd.f32 %v10796, 1.0
  %v10861 = vadd.f32 %v10797, 1.0
  %v10862 = vadd.f32 %v10798, 1.0
  %v10863 = vadd.f32 %v10799, 1.0
  %v10864 = vadd.f32 %v10800, 1.0
  %v10865 = vadd.f32 %v10801, 1.0
  %v10866 = vadd.f32 %v10802, 1.0
  %v10867 = vadd.f32 %v10803, 1.0
  %v10868 = vadd.f32 %v10804, 1.0
  %v10869 = vadd.f32 %v10805, 1.0
  %v10870 = vadd.f32 %v10806, 1.0
  %v10871 = vadd.f32 %v10807, 1.0
  %v10872 = vadd.f32 %v10808, 1.0
  %v10873 = vadd.f32 %v10809, 1.0
  %v10874 = vadd.f32 %v10810, 1.0
  %v10875 = vadd.f32 %v10811, 1.0
  %v10876 = vadd.f32 %v10812, 1.0
  %v10877 = vadd.f32 %v10813, 1.0
  %v10878 = vadd.f32 %v10814, 1.0
  %v10879 = vadd.f32 %v10815, 1.0
  %v10880 = vadd.f32 %v10816, 1.0
  %v10881 = vadd.f32 %v10817, 1.0
  %v10882 = vmul.f32 %v10626, %v10818
  %v10883 = vmul.f32 %v10627, %v10819
  %v10884 = vmul.f32 %v10628, %v10820
  %v10885 = vmul.f32 %v10629, %v10821
  %v10886 = vmul.f32 %v10630, %v10822
  %v10887 = vmul.f32 %v10631, %v10823
  %v10888 = vmul.f32 %v10632, %v10824
  %v10889 = vmul.f32 %v10633, %v10825
  %v10890 = vmul.f32 %v10634, %v10826
  %v10891 = vmul.f32 %v10635, %v10827
  %v10892 = vmul.f32 %v10636, %v10828
  %v10893 = vmul.f32 %v10637, %v10829
  %v10894 = vmul.f32 %v10638, %v10830
  %v10895 = vmul.f32 %v10639, %v10831
  %v10896 = vmul.f32 %v10640, %v10832
  %v10897 = vmul.f32 %v10641, %v10833
  %v10898 = vmul.f32 %v10642, %v10834
  %v10899 = vmul.f32 %v10643, %v10835
  %v10900 = vmul.f32 %v10644, %v10836
  %v10901 = vmul.f32 %v10645, %v10837
  %v10902 = vmul.f32 %v10646, %v10838
  %v10903 = vmul.f32 %v10647, %v10839
  %v10904 = vmul.f32 %v10648, %v10840
  %v10905 = vmul.f32 %v10649, %v10841
  %v10906 = vmul.f32 %v10650, %v10842
  %v10907 = vmul.f32 %v10651, %v10843
  %v10908 = vmul.f32 %v10652, %v10844
  %v10909 = vmul.f32 %v10653, %v10845
  %v10910 = vmul.f32 %v10654, %v10846
  %v10911 = vmul.f32 %v10655, %v10847
  %v10912 = vmul.f32 %v10656, %v10848
  %v10913 = vmul.f32 %v10657, %v10849
  %v10914 = vmul.f32 %v10658, %v10850
  %v10915 = vmul.f32 %v10659, %v10851
  %v10916 = vmul.f32 %v10660, %v10852
  %v10917 = vmul.f32 %v10661, %v10853
  %v10918 = vmul.f32 %v10662, %v10854
  %v10919 = vmul.f32 %v10663, %v10855
  %v10920 = vmul.f32 %v10664, %v10856
  %v10921 = vmul.f32 %v10665, %v10857
  %v10922 = vmul.f32 %v10666, %v10858
  %v10923 = vmul.f32 %v10667, %v10859
  %v10924 = vmul.f32 %v10668, %v10860
  %v10925 = vmul.f32 %v10669, %v10861
  %v10926 = vmul.f32 %v10670, %v10862
  %v10927 = vmul.f32 %v10671, %v10863
  %v10928 = vmul.f32 %v10672, %v10864
  %v10929 = vmul.f32 %v10673, %v10865
  %v10930 = vmul.f32 %v10674, %v10866
  %v10931 = vmul.f32 %v10675, %v10867
  %v10932 = vmul.f32 %v10676, %v10868
  %v10933 = vmul.f32 %v10677, %v10869
  %v10934 = vmul.f32 %v10678, %v10870
  %v10935 = vmul.f32 %v10679, %v10871
  %v10936 = vmul.f32 %v10680, %v10872
  %v10937 = vmul.f32 %v10681, %v10873
  %v10938 = vmul.f32 %v10682, %v10874
  %v10939 = vmul.f32 %v10683, %v10875
  %v10940 = vmul.f32 %v10684, %v10876
  %v10941 = vmul.f32 %v10685, %v10877
  %v10942 = vmul.f32 %v10686, %v10878
  %v10943 = vmul.f32 %v10687, %v10879
  %v10944 = vmul.f32 %v10688, %v10880
  %v10945 = vmul.f32 %v10689, %v10881
  %v10946 = vmul.f32 %v10882, %v10562
  %v10947 = vmul.f32 %v10883, %v10563
  %v10948 = vmul.f32 %v10884, %v10564
  %v10949 = vmul.f32 %v10885, %v10565
  %v10950 = vmul.f32 %v10886, %v10566
  %v10951 = vmul.f32 %v10887, %v10567
  %v10952 = vmul.f32 %v10888, %v10568
  %v10953 = vmul.f32 %v10889, %v10569
  %v10954 = vmul.f32 %v10890, %v10570
  %v10955 = vmul.f32 %v10891, %v10571
  %v10956 = vmul.f32 %v10892, %v10572
  %v10957 = vmul.f32 %v10893, %v10573
  %v10958 = vmul.f32 %v10894, %v10574
  %v10959 = vmul.f32 %v10895, %v10575
  %v10960 = vmul.f32 %v10896, %v10576
  %v10961 = vmul.f32 %v10897, %v10577
  %v10962 = vmul.f32 %v10898, %v10578
  %v10963 = vmul.f32 %v10899, %v10579
  %v10964 = vmul.f32 %v10900, %v10580
  %v10965 = vmul.f32 %v10901, %v10581
  %v10966 = vmul.f32 %v10902, %v10582
  %v10967 = vmul.f32 %v10903, %v10583
  %v10968 = vmul.f32 %v10904, %v10584
  %v10969 = vmul.f32 %v10905, %v10585
  %v10970 = vmul.f32 %v10906, %v10586
  %v10971 = vmul.f32 %v10907, %v10587
  %v10972 = vmul.f32 %v10908, %v10588
  %v10973 = vmul.f32 %v10909, %v10589
  %v10974 = vmul.f32 %v10910, %v10590
  %v10975 = vmul.f32 %v10911, %v10591
  %v10976 = vmul.f32 %v10912, %v10592
  %v10977 = vmul.f32 %v10913, %v10593
  %v10978 = vmul.f32 %v10914, %v10594
  %v10979 = vmul.f32 %v10915, %v10595
  %v10980 = vmul.f32 %v10916, %v10596
  %v10981 = vmul.f32 %v10917, %v10597
  %v10982 = vmul.f32 %v10918, %v10598
  %v10983 = vmul.f32 %v10919, %v10599
  %v10984 = vmul.f32 %v10920, %v10600
  %v10985 = vmul.f32 %v10921, %v10601
  %v10986 = vmul.f32 %v10922, %v10602
  %v10987 = vmul.f32 %v10923, %v10603
  %v10988 = vmul.f32 %v10924, %v10604
  %v10989 = vmul.f32 %v10925, %v10605
  %v10990 = vmul.f32 %v10926, %v10606
  %v10991 = vmul.f32 %v10927, %v10607
  %v10992 = vmul.f32 %v10928, %v10608
  %v10993 = vmul.f32 %v10929, %v10609
  %v10994 = vmul.f32 %v10930, %v10610
  %v10995 = vmul.f32 %v10931, %v10611
  %v10996 = vmul.f32 %v10932, %v10612
  %v10997 = vmul.f32 %v10933, %v10613
  %v10998 = vmul.f32 %v10934, %v10614
  %v10999 = vmul.f32 %v10935, %v10615
  %v11000 = vmul.f32 %v10936, %v10616
  %v11001 = vmul.f32 %v10937, %v10617
  %v11002 = vmul.f32 %v10938, %v10618
  %v11003 = vmul.f32 %v10939, %v10619
  %v11004 = vmul.f32 %v10940, %v10620
  %v11005 = vmul.f32 %v10941, %v10621
  %v11006 = vmul.f32 %v10942, %v10622
  %v11007 = vmul.f32 %v10943, %v10623
  %v11008 = vmul.f32 %v10944, %v10624
  %v11009 = vmul.f32 %v10945, %v10625
  %v11010 = vld [vmem:[%s4] sm:$0xff]
  %v11011 = vld [vmem:[%s4 + $0x8] sm:$0xff]
  %v11012 = vld [vmem:[%s4 + $0x10] sm:$0xff]
  %v11013 = vld [vmem:[%s4 + $0x18] sm:$0xff]
  %v11014 = vld [vmem:[%s5 + $0x3] sm:$0x1]
  %v11015 = vlaneseq
  %v11016 = vshrl.u32 %v11015, 7
  %v11017 = vsub.s32 0, %v11016
  %v11018 = vrot.slane %v11014, %v11017
  %v11020 = vsel %vm1907, %v10946, 0
  %v11023 = vsel %vm1907, %v10947, 0
  %v11026 = vsel %vm1907, %v10948, 0
  %v11029 = vsel %vm1907, %v10949, 0
  %v11032 = vsel %vm1907, %v10950, 0
  %v11035 = vsel %vm1907, %v10951, 0
  %v11038 = vsel %vm1907, %v10952, 0
  %v11041 = vsel %vm1907, %v10953, 0
  %v11044 = vsel %vm1907, %v10954, 0
  %v11047 = vsel %vm1907, %v10955, 0
  %v11050 = vsel %vm1907, %v10956, 0
  %v11053 = vsel %vm1907, %v10957, 0
  %v11056 = vsel %vm1907, %v10958, 0
  %v11059 = vsel %vm1907, %v10959, 0
  %v11062 = vsel %vm1907, %v10960, 0
  %v11065 = vsel %vm1907, %v10961, 0
  %v11068 = vsel %vm1907, %v10962, 0
  %v11071 = vsel %vm1907, %v10963, 0
  %v11074 = vsel %vm1907, %v10964, 0
  %v11077 = vsel %vm1907, %v10965, 0
  %v11080 = vsel %vm1907, %v10966, 0
  %v11083 = vsel %vm1907, %v10967, 0
  %v11086 = vsel %vm1907, %v10968, 0
  %v11089 = vsel %vm1907, %v10969, 0
  %v11092 = vsel %vm1907, %v10970, 0
  %v11095 = vsel %vm1907, %v10971, 0
  %v11098 = vsel %vm1907, %v10972, 0
  %v11101 = vsel %vm1907, %v10973, 0
  %v11104 = vsel %vm1907, %v10974, 0
  %v11107 = vsel %vm1907, %v10975, 0
  %v11110 = vsel %vm1907, %v10976, 0
  %v11113 = vsel %vm1907, %v10977, 0
  %v11116 = vsel %vm1907, %v10978, 0
  %v11119 = vsel %vm1907, %v10979, 0
  %v11122 = vsel %vm1907, %v10980, 0
  %v11125 = vsel %vm1907, %v10981, 0
  %v11128 = vsel %vm1907, %v10982, 0
  %v11131 = vsel %vm1907, %v10983, 0
  %v11134 = vsel %vm1907, %v10984, 0
  %v11137 = vsel %vm1907, %v10985, 0
  %v11140 = vsel %vm1907, %v10986, 0
  %v11143 = vsel %vm1907, %v10987, 0
  %v11146 = vsel %vm1907, %v10988, 0
  %v11149 = vsel %vm1907, %v10989, 0
  %v11152 = vsel %vm1907, %v10990, 0
  %v11155 = vsel %vm1907, %v10991, 0
  %v11158 = vsel %vm1907, %v10992, 0
  %v11161 = vsel %vm1907, %v10993, 0
  %v11164 = vsel %vm1907, %v10994, 0
  %v11167 = vsel %vm1907, %v10995, 0
  %v11170 = vsel %vm1907, %v10996, 0
  %v11173 = vsel %vm1907, %v10997, 0
  %v11176 = vsel %vm1907, %v10998, 0
  %v11179 = vsel %vm1907, %v10999, 0
  %v11182 = vsel %vm1907, %v11000, 0
  %v11185 = vsel %vm1907, %v11001, 0
  %v11188 = vsel %vm1907, %v11002, 0
  %v11191 = vsel %vm1907, %v11003, 0
  %v11194 = vsel %vm1907, %v11004, 0
  %v11197 = vsel %vm1907, %v11005, 0
  %v11200 = vsel %vm1907, %v11006, 0
  %v11203 = vsel %vm1907, %v11007, 0
  %v11206 = vsel %vm1907, %v11008, 0
  %v11209 = vsel %vm1907, %v11009, 0
  %11211 = vmatprep.subr.mxu0 0.0
  %11212 = vmatpush1.msra.mxu0 %v11010
  %11213 = vmatprep.subr.mxu0 0.0
  %11214 = vmatpush1.msra.mxu0 %v11011
  %11215 = vmatprep.subr.mxu0 0.0
  %11216 = vmatpush1.msra.mxu0 %v11012
  %11217 = vmatprep.subr.mxu0 0.0
  %11218 = vmatpush1.msra.mxu0 %v11013
  %11219 = vmatprep.subr.mxu0 0.0
  %11220 = vmatpush1.msra.mxu0 0.0
  %11221 = vmatprep.subr.mxu0 0.0
  %11222 = vmatpush1.msra.mxu0 0.0
  %11223 = vmatprep.subr.mxu0 0.0
  %11224 = vmatpush1.msra.mxu0 0.0
  %11225 = vmatprep.subr.mxu0 0.0
  %11226 = vmatpush1.msra.mxu0 0.0
  %11227 = vmatprep.subr.mxu0 0.0
  %11228 = vmatpush1.msra.mxu0 0.0
  %11229 = vmatprep.subr.mxu0 0.0
  %11230 = vmatpush1.msra.mxu0 0.0
  %11231 = vmatprep.subr.mxu0 0.0
  %11232 = vmatpush1.msra.mxu0 0.0
  %11233 = vmatprep.subr.mxu0 0.0
  %11234 = vmatpush1.msra.mxu0 0.0
  %11235 = vmatprep.subr.mxu0 0.0
  %11236 = vmatpush1.msra.mxu0 0.0
  %11237 = vmatprep.subr.mxu0 0.0
  %11238 = vmatpush1.msra.mxu0 0.0
  %11239 = vmatprep.subr.mxu0 0.0
  %11240 = vmatpush1.msra.mxu0 0.0
  %11241 = vmatprep.subr.mxu0 0.0
  %11242 = vmatpush1.msra.mxu0 0.0
  %11243 = vmatprep.subr.mxu0 0.0
  %11244 = vmatpush1.msra.mxu0 0.0
  %11245 = vmatprep.subr.mxu0 0.0
  %11246 = vmatpush1.msra.mxu0 0.0
  %11247 = vmatprep.subr.mxu0 0.0
  %11248 = vmatpush1.msra.mxu0 0.0
  %11249 = vmatprep.subr.mxu0 0.0
  %11250 = vmatpush1.msra.mxu0 0.0
  %11251 = vmatprep.subr.mxu0 0.0
  %11252 = vmatpush1.msra.mxu0 0.0
  %11253 = vmatprep.subr.mxu0 0.0
  %11254 = vmatpush1.msra.mxu0 0.0
  %11255 = vmatprep.subr.mxu0 0.0
  %11256 = vmatpush1.msra.mxu0 0.0
  %11257 = vmatprep.subr.mxu0 0.0
  %11258 = vmatpush1.msra.mxu0 0.0
  %11259 = vmatprep.subr.mxu0 0.0
  %11260 = vmatpush1.msra.mxu0 0.0
  %11261 = vmatprep.subr.mxu0 0.0
  %11262 = vmatpush1.msra.mxu0 0.0
  %11263 = vmatprep.subr.mxu0 0.0
  %11264 = vmatpush1.msra.mxu0 0.0
  %11265 = vmatprep.subr.mxu0 0.0
  %11266 = vmatpush1.msra.mxu0 0.0
  %11267 = vmatprep.subr.mxu0 0.0
  %11268 = vmatpush1.msra.mxu0 0.0
  %11269 = vmatprep.subr.mxu0 0.0
  %11270 = vmatpush1.msra.mxu0 0.0
  %11271 = vmatprep.subr.mxu0 0.0
  %11272 = vmatpush1.msra.mxu0 0.0
  %11273 = vmatprep.subr.mxu0 0.0
  %11274 = vmatpush1.msra.mxu0 0.0
  %11275 = vmatprep.mubr.f32.mxu0 0.0
  %11276 = vmatmul.mubr.f32.gmra.mrb[0].mxu0 %v11020
  %v11277 = vpop.f32.mrb[0].mxu0
  %v11278 = vadd.f32 %v11018, %v11277
  %v11279 = vpop.f32.mrb[0].mxu0
  %11280 = vmatprep.mubr.f32.mxu0 0.0
  %11281 = vmatmul.mubr.f32.gmra.mrb[0].mxu0 %v11023
  %v11282 = vpop.f32.mrb[0].mxu0
  %v11283 = vadd.f32 %v11018, %v11282
  %v11284 = vpop.f32.mrb[0].mxu0
  %11285 = vmatprep.mubr.f32.mxu0 0.0
  %11286 = vmatmul.mubr.f32.gmra.mrb[0].mxu0 %v11026
  %v11287 = vpop.f32.mrb[0].mxu0
  %v11288 = vadd.f32 %v11018, %v11287
  %v11289 = vpop.f32.mrb[0].mxu0
  %11290 = vmatprep.mubr.f32.mxu0 0.0
  %11291 = vmatmul.mubr.f32.gmra.mrb[0].mxu0 %v11029
  %v11292 = vpop.f32.mrb[0].mxu0
  %v11293 = vadd.f32 %v11018, %v11292
  %v11294 = vpop.f32.mrb[0].mxu0
  %11295 = vmatprep.mubr.f32.mxu0 0.0
  %11296 = vmatmul.mubr.f32.gmra.mrb[0].mxu0 %v11032
  %v11297 = vpop.f32.mrb[0].mxu0
  %v11298 = vadd.f32 %v11018, %v11297
  %v11299 = vpop.f32.mrb[0].mxu0
  %11300 = vmatprep.mubr.f32.mxu0 0.0
  %11301 = vmatmul.mubr.f32.gmra.mrb[0].mxu0 %v11035
  %v11302 = vpop.f32.mrb[0].mxu0
  %v11303 = vadd.f32 %v11018, %v11302
  %v11304 = vpop.f32.mrb[0].mxu0
  %11305 = vmatprep.mubr.f32.mxu0 0.0
  %11306 = vmatmul.mubr.f32.gmra.mrb[0].mxu0 %v11038
  %v11307 = vpop.f32.mrb[0].mxu0
  %v11308 = vadd.f32 %v11018, %v11307
  %v11309 = vpop.f32.mrb[0].mxu0
  %11310 = vmatprep.mubr.f32.mxu0 0.0
  %11311 = vmatmul.mubr.f32.gmra.mrb[0].mxu0 %v11041
  %v11312 = vpop.f32.mrb[0].mxu0
  %v11313 = vadd.f32 %v11018, %v11312
  %v11314 = vpop.f32.mrb[0].mxu0
  %11315 = vmatprep.mubr.f32.mxu0 0.0
  %11316 = vmatmul.mubr.f32.gmra.mrb[0].mxu0 %v11044
  %v11317 = vpop.f32.mrb[0].mxu0
  %v11318 = vadd.f32 %v11018, %v11317
  %v11319 = vpop.f32.mrb[0].mxu0
  %11320 = vmatprep.mubr.f32.mxu0 0.0
  %11321 = vmatmul.mubr.f32.gmra.mrb[0].mxu0 %v11047
  %v11322 = vpop.f32.mrb[0].mxu0
  %v11323 = vadd.f32 %v11018, %v11322
  %v11324 = vpop.f32.mrb[0].mxu0
  %11325 = vmatprep.mubr.f32.mxu0 0.0
  %11326 = vmatmul.mubr.f32.gmra.mrb[0].mxu0 %v11050
  %v11327 = vpop.f32.mrb[0].mxu0
  %v11328 = vadd.f32 %v11018, %v11327
  %v11329 = vpop.f32.mrb[0].mxu0
  %11330 = vmatprep.mubr.f32.mxu0 0.0
  %11331 = vmatmul.mubr.f32.gmra.mrb[0].mxu0 %v11053
  %v11332 = vpop.f32.mrb[0].mxu0
  %v11333 = vadd.f32 %v11018, %v11332
  %v11334 = vpop.f32.mrb[0].mxu0
  %11335 = vmatprep.mubr.f32.mxu0 0.0
  %11336 = vmatmul.mubr.f32.gmra.mrb[0].mxu0 %v11056
  %v11337 = vpop.f32.mrb[0].mxu0
  %v11338 = vadd.f32 %v11018, %v11337
  %v11339 = vpop.f32.mrb[0].mxu0
  %11340 = vmatprep.mubr.f32.mxu0 0.0
  %11341 = vmatmul.mubr.f32.gmra.mrb[0].mxu0 %v11059
  %v11342 = vpop.f32.mrb[0].mxu0
  %v11343 = vadd.f32 %v11018, %v11342
  %v11344 = vpop.f32.mrb[0].mxu0
  %11345 = vmatprep.mubr.f32.mxu0 0.0
  %11346 = vmatmul.mubr.f32.gmra.mrb[0].mxu0 %v11062
  %v11347 = vpop.f32.mrb[0].mxu0
  %v11348 = vadd.f32 %v11018, %v11347
  %v11349 = vpop.f32.mrb[0].mxu0
  %11350 = vmatprep.mubr.f32.mxu0 0.0
  %11351 = vmatmul.mubr.f32.gmra.mrb[0].mxu0 %v11065
  %v11352 = vpop.f32.mrb[0].mxu0
  %v11353 = vadd.f32 %v11018, %v11352
  %v11354 = vpop.f32.mrb[0].mxu0
  %11355 = vmatprep.mubr.f32.mxu0 0.0
  %11356 = vmatmul.mubr.f32.gmra.mrb[0].mxu0 %v11068
  %v11357 = vpop.f32.mrb[0].mxu0
  %v11358 = vadd.f32 %v11018, %v11357
  %v11359 = vpop.f32.mrb[0].mxu0
  %11360 = vmatprep.mubr.f32.mxu0 0.0
  %11361 = vmatmul.mubr.f32.gmra.mrb[0].mxu0 %v11071
  %v11362 = vpop.f32.mrb[0].mxu0
  %v11363 = vadd.f32 %v11018, %v11362
  %v11364 = vpop.f32.mrb[0].mxu0
  %11365 = vmatprep.mubr.f32.mxu0 0.0
  %11366 = vmatmul.mubr.f32.gmra.mrb[0].mxu0 %v11074
  %v11367 = vpop.f32.mrb[0].mxu0
  %v11368 = vadd.f32 %v11018, %v11367
  %v11369 = vpop.f32.mrb[0].mxu0
  %11370 = vmatprep.mubr.f32.mxu0 0.0
  %11371 = vmatmul.mubr.f32.gmra.mrb[0].mxu0 %v11077
  %v11372 = vpop.f32.mrb[0].mxu0
  %v11373 = vadd.f32 %v11018, %v11372
  %v11374 = vpop.f32.mrb[0].mxu0
  %11375 = vmatprep.mubr.f32.mxu0 0.0
  %11376 = vmatmul.mubr.f32.gmra.mrb[0].mxu0 %v11080
  %v11377 = vpop.f32.mrb[0].mxu0
  %v11378 = vadd.f32 %v11018, %v11377
  %v11379 = vpop.f32.mrb[0].mxu0
  %11380 = vmatprep.mubr.f32.mxu0 0.0
  %11381 = vmatmul.mubr.f32.gmra.mrb[0].mxu0 %v11083
  %v11382 = vpop.f32.mrb[0].mxu0
  %v11383 = vadd.f32 %v11018, %v11382
  %v11384 = vpop.f32.mrb[0].mxu0
  %11385 = vmatprep.mubr.f32.mxu0 0.0
  %11386 = vmatmul.mubr.f32.gmra.mrb[0].mxu0 %v11086
  %v11387 = vpop.f32.mrb[0].mxu0
  %v11388 = vadd.f32 %v11018, %v11387
  %v11389 = vpop.f32.mrb[0].mxu0
  %11390 = vmatprep.mubr.f32.mxu0 0.0
  %11391 = vmatmul.mubr.f32.gmra.mrb[0].mxu0 %v11089
  %v11392 = vpop.f32.mrb[0].mxu0
  %v11393 = vadd.f32 %v11018, %v11392
  %v11394 = vpop.f32.mrb[0].mxu0
  %11395 = vmatprep.mubr.f32.mxu0 0.0
  %11396 = vmatmul.mubr.f32.gmra.mrb[0].mxu0 %v11092
  %v11397 = vpop.f32.mrb[0].mxu0
  %v11398 = vadd.f32 %v11018, %v11397
  %v11399 = vpop.f32.mrb[0].mxu0
  %11400 = vmatprep.mubr.f32.mxu0 0.0
  %11401 = vmatmul.mubr.f32.gmra.mrb[0].mxu0 %v11095
  %v11402 = vpop.f32.mrb[0].mxu0
  %v11403 = vadd.f32 %v11018, %v11402
  %v11404 = vpop.f32.mrb[0].mxu0
  %11405 = vmatprep.mubr.f32.mxu0 0.0
  %11406 = vmatmul.mubr.f32.gmra.mrb[0].mxu0 %v11098
  %v11407 = vpop.f32.mrb[0].mxu0
  %v11408 = vadd.f32 %v11018, %v11407
  %v11409 = vpop.f32.mrb[0].mxu0
  %11410 = vmatprep.mubr.f32.mxu0 0.0
  %11411 = vmatmul.mubr.f32.gmra.mrb[0].mxu0 %v11101
  %v11412 = vpop.f32.mrb[0].mxu0
  %v11413 = vadd.f32 %v11018, %v11412
  %v11414 = vpop.f32.mrb[0].mxu0
  %11415 = vmatprep.mubr.f32.mxu0 0.0
  %11416 = vmatmul.mubr.f32.gmra.mrb[0].mxu0 %v11104
  %v11417 = vpop.f32.mrb[0].mxu0
  %v11418 = vadd.f32 %v11018, %v11417
  %v11419 = vpop.f32.mrb[0].mxu0
  %11420 = vmatprep.mubr.f32.mxu0 0.0
  %11421 = vmatmul.mubr.f32.gmra.mrb[0].mxu0 %v11107
  %v11422 = vpop.f32.mrb[0].mxu0
  %v11423 = vadd.f32 %v11018, %v11422
  %v11424 = vpop.f32.mrb[0].mxu0
  %11425 = vmatprep.mubr.f32.mxu0 0.0
  %11426 = vmatmul.mubr.f32.gmra.mrb[0].mxu0 %v11110
  %v11427 = vpop.f32.mrb[0].mxu0
  %v11428 = vadd.f32 %v11018, %v11427
  %v11429 = vpop.f32.mrb[0].mxu0
  %11430 = vmatprep.mubr.f32.mxu0 0.0
  %11431 = vmatmul.mubr.f32.gmra.mrb[0].mxu0 %v11113
  %v11432 = vpop.f32.mrb[0].mxu0
  %v11433 = vadd.f32 %v11018, %v11432
  %v11434 = vpop.f32.mrb[0].mxu0
  %11435 = vmatprep.mubr.f32.mxu0 0.0
  %11436 = vmatmul.mubr.f32.gmra.mrb[0].mxu0 %v11116
  %v11437 = vpop.f32.mrb[0].mxu0
  %v11438 = vadd.f32 %v11018, %v11437
  %v11439 = vpop.f32.mrb[0].mxu0
  %11440 = vmatprep.mubr.f32.mxu0 0.0
  %11441 = vmatmul.mubr.f32.gmra.mrb[0].mxu0 %v11119
  %v11442 = vpop.f32.mrb[0].mxu0
  %v11443 = vadd.f32 %v11018, %v11442
  %v11444 = vpop.f32.mrb[0].mxu0
  %11445 = vmatprep.mubr.f32.mxu0 0.0
  %11446 = vmatmul.mubr.f32.gmra.mrb[0].mxu0 %v11122
  %v11447 = vpop.f32.mrb[0].mxu0
  %v11448 = vadd.f32 %v11018, %v11447
  %v11449 = vpop.f32.mrb[0].mxu0
  %11450 = vmatprep.mubr.f32.mxu0 0.0
  %11451 = vmatmul.mubr.f32.gmra.mrb[0].mxu0 %v11125
  %v11452 = vpop.f32.mrb[0].mxu0
  %v11453 = vadd.f32 %v11018, %v11452
  %v11454 = vpop.f32.mrb[0].mxu0
  %11455 = vmatprep.mubr.f32.mxu0 0.0
  %11456 = vmatmul.mubr.f32.gmra.mrb[0].mxu0 %v11128
  %v11457 = vpop.f32.mrb[0].mxu0
  %v11458 = vadd.f32 %v11018, %v11457
  %v11459 = vpop.f32.mrb[0].mxu0
  %11460 = vmatprep.mubr.f32.mxu0 0.0
  %11461 = vmatmul.mubr.f32.gmra.mrb[0].mxu0 %v11131
  %v11462 = vpop.f32.mrb[0].mxu0
  %v11463 = vadd.f32 %v11018, %v11462
  %v11464 = vpop.f32.mrb[0].mxu0
  %11465 = vmatprep.mubr.f32.mxu0 0.0
  %11466 = vmatmul.mubr.f32.gmra.mrb[0].mxu0 %v11134
  %v11467 = vpop.f32.mrb[0].mxu0
  %v11468 = vadd.f32 %v11018, %v11467
  %v11469 = vpop.f32.mrb[0].mxu0
  %11470 = vmatprep.mubr.f32.mxu0 0.0
  %11471 = vmatmul.mubr.f32.gmra.mrb[0].mxu0 %v11137
  %v11472 = vpop.f32.mrb[0].mxu0
  %v11473 = vadd.f32 %v11018, %v11472
  %v11474 = vpop.f32.mrb[0].mxu0
  %11475 = vmatprep.mubr.f32.mxu0 0.0
  %11476 = vmatmul.mubr.f32.gmra.mrb[0].mxu0 %v11140
  %v11477 = vpop.f32.mrb[0].mxu0
  %v11478 = vadd.f32 %v11018, %v11477
  %v11479 = vpop.f32.mrb[0].mxu0
  %11480 = vmatprep.mubr.f32.mxu0 0.0
  %11481 = vmatmul.mubr.f32.gmra.mrb[0].mxu0 %v11143
  %v11482 = vpop.f32.mrb[0].mxu0
  %v11483 = vadd.f32 %v11018, %v11482
  %v11484 = vpop.f32.mrb[0].mxu0
  %11485 = vmatprep.mubr.f32.mxu0 0.0
  %11486 = vmatmul.mubr.f32.gmra.mrb[0].mxu0 %v11146
  %v11487 = vpop.f32.mrb[0].mxu0
  %v11488 = vadd.f32 %v11018, %v11487
  %v11489 = vpop.f32.mrb[0].mxu0
  %11490 = vmatprep.mubr.f32.mxu0 0.0
  %11491 = vmatmul.mubr.f32.gmra.mrb[0].mxu0 %v11149
  %v11492 = vpop.f32.mrb[0].mxu0
  %v11493 = vadd.f32 %v11018, %v11492
  %v11494 = vpop.f32.mrb[0].mxu0
  %11495 = vmatprep.mubr.f32.mxu0 0.0
  %11496 = vmatmul.mubr.f32.gmra.mrb[0].mxu0 %v11152
  %v11497 = vpop.f32.mrb[0].mxu0
  %v11498 = vadd.f32 %v11018, %v11497
  %v11499 = vpop.f32.mrb[0].mxu0
  %11500 = vmatprep.mubr.f32.mxu0 0.0
  %11501 = vmatmul.mubr.f32.gmra.mrb[0].mxu0 %v11155
  %v11502 = vpop.f32.mrb[0].mxu0
  %v11503 = vadd.f32 %v11018, %v11502
  %v11504 = vpop.f32.mrb[0].mxu0
  %11505 = vmatprep.mubr.f32.mxu0 0.0
  %11506 = vmatmul.mubr.f32.gmra.mrb[0].mxu0 %v11158
  %v11507 = vpop.f32.mrb[0].mxu0
  %v11508 = vadd.f32 %v11018, %v11507
  %v11509 = vpop.f32.mrb[0].mxu0
  %11510 = vmatprep.mubr.f32.mxu0 0.0
  %11511 = vmatmul.mubr.f32.gmra.mrb[0].mxu0 %v11161
  %v11512 = vpop.f32.mrb[0].mxu0
  %v11513 = vadd.f32 %v11018, %v11512
  %v11514 = vpop.f32.mrb[0].mxu0
  %11515 = vmatprep.mubr.f32.mxu0 0.0
  %11516 = vmatmul.mubr.f32.gmra.mrb[0].mxu0 %v11164
  %v11517 = vpop.f32.mrb[0].mxu0
  %v11518 = vadd.f32 %v11018, %v11517
  %v11519 = vpop.f32.mrb[0].mxu0
  %11520 = vmatprep.mubr.f32.mxu0 0.0
  %11521 = vmatmul.mubr.f32.gmra.mrb[0].mxu0 %v11167
  %v11522 = vpop.f32.mrb[0].mxu0
  %v11523 = vadd.f32 %v11018, %v11522
  %v11524 = vpop.f32.mrb[0].mxu0
  %11525 = vmatprep.mubr.f32.mxu0 0.0
  %11526 = vmatmul.mubr.f32.gmra.mrb[0].mxu0 %v11170
  %v11527 = vpop.f32.mrb[0].mxu0
  %v11528 = vadd.f32 %v11018, %v11527
  %v11529 = vpop.f32.mrb[0].mxu0
  %11530 = vmatprep.mubr.f32.mxu0 0.0
  %11531 = vmatmul.mubr.f32.gmra.mrb[0].mxu0 %v11173
  %v11532 = vpop.f32.mrb[0].mxu0
  %v11533 = vadd.f32 %v11018, %v11532
  %v11534 = vpop.f32.mrb[0].mxu0
  %11535 = vmatprep.mubr.f32.mxu0 0.0
  %11536 = vmatmul.mubr.f32.gmra.mrb[0].mxu0 %v11176
  %v11537 = vpop.f32.mrb[0].mxu0
  %v11538 = vadd.f32 %v11018, %v11537
  %v11539 = vpop.f32.mrb[0].mxu0
  %11540 = vmatprep.mubr.f32.mxu0 0.0
  %11541 = vmatmul.mubr.f32.gmra.mrb[0].mxu0 %v11179
  %v11542 = vpop.f32.mrb[0].mxu0
  %v11543 = vadd.f32 %v11018, %v11542
  %v11544 = vpop.f32.mrb[0].mxu0
  %11545 = vmatprep.mubr.f32.mxu0 0.0
  %11546 = vmatmul.mubr.f32.gmra.mrb[0].mxu0 %v11182
  %v11547 = vpop.f32.mrb[0].mxu0
  %v11548 = vadd.f32 %v11018, %v11547
  %v11549 = vpop.f32.mrb[0].mxu0
  %11550 = vmatprep.mubr.f32.mxu0 0.0
  %11551 = vmatmul.mubr.f32.gmra.mrb[0].mxu0 %v11185
  %v11552 = vpop.f32.mrb[0].mxu0
  %v11553 = vadd.f32 %v11018, %v11552
  %v11554 = vpop.f32.mrb[0].mxu0
  %11555 = vmatprep.mubr.f32.mxu0 0.0
  %11556 = vmatmul.mubr.f32.gmra.mrb[0].mxu0 %v11188
  %v11557 = vpop.f32.mrb[0].mxu0
  %v11558 = vadd.f32 %v11018, %v11557
  %v11559 = vpop.f32.mrb[0].mxu0
  %11560 = vmatprep.mubr.f32.mxu0 0.0
  %11561 = vmatmul.mubr.f32.gmra.mrb[0].mxu0 %v11191
  %v11562 = vpop.f32.mrb[0].mxu0
  %v11563 = vadd.f32 %v11018, %v11562
  %v11564 = vpop.f32.mrb[0].mxu0
  %11565 = vmatprep.mubr.f32.mxu0 0.0
  %11566 = vmatmul.mubr.f32.gmra.mrb[0].mxu0 %v11194
  %v11567 = vpop.f32.mrb[0].mxu0
  %v11568 = vadd.f32 %v11018, %v11567
  %v11569 = vpop.f32.mrb[0].mxu0
  %11570 = vmatprep.mubr.f32.mxu0 0.0
  %11571 = vmatmul.mubr.f32.gmra.mrb[0].mxu0 %v11197
  %v11572 = vpop.f32.mrb[0].mxu0
  %v11573 = vadd.f32 %v11018, %v11572
  %v11574 = vpop.f32.mrb[0].mxu0
  %11575 = vmatprep.mubr.f32.mxu0 0.0
  %11576 = vmatmul.mubr.f32.gmra.mrb[0].mxu0 %v11200
  %v11577 = vpop.f32.mrb[0].mxu0
  %v11578 = vadd.f32 %v11018, %v11577
  %v11579 = vpop.f32.mrb[0].mxu0
  %11580 = vmatprep.mubr.f32.mxu0 0.0
  %11581 = vmatmul.mubr.f32.gmra.mrb[0].mxu0 %v11203
  %v11582 = vpop.f32.mrb[0].mxu0
  %v11583 = vadd.f32 %v11018, %v11582
  %v11584 = vpop.f32.mrb[0].mxu0
  %11585 = vmatprep.mubr.f32.mxu0 0.0
  %11586 = vmatmul.mubr.f32.gmra.mrb[0].mxu0 %v11206
  %v11587 = vpop.f32.mrb[0].mxu0
  %v11588 = vadd.f32 %v11018, %v11587
  %v11589 = vpop.f32.mrb[0].mxu0
  %11590 = vmatprep.mubr.f32.mxu0 0.0
  %11591 = vmatmul.mubr.f32.gmra.mrb[0].mxu0 %v11209
  %v11592 = vpop.f32.mrb[0].mxu0
  %v11593 = vadd.f32 %v11018, %v11592
  %v11594 = vpop.f32.mrb[0].mxu0
  %11595 = vdwg.mxu0
  %v11596 = vadd.f32 %v11278, %v26
  %v11597 = vadd.f32 %v11283, %v27
  %v11598 = vadd.f32 %v11288, %v28
  %v11599 = vadd.f32 %v11293, %v29
  %v11600 = vadd.f32 %v11298, %v30
  %v11601 = vadd.f32 %v11303, %v31
  %v11602 = vadd.f32 %v11308, %v32
  %v11603 = vadd.f32 %v11313, %v33
  %v11604 = vadd.f32 %v11318, %v34
  %v11605 = vadd.f32 %v11323, %v35
  %v11606 = vadd.f32 %v11328, %v36
  %v11607 = vadd.f32 %v11333, %v37
  %v11608 = vadd.f32 %v11338, %v38
  %v11609 = vadd.f32 %v11343, %v39
  %v11610 = vadd.f32 %v11348, %v40
  %v11611 = vadd.f32 %v11353, %v41
  %v11612 = vadd.f32 %v11358, %v42
  %v11613 = vadd.f32 %v11363, %v43
  %v11614 = vadd.f32 %v11368, %v44
  %v11615 = vadd.f32 %v11373, %v45
  %v11616 = vadd.f32 %v11378, %v46
  %v11617 = vadd.f32 %v11383, %v47
  %v11618 = vadd.f32 %v11388, %v48
  %v11619 = vadd.f32 %v11393, %v49
  %v11620 = vadd.f32 %v11398, %v50
  %v11621 = vadd.f32 %v11403, %v51
  %v11622 = vadd.f32 %v11408, %v52
  %v11623 = vadd.f32 %v11413, %v53
  %v11624 = vadd.f32 %v11418, %v54
  %v11625 = vadd.f32 %v11423, %v55
  %v11626 = vadd.f32 %v11428, %v56
  %v11627 = vadd.f32 %v11433, %v57
  %v11628 = vadd.f32 %v11438, %v58
  %v11629 = vadd.f32 %v11443, %v59
  %v11630 = vadd.f32 %v11448, %v60
  %v11631 = vadd.f32 %v11453, %v61
  %v11632 = vadd.f32 %v11458, %v62
  %v11633 = vadd.f32 %v11463, %v63
  %v11634 = vadd.f32 %v11468, %v64
  %v11635 = vadd.f32 %v11473, %v65
  %v11636 = vadd.f32 %v11478, %v66
  %v11637 = vadd.f32 %v11483, %v67
  %v11638 = vadd.f32 %v11488, %v68
  %v11639 = vadd.f32 %v11493, %v69
  %v11640 = vadd.f32 %v11498, %v70
  %v11641 = vadd.f32 %v11503, %v71
  %v11642 = vadd.f32 %v11508, %v72
  %v11643 = vadd.f32 %v11513, %v73
  %v11644 = vadd.f32 %v11518, %v74
  %v11645 = vadd.f32 %v11523, %v75
  %v11646 = vadd.f32 %v11528, %v76
  %v11647 = vadd.f32 %v11533, %v77
  %v11648 = vadd.f32 %v11538, %v78
  %v11649 = vadd.f32 %v11543, %v79
  %v11650 = vadd.f32 %v11548, %v80
  %v11651 = vadd.f32 %v11553, %v81
  %v11652 = vadd.f32 %v11558, %v82
  %v11653 = vadd.f32 %v11563, %v83
  %v11654 = vadd.f32 %v11568, %v84
  %v11655 = vadd.f32 %v11573, %v85
  %v11656 = vadd.f32 %v11578, %v86
  %v11657 = vadd.f32 %v11583, %v87
  %v11658 = vadd.f32 %v11588, %v88
  %v11659 = vadd.f32 %v11593, %v89
  %11660 = vst.msk [vmem:[%s7] sm:$0xff] %vm90, %v11596
  %11661 = vst.msk [vmem:[%s7 + $0x8] sm:$0xff] %vm90, %v11597
  %11662 = vst.msk [vmem:[%s7 + $0x10] sm:$0xff] %vm90, %v11598
  %11663 = vst.msk [vmem:[%s7 + $0x18] sm:$0xff] %vm90, %v11599
  %11664 = vst.msk [vmem:[%s7 + $0x20] sm:$0xff] %vm90, %v11600
  %11665 = vst.msk [vmem:[%s7 + $0x28] sm:$0xff] %vm90, %v11601
  %11666 = vst.msk [vmem:[%s7 + $0x30] sm:$0xff] %vm90, %v11602
  %11667 = vst.msk [vmem:[%s7 + $0x38] sm:$0xff] %vm90, %v11603
  %11668 = vst.msk [vmem:[%s7 + $0x40] sm:$0xff] %vm90, %v11604
  %11669 = vst.msk [vmem:[%s7 + $0x48] sm:$0xff] %vm90, %v11605
  %11670 = vst.msk [vmem:[%s7 + $0x50] sm:$0xff] %vm90, %v11606
  %11671 = vst.msk [vmem:[%s7 + $0x58] sm:$0xff] %vm90, %v11607
  %11672 = vst.msk [vmem:[%s7 + $0x60] sm:$0xff] %vm90, %v11608
  %11673 = vst.msk [vmem:[%s7 + $0x68] sm:$0xff] %vm90, %v11609
  %11674 = vst.msk [vmem:[%s7 + $0x70] sm:$0xff] %vm90, %v11610
  %11675 = vst.msk [vmem:[%s7 + $0x78] sm:$0xff] %vm90, %v11611
  %11676 = vst.msk [vmem:[%s7 + $0x80] sm:$0xff] %vm90, %v11612
  %11677 = vst.msk [vmem:[%s7 + $0x88] sm:$0xff] %vm90, %v11613
  %11678 = vst.msk [vmem:[%s7 + $0x90] sm:$0xff] %vm90, %v11614
  %11679 = vst.msk [vmem:[%s7 + $0x98] sm:$0xff] %vm90, %v11615
  %11680 = vst.msk [vmem:[%s7 + $0xa0] sm:$0xff] %vm90, %v11616
  %11681 = vst.msk [vmem:[%s7 + $0xa8] sm:$0xff] %vm90, %v11617
  %11682 = vst.msk [vmem:[%s7 + $0xb0] sm:$0xff] %vm90, %v11618
  %11683 = vst.msk [vmem:[%s7 + $0xb8] sm:$0xff] %vm90, %v11619
  %11684 = vst.msk [vmem:[%s7 + $0xc0] sm:$0xff] %vm90, %v11620
  %11685 = vst.msk [vmem:[%s7 + $0xc8] sm:$0xff] %vm90, %v11621
  %11686 = vst.msk [vmem:[%s7 + $0xd0] sm:$0xff] %vm90, %v11622
  %11687 = vst.msk [vmem:[%s7 + $0xd8] sm:$0xff] %vm90, %v11623
  %11688 = vst.msk [vmem:[%s7 + $0xe0] sm:$0xff] %vm90, %v11624
  %11689 = vst.msk [vmem:[%s7 + $0xe8] sm:$0xff] %vm90, %v11625
  %11690 = vst.msk [vmem:[%s7 + $0xf0] sm:$0xff] %vm90, %v11626
  %11691 = vst.msk [vmem:[%s7 + $0xf8] sm:$0xff] %vm90, %v11627
  %11692 = vst.msk [vmem:[%s7 + $0x100] sm:$0xff] %vm90, %v11628
  %11693 = vst.msk [vmem:[%s7 + $0x108] sm:$0xff] %vm90, %v11629
  %11694 = vst.msk [vmem:[%s7 + $0x110] sm:$0xff] %vm90, %v11630
  %11695 = vst.msk [vmem:[%s7 + $0x118] sm:$0xff] %vm90, %v11631
  %11696 = vst.msk [vmem:[%s7 + $0x120] sm:$0xff] %vm90, %v11632
  %11697 = vst.msk [vmem:[%s7 + $0x128] sm:$0xff] %vm90, %v11633
  %11698 = vst.msk [vmem:[%s7 + $0x130] sm:$0xff] %vm90, %v11634
  %11699 = vst.msk [vmem:[%s7 + $0x138] sm:$0xff] %vm90, %v11635
  %11700 = vst.msk [vmem:[%s7 + $0x140] sm:$0xff] %vm90, %v11636
  %11701 = vst.msk [vmem:[%s7 + $0x148] sm:$0xff] %vm90, %v11637
  %11702 = vst.msk [vmem:[%s7 + $0x150] sm:$0xff] %vm90, %v11638
  %11703 = vst.msk [vmem:[%s7 + $0x158] sm:$0xff] %vm90, %v11639
  %11704 = vst.msk [vmem:[%s7 + $0x160] sm:$0xff] %vm90, %v11640
  %11705 = vst.msk [vmem:[%s7 + $0x168] sm:$0xff] %vm90, %v11641
  %11706 = vst.msk [vmem:[%s7 + $0x170] sm:$0xff] %vm90, %v11642
  %11707 = vst.msk [vmem:[%s7 + $0x178] sm:$0xff] %vm90, %v11643
  %11708 = vst.msk [vmem:[%s7 + $0x180] sm:$0xff] %vm90, %v11644
  %11709 = vst.msk [vmem:[%s7 + $0x188] sm:$0xff] %vm90, %v11645
  %11710 = vst.msk [vmem:[%s7 + $0x190] sm:$0xff] %vm90, %v11646
  %11711 = vst.msk [vmem:[%s7 + $0x198] sm:$0xff] %vm90, %v11647
  %11712 = vst.msk [vmem:[%s7 + $0x1a0] sm:$0xff] %vm90, %v11648
  %11713 = vst.msk [vmem:[%s7 + $0x1a8] sm:$0xff] %vm90, %v11649
  %11714 = vst.msk [vmem:[%s7 + $0x1b0] sm:$0xff] %vm90, %v11650
  %11715 = vst.msk [vmem:[%s7 + $0x1b8] sm:$0xff] %vm90, %v11651
  %11716 = vst.msk [vmem:[%s7 + $0x1c0] sm:$0xff] %vm90, %v11652
  %11717 = vst.msk [vmem:[%s7 + $0x1c8] sm:$0xff] %vm90, %v11653
  %11718 = vst.msk [vmem:[%s7 + $0x1d0] sm:$0xff] %vm90, %v11654
  %11719 = vst.msk [vmem:[%s7 + $0x1d8] sm:$0xff] %vm90, %v11655
  %11720 = vst.msk [vmem:[%s7 + $0x1e0] sm:$0xff] %vm90, %v11656
  %11721 = vst.msk [vmem:[%s7 + $0x1e8] sm:$0xff] %vm90, %v11657
  %11722 = vst.msk [vmem:[%s7 + $0x1f0] sm:$0xff] %vm90, %v11658
  %11723 = vst.msk [vmem:[%s7 + $0x1f8] sm:$0xff] %vm90, %v11659
  // Predicated region
  $region30: #{gated_cnn_block.1} parent=0 // pred_check
    _
  $region31: #{gated_cnn_block.1} parent=0 // pred_check_branch
    %11725 = sbr.rel (0) target = $region33
  $region32: #{gated_cnn_block.1} parent=0 // pred_region
    _
  $region33: #{gated_cnn_block.1} parent=0 // pred_fallthru
    _
  // Predicated region
  $region34: #{gated_cnn_block.1} parent=0 // pred_check
    _
  $region35: #{gated_cnn_block.1} parent=0 // pred_check_branch
    %11727 = sbr.rel (0) target = $region37
  $region36: #{gated_cnn_block.1} parent=0 // pred_region
    _
  $region37: #{gated_cnn_block.1} parent=0 // pred_fallthru
    _

</llo_original>
